<compile_context>
chip_gen: v7x
topology: tpu7x:2x2x1
jax: 0.10.0
libtpu: 0.0.40
codegen_flags: <defaults>
</compile_context>

<pallas_src>
import functools

import jax
import jax.numpy as jnp
from jax import lax
from jax.experimental import pallas as pl
from jax.experimental.pallas import tpu as pltpu


# ----------------------------------------------------------------------------
# Pallas kernel. Grid = (batch, query-tile). Everything channels-first (C, N)
# with the spatial axis N on lanes.
# ----------------------------------------------------------------------------
def _attn_block_kernel(x_ref,
                       wq1_ref, bq1_ref, wq2_ref, bq2_ref,
                       wk1_ref, bk1_ref, wk2_ref, bk2_ref,
                       wv_ref, ww_ref, bw_ref,
                       o_ref,
                       k_scr, vaug_scr,
                       *, cv_pad, q_tile, matmul_dtype, exp_dtype, approx_recip):
    mmt = matmul_dtype
    qi = pl.program_id(1)

    def mm(a, b, dims):
        # MXU matmul: operands in matmul_dtype (f32 or bf16), f32 accumulation.
        return lax.dot_general(
            a.astype(mmt), b.astype(mmt),
            dimension_numbers=(dims, ((), ())),
            preferred_element_type=jnp.float32)

    # ---- per-batch stage: project keys/values once, reuse for all q tiles ---
    @pl.when(qi == 0)
    def _():
        x = x_ref[0]                                                  # (Cin, N)
        k1 = jnp.maximum(mm(wk1_ref[...], x, ((1,), (0,))) + bk1_ref[...], 0.0)
        k = jnp.maximum(mm(wk2_ref[...], k1, ((1,), (0,))) + bk2_ref[...], 0.0)
        k_scr[...] = k.astype(k_scr.dtype)                            # (Ck, N)
        v = mm(wv_ref[...], x, ((1,), (0,)))                          # (Cv_pad, N), no bias/relu
        vaug_scr[0:cv_pad, :] = v.astype(vaug_scr.dtype)
        # Ones row: the softmax denominator rides the PV matmul for free.
        vaug_scr[cv_pad:cv_pad + 1, :] = jnp.ones((1, vaug_scr.shape[1]),
                                                  vaug_scr.dtype)

    # ---- per-tile stage ------------------------------------------------------
    qstart = pl.multiple_of(qi * q_tile, q_tile)
    xq = x_ref[0, :, pl.ds(qstart, q_tile)]                           # (Cin, Tq)
    q1 = jnp.maximum(mm(wq1_ref[...], xq, ((1,), (0,))) + bq1_ref[...], 0.0)
    # softmax scale is pre-folded into wq2/bq2 in the wrapper.
    q = jnp.maximum(mm(wq2_ref[...], q1, ((1,), (0,))) + bq2_ref[...], 0.0)  # (Ck, Tq)

    # sim_T[j, i] = sum_c k[c, j] * q[c, i]: contract the channel axis of both
    # operands directly (TN dot) -> no materialized q.T, keys on sublanes,
    # queries lane-dense.
    sim_t = mm(k_scr[...], q, ((0,), (0,)))                           # (N, Tq) f32
    m = jnp.max(sim_t, axis=0, keepdims=True)                         # (1, Tq), sublane reduce
    e = jnp.exp((sim_t - m).astype(exp_dtype))                        # (N, Tq)

    # PV matmul (canonical NN); last row of vaug is ones -> per-query denom.
    ctx_aug = mm(vaug_scr[...], e, ((1,), (0,)))                      # (Cv_pad+1, Tq) f32
    denom = ctx_aug[cv_pad:cv_pad + 1, :]                             # (1, Tq)
    ctx = ctx_aug[0:cv_pad, :] * pl.reciprocal(denom, approx=approx_recip)

    # Output 1x1 conv + folded BN + ReLU; lane-dense (Cout, Tq) store.
    out = jnp.maximum(mm(ww_ref[...], ctx, ((1,), (0,))) + bw_ref[...], 0.0)
    o_ref[0] = out.astype(o_ref.dtype)


def _fold_bn(w, gamma, beta, mean, var, eps=1e-5):
    """Fold BatchNorm (eval mode) into a 1x1 conv weight (Cout, Cin)."""
    s = gamma / jnp.sqrt(var + eps)
    w_eff = w * s[:, None]
    b_eff = beta - mean * s
    return w_eff.astype(jnp.float32), b_eff.astype(jnp.float32)


def _round_up(x, m):
    return (x + m - 1) // m * m


# ----------------------------------------------------------------------------
# Wrapper: NCHW in, NCHW out (no transposes, only reshapes).
# ----------------------------------------------------------------------------
def self_attention_block_2d(x_nchw, params, key_channels, *,
                            matmul_dtype=jnp.bfloat16,   # bf16 MXU path on all chips
                            exp_dtype=jnp.float32,       # jnp.bfloat16 is a v6e/v7x option
                            approx_recip=True,
                            out_dtype=jnp.float32,
                            q_tile=512):
    B, Cin, H, W = x_nchw.shape
    N = H * W
    Ck = key_channels
    Cv = params["wv"].shape[0]
    Cout = params["ww"].shape[0]
    Cv_pad = _round_up(Cv, 8)

    # Query tile: a multiple of 128 that divides N, else the whole N (block ==
    # full dim is always legal; non-128-multiple N degrades to masked stores).
    Tq = N
    if N % 128 == 0:
        for cand in (q_tile, 512, 256, 128):
            if cand % 128 == 0 and cand <= N and N % cand == 0:
                Tq = cand
                break
    assert N % Tq == 0
    num_q_tiles = N // Tq

    # NCHW is already channels-first: pure reshape to (B, Cin, N).
    x = x_nchw.reshape(B, Cin, N).astype(matmul_dtype)

    scale = float(key_channels) ** (-0.5)
    # Fold the softmax scale into the second query projection (exact: scale>0).
    wq2 = params["wq2"] * scale
    bq2 = params["bq2"] * scale

    # Zero-pad value channels to a multiple of 8 so context slices stay aligned.
    wv_p = jnp.zeros((Cv_pad, Cin), jnp.float32).at[:Cv].set(params["wv"])
    ww_p = jnp.zeros((Cout, Cv_pad), jnp.float32).at[:, :Cv].set(params["ww"])

    def col(b):  # per-channel bias column, broadcasts along the lane (N) axis
        return b.reshape(-1, 1).astype(jnp.float32)

    weight_args = (
        params["wq1"].astype(matmul_dtype), col(params["bq1"]),
        wq2.astype(matmul_dtype), col(bq2),
        params["wk1"].astype(matmul_dtype), col(params["bk1"]),
        params["wk2"].astype(matmul_dtype), col(params["bk2"]),
        wv_p.astype(matmul_dtype),
        ww_p.astype(matmul_dtype), col(params["bw"]),
    )

    def full_spec(arr):
        nd = arr.ndim
        # Block index constant across the whole grid -> single resident copy.
        return pl.BlockSpec(arr.shape, lambda b, qi, _nd=nd: (0,) * _nd)

    in_specs = [pl.BlockSpec((1, Cin, N), lambda b, qi: (b, 0, 0))]
    in_specs += [full_spec(a) for a in weight_args]
    out_specs = pl.BlockSpec((1, Cout, Tq), lambda b, qi: (b, 0, qi))

    kernel = functools.partial(
        _attn_block_kernel,
        cv_pad=Cv_pad, q_tile=Tq,
        matmul_dtype=matmul_dtype, exp_dtype=exp_dtype,
        approx_recip=approx_recip)

    # Advisory cost estimate (projections + N^2 attention chain).
    isz = jnp.dtype(matmul_dtype).itemsize
    osz = jnp.dtype(out_dtype).itemsize
    wbytes = int(sum(int(a.size) * a.dtype.itemsize for a in weight_args))
    proj_flops = 2 * N * (2 * Ck * Cin + 2 * Ck * Ck + Cv_pad * Cin + Cout * Cv_pad)
    attn_flops = 2 * N * N * (Ck + Cv_pad + 1)
    cost = pl.CostEstimate(
        flops=int(B * (proj_flops + attn_flops)),
        transcendentals=int(B * (N * N + N)),
        bytes_accessed=int(B * (Cin * N * isz + Cout * N * osz) + wbytes))

    # Explicit VMEM budget (do not rely on the per-chip scoped default).
    vmem_est = (2 * Cin * N * isz                 # x block (double buffered)
                + 2 * Cout * Tq * osz             # output block (double buffered)
                + (Ck + Cv_pad + 1) * N * isz     # key / value(+ones) scratch
                + 2 * wbytes                      # weights (double buffered)
                + 3 * N * Tq * 4                  # sim_t / exp temporaries (f32)
                + (2 * Ck + 2 * Cv_pad + Cout + 4) * Tq * 4)
    vmem_limit = int(min(max(2 * vmem_est, 32 * 1024 * 1024), 64 * 1024 * 1024))

    out = pl.pallas_call(
        kernel,
        out_shape=jax.ShapeDtypeStruct((B, Cout, N), out_dtype),
        grid_spec=pltpu.PrefetchScalarGridSpec(
            num_scalar_prefetch=0,
            grid=(B, num_q_tiles),
            in_specs=in_specs,
            out_specs=out_specs,
            scratch_shapes=[
                pltpu.VMEM((Ck, N), matmul_dtype),          # keys
                pltpu.VMEM((Cv_pad + 1, N), matmul_dtype),  # values + ones row
            ],
        ),
        compiler_params=pltpu.CompilerParams(
            dimension_semantics=("parallel", "arbitrary"),
            vmem_limit_bytes=vmem_limit),
        cost_estimate=cost,
    )(x, *weight_args)

    # (B, Cout, N) is already flat NCHW: reshape only, no transpose.
    return out.reshape(B, Cout, H, W)


# ----------------------------------------------------------------------------
# Pure-JAX reference (same math, no Pallas) for a sanity check.
# ----------------------------------------------------------------------------
def _reference(x_nchw, params, key_channels):
    B, Cin, H, W = x_nchw.shape
    N = H * W
    x = jnp.transpose(x_nchw, (0, 2, 3, 1)).reshape(B, N, Cin).astype(jnp.float32)

    def proj(x_, w1, b1, w2, b2):
        h = jnp.maximum(x_ @ w1.T + b1, 0.0)
        return jnp.maximum(h @ w2.T + b2, 0.0)

    q = proj(x, params["wq1"], params["bq1"], params["wq2"], params["bq2"])
    k = proj(x, params["wk1"], params["bk1"], params["wk2"], params["bk2"])
    v = x @ params["wv"].T
    sim = jnp.einsum("bnc,bmc->bnm", q, k) * (float(key_channels) ** -0.5)
    p = jax.nn.softmax(sim, axis=-1)
    ctx = jnp.einsum("bnm,bmc->bnc", p, v)
    out = jnp.maximum(ctx @ params["ww"].T + params["bw"], 0.0)
    Cout = params["ww"].shape[0]
    return jnp.transpose(out.reshape(B, H, W, Cout), (0, 3, 1, 2))


# ----------------------------------------------------------------------------
# Deterministic parameter construction (mirrors the module's __init__ shapes).
# ----------------------------------------------------------------------------
def make_params(key, in_channels, key_channels, value_channels, out_channels):
    ks = jax.random.split(key, 32)
    it = iter(ks)

    def conv_w(cout, cin):
        return (jax.random.normal(next(it), (cout, cin), jnp.float32)
                * (1.0 / jnp.sqrt(cin)))

    def bn(c):
        gamma = 0.5 + jax.random.uniform(next(it), (c,), jnp.float32)
        beta = 0.1 * jax.random.normal(next(it), (c,), jnp.float32)
        mean = 0.1 * jax.random.normal(next(it), (c,), jnp.float32)
        var = 0.5 + jax.random.uniform(next(it), (c,), jnp.float32)
        return gamma, beta, mean, var

    # f_query: conv-bn-relu-conv-bn-relu
    wq1, bq1 = _fold_bn(conv_w(key_channels, in_channels), *bn(key_channels))
    wq2, bq2 = _fold_bn(conv_w(key_channels, key_channels), *bn(key_channels))
    # f_key
    wk1, bk1 = _fold_bn(conv_w(key_channels, in_channels), *bn(key_channels))
    wk2, bk2 = _fold_bn(conv_w(key_channels, key_channels), *bn(key_channels))
    # f_value: plain conv, no bias
    wv = conv_w(value_channels, in_channels)
    # W: conv-bn-relu
    ww, bw = _fold_bn(conv_w(out_channels, value_channels), *bn(out_channels))

    return dict(wq1=wq1, bq1=bq1, wq2=wq2, bq2=bq2,
                wk1=wk1, bk1=bk1, wk2=wk2, bk2=bk2,
                wv=wv, ww=ww, bw=bw)


if __name__ == "__main__":
    # N = 32*32 = 1024 with Tq = 512 exercises the query-tile grid (grid=(2,2))
    # and the per-batch key/value scratch reuse; value_channels=12 exercises
    # the pad-to-multiple-of-8 path.
    B, Cin, H, W = 2, 8, 32, 32
    key_channels, value_channels = 8, 12
    out_channels = Cin  # module default: out_channels = in_channels

    root = jax.random.PRNGKey(0)
    kx, kp = jax.random.split(root)
    x = jax.random.normal(kx, (B, Cin, H, W), jnp.float32)
    params = make_params(kp, Cin, key_channels, value_channels, out_channels)

    ref = jax.block_until_ready(_reference(x, params, key_channels))

    # Strict f32 path (f32 MXU, exact reciprocal) — tight tolerance vs reference.
    out_f32 = jax.block_until_ready(
        self_attention_block_2d(x, params, key_channels,
                                matmul_dtype=jnp.float32, approx_recip=False))
    assert out_f32.shape == (B, out_channels, H, W)
    assert jnp.allclose(out_f32, ref, atol=2e-4, rtol=2e-4), "f32 mismatch vs reference"

    # Default fast path: bf16 MXU inputs / f32 accumulation + approx reciprocal.
    out_fast = jax.block_until_ready(
        self_attention_block_2d(x, params, key_channels))
    assert out_fast.shape == (B, out_channels, H, W)
    assert jnp.allclose(out_fast, ref, atol=1e-1, rtol=1e-1), "bf16 mismatch vs reference"

    print("KERNEL_OK")
</pallas_src>

<mosaic_0001>
module attributes {stable_mosaic.version = 11 : i64} {
  func.func @_attn_block_kernel(%arg0: i32, %arg1: i32, %arg2: memref<1x8x1024xf32, #tpu.memory_space<vmem>>, %arg3: memref<8x8xf32, #tpu.memory_space<vmem>>, %arg4: memref<8x1xf32, #tpu.memory_space<vmem>>, %arg5: memref<8x8xf32, #tpu.memory_space<vmem>>, %arg6: memref<8x1xf32, #tpu.memory_space<vmem>>, %arg7: memref<8x8xf32, #tpu.memory_space<vmem>>, %arg8: memref<8x1xf32, #tpu.memory_space<vmem>>, %arg9: memref<8x8xf32, #tpu.memory_space<vmem>>, %arg10: memref<8x1xf32, #tpu.memory_space<vmem>>, %arg11: memref<16x8xf32, #tpu.memory_space<vmem>>, %arg12: memref<8x16xf32, #tpu.memory_space<vmem>>, %arg13: memref<8x1xf32, #tpu.memory_space<vmem>>, %arg14: memref<1x8x512xf32, #tpu.memory_space<vmem>>, %arg15: memref<8x1024xf32, #tpu.memory_space<vmem>>, %arg16: memref<17x1024xf32, #tpu.memory_space<vmem>>) attributes {dimension_semantics = [#tpu.dimension_semantics<parallel>, #tpu.dimension_semantics<arbitrary>], iteration_bounds = array<i64: 2, 2>, scalar_prefetch = 0 : i64, scratch_operands = 2 : i64, tpu.core_type = #tpu.core_type<tc>, window_params = [{transform_indices = @transform_0, window_bounds = array<i64: 1, 8, 1024>}, {pipeline_mode = #tpu.pipeline_mode<synchronous>, transform_indices = @transform_1, window_bounds = array<i64: 8, 8>}, {pipeline_mode = #tpu.pipeline_mode<synchronous>, transform_indices = @transform_2, window_bounds = array<i64: 8, 1>}, {pipeline_mode = #tpu.pipeline_mode<synchronous>, transform_indices = @transform_3, window_bounds = array<i64: 8, 8>}, {pipeline_mode = #tpu.pipeline_mode<synchronous>, transform_indices = @transform_4, window_bounds = array<i64: 8, 1>}, {pipeline_mode = #tpu.pipeline_mode<synchronous>, transform_indices = @transform_5, window_bounds = array<i64: 8, 8>}, {pipeline_mode = #tpu.pipeline_mode<synchronous>, transform_indices = @transform_6, window_bounds = array<i64: 8, 1>}, {pipeline_mode = #tpu.pipeline_mode<synchronous>, transform_indices = @transform_7, window_bounds = array<i64: 8, 8>}, {pipeline_mode = #tpu.pipeline_mode<synchronous>, transform_indices = @transform_8, window_bounds = array<i64: 8, 1>}, {pipeline_mode = #tpu.pipeline_mode<synchronous>, transform_indices = @transform_9, window_bounds = array<i64: 16, 8>}, {pipeline_mode = #tpu.pipeline_mode<synchronous>, transform_indices = @transform_10, window_bounds = array<i64: 8, 16>}, {pipeline_mode = #tpu.pipeline_mode<synchronous>, transform_indices = @transform_11, window_bounds = array<i64: 8, 1>}, {transform_indices = @transform_12, window_bounds = array<i64: 1, 8, 512>}]} {
    %c0_i32 = arith.constant 0 : i32
    %0 = arith.cmpi eq, %arg1, %c0_i32 : i32
    %1 = arith.extui %0 : i1 to i32
    %c0_i32_0 = arith.constant 0 : i32
    %2 = arith.cmpi ne, %1, %c0_i32_0 : i32
    scf.if %2 {
      %c0_29 = arith.constant 0 : index
      %c0_30 = arith.constant 0 : index
      %c0_31 = arith.constant 0 : index
      %46 = vector.load %arg2[%c0_29, %c0_30, %c0_31] : memref<1x8x1024xf32, #tpu.memory_space<vmem>>, vector<1x8x1024xf32>
      %47 = vector.shape_cast %46 : vector<1x8x1024xf32> to vector<8x1024xf32>
      %c0_32 = arith.constant 0 : index
      %c0_33 = arith.constant 0 : index
      %48 = vector.load %arg7[%c0_32, %c0_33] : memref<8x8xf32, #tpu.memory_space<vmem>>, vector<8x8xf32>
      %cst_34 = arith.constant dense<0.000000e+00> : vector<8x1024xf32>
      %49 = tpu.matmul %48, %47, %cst_34 {dimension_numbers = #tpu.dot_dimension_numbers<[1], [0], [0], [1], [0, 0, 1, 1], [], []>} : vector<8x8xf32>, vector<8x1024xf32>, vector<8x1024xf32> -> vector<8x1024xf32>
      %c0_35 = arith.constant 0 : index
      %c0_36 = arith.constant 0 : index
      %50 = vector.load %arg8[%c0_35, %c0_36] : memref<8x1xf32, #tpu.memory_space<vmem>>, vector<8x1xf32>
      %51 = vector.broadcast %50 : vector<8x1xf32> to vector<8x1024xf32>
      %52 = arith.addf %49, %51 : vector<8x1024xf32>
      %cst_37 = arith.constant 0.000000e+00 : f32
      %53 = vector.broadcast %cst_37 : f32 to vector<8x1024xf32>
      %54 = arith.maximumf %52, %53 : vector<8x1024xf32>
      %c0_38 = arith.constant 0 : index
      %c0_39 = arith.constant 0 : index
      %55 = vector.load %arg9[%c0_38, %c0_39] : memref<8x8xf32, #tpu.memory_space<vmem>>, vector<8x8xf32>
      %cst_40 = arith.constant dense<0.000000e+00> : vector<8x1024xf32>
      %56 = tpu.matmul %55, %54, %cst_40 {dimension_numbers = #tpu.dot_dimension_numbers<[1], [0], [0], [1], [0, 0, 1, 1], [], []>} : vector<8x8xf32>, vector<8x1024xf32>, vector<8x1024xf32> -> vector<8x1024xf32>
      %c0_41 = arith.constant 0 : index
      %c0_42 = arith.constant 0 : index
      %57 = vector.load %arg10[%c0_41, %c0_42] : memref<8x1xf32, #tpu.memory_space<vmem>>, vector<8x1xf32>
      %58 = vector.broadcast %57 : vector<8x1xf32> to vector<8x1024xf32>
      %59 = arith.addf %56, %58 : vector<8x1024xf32>
      %cst_43 = arith.constant 0.000000e+00 : f32
      %60 = vector.broadcast %cst_43 : f32 to vector<8x1024xf32>
      %61 = arith.maximumf %59, %60 : vector<8x1024xf32>
      %c0_44 = arith.constant 0 : index
      %c0_45 = arith.constant 0 : index
      %62 = vector.load %arg15[%c0_44, %c0_45] : memref<8x1024xf32, #tpu.memory_space<vmem>>, vector<8x1024xf32>
      tpu.vector_store %arg15[%c0_44, %c0_45], %61 {strides = array<i32>} : memref<8x1024xf32, #tpu.memory_space<vmem>>, vector<8x1024xf32>,
      %c0_46 = arith.constant 0 : index
      %c0_47 = arith.constant 0 : index
      %63 = vector.load %arg11[%c0_46, %c0_47] : memref<16x8xf32, #tpu.memory_space<vmem>>, vector<16x8xf32>
      %cst_48 = arith.constant dense<0.000000e+00> : vector<16x1024xf32>
      %64 = tpu.matmul %63, %47, %cst_48 {dimension_numbers = #tpu.dot_dimension_numbers<[1], [0], [0], [1], [0, 0, 1, 1], [], []>} : vector<16x8xf32>, vector<8x1024xf32>, vector<16x1024xf32> -> vector<16x1024xf32>
      %c0_49 = arith.constant 0 : index
      %c0_50 = arith.constant 0 : index
      %65 = vector.load %arg16[%c0_49, %c0_50] : memref<17x1024xf32, #tpu.memory_space<vmem>>, vector<16x1024xf32>
      tpu.vector_store %arg16[%c0_49, %c0_50], %64 {strides = array<i32>} : memref<17x1024xf32, #tpu.memory_space<vmem>>, vector<16x1024xf32>,
      %cst_51 = arith.constant 1.000000e+00 : f32
      %66 = vector.broadcast %cst_51 : f32 to vector<1x1024xf32>
      %c16 = arith.constant 16 : index
      %c0_52 = arith.constant 0 : index
      %67 = vector.load %arg16[%c16, %c0_52] : memref<17x1024xf32, #tpu.memory_space<vmem>>, vector<1x1024xf32>
      tpu.vector_store %arg16[%c16, %c0_52], %66 {strides = array<i32>} : memref<17x1024xf32, #tpu.memory_space<vmem>>, vector<1x1024xf32>,
    } else {
    }
    %c512_i32 = arith.constant 512 : i32
    %3 = arith.muli %arg1, %c512_i32 : i32
    %4 = tpu.assume_multiple %3, 512 : i32
    %c0 = arith.constant 0 : index
    %c0_1 = arith.constant 0 : index
    %5 = arith.index_cast %4 : i32 to index
    %6 = vector.load %arg2[%c0, %c0_1, %5] : memref<1x8x1024xf32, #tpu.memory_space<vmem>>, vector<1x8x512xf32>
    %7 = vector.shape_cast %6 : vector<1x8x512xf32> to vector<8x512xf32>
    %c0_2 = arith.constant 0 : index
    %c0_3 = arith.constant 0 : index
    %8 = vector.load %arg3[%c0_2, %c0_3] : memref<8x8xf32, #tpu.memory_space<vmem>>, vector<8x8xf32>
    %cst = arith.constant dense<0.000000e+00> : vector<8x512xf32>
    %9 = tpu.matmul %8, %7, %cst {dimension_numbers = #tpu.dot_dimension_numbers<[1], [0], [0], [1], [0, 0, 1, 1], [], []>} : vector<8x8xf32>, vector<8x512xf32>, vector<8x512xf32> -> vector<8x512xf32>
    %c0_4 = arith.constant 0 : index
    %c0_5 = arith.constant 0 : index
    %10 = vector.load %arg4[%c0_4, %c0_5] : memref<8x1xf32, #tpu.memory_space<vmem>>, vector<8x1xf32>
    %11 = vector.broadcast %10 : vector<8x1xf32> to vector<8x512xf32>
    %12 = arith.addf %9, %11 : vector<8x512xf32>
    %cst_6 = arith.constant 0.000000e+00 : f32
    %13 = vector.broadcast %cst_6 : f32 to vector<8x512xf32>
    %14 = arith.maximumf %12, %13 : vector<8x512xf32>
    %c0_7 = arith.constant 0 : index
    %c0_8 = arith.constant 0 : index
    %15 = vector.load %arg5[%c0_7, %c0_8] : memref<8x8xf32, #tpu.memory_space<vmem>>, vector<8x8xf32>
    %cst_9 = arith.constant dense<0.000000e+00> : vector<8x512xf32>
    %16 = tpu.matmul %15, %14, %cst_9 {dimension_numbers = #tpu.dot_dimension_numbers<[1], [0], [0], [1], [0, 0, 1, 1], [], []>} : vector<8x8xf32>, vector<8x512xf32>, vector<8x512xf32> -> vector<8x512xf32>
    %c0_10 = arith.constant 0 : index
    %c0_11 = arith.constant 0 : index
    %17 = vector.load %arg6[%c0_10, %c0_11] : memref<8x1xf32, #tpu.memory_space<vmem>>, vector<8x1xf32>
    %18 = vector.broadcast %17 : vector<8x1xf32> to vector<8x512xf32>
    %19 = arith.addf %16, %18 : vector<8x512xf32>
    %cst_12 = arith.constant 0.000000e+00 : f32
    %20 = vector.broadcast %cst_12 : f32 to vector<8x512xf32>
    %21 = arith.maximumf %19, %20 : vector<8x512xf32>
    %c0_13 = arith.constant 0 : index
    %c0_14 = arith.constant 0 : index
    %22 = vector.load %arg15[%c0_13, %c0_14] : memref<8x1024xf32, #tpu.memory_space<vmem>>, vector<8x1024xf32>
    %cst_15 = arith.constant dense<0.000000e+00> : vector<1024x512xf32>
    %23 = tpu.matmul %22, %21, %cst_15 {dimension_numbers = #tpu.dot_dimension_numbers<[0], [0], [1], [1], [0, 1, 1, 1], [], []>} : vector<8x1024xf32>, vector<8x512xf32>, vector<1024x512xf32> -> vector<1024x512xf32>
    %cst_16 = arith.constant dense<0xFF800000> : vector<512xf32>
    %24 = vector.multi_reduction <maximumf>, %23, %cst_16 [0] : vector<1024x512xf32> to vector<512xf32>
    %25 = vector.shape_cast %24 : vector<512xf32> to vector<1x512xf32>
    %26 = vector.broadcast %25 : vector<1x512xf32> to vector<1024x512xf32>
    %27 = arith.subf %23, %26 : vector<1024x512xf32>
    %28 = math.exp %27 : vector<1024x512xf32>
    %c0_17 = arith.constant 0 : index
    %c0_18 = arith.constant 0 : index
    %29 = vector.load %arg16[%c0_17, %c0_18] : memref<17x1024xf32, #tpu.memory_space<vmem>>, vector<17x1024xf32>
    %cst_19 = arith.constant dense<0.000000e+00> : vector<17x512xf32>
    %30 = tpu.matmul %29, %28, %cst_19 {dimension_numbers = #tpu.dot_dimension_numbers<[1], [0], [0], [1], [0, 0, 1, 1], [], []>} : vector<17x1024xf32>, vector<1024x512xf32>, vector<17x512xf32> -> vector<17x512xf32>
    %31 = vector.extract_strided_slice %30 {offsets = [16, 0], sizes = [1, 512], strides = [1, 1]} : vector<17x512xf32> to vector<1x512xf32>
    %32 = vector.extract_strided_slice %30 {offsets = [0, 0], sizes = [16, 512], strides = [1, 1]} : vector<17x512xf32> to vector<16x512xf32>
    %33 = tpu.reciprocal %31 : vector<1x512xf32> -> vector<1x512xf32>
    %34 = vector.broadcast %33 : vector<1x512xf32> to vector<16x512xf32>
    %35 = arith.mulf %32, %34 : vector<16x512xf32>
    %c0_20 = arith.constant 0 : index
    %c0_21 = arith.constant 0 : index
    %36 = vector.load %arg12[%c0_20, %c0_21] : memref<8x16xf32, #tpu.memory_space<vmem>>, vector<8x16xf32>
    %cst_22 = arith.constant dense<0.000000e+00> : vector<8x512xf32>
    %37 = tpu.matmul %36, %35, %cst_22 {dimension_numbers = #tpu.dot_dimension_numbers<[1], [0], [0], [1], [0, 0, 1, 1], [], []>} : vector<8x16xf32>, vector<16x512xf32>, vector<8x512xf32> -> vector<8x512xf32>
    %c0_23 = arith.constant 0 : index
    %c0_24 = arith.constant 0 : index
    %38 = vector.load %arg13[%c0_23, %c0_24] : memref<8x1xf32, #tpu.memory_space<vmem>>, vector<8x1xf32>
    %39 = vector.broadcast %38 : vector<8x1xf32> to vector<8x512xf32>
    %40 = arith.addf %37, %39 : vector<8x512xf32>
    %cst_25 = arith.constant 0.000000e+00 : f32
    %41 = vector.broadcast %cst_25 : f32 to vector<8x512xf32>
    %42 = arith.maximumf %40, %41 : vector<8x512xf32>
    %c0_26 = arith.constant 0 : index
    %c0_27 = arith.constant 0 : index
    %c0_28 = arith.constant 0 : index
    %43 = vector.load %arg14[%c0_26, %c0_27, %c0_28] : memref<1x8x512xf32, #tpu.memory_space<vmem>>, vector<1x8x512xf32>
    %44 = vector.shape_cast %43 : vector<1x8x512xf32> to vector<8x512xf32>
    %45 = vector.shape_cast %42 : vector<8x512xf32> to vector<1x8x512xf32>
    tpu.vector_store %arg14[%c0_26, %c0_27, %c0_28], %45 {strides = array<i32>} : memref<1x8x512xf32, #tpu.memory_space<vmem>>, vector<1x8x512xf32>,
    return
  }
  func.func @transform_0(%arg0: i32, %arg1: i32) -> (i32, i32, i32) {
    %c0_i32 = arith.constant 0 : i32
    %c0_i32_0 = arith.constant 0 : i32
    %c0_i32_1 = arith.constant 0 : i32
    return %arg0, %c0_i32, %c0_i32_0 : i32, i32, i32
  }
  func.func @transform_1(%arg0: i32, %arg1: i32) -> (i32, i32) {
    %c0_i32 = arith.constant 0 : i32
    %c0_i32_0 = arith.constant 0 : i32
    %c0_i32_1 = arith.constant 0 : i32
    return %c0_i32, %c0_i32_0 : i32, i32
  }
  func.func @transform_2(%arg0: i32, %arg1: i32) -> (i32, i32) {
    %c0_i32 = arith.constant 0 : i32
    %c0_i32_0 = arith.constant 0 : i32
    %c0_i32_1 = arith.constant 0 : i32
    return %c0_i32, %c0_i32_0 : i32, i32
  }
  func.func @transform_3(%arg0: i32, %arg1: i32) -> (i32, i32) {
    %c0_i32 = arith.constant 0 : i32
    %c0_i32_0 = arith.constant 0 : i32
    %c0_i32_1 = arith.constant 0 : i32
    return %c0_i32, %c0_i32_0 : i32, i32
  }
  func.func @transform_4(%arg0: i32, %arg1: i32) -> (i32, i32) {
    %c0_i32 = arith.constant 0 : i32
    %c0_i32_0 = arith.constant 0 : i32
    %c0_i32_1 = arith.constant 0 : i32
    return %c0_i32, %c0_i32_0 : i32, i32
  }
  func.func @transform_5(%arg0: i32, %arg1: i32) -> (i32, i32) {
    %c0_i32 = arith.constant 0 : i32
    %c0_i32_0 = arith.constant 0 : i32
    %c0_i32_1 = arith.constant 0 : i32
    return %c0_i32, %c0_i32_0 : i32, i32
  }
  func.func @transform_6(%arg0: i32, %arg1: i32) -> (i32, i32) {
    %c0_i32 = arith.constant 0 : i32
    %c0_i32_0 = arith.constant 0 : i32
    %c0_i32_1 = arith.constant 0 : i32
    return %c0_i32, %c0_i32_0 : i32, i32
  }
  func.func @transform_7(%arg0: i32, %arg1: i32) -> (i32, i32) {
    %c0_i32 = arith.constant 0 : i32
    %c0_i32_0 = arith.constant 0 : i32
    %c0_i32_1 = arith.constant 0 : i32
    return %c0_i32, %c0_i32_0 : i32, i32
  }
  func.func @transform_8(%arg0: i32, %arg1: i32) -> (i32, i32) {
    %c0_i32 = arith.constant 0 : i32
    %c0_i32_0 = arith.constant 0 : i32
    %c0_i32_1 = arith.constant 0 : i32
    return %c0_i32, %c0_i32_0 : i32, i32
  }
  func.func @transform_9(%arg0: i32, %arg1: i32) -> (i32, i32) {
    %c0_i32 = arith.constant 0 : i32
    %c0_i32_0 = arith.constant 0 : i32
    %c0_i32_1 = arith.constant 0 : i32
    return %c0_i32, %c0_i32_0 : i32, i32
  }
  func.func @transform_10(%arg0: i32, %arg1: i32) -> (i32, i32) {
    %c0_i32 = arith.constant 0 : i32
    %c0_i32_0 = arith.constant 0 : i32
    %c0_i32_1 = arith.constant 0 : i32
    return %c0_i32, %c0_i32_0 : i32, i32
  }
  func.func @transform_11(%arg0: i32, %arg1: i32) -> (i32, i32) {
    %c0_i32 = arith.constant 0 : i32
    %c0_i32_0 = arith.constant 0 : i32
    %c0_i32_1 = arith.constant 0 : i32
    return %c0_i32, %c0_i32_0 : i32, i32
  }
  func.func @transform_12(%arg0: i32, %arg1: i32) -> (i32, i32, i32) {
    %c0_i32 = arith.constant 0 : i32
    %c0_i32_0 = arith.constant 0 : i32
    return %arg0, %c0_i32, %arg1 : i32, i32, i32
  }
}

</mosaic_0001>

<llo_original>
// kernel: tpu_custom_call.1
$region0: #{tpu_custom_call.1}
  #allocation0 [shape = 'u32[]', space=smem, size = 0x4, offset = 0x4, fixed_abs, tag = 'smem constant byte address 0x4 - core index']
  #allocation1 [shape = 'u32[144,128]{1,0:T(1,128)}', space=vmem, size = 0x12000, scoped, tag = 'internal scratch']
  #allocation2 [shape = 'f32[8,1024]{1,0:T(8,128)}', space=vmem, size = 0x8000, scoped, tag = 'scratch operand']
  #allocation3 [shape = 'f32[17,1024]{1,0:T(8,128)}', space=vmem, size = 0x18000, scoped, tag = 'scratch operand']
  %s0 = inlined_call_operand.hbm [shape: f32[2,8,1024], index: 0, kind: input, shape index: {}]
  %s1 = inlined_call_operand.vmem [shape: f32[8,8], index: 1, kind: input, shape index: {}]
  %s2 = inlined_call_operand.vmem [shape: f32[8,1], index: 2, kind: input, shape index: {}]
  %s3 = inlined_call_operand.vmem [shape: f32[8,8], index: 3, kind: input, shape index: {}]
  %s4 = inlined_call_operand.vmem [shape: f32[8,1], index: 4, kind: input, shape index: {}]
  %s5 = inlined_call_operand.vmem [shape: f32[8,8], index: 5, kind: input, shape index: {}]
  %s6 = inlined_call_operand.vmem [shape: f32[8,1], index: 6, kind: input, shape index: {}]
  %s7 = inlined_call_operand.vmem [shape: f32[8,8], index: 7, kind: input, shape index: {}]
  %s8 = inlined_call_operand.vmem [shape: f32[8,1], index: 8, kind: input, shape index: {}]
  %s9 = inlined_call_operand.vmem [shape: f32[16,8], index: 9, kind: input, shape index: {}]
  %s10 = inlined_call_operand.vmem [shape: f32[8,16], index: 10, kind: input, shape index: {}]
  %s11 = inlined_call_operand.vmem [shape: f32[8,1], index: 11, kind: input, shape index: {}]
  %s12 = inlined_call_operand.hbm [shape: f32[2,8,1024], index: 12, kind: output, shape index: {}]
  %s13 = sld [smem:[#allocation0]]
  $region89: #{tpu_custom_call.1} parent=0
    _
  %s15 = ssub.s32 1, %s13
  %s16 = scalar_select 0, %s15, %s13
  $region1: #{tpu_custom_call.1} parent=0
    #allocation4 [shape = 'u8[65536]{0}', space=vmem, size = 0x10000, scoped, tag = 'input window, operand 0']
    #allocation5 [shape = 's32[2]{0}', space=sflag, size = 0x8, scoped, tag = 'scoped memory for tpu_custom_call.1']
    #allocation6 [shape = 's32[2]{0}', space=sflag, size = 0x8, scoped, tag = 'scoped memory for tpu_custom_call.1']
    #allocation7 [shape = 'u8[32768]{0}', space=vmem, size = 0x8000, scoped, tag = 'output window, operand 0']
    %17 = vsyncpa [#allocation5], 0
    %s18 = scalar_lea.sflag [#allocation5], 1
    %19 = vsyncpa %s18, 0
    %20 = vsyncpa [#allocation6], 0
    %s21 = scalar_lea.sflag [#allocation6], 1
    %22 = vsyncpa %s21, 0
    loop: start=0, step=1, limit=6
    $region2: #{tpu_custom_call.1} parent=1 // loop_pre_header
      _
    $region3: #{tpu_custom_call.1} parent=1 // loop_header
      %s24 = sphi 0, %s28
      %p25 = scmp.ge.s32.totalorder %s24, 6
      %s31 = sphi 0, %s43
      %s32 = sphi 0, %s39
      %s33 = sphi 0, %s31
      %s34 = sphi 0, %s32
      %s35 = sphi 0, %s33
      %s36 = sphi 0, %s34
      %s46 = sphi 0, %s48
      %s49 = sphi 0, %s46
      %s50 = sphi 0, %s49
      %s66 = sphi 0, %s50
      %s70 = sphi 0, %s70
      %s72 = sphi 0, %s70
      %s73 = sphi 0, %s72
      %s87 = sphi 0, %s73
      %s91 = sphi 0, %s91
      %s93 = sphi 0, %s91
      %s94 = sphi 0, %s93
      %s108 = sphi 0, %s94
      %s112 = sphi 0, %s112
      %s114 = sphi 0, %s112
      %s115 = sphi 0, %s114
      %s129 = sphi 0, %s115
      %s133 = sphi 0, %s133
      %s135 = sphi 0, %s133
      %s136 = sphi 0, %s135
      %s150 = sphi 0, %s136
      %s154 = sphi 0, %s154
      %s156 = sphi 0, %s154
      %s157 = sphi 0, %s156
      %s171 = sphi 0, %s157
      %s175 = sphi 0, %s175
      %s177 = sphi 0, %s175
      %s178 = sphi 0, %s177
      %s192 = sphi 0, %s178
      %s196 = sphi 0, %s196
      %s198 = sphi 0, %s196
      %s199 = sphi 0, %s198
      %s213 = sphi 0, %s199
      %s217 = sphi 0, %s217
      %s219 = sphi 0, %s217
      %s220 = sphi 0, %s219
      %s234 = sphi 0, %s220
      %s238 = sphi 0, %s238
      %s240 = sphi 0, %s238
      %s241 = sphi 0, %s240
      %s255 = sphi 0, %s241
      %s259 = sphi 0, %s259
      %s261 = sphi 0, %s259
      %s262 = sphi 0, %s261
      %s276 = sphi 0, %s262
      %s280 = sphi 0, %s280
      %s282 = sphi 0, %s280
      %s283 = sphi 0, %s282
      %s297 = sphi 0, %s283
      %s305 = sphi 0, %s307
      %s308 = sphi 0, %s305
      %s309 = sphi 0, %s308
      %s325 = sphi 0, %s309
    $region4: #{tpu_custom_call.1} parent=1 // loop_header_branch
      %27 = sbr.rel (%p25) target = $region8
    $region5: #{tpu_custom_call.1} parent=1 // loop_body
      %s29 = ssub.s32 %s24, 1
      %s30 = ssub.s32 %s24, 2
      %s37 = sadd.s32 1, %s32
      %p38 = scmp.ge.s32.totalorder %s37, 2
      %s39 = scalar_select %p38, 0, %s37
      %s40 = sadd.s32 1, %s31
      %s41 = scalar_select %p38, %s40, %s31
      %p42 = scmp.ge.s32.totalorder %s41, 2
      %s43 = scalar_select %p42, 0, %s41
      %s44 = ssub.s32 %s31, %s43
      %p45 = scmp.eq.s32.totalorder %s44, 0
      %s47 = sadd.s32 %s46, 1
      %s48 = scalar_select %p45, %s46, %s47
      %p51 = pneg %p45
      %p52 = scmp.eq.s32.totalorder %s24, 3
      %p53 = por %p51, %p52
      %p54 = scmp.ne.s32.totalorder %s46, %s49
      %p55 = scmp.eq.s32.totalorder %s24, 0
      %p56 = por %p54, %p55
      %p57 = scmp.ne.s32.totalorder %s46, %s49
      %p58 = scmp.eq.s32.totalorder %s29, 3
      %p59 = por %p57, %p58
      %p60 = scmp.ne.s32.totalorder %s49, %s50
      %p61 = scmp.eq.s32.totalorder %s29, 0
      %p62 = por %p60, %p61
      %p63 = scmp.ne.s32.totalorder %s49, %s50
      %p64 = scmp.eq.s32.totalorder %s30, 3
      %p65 = por %p63, %p64
      %p67 = scmp.ne.s32.totalorder %s50, %s66
      %p68 = scmp.eq.s32.totalorder %s30, 0
      %p69 = por %p67, %p68
      %s71 = sadd.s32 %s70, 1
      %p74 = scmp.eq.s32.totalorder %s24, 3
      %p75 = scmp.ne.s32.totalorder %s70, %s72
      %p76 = scmp.eq.s32.totalorder %s24, 0
      %p77 = por %p75, %p76
      %p78 = scmp.ne.s32.totalorder %s70, %s72
      %p79 = scmp.eq.s32.totalorder %s29, 3
      %p80 = por %p78, %p79
      %p81 = scmp.ne.s32.totalorder %s72, %s73
      %p82 = scmp.eq.s32.totalorder %s29, 0
      %p83 = por %p81, %p82
      %p84 = scmp.ne.s32.totalorder %s72, %s73
      %p85 = scmp.eq.s32.totalorder %s30, 3
      %p86 = por %p84, %p85
      %p88 = scmp.ne.s32.totalorder %s73, %s87
      %p89 = scmp.eq.s32.totalorder %s30, 0
      %p90 = por %p88, %p89
      %s92 = sadd.s32 %s91, 1
      %p95 = scmp.eq.s32.totalorder %s24, 3
      %p96 = scmp.ne.s32.totalorder %s91, %s93
      %p97 = scmp.eq.s32.totalorder %s24, 0
      %p98 = por %p96, %p97
      %p99 = scmp.ne.s32.totalorder %s91, %s93
      %p100 = scmp.eq.s32.totalorder %s29, 3
      %p101 = por %p99, %p100
      %p102 = scmp.ne.s32.totalorder %s93, %s94
      %p103 = scmp.eq.s32.totalorder %s29, 0
      %p104 = por %p102, %p103
      %p105 = scmp.ne.s32.totalorder %s93, %s94
      %p106 = scmp.eq.s32.totalorder %s30, 3
      %p107 = por %p105, %p106
      %p109 = scmp.ne.s32.totalorder %s94, %s108
      %p110 = scmp.eq.s32.totalorder %s30, 0
      %p111 = por %p109, %p110
      %s113 = sadd.s32 %s112, 1
      %p116 = scmp.eq.s32.totalorder %s24, 3
      %p117 = scmp.ne.s32.totalorder %s112, %s114
      %p118 = scmp.eq.s32.totalorder %s24, 0
      %p119 = por %p117, %p118
      %p120 = scmp.ne.s32.totalorder %s112, %s114
      %p121 = scmp.eq.s32.totalorder %s29, 3
      %p122 = por %p120, %p121
      %p123 = scmp.ne.s32.totalorder %s114, %s115
      %p124 = scmp.eq.s32.totalorder %s29, 0
      %p125 = por %p123, %p124
      %p126 = scmp.ne.s32.totalorder %s114, %s115
      %p127 = scmp.eq.s32.totalorder %s30, 3
      %p128 = por %p126, %p127
      %p130 = scmp.ne.s32.totalorder %s115, %s129
      %p131 = scmp.eq.s32.totalorder %s30, 0
      %p132 = por %p130, %p131
      %s134 = sadd.s32 %s133, 1
      %p137 = scmp.eq.s32.totalorder %s24, 3
      %p138 = scmp.ne.s32.totalorder %s133, %s135
      %p139 = scmp.eq.s32.totalorder %s24, 0
      %p140 = por %p138, %p139
      %p141 = scmp.ne.s32.totalorder %s133, %s135
      %p142 = scmp.eq.s32.totalorder %s29, 3
      %p143 = por %p141, %p142
      %p144 = scmp.ne.s32.totalorder %s135, %s136
      %p145 = scmp.eq.s32.totalorder %s29, 0
      %p146 = por %p144, %p145
      %p147 = scmp.ne.s32.totalorder %s135, %s136
      %p148 = scmp.eq.s32.totalorder %s30, 3
      %p149 = por %p147, %p148
      %p151 = scmp.ne.s32.totalorder %s136, %s150
      %p152 = scmp.eq.s32.totalorder %s30, 0
      %p153 = por %p151, %p152
      %s155 = sadd.s32 %s154, 1
      %p158 = scmp.eq.s32.totalorder %s24, 3
      %p159 = scmp.ne.s32.totalorder %s154, %s156
      %p160 = scmp.eq.s32.totalorder %s24, 0
      %p161 = por %p159, %p160
      %p162 = scmp.ne.s32.totalorder %s154, %s156
      %p163 = scmp.eq.s32.totalorder %s29, 3
      %p164 = por %p162, %p163
      %p165 = scmp.ne.s32.totalorder %s156, %s157
      %p166 = scmp.eq.s32.totalorder %s29, 0
      %p167 = por %p165, %p166
      %p168 = scmp.ne.s32.totalorder %s156, %s157
      %p169 = scmp.eq.s32.totalorder %s30, 3
      %p170 = por %p168, %p169
      %p172 = scmp.ne.s32.totalorder %s157, %s171
      %p173 = scmp.eq.s32.totalorder %s30, 0
      %p174 = por %p172, %p173
      %s176 = sadd.s32 %s175, 1
      %p179 = scmp.eq.s32.totalorder %s24, 3
      %p180 = scmp.ne.s32.totalorder %s175, %s177
      %p181 = scmp.eq.s32.totalorder %s24, 0
      %p182 = por %p180, %p181
      %p183 = scmp.ne.s32.totalorder %s175, %s177
      %p184 = scmp.eq.s32.totalorder %s29, 3
      %p185 = por %p183, %p184
      %p186 = scmp.ne.s32.totalorder %s177, %s178
      %p187 = scmp.eq.s32.totalorder %s29, 0
      %p188 = por %p186, %p187
      %p189 = scmp.ne.s32.totalorder %s177, %s178
      %p190 = scmp.eq.s32.totalorder %s30, 3
      %p191 = por %p189, %p190
      %p193 = scmp.ne.s32.totalorder %s178, %s192
      %p194 = scmp.eq.s32.totalorder %s30, 0
      %p195 = por %p193, %p194
      %s197 = sadd.s32 %s196, 1
      %p200 = scmp.eq.s32.totalorder %s24, 3
      %p201 = scmp.ne.s32.totalorder %s196, %s198
      %p202 = scmp.eq.s32.totalorder %s24, 0
      %p203 = por %p201, %p202
      %p204 = scmp.ne.s32.totalorder %s196, %s198
      %p205 = scmp.eq.s32.totalorder %s29, 3
      %p206 = por %p204, %p205
      %p207 = scmp.ne.s32.totalorder %s198, %s199
      %p208 = scmp.eq.s32.totalorder %s29, 0
      %p209 = por %p207, %p208
      %p210 = scmp.ne.s32.totalorder %s198, %s199
      %p211 = scmp.eq.s32.totalorder %s30, 3
      %p212 = por %p210, %p211
      %p214 = scmp.ne.s32.totalorder %s199, %s213
      %p215 = scmp.eq.s32.totalorder %s30, 0
      %p216 = por %p214, %p215
      %s218 = sadd.s32 %s217, 1
      %p221 = scmp.eq.s32.totalorder %s24, 3
      %p222 = scmp.ne.s32.totalorder %s217, %s219
      %p223 = scmp.eq.s32.totalorder %s24, 0
      %p224 = por %p222, %p223
      %p225 = scmp.ne.s32.totalorder %s217, %s219
      %p226 = scmp.eq.s32.totalorder %s29, 3
      %p227 = por %p225, %p226
      %p228 = scmp.ne.s32.totalorder %s219, %s220
      %p229 = scmp.eq.s32.totalorder %s29, 0
      %p230 = por %p228, %p229
      %p231 = scmp.ne.s32.totalorder %s219, %s220
      %p232 = scmp.eq.s32.totalorder %s30, 3
      %p233 = por %p231, %p232
      %p235 = scmp.ne.s32.totalorder %s220, %s234
      %p236 = scmp.eq.s32.totalorder %s30, 0
      %p237 = por %p235, %p236
      %s239 = sadd.s32 %s238, 1
      %p242 = scmp.eq.s32.totalorder %s24, 3
      %p243 = scmp.ne.s32.totalorder %s238, %s240
      %p244 = scmp.eq.s32.totalorder %s24, 0
      %p245 = por %p243, %p244
      %p246 = scmp.ne.s32.totalorder %s238, %s240
      %p247 = scmp.eq.s32.totalorder %s29, 3
      %p248 = por %p246, %p247
      %p249 = scmp.ne.s32.totalorder %s240, %s241
      %p250 = scmp.eq.s32.totalorder %s29, 0
      %p251 = por %p249, %p250
      %p252 = scmp.ne.s32.totalorder %s240, %s241
      %p253 = scmp.eq.s32.totalorder %s30, 3
      %p254 = por %p252, %p253
      %p256 = scmp.ne.s32.totalorder %s241, %s255
      %p257 = scmp.eq.s32.totalorder %s30, 0
      %p258 = por %p256, %p257
      %s260 = sadd.s32 %s259, 1
      %p263 = scmp.eq.s32.totalorder %s24, 3
      %p264 = scmp.ne.s32.totalorder %s259, %s261
      %p265 = scmp.eq.s32.totalorder %s24, 0
      %p266 = por %p264, %p265
      %p267 = scmp.ne.s32.totalorder %s259, %s261
      %p268 = scmp.eq.s32.totalorder %s29, 3
      %p269 = por %p267, %p268
      %p270 = scmp.ne.s32.totalorder %s261, %s262
      %p271 = scmp.eq.s32.totalorder %s29, 0
      %p272 = por %p270, %p271
      %p273 = scmp.ne.s32.totalorder %s261, %s262
      %p274 = scmp.eq.s32.totalorder %s30, 3
      %p275 = por %p273, %p274
      %p277 = scmp.ne.s32.totalorder %s262, %s276
      %p278 = scmp.eq.s32.totalorder %s30, 0
      %p279 = por %p277, %p278
      %s281 = sadd.s32 %s280, 1
      %p284 = scmp.eq.s32.totalorder %s24, 3
      %p285 = scmp.ne.s32.totalorder %s280, %s282
      %p286 = scmp.eq.s32.totalorder %s24, 0
      %p287 = por %p285, %p286
      %p288 = scmp.ne.s32.totalorder %s280, %s282
      %p289 = scmp.eq.s32.totalorder %s29, 3
      %p290 = por %p288, %p289
      %p291 = scmp.ne.s32.totalorder %s282, %s283
      %p292 = scmp.eq.s32.totalorder %s29, 0
      %p293 = por %p291, %p292
      %p294 = scmp.ne.s32.totalorder %s282, %s283
      %p295 = scmp.eq.s32.totalorder %s30, 3
      %p296 = por %p294, %p295
      %p298 = scmp.ne.s32.totalorder %s283, %s297
      %p299 = scmp.eq.s32.totalorder %s30, 0
      %p300 = por %p298, %p299
      %s301 = ssub.s32 %s31, %s43
      %s302 = ssub.s32 %s32, %s39
      %s303 = sor.u32 %s301, %s302
      %p304 = scmp.eq.s32.totalorder %s303, 0
      %s306 = sadd.s32 %s305, 1
      %s307 = scalar_select %p304, %s305, %s306
      %p310 = pneg %p304
      %p311 = scmp.eq.s32.totalorder %s24, 3
      %p312 = por %p310, %p311
      %p313 = scmp.ne.s32.totalorder %s305, %s308
      %p314 = scmp.eq.s32.totalorder %s24, 0
      %p315 = por %p313, %p314
      %p316 = scmp.ne.s32.totalorder %s305, %s308
      %p317 = scmp.eq.s32.totalorder %s29, 3
      %p318 = por %p316, %p317
      %p319 = scmp.ne.s32.totalorder %s308, %s309
      %p320 = scmp.eq.s32.totalorder %s29, 0
      %p321 = por %p319, %p320
      %p322 = scmp.ne.s32.totalorder %s308, %s309
      %p323 = scmp.eq.s32.totalorder %s30, 3
      %p324 = por %p322, %p323
      %p326 = scmp.ne.s32.totalorder %s309, %s325
      %p327 = scmp.eq.s32.totalorder %s30, 0
      %p328 = por %p326, %p327
      %p329 = scmp.le.s32.totalorder 1, %s24
      %p330 = scmp.lt.s32.totalorder %s24, 5
      %p331 = pnand %p329, %p330
      %p332 = pneg %p331
      // Predicated region
      $region9: #{tpu_custom_call.1} parent=5 // pred_check
        _
      $region10: #{tpu_custom_call.1} parent=5 // pred_check_branch
        %334 = sbr.rel (%p331) target = $region12
      $region11: #{tpu_custom_call.1} parent=5 // pred_region
        %s335 = ssub.s32 %s24, 1
        // Predicated region
        $region13: #{tpu_custom_call.1} parent=11 // pred_check
          %p336 = pneg %p83
        $region14: #{tpu_custom_call.1} parent=11 // pred_check_branch
          %338 = sbr.rel (%p336) target = $region16
        $region15: #{tpu_custom_call.1} parent=11 // pred_region
          _
        $region16: #{tpu_custom_call.1} parent=11 // pred_fallthru
          _
        // Predicated region
        $region17: #{tpu_custom_call.1} parent=11 // pred_check
          %p339 = pneg %p104
        $region18: #{tpu_custom_call.1} parent=11 // pred_check_branch
          %341 = sbr.rel (%p339) target = $region20
        $region19: #{tpu_custom_call.1} parent=11 // pred_region
          _
        $region20: #{tpu_custom_call.1} parent=11 // pred_fallthru
          _
        // Predicated region
        $region21: #{tpu_custom_call.1} parent=11 // pred_check
          %p342 = pneg %p125
        $region22: #{tpu_custom_call.1} parent=11 // pred_check_branch
          %344 = sbr.rel (%p342) target = $region24
        $region23: #{tpu_custom_call.1} parent=11 // pred_region
          _
        $region24: #{tpu_custom_call.1} parent=11 // pred_fallthru
          _
        // Predicated region
        $region25: #{tpu_custom_call.1} parent=11 // pred_check
          %p345 = pneg %p146
        $region26: #{tpu_custom_call.1} parent=11 // pred_check_branch
          %347 = sbr.rel (%p345) target = $region28
        $region27: #{tpu_custom_call.1} parent=11 // pred_region
          _
        $region28: #{tpu_custom_call.1} parent=11 // pred_fallthru
          _
        // Predicated region
        $region29: #{tpu_custom_call.1} parent=11 // pred_check
          %p348 = pneg %p167
        $region30: #{tpu_custom_call.1} parent=11 // pred_check_branch
          %350 = sbr.rel (%p348) target = $region32
        $region31: #{tpu_custom_call.1} parent=11 // pred_region
          _
        $region32: #{tpu_custom_call.1} parent=11 // pred_fallthru
          _
        // Predicated region
        $region33: #{tpu_custom_call.1} parent=11 // pred_check
          %p351 = pneg %p188
        $region34: #{tpu_custom_call.1} parent=11 // pred_check_branch
          %353 = sbr.rel (%p351) target = $region36
        $region35: #{tpu_custom_call.1} parent=11 // pred_region
          _
        $region36: #{tpu_custom_call.1} parent=11 // pred_fallthru
          _
        // Predicated region
        $region37: #{tpu_custom_call.1} parent=11 // pred_check
          %p354 = pneg %p209
        $region38: #{tpu_custom_call.1} parent=11 // pred_check_branch
          %356 = sbr.rel (%p354) target = $region40
        $region39: #{tpu_custom_call.1} parent=11 // pred_region
          _
        $region40: #{tpu_custom_call.1} parent=11 // pred_fallthru
          _
        // Predicated region
        $region41: #{tpu_custom_call.1} parent=11 // pred_check
          %p357 = pneg %p230
        $region42: #{tpu_custom_call.1} parent=11 // pred_check_branch
          %359 = sbr.rel (%p357) target = $region44
        $region43: #{tpu_custom_call.1} parent=11 // pred_region
          _
        $region44: #{tpu_custom_call.1} parent=11 // pred_fallthru
          _
        // Predicated region
        $region45: #{tpu_custom_call.1} parent=11 // pred_check
          %p360 = pneg %p251
        $region46: #{tpu_custom_call.1} parent=11 // pred_check_branch
          %362 = sbr.rel (%p360) target = $region48
        $region47: #{tpu_custom_call.1} parent=11 // pred_region
          _
        $region48: #{tpu_custom_call.1} parent=11 // pred_fallthru
          _
        // Predicated region
        $region49: #{tpu_custom_call.1} parent=11 // pred_check
          %p363 = pneg %p272
        $region50: #{tpu_custom_call.1} parent=11 // pred_check_branch
          %365 = sbr.rel (%p363) target = $region52
        $region51: #{tpu_custom_call.1} parent=11 // pred_region
          _
        $region52: #{tpu_custom_call.1} parent=11 // pred_fallthru
          _
        // Predicated region
        $region53: #{tpu_custom_call.1} parent=11 // pred_check
          %p366 = pneg %p293
        $region54: #{tpu_custom_call.1} parent=11 // pred_check_branch
          %368 = sbr.rel (%p366) target = $region56
        $region55: #{tpu_custom_call.1} parent=11 // pred_region
          _
        $region56: #{tpu_custom_call.1} parent=11 // pred_fallthru
          _
      $region12: #{tpu_custom_call.1} parent=5 // pred_fallthru
        _
      %p369 = scmp.lt.s32.totalorder %s24, 4
      // Predicated region
      $region57: #{tpu_custom_call.1} parent=5 // pred_check
        %p370 = pneg %p369
      $region58: #{tpu_custom_call.1} parent=5 // pred_check_branch
        %372 = sbr.rel (%p370) target = $region60
      $region59: #{tpu_custom_call.1} parent=5 // pred_region
        // Predicated region
        $region61: #{tpu_custom_call.1} parent=59 // pred_check
          %p373 = pneg %p56
        $region62: #{tpu_custom_call.1} parent=59 // pred_check_branch
          %375 = sbr.rel (%p373) target = $region64
        $region63: #{tpu_custom_call.1} parent=59 // pred_region
          %s376 = sand.u32 %s46, 1
          %s377 = scalar_lea.sflag [#allocation5], %s376
          %s378 = sand.u32 %s46, 1
          %s379 = smul.addr %s378, 64
          %s380 = scalar_lea.vmem [#allocation4], %s379
          %s382 = ssub.s32 1024, 1024
          %383 = vsyncadd %s377, %s382
          %s384 = smul.addr %s31, 8
          %s385 = smul.addr %s384, 128
          %s386 = scalar_lea.hbm %s0, %s385
          %s388 = sshll.u32 %s380, 4
          %s389 = int_to_ptr.vmem [resolvable:$true] %s388
          %391 = dma.hbm_to_vmem [thread:$0]  %s386, 1024, %s389, %s377
        $region64: #{tpu_custom_call.1} parent=59 // pred_fallthru
          _
      $region60: #{tpu_custom_call.1} parent=5 // pred_fallthru
        _
      %p392 = scmp.le.s32.totalorder 1, %s24
      %p393 = scmp.lt.s32.totalorder %s24, 5
      %p394 = pnand %p392, %p393
      %p395 = pneg %p394
      // Predicated region
      $region65: #{tpu_custom_call.1} parent=5 // pred_check
        _
      $region66: #{tpu_custom_call.1} parent=5 // pred_check_branch
        %397 = sbr.rel (%p394) target = $region68
      $region67: #{tpu_custom_call.1} parent=5 // pred_region
        %s398 = ssub.s32 %s24, 1
        %s399 = sand.u32 %s49, 1
        %s400 = scalar_lea.sflag [#allocation5], %s399
        %s401 = sand.u32 %s49, 1
        %s402 = smul.addr %s401, 64
        %s403 = scalar_lea.vmem [#allocation4], %s402
        // Predicated region
        $region69: #{tpu_custom_call.1} parent=67 // pred_check
          %p404 = pneg %p62
        $region70: #{tpu_custom_call.1} parent=67 // pred_check_branch
          %406 = sbr.rel (%p404) target = $region72
        $region71: #{tpu_custom_call.1} parent=67 // pred_region
          %407 = dma.done %s400, 1024
        $region72: #{tpu_custom_call.1} parent=67 // pred_fallthru
          _
        %s408 = sand.u32 %s49, 1
        %s409 = scalar_lea.sflag [#allocation5], %s408
        %s410 = sand.u32 %s49, 1
        %s411 = smul.addr %s410, 64
        %s412 = scalar_lea.vmem [#allocation4], %s411
        %p413 = pneg %p62
        %p414 = pneg %p59
        %p415 = pneg %p83
        %p416 = pneg %p80
        %p417 = pneg %p104
        %p418 = pneg %p101
        %p419 = pneg %p125
        %p420 = pneg %p122
        %p421 = pneg %p146
        %p422 = pneg %p143
        %p423 = pneg %p167
        %p424 = pneg %p164
        %p425 = pneg %p188
        %p426 = pneg %p185
        %p427 = pneg %p209
        %p428 = pneg %p206
        %p429 = pneg %p230
        %p430 = pneg %p227
        %p431 = pneg %p251
        %p432 = pneg %p248
        %p433 = pneg %p272
        %p434 = pneg %p269
        %p435 = pneg %p293
        %p436 = pneg %p290
        %p437 = pneg %p321
        %p438 = pneg %p318
        %s439 = sand.u32 %s308, 1
        %s440 = scalar_lea.sflag [#allocation6], %s439
        %s441 = sand.u32 %s308, 1
        %s442 = smul.addr %s441, 32
        %s443 = scalar_lea.vmem [#allocation7], %s442
        %s444 = smul.u32 4, %s34
        %p445 = scmp.eq.s32.totalorder %s34, 0
        // Predicated region
        $region73: #{tpu_custom_call.1} parent=67 // pred_check
          %p446 = pneg %p445
        $region74: #{tpu_custom_call.1} parent=67 // pred_check_branch
          %448 = sbr.rel (%p446) target = $region76
        $region75: #{tpu_custom_call.1} parent=67 // pred_region
          %v449 = vld [vmem:[%s403] sm:$0xff]
          %v450 = vld [vmem:[%s403 + $0x8] sm:$0xff]
          %v451 = vld [vmem:[%s403 + $0x10] sm:$0xff]
          %v452 = vld [vmem:[%s403 + $0x18] sm:$0xff]
          %v453 = vld [vmem:[%s403 + $0x20] sm:$0xff]
          %v454 = vld [vmem:[%s403 + $0x28] sm:$0xff]
          %v455 = vld [vmem:[%s403 + $0x30] sm:$0xff]
          %v456 = vld [vmem:[%s403 + $0x38] sm:$0xff]
          %v457 = vld [vmem:[%s5] sm:$0xff]
          %v458 = vld [vmem:[%s6] sm:$0xff]
          %460 = vset.pattern.permute.xlu0 0
          %461 = vperm.xlu0 %460, %v458
          %v462 = vpop.permute.xlu0 %461
          %vm464 = vcmask 64512
          %v466 = vsel %vm464, %v457, 0
          %468 = vmatprep.subr.mxu0 %v450
          %469 = vmatpush1.msra.mxu0 %v449
          %470 = vmatprep.subr.mxu0 0.0
          %471 = vmatpush1.msra.mxu0 0.0
          %472 = vmatprep.subr.mxu0 0.0
          %473 = vmatpush1.msra.mxu0 0.0
          %474 = vmatprep.subr.mxu0 0.0
          %475 = vmatpush1.msra.mxu0 0.0
          %476 = vmatprep.subr.mxu0 0.0
          %477 = vmatpush1.msra.mxu0 0.0
          %478 = vmatprep.subr.mxu0 0.0
          %479 = vmatpush1.msra.mxu0 0.0
          %480 = vmatprep.subr.mxu0 0.0
          %481 = vmatpush1.msra.mxu0 0.0
          %482 = vmatprep.subr.mxu0 0.0
          %483 = vmatpush1.msra.mxu0 0.0
          %484 = vmatprep.subr.mxu0 0.0
          %485 = vmatpush1.msra.mxu0 0.0
          %486 = vmatprep.subr.mxu0 0.0
          %487 = vmatpush1.msra.mxu0 0.0
          %488 = vmatprep.subr.mxu0 0.0
          %489 = vmatpush1.msra.mxu0 0.0
          %490 = vmatprep.subr.mxu0 0.0
          %491 = vmatpush1.msra.mxu0 0.0
          %492 = vmatprep.subr.mxu0 0.0
          %493 = vmatpush1.msra.mxu0 0.0
          %494 = vmatprep.subr.mxu0 0.0
          %495 = vmatpush1.msra.mxu0 0.0
          %496 = vmatprep.subr.mxu0 0.0
          %497 = vmatpush1.msra.mxu0 0.0
          %498 = vmatprep.subr.mxu0 0.0
          %499 = vmatpush1.msra.mxu0 0.0
          %500 = vmatprep.subr.mxu0 0.0
          %501 = vmatpush1.msra.mxu0 0.0
          %502 = vmatprep.subr.mxu0 0.0
          %503 = vmatpush1.msra.mxu0 0.0
          %504 = vmatprep.subr.mxu0 0.0
          %505 = vmatpush1.msra.mxu0 0.0
          %506 = vmatprep.subr.mxu0 0.0
          %507 = vmatpush1.msra.mxu0 0.0
          %508 = vmatprep.subr.mxu0 0.0
          %509 = vmatpush1.msra.mxu0 0.0
          %510 = vmatprep.subr.mxu0 0.0
          %511 = vmatpush1.msra.mxu0 0.0
          %512 = vmatprep.subr.mxu0 0.0
          %513 = vmatpush1.msra.mxu0 0.0
          %514 = vmatprep.subr.mxu0 0.0
          %515 = vmatpush1.msra.mxu0 0.0
          %516 = vmatprep.subr.mxu0 0.0
          %517 = vmatpush1.msra.mxu0 0.0
          %518 = vmatprep.subr.mxu0 0.0
          %519 = vmatpush1.msra.mxu0 0.0
          %520 = vmatprep.subr.mxu0 0.0
          %521 = vmatpush1.msra.mxu0 0.0
          %522 = vmatprep.subr.mxu0 0.0
          %523 = vmatpush1.msra.mxu0 0.0
          %524 = vmatprep.subr.mxu0 0.0
          %525 = vmatpush1.msra.mxu0 0.0
          %526 = vmatprep.subr.mxu0 0.0
          %527 = vmatpush1.msra.mxu0 0.0
          %528 = vmatprep.subr.mxu0 0.0
          %529 = vmatpush1.msra.mxu0 0.0
          %530 = vmatprep.subr.mxu0 0.0
          %531 = vmatpush1.msra.mxu0 0.0
          %532 = vmatprep.mubr.f32.mxu0 0.0
          %533 = vmatmul.mubr.f32.gmra.mrb[0].mxu0 %v466
          %v534 = vpop.f32.mrb[0].mxu0
          %v535 = vadd.f32 %v462, %v534
          %v536 = vpop.f32.mrb[0].mxu0
          %v537 = vadd.f32 %v462, %v536
          %538 = vdwg.mxu0
          %539 = vmatprep.subr.mxu0 %v452
          %540 = vmatpush1.msra.mxu0 %v451
          %541 = vmatprep.subr.mxu0 0.0
          %542 = vmatpush1.msra.mxu0 0.0
          %543 = vmatprep.subr.mxu0 0.0
          %544 = vmatpush1.msra.mxu0 0.0
          %545 = vmatprep.subr.mxu0 0.0
          %546 = vmatpush1.msra.mxu0 0.0
          %547 = vmatprep.subr.mxu0 0.0
          %548 = vmatpush1.msra.mxu0 0.0
          %549 = vmatprep.subr.mxu0 0.0
          %550 = vmatpush1.msra.mxu0 0.0
          %551 = vmatprep.subr.mxu0 0.0
          %552 = vmatpush1.msra.mxu0 0.0
          %553 = vmatprep.subr.mxu0 0.0
          %554 = vmatpush1.msra.mxu0 0.0
          %555 = vmatprep.subr.mxu0 0.0
          %556 = vmatpush1.msra.mxu0 0.0
          %557 = vmatprep.subr.mxu0 0.0
          %558 = vmatpush1.msra.mxu0 0.0
          %559 = vmatprep.subr.mxu0 0.0
          %560 = vmatpush1.msra.mxu0 0.0
          %561 = vmatprep.subr.mxu0 0.0
          %562 = vmatpush1.msra.mxu0 0.0
          %563 = vmatprep.subr.mxu0 0.0
          %564 = vmatpush1.msra.mxu0 0.0
          %565 = vmatprep.subr.mxu0 0.0
          %566 = vmatpush1.msra.mxu0 0.0
          %567 = vmatprep.subr.mxu0 0.0
          %568 = vmatpush1.msra.mxu0 0.0
          %569 = vmatprep.subr.mxu0 0.0
          %570 = vmatpush1.msra.mxu0 0.0
          %571 = vmatprep.subr.mxu0 0.0
          %572 = vmatpush1.msra.mxu0 0.0
          %573 = vmatprep.subr.mxu0 0.0
          %574 = vmatpush1.msra.mxu0 0.0
          %575 = vmatprep.subr.mxu0 0.0
          %576 = vmatpush1.msra.mxu0 0.0
          %577 = vmatprep.subr.mxu0 0.0
          %578 = vmatpush1.msra.mxu0 0.0
          %579 = vmatprep.subr.mxu0 0.0
          %580 = vmatpush1.msra.mxu0 0.0
          %581 = vmatprep.subr.mxu0 0.0
          %582 = vmatpush1.msra.mxu0 0.0
          %583 = vmatprep.subr.mxu0 0.0
          %584 = vmatpush1.msra.mxu0 0.0
          %585 = vmatprep.subr.mxu0 0.0
          %586 = vmatpush1.msra.mxu0 0.0
          %587 = vmatprep.subr.mxu0 0.0
          %588 = vmatpush1.msra.mxu0 0.0
          %589 = vmatprep.subr.mxu0 0.0
          %590 = vmatpush1.msra.mxu0 0.0
          %591 = vmatprep.subr.mxu0 0.0
          %592 = vmatpush1.msra.mxu0 0.0
          %593 = vmatprep.subr.mxu0 0.0
          %594 = vmatpush1.msra.mxu0 0.0
          %595 = vmatprep.subr.mxu0 0.0
          %596 = vmatpush1.msra.mxu0 0.0
          %597 = vmatprep.subr.mxu0 0.0
          %598 = vmatpush1.msra.mxu0 0.0
          %599 = vmatprep.subr.mxu0 0.0
          %600 = vmatpush1.msra.mxu0 0.0
          %601 = vmatprep.subr.mxu0 0.0
          %602 = vmatpush1.msra.mxu0 0.0
          %603 = vmatprep.mubr.f32.mxu0 0.0
          %604 = vmatmul.mubr.f32.gmra.mrb[0].mxu0 %v466
          %v605 = vpop.f32.mrb[0].mxu0
          %v606 = vadd.f32 %v462, %v605
          %v607 = vpop.f32.mrb[0].mxu0
          %v608 = vadd.f32 %v462, %v607
          %609 = vdwg.mxu0
          %610 = vmatprep.subr.mxu0 %v454
          %611 = vmatpush1.msra.mxu0 %v453
          %612 = vmatprep.subr.mxu0 0.0
          %613 = vmatpush1.msra.mxu0 0.0
          %614 = vmatprep.subr.mxu0 0.0
          %615 = vmatpush1.msra.mxu0 0.0
          %616 = vmatprep.subr.mxu0 0.0
          %617 = vmatpush1.msra.mxu0 0.0
          %618 = vmatprep.subr.mxu0 0.0
          %619 = vmatpush1.msra.mxu0 0.0
          %620 = vmatprep.subr.mxu0 0.0
          %621 = vmatpush1.msra.mxu0 0.0
          %622 = vmatprep.subr.mxu0 0.0
          %623 = vmatpush1.msra.mxu0 0.0
          %624 = vmatprep.subr.mxu0 0.0
          %625 = vmatpush1.msra.mxu0 0.0
          %626 = vmatprep.subr.mxu0 0.0
          %627 = vmatpush1.msra.mxu0 0.0
          %628 = vmatprep.subr.mxu0 0.0
          %629 = vmatpush1.msra.mxu0 0.0
          %630 = vmatprep.subr.mxu0 0.0
          %631 = vmatpush1.msra.mxu0 0.0
          %632 = vmatprep.subr.mxu0 0.0
          %633 = vmatpush1.msra.mxu0 0.0
          %634 = vmatprep.subr.mxu0 0.0
          %635 = vmatpush1.msra.mxu0 0.0
          %636 = vmatprep.subr.mxu0 0.0
          %637 = vmatpush1.msra.mxu0 0.0
          %638 = vmatprep.subr.mxu0 0.0
          %639 = vmatpush1.msra.mxu0 0.0
          %640 = vmatprep.subr.mxu0 0.0
          %641 = vmatpush1.msra.mxu0 0.0
          %642 = vmatprep.subr.mxu0 0.0
          %643 = vmatpush1.msra.mxu0 0.0
          %644 = vmatprep.subr.mxu0 0.0
          %645 = vmatpush1.msra.mxu0 0.0
          %646 = vmatprep.subr.mxu0 0.0
          %647 = vmatpush1.msra.mxu0 0.0
          %648 = vmatprep.subr.mxu0 0.0
          %649 = vmatpush1.msra.mxu0 0.0
          %650 = vmatprep.subr.mxu0 0.0
          %651 = vmatpush1.msra.mxu0 0.0
          %652 = vmatprep.subr.mxu0 0.0
          %653 = vmatpush1.msra.mxu0 0.0
          %654 = vmatprep.subr.mxu0 0.0
          %655 = vmatpush1.msra.mxu0 0.0
          %656 = vmatprep.subr.mxu0 0.0
          %657 = vmatpush1.msra.mxu0 0.0
          %658 = vmatprep.subr.mxu0 0.0
          %659 = vmatpush1.msra.mxu0 0.0
          %660 = vmatprep.subr.mxu0 0.0
          %661 = vmatpush1.msra.mxu0 0.0
          %662 = vmatprep.subr.mxu0 0.0
          %663 = vmatpush1.msra.mxu0 0.0
          %664 = vmatprep.subr.mxu0 0.0
          %665 = vmatpush1.msra.mxu0 0.0
          %666 = vmatprep.subr.mxu0 0.0
          %667 = vmatpush1.msra.mxu0 0.0
          %668 = vmatprep.subr.mxu0 0.0
          %669 = vmatpush1.msra.mxu0 0.0
          %670 = vmatprep.subr.mxu0 0.0
          %671 = vmatpush1.msra.mxu0 0.0
          %672 = vmatprep.subr.mxu0 0.0
          %673 = vmatpush1.msra.mxu0 0.0
          %674 = vmatprep.mubr.f32.mxu0 0.0
          %675 = vmatmul.mubr.f32.gmra.mrb[0].mxu0 %v466
          %v676 = vpop.f32.mrb[0].mxu0
          %v677 = vadd.f32 %v462, %v676
          %v678 = vpop.f32.mrb[0].mxu0
          %v679 = vadd.f32 %v462, %v678
          %680 = vdwg.mxu0
          %681 = vmatprep.subr.mxu0 %v456
          %682 = vmatpush1.msra.mxu0 %v455
          %683 = vmatprep.subr.mxu0 0.0
          %684 = vmatpush1.msra.mxu0 0.0
          %685 = vmatprep.subr.mxu0 0.0
          %686 = vmatpush1.msra.mxu0 0.0
          %687 = vmatprep.subr.mxu0 0.0
          %688 = vmatpush1.msra.mxu0 0.0
          %689 = vmatprep.subr.mxu0 0.0
          %690 = vmatpush1.msra.mxu0 0.0
          %691 = vmatprep.subr.mxu0 0.0
          %692 = vmatpush1.msra.mxu0 0.0
          %693 = vmatprep.subr.mxu0 0.0
          %694 = vmatpush1.msra.mxu0 0.0
          %695 = vmatprep.subr.mxu0 0.0
          %696 = vmatpush1.msra.mxu0 0.0
          %697 = vmatprep.subr.mxu0 0.0
          %698 = vmatpush1.msra.mxu0 0.0
          %699 = vmatprep.subr.mxu0 0.0
          %700 = vmatpush1.msra.mxu0 0.0
          %701 = vmatprep.subr.mxu0 0.0
          %702 = vmatpush1.msra.mxu0 0.0
          %703 = vmatprep.subr.mxu0 0.0
          %704 = vmatpush1.msra.mxu0 0.0
          %705 = vmatprep.subr.mxu0 0.0
          %706 = vmatpush1.msra.mxu0 0.0
          %707 = vmatprep.subr.mxu0 0.0
          %708 = vmatpush1.msra.mxu0 0.0
          %709 = vmatprep.subr.mxu0 0.0
          %710 = vmatpush1.msra.mxu0 0.0
          %711 = vmatprep.subr.mxu0 0.0
          %712 = vmatpush1.msra.mxu0 0.0
          %713 = vmatprep.subr.mxu0 0.0
          %714 = vmatpush1.msra.mxu0 0.0
          %715 = vmatprep.subr.mxu0 0.0
          %716 = vmatpush1.msra.mxu0 0.0
          %717 = vmatprep.subr.mxu0 0.0
          %718 = vmatpush1.msra.mxu0 0.0
          %719 = vmatprep.subr.mxu0 0.0
          %720 = vmatpush1.msra.mxu0 0.0
          %721 = vmatprep.subr.mxu0 0.0
          %722 = vmatpush1.msra.mxu0 0.0
          %723 = vmatprep.subr.mxu0 0.0
          %724 = vmatpush1.msra.mxu0 0.0
          %725 = vmatprep.subr.mxu0 0.0
          %726 = vmatpush1.msra.mxu0 0.0
          %727 = vmatprep.subr.mxu0 0.0
          %728 = vmatpush1.msra.mxu0 0.0
          %729 = vmatprep.subr.mxu0 0.0
          %730 = vmatpush1.msra.mxu0 0.0
          %731 = vmatprep.subr.mxu0 0.0
          %732 = vmatpush1.msra.mxu0 0.0
          %733 = vmatprep.subr.mxu0 0.0
          %734 = vmatpush1.msra.mxu0 0.0
          %735 = vmatprep.subr.mxu0 0.0
          %736 = vmatpush1.msra.mxu0 0.0
          %737 = vmatprep.subr.mxu0 0.0
          %738 = vmatpush1.msra.mxu0 0.0
          %739 = vmatprep.subr.mxu0 0.0
          %740 = vmatpush1.msra.mxu0 0.0
          %741 = vmatprep.subr.mxu0 0.0
          %742 = vmatpush1.msra.mxu0 0.0
          %743 = vmatprep.subr.mxu0 0.0
          %744 = vmatpush1.msra.mxu0 0.0
          %745 = vmatprep.mubr.f32.mxu0 0.0
          %746 = vmatmul.mubr.f32.gmra.mrb[0].mxu0 %v466
          %v747 = vpop.f32.mrb[0].mxu0
          %v748 = vadd.f32 %v462, %v747
          %v749 = vpop.f32.mrb[0].mxu0
          %v750 = vadd.f32 %v462, %v749
          %751 = vdwg.mxu0
          %v752 = vmax.f32 %v535, 0.0
          %v753 = vmax.f32 %v537, 0.0
          %v754 = vmax.f32 %v606, 0.0
          %v755 = vmax.f32 %v608, 0.0
          %v756 = vmax.f32 %v677, 0.0
          %v757 = vmax.f32 %v679, 0.0
          %v758 = vmax.f32 %v748, 0.0
          %v759 = vmax.f32 %v750, 0.0
          %v760 = vld [vmem:[%s7] sm:$0xff]
          %v761 = vld [vmem:[%s8] sm:$0xff]
          %763 = vset.pattern.permute.xlu0 0
          %764 = vperm.xlu0 %763, %v761
          %v765 = vpop.permute.xlu0 %764
          %v768 = vsel %vm464, %v760, 0
          %770 = vmatprep.subr.mxu0 %v753
          %771 = vmatpush1.msra.mxu0 %v752
          %772 = vmatprep.subr.mxu0 0.0
          %773 = vmatpush1.msra.mxu0 0.0
          %774 = vmatprep.subr.mxu0 0.0
          %775 = vmatpush1.msra.mxu0 0.0
          %776 = vmatprep.subr.mxu0 0.0
          %777 = vmatpush1.msra.mxu0 0.0
          %778 = vmatprep.subr.mxu0 0.0
          %779 = vmatpush1.msra.mxu0 0.0
          %780 = vmatprep.subr.mxu0 0.0
          %781 = vmatpush1.msra.mxu0 0.0
          %782 = vmatprep.subr.mxu0 0.0
          %783 = vmatpush1.msra.mxu0 0.0
          %784 = vmatprep.subr.mxu0 0.0
          %785 = vmatpush1.msra.mxu0 0.0
          %786 = vmatprep.subr.mxu0 0.0
          %787 = vmatpush1.msra.mxu0 0.0
          %788 = vmatprep.subr.mxu0 0.0
          %789 = vmatpush1.msra.mxu0 0.0
          %790 = vmatprep.subr.mxu0 0.0
          %791 = vmatpush1.msra.mxu0 0.0
          %792 = vmatprep.subr.mxu0 0.0
          %793 = vmatpush1.msra.mxu0 0.0
          %794 = vmatprep.subr.mxu0 0.0
          %795 = vmatpush1.msra.mxu0 0.0
          %796 = vmatprep.subr.mxu0 0.0
          %797 = vmatpush1.msra.mxu0 0.0
          %798 = vmatprep.subr.mxu0 0.0
          %799 = vmatpush1.msra.mxu0 0.0
          %800 = vmatprep.subr.mxu0 0.0
          %801 = vmatpush1.msra.mxu0 0.0
          %802 = vmatprep.subr.mxu0 0.0
          %803 = vmatpush1.msra.mxu0 0.0
          %804 = vmatprep.subr.mxu0 0.0
          %805 = vmatpush1.msra.mxu0 0.0
          %806 = vmatprep.subr.mxu0 0.0
          %807 = vmatpush1.msra.mxu0 0.0
          %808 = vmatprep.subr.mxu0 0.0
          %809 = vmatpush1.msra.mxu0 0.0
          %810 = vmatprep.subr.mxu0 0.0
          %811 = vmatpush1.msra.mxu0 0.0
          %812 = vmatprep.subr.mxu0 0.0
          %813 = vmatpush1.msra.mxu0 0.0
          %814 = vmatprep.subr.mxu0 0.0
          %815 = vmatpush1.msra.mxu0 0.0
          %816 = vmatprep.subr.mxu0 0.0
          %817 = vmatpush1.msra.mxu0 0.0
          %818 = vmatprep.subr.mxu0 0.0
          %819 = vmatpush1.msra.mxu0 0.0
          %820 = vmatprep.subr.mxu0 0.0
          %821 = vmatpush1.msra.mxu0 0.0
          %822 = vmatprep.subr.mxu0 0.0
          %823 = vmatpush1.msra.mxu0 0.0
          %824 = vmatprep.subr.mxu0 0.0
          %825 = vmatpush1.msra.mxu0 0.0
          %826 = vmatprep.subr.mxu0 0.0
          %827 = vmatpush1.msra.mxu0 0.0
          %828 = vmatprep.subr.mxu0 0.0
          %829 = vmatpush1.msra.mxu0 0.0
          %830 = vmatprep.subr.mxu0 0.0
          %831 = vmatpush1.msra.mxu0 0.0
          %832 = vmatprep.subr.mxu0 0.0
          %833 = vmatpush1.msra.mxu0 0.0
          %834 = vmatprep.mubr.f32.mxu0 0.0
          %835 = vmatmul.mubr.f32.gmra.mrb[0].mxu0 %v768
          %v836 = vpop.f32.mrb[0].mxu0
          %v837 = vadd.f32 %v765, %v836
          %v838 = vpop.f32.mrb[0].mxu0
          %v839 = vadd.f32 %v765, %v838
          %840 = vdwg.mxu0
          %841 = vmatprep.subr.mxu0 %v755
          %842 = vmatpush1.msra.mxu0 %v754
          %843 = vmatprep.subr.mxu0 0.0
          %844 = vmatpush1.msra.mxu0 0.0
          %845 = vmatprep.subr.mxu0 0.0
          %846 = vmatpush1.msra.mxu0 0.0
          %847 = vmatprep.subr.mxu0 0.0
          %848 = vmatpush1.msra.mxu0 0.0
          %849 = vmatprep.subr.mxu0 0.0
          %850 = vmatpush1.msra.mxu0 0.0
          %851 = vmatprep.subr.mxu0 0.0
          %852 = vmatpush1.msra.mxu0 0.0
          %853 = vmatprep.subr.mxu0 0.0
          %854 = vmatpush1.msra.mxu0 0.0
          %855 = vmatprep.subr.mxu0 0.0
          %856 = vmatpush1.msra.mxu0 0.0
          %857 = vmatprep.subr.mxu0 0.0
          %858 = vmatpush1.msra.mxu0 0.0
          %859 = vmatprep.subr.mxu0 0.0
          %860 = vmatpush1.msra.mxu0 0.0
          %861 = vmatprep.subr.mxu0 0.0
          %862 = vmatpush1.msra.mxu0 0.0
          %863 = vmatprep.subr.mxu0 0.0
          %864 = vmatpush1.msra.mxu0 0.0
          %865 = vmatprep.subr.mxu0 0.0
          %866 = vmatpush1.msra.mxu0 0.0
          %867 = vmatprep.subr.mxu0 0.0
          %868 = vmatpush1.msra.mxu0 0.0
          %869 = vmatprep.subr.mxu0 0.0
          %870 = vmatpush1.msra.mxu0 0.0
          %871 = vmatprep.subr.mxu0 0.0
          %872 = vmatpush1.msra.mxu0 0.0
          %873 = vmatprep.subr.mxu0 0.0
          %874 = vmatpush1.msra.mxu0 0.0
          %875 = vmatprep.subr.mxu0 0.0
          %876 = vmatpush1.msra.mxu0 0.0
          %877 = vmatprep.subr.mxu0 0.0
          %878 = vmatpush1.msra.mxu0 0.0
          %879 = vmatprep.subr.mxu0 0.0
          %880 = vmatpush1.msra.mxu0 0.0
          %881 = vmatprep.subr.mxu0 0.0
          %882 = vmatpush1.msra.mxu0 0.0
          %883 = vmatprep.subr.mxu0 0.0
          %884 = vmatpush1.msra.mxu0 0.0
          %885 = vmatprep.subr.mxu0 0.0
          %886 = vmatpush1.msra.mxu0 0.0
          %887 = vmatprep.subr.mxu0 0.0
          %888 = vmatpush1.msra.mxu0 0.0
          %889 = vmatprep.subr.mxu0 0.0
          %890 = vmatpush1.msra.mxu0 0.0
          %891 = vmatprep.subr.mxu0 0.0
          %892 = vmatpush1.msra.mxu0 0.0
          %893 = vmatprep.subr.mxu0 0.0
          %894 = vmatpush1.msra.mxu0 0.0
          %895 = vmatprep.subr.mxu0 0.0
          %896 = vmatpush1.msra.mxu0 0.0
          %897 = vmatprep.subr.mxu0 0.0
          %898 = vmatpush1.msra.mxu0 0.0
          %899 = vmatprep.subr.mxu0 0.0
          %900 = vmatpush1.msra.mxu0 0.0
          %901 = vmatprep.subr.mxu0 0.0
          %902 = vmatpush1.msra.mxu0 0.0
          %903 = vmatprep.subr.mxu0 0.0
          %904 = vmatpush1.msra.mxu0 0.0
          %905 = vmatprep.mubr.f32.mxu0 0.0
          %906 = vmatmul.mubr.f32.gmra.mrb[0].mxu0 %v768
          %v907 = vpop.f32.mrb[0].mxu0
          %v908 = vadd.f32 %v765, %v907
          %v909 = vpop.f32.mrb[0].mxu0
          %v910 = vadd.f32 %v765, %v909
          %911 = vdwg.mxu0
          %912 = vmatprep.subr.mxu0 %v757
          %913 = vmatpush1.msra.mxu0 %v756
          %914 = vmatprep.subr.mxu0 0.0
          %915 = vmatpush1.msra.mxu0 0.0
          %916 = vmatprep.subr.mxu0 0.0
          %917 = vmatpush1.msra.mxu0 0.0
          %918 = vmatprep.subr.mxu0 0.0
          %919 = vmatpush1.msra.mxu0 0.0
          %920 = vmatprep.subr.mxu0 0.0
          %921 = vmatpush1.msra.mxu0 0.0
          %922 = vmatprep.subr.mxu0 0.0
          %923 = vmatpush1.msra.mxu0 0.0
          %924 = vmatprep.subr.mxu0 0.0
          %925 = vmatpush1.msra.mxu0 0.0
          %926 = vmatprep.subr.mxu0 0.0
          %927 = vmatpush1.msra.mxu0 0.0
          %928 = vmatprep.subr.mxu0 0.0
          %929 = vmatpush1.msra.mxu0 0.0
          %930 = vmatprep.subr.mxu0 0.0
          %931 = vmatpush1.msra.mxu0 0.0
          %932 = vmatprep.subr.mxu0 0.0
          %933 = vmatpush1.msra.mxu0 0.0
          %934 = vmatprep.subr.mxu0 0.0
          %935 = vmatpush1.msra.mxu0 0.0
          %936 = vmatprep.subr.mxu0 0.0
          %937 = vmatpush1.msra.mxu0 0.0
          %938 = vmatprep.subr.mxu0 0.0
          %939 = vmatpush1.msra.mxu0 0.0
          %940 = vmatprep.subr.mxu0 0.0
          %941 = vmatpush1.msra.mxu0 0.0
          %942 = vmatprep.subr.mxu0 0.0
          %943 = vmatpush1.msra.mxu0 0.0
          %944 = vmatprep.subr.mxu0 0.0
          %945 = vmatpush1.msra.mxu0 0.0
          %946 = vmatprep.subr.mxu0 0.0
          %947 = vmatpush1.msra.mxu0 0.0
          %948 = vmatprep.subr.mxu0 0.0
          %949 = vmatpush1.msra.mxu0 0.0
          %950 = vmatprep.subr.mxu0 0.0
          %951 = vmatpush1.msra.mxu0 0.0
          %952 = vmatprep.subr.mxu0 0.0
          %953 = vmatpush1.msra.mxu0 0.0
          %954 = vmatprep.subr.mxu0 0.0
          %955 = vmatpush1.msra.mxu0 0.0
          %956 = vmatprep.subr.mxu0 0.0
          %957 = vmatpush1.msra.mxu0 0.0
          %958 = vmatprep.subr.mxu0 0.0
          %959 = vmatpush1.msra.mxu0 0.0
          %960 = vmatprep.subr.mxu0 0.0
          %961 = vmatpush1.msra.mxu0 0.0
          %962 = vmatprep.subr.mxu0 0.0
          %963 = vmatpush1.msra.mxu0 0.0
          %964 = vmatprep.subr.mxu0 0.0
          %965 = vmatpush1.msra.mxu0 0.0
          %966 = vmatprep.subr.mxu0 0.0
          %967 = vmatpush1.msra.mxu0 0.0
          %968 = vmatprep.subr.mxu0 0.0
          %969 = vmatpush1.msra.mxu0 0.0
          %970 = vmatprep.subr.mxu0 0.0
          %971 = vmatpush1.msra.mxu0 0.0
          %972 = vmatprep.subr.mxu0 0.0
          %973 = vmatpush1.msra.mxu0 0.0
          %974 = vmatprep.subr.mxu0 0.0
          %975 = vmatpush1.msra.mxu0 0.0
          %976 = vmatprep.mubr.f32.mxu0 0.0
          %977 = vmatmul.mubr.f32.gmra.mrb[0].mxu0 %v768
          %v978 = vpop.f32.mrb[0].mxu0
          %v979 = vadd.f32 %v765, %v978
          %v980 = vpop.f32.mrb[0].mxu0
          %v981 = vadd.f32 %v765, %v980
          %982 = vdwg.mxu0
          %983 = vmatprep.subr.mxu0 %v759
          %984 = vmatpush1.msra.mxu0 %v758
          %985 = vmatprep.subr.mxu0 0.0
          %986 = vmatpush1.msra.mxu0 0.0
          %987 = vmatprep.subr.mxu0 0.0
          %988 = vmatpush1.msra.mxu0 0.0
          %989 = vmatprep.subr.mxu0 0.0
          %990 = vmatpush1.msra.mxu0 0.0
          %991 = vmatprep.subr.mxu0 0.0
          %992 = vmatpush1.msra.mxu0 0.0
          %993 = vmatprep.subr.mxu0 0.0
          %994 = vmatpush1.msra.mxu0 0.0
          %995 = vmatprep.subr.mxu0 0.0
          %996 = vmatpush1.msra.mxu0 0.0
          %997 = vmatprep.subr.mxu0 0.0
          %998 = vmatpush1.msra.mxu0 0.0
          %999 = vmatprep.subr.mxu0 0.0
          %1000 = vmatpush1.msra.mxu0 0.0
          %1001 = vmatprep.subr.mxu0 0.0
          %1002 = vmatpush1.msra.mxu0 0.0
          %1003 = vmatprep.subr.mxu0 0.0
          %1004 = vmatpush1.msra.mxu0 0.0
          %1005 = vmatprep.subr.mxu0 0.0
          %1006 = vmatpush1.msra.mxu0 0.0
          %1007 = vmatprep.subr.mxu0 0.0
          %1008 = vmatpush1.msra.mxu0 0.0
          %1009 = vmatprep.subr.mxu0 0.0
          %1010 = vmatpush1.msra.mxu0 0.0
          %1011 = vmatprep.subr.mxu0 0.0
          %1012 = vmatpush1.msra.mxu0 0.0
          %1013 = vmatprep.subr.mxu0 0.0
          %1014 = vmatpush1.msra.mxu0 0.0
          %1015 = vmatprep.subr.mxu0 0.0
          %1016 = vmatpush1.msra.mxu0 0.0
          %1017 = vmatprep.subr.mxu0 0.0
          %1018 = vmatpush1.msra.mxu0 0.0
          %1019 = vmatprep.subr.mxu0 0.0
          %1020 = vmatpush1.msra.mxu0 0.0
          %1021 = vmatprep.subr.mxu0 0.0
          %1022 = vmatpush1.msra.mxu0 0.0
          %1023 = vmatprep.subr.mxu0 0.0
          %1024 = vmatpush1.msra.mxu0 0.0
          %1025 = vmatprep.subr.mxu0 0.0
          %1026 = vmatpush1.msra.mxu0 0.0
          %1027 = vmatprep.subr.mxu0 0.0
          %1028 = vmatpush1.msra.mxu0 0.0
          %1029 = vmatprep.subr.mxu0 0.0
          %1030 = vmatpush1.msra.mxu0 0.0
          %1031 = vmatprep.subr.mxu0 0.0
          %1032 = vmatpush1.msra.mxu0 0.0
          %1033 = vmatprep.subr.mxu0 0.0
          %1034 = vmatpush1.msra.mxu0 0.0
          %1035 = vmatprep.subr.mxu0 0.0
          %1036 = vmatpush1.msra.mxu0 0.0
          %1037 = vmatprep.subr.mxu0 0.0
          %1038 = vmatpush1.msra.mxu0 0.0
          %1039 = vmatprep.subr.mxu0 0.0
          %1040 = vmatpush1.msra.mxu0 0.0
          %1041 = vmatprep.subr.mxu0 0.0
          %1042 = vmatpush1.msra.mxu0 0.0
          %1043 = vmatprep.subr.mxu0 0.0
          %1044 = vmatpush1.msra.mxu0 0.0
          %1045 = vmatprep.subr.mxu0 0.0
          %1046 = vmatpush1.msra.mxu0 0.0
          %1047 = vmatprep.mubr.f32.mxu0 0.0
          %1048 = vmatmul.mubr.f32.gmra.mrb[0].mxu0 %v768
          %v1049 = vpop.f32.mrb[0].mxu0
          %v1050 = vadd.f32 %v765, %v1049
          %v1051 = vpop.f32.mrb[0].mxu0
          %v1052 = vadd.f32 %v765, %v1051
          %1053 = vdwg.mxu0
          %v1054 = vmax.f32 %v837, 0.0
          %v1055 = vmax.f32 %v839, 0.0
          %v1056 = vmax.f32 %v908, 0.0
          %v1057 = vmax.f32 %v910, 0.0
          %v1058 = vmax.f32 %v979, 0.0
          %v1059 = vmax.f32 %v981, 0.0
          %v1060 = vmax.f32 %v1050, 0.0
          %v1061 = vmax.f32 %v1052, 0.0
          %1062 = vst [vmem:[#allocation2] sm:$0xff] %v1054
          %1063 = vst [vmem:[#allocation2 + $0x8] sm:$0xff] %v1055
          %1064 = vst [vmem:[#allocation2 + $0x10] sm:$0xff] %v1056
          %1065 = vst [vmem:[#allocation2 + $0x18] sm:$0xff] %v1057
          %1066 = vst [vmem:[#allocation2 + $0x20] sm:$0xff] %v1058
          %1067 = vst [vmem:[#allocation2 + $0x28] sm:$0xff] %v1059
          %1068 = vst [vmem:[#allocation2 + $0x30] sm:$0xff] %v1060
          %1069 = vst [vmem:[#allocation2 + $0x38] sm:$0xff] %v1061
          %v1070 = vld [vmem:[%s9] sm:$0xff]
          %v1071 = vld [vmem:[%s9 + $0x8] sm:$0xff]
          %v1073 = vsel %vm464, %v1070, 0
          %v1076 = vsel %vm464, %v1071, 0
          %1078 = vmatprep.subr.mxu0 %v450
          %1079 = vmatpush1.msra.mxu0 %v449
          %1080 = vmatprep.subr.mxu0 0.0
          %1081 = vmatpush1.msra.mxu0 0.0
          %1082 = vmatprep.subr.mxu0 0.0
          %1083 = vmatpush1.msra.mxu0 0.0
          %1084 = vmatprep.subr.mxu0 0.0
          %1085 = vmatpush1.msra.mxu0 0.0
          %1086 = vmatprep.subr.mxu0 0.0
          %1087 = vmatpush1.msra.mxu0 0.0
          %1088 = vmatprep.subr.mxu0 0.0
          %1089 = vmatpush1.msra.mxu0 0.0
          %1090 = vmatprep.subr.mxu0 0.0
          %1091 = vmatpush1.msra.mxu0 0.0
          %1092 = vmatprep.subr.mxu0 0.0
          %1093 = vmatpush1.msra.mxu0 0.0
          %1094 = vmatprep.subr.mxu0 0.0
          %1095 = vmatpush1.msra.mxu0 0.0
          %1096 = vmatprep.subr.mxu0 0.0
          %1097 = vmatpush1.msra.mxu0 0.0
          %1098 = vmatprep.subr.mxu0 0.0
          %1099 = vmatpush1.msra.mxu0 0.0
          %1100 = vmatprep.subr.mxu0 0.0
          %1101 = vmatpush1.msra.mxu0 0.0
          %1102 = vmatprep.subr.mxu0 0.0
          %1103 = vmatpush1.msra.mxu0 0.0
          %1104 = vmatprep.subr.mxu0 0.0
          %1105 = vmatpush1.msra.mxu0 0.0
          %1106 = vmatprep.subr.mxu0 0.0
          %1107 = vmatpush1.msra.mxu0 0.0
          %1108 = vmatprep.subr.mxu0 0.0
          %1109 = vmatpush1.msra.mxu0 0.0
          %1110 = vmatprep.subr.mxu0 0.0
          %1111 = vmatpush1.msra.mxu0 0.0
          %1112 = vmatprep.subr.mxu0 0.0
          %1113 = vmatpush1.msra.mxu0 0.0
          %1114 = vmatprep.subr.mxu0 0.0
          %1115 = vmatpush1.msra.mxu0 0.0
          %1116 = vmatprep.subr.mxu0 0.0
          %1117 = vmatpush1.msra.mxu0 0.0
          %1118 = vmatprep.subr.mxu0 0.0
          %1119 = vmatpush1.msra.mxu0 0.0
          %1120 = vmatprep.subr.mxu0 0.0
          %1121 = vmatpush1.msra.mxu0 0.0
          %1122 = vmatprep.subr.mxu0 0.0
          %1123 = vmatpush1.msra.mxu0 0.0
          %1124 = vmatprep.subr.mxu0 0.0
          %1125 = vmatpush1.msra.mxu0 0.0
          %1126 = vmatprep.subr.mxu0 0.0
          %1127 = vmatpush1.msra.mxu0 0.0
          %1128 = vmatprep.subr.mxu0 0.0
          %1129 = vmatpush1.msra.mxu0 0.0
          %1130 = vmatprep.subr.mxu0 0.0
          %1131 = vmatpush1.msra.mxu0 0.0
          %1132 = vmatprep.subr.mxu0 0.0
          %1133 = vmatpush1.msra.mxu0 0.0
          %1134 = vmatprep.subr.mxu0 0.0
          %1135 = vmatpush1.msra.mxu0 0.0
          %1136 = vmatprep.subr.mxu0 0.0
          %1137 = vmatpush1.msra.mxu0 0.0
          %1138 = vmatprep.subr.mxu0 0.0
          %1139 = vmatpush1.msra.mxu0 0.0
          %1140 = vmatprep.subr.mxu0 0.0
          %1141 = vmatpush1.msra.mxu0 0.0
          %1142 = vmatprep.mubr.f32.mxu0 0.0
          %1143 = vmatmul.mubr.f32.gmra.mrb[0].mxu0 %v1073
          %v1144 = vpop.f32.mrb[0].mxu0
          %v1145 = vadd.f32 0.0, %v1144
          %v1146 = vpop.f32.mrb[0].mxu0
          %v1147 = vadd.f32 0.0, %v1146
          %1148 = vmatprep.mubr.f32.mxu0 0.0
          %1149 = vmatmul.mubr.f32.gmra.mrb[0].mxu0 %v1076
          %v1150 = vpop.f32.mrb[0].mxu0
          %v1151 = vadd.f32 0.0, %v1150
          %v1152 = vpop.f32.mrb[0].mxu0
          %v1153 = vadd.f32 0.0, %v1152
          %1154 = vdwg.mxu0
          %1155 = vmatprep.subr.mxu0 %v452
          %1156 = vmatpush1.msra.mxu0 %v451
          %1157 = vmatprep.subr.mxu0 0.0
          %1158 = vmatpush1.msra.mxu0 0.0
          %1159 = vmatprep.subr.mxu0 0.0
          %1160 = vmatpush1.msra.mxu0 0.0
          %1161 = vmatprep.subr.mxu0 0.0
          %1162 = vmatpush1.msra.mxu0 0.0
          %1163 = vmatprep.subr.mxu0 0.0
          %1164 = vmatpush1.msra.mxu0 0.0
          %1165 = vmatprep.subr.mxu0 0.0
          %1166 = vmatpush1.msra.mxu0 0.0
          %1167 = vmatprep.subr.mxu0 0.0
          %1168 = vmatpush1.msra.mxu0 0.0
          %1169 = vmatprep.subr.mxu0 0.0
          %1170 = vmatpush1.msra.mxu0 0.0
          %1171 = vmatprep.subr.mxu0 0.0
          %1172 = vmatpush1.msra.mxu0 0.0
          %1173 = vmatprep.subr.mxu0 0.0
          %1174 = vmatpush1.msra.mxu0 0.0
          %1175 = vmatprep.subr.mxu0 0.0
          %1176 = vmatpush1.msra.mxu0 0.0
          %1177 = vmatprep.subr.mxu0 0.0
          %1178 = vmatpush1.msra.mxu0 0.0
          %1179 = vmatprep.subr.mxu0 0.0
          %1180 = vmatpush1.msra.mxu0 0.0
          %1181 = vmatprep.subr.mxu0 0.0
          %1182 = vmatpush1.msra.mxu0 0.0
          %1183 = vmatprep.subr.mxu0 0.0
          %1184 = vmatpush1.msra.mxu0 0.0
          %1185 = vmatprep.subr.mxu0 0.0
          %1186 = vmatpush1.msra.mxu0 0.0
          %1187 = vmatprep.subr.mxu0 0.0
          %1188 = vmatpush1.msra.mxu0 0.0
          %1189 = vmatprep.subr.mxu0 0.0
          %1190 = vmatpush1.msra.mxu0 0.0
          %1191 = vmatprep.subr.mxu0 0.0
          %1192 = vmatpush1.msra.mxu0 0.0
          %1193 = vmatprep.subr.mxu0 0.0
          %1194 = vmatpush1.msra.mxu0 0.0
          %1195 = vmatprep.subr.mxu0 0.0
          %1196 = vmatpush1.msra.mxu0 0.0
          %1197 = vmatprep.subr.mxu0 0.0
          %1198 = vmatpush1.msra.mxu0 0.0
          %1199 = vmatprep.subr.mxu0 0.0
          %1200 = vmatpush1.msra.mxu0 0.0
          %1201 = vmatprep.subr.mxu0 0.0
          %1202 = vmatpush1.msra.mxu0 0.0
          %1203 = vmatprep.subr.mxu0 0.0
          %1204 = vmatpush1.msra.mxu0 0.0
          %1205 = vmatprep.subr.mxu0 0.0
          %1206 = vmatpush1.msra.mxu0 0.0
          %1207 = vmatprep.subr.mxu0 0.0
          %1208 = vmatpush1.msra.mxu0 0.0
          %1209 = vmatprep.subr.mxu0 0.0
          %1210 = vmatpush1.msra.mxu0 0.0
          %1211 = vmatprep.subr.mxu0 0.0
          %1212 = vmatpush1.msra.mxu0 0.0
          %1213 = vmatprep.subr.mxu0 0.0
          %1214 = vmatpush1.msra.mxu0 0.0
          %1215 = vmatprep.subr.mxu0 0.0
          %1216 = vmatpush1.msra.mxu0 0.0
          %1217 = vmatprep.subr.mxu0 0.0
          %1218 = vmatpush1.msra.mxu0 0.0
          %1219 = vmatprep.mubr.f32.mxu0 0.0
          %1220 = vmatmul.mubr.f32.gmra.mrb[0].mxu0 %v1073
          %v1221 = vpop.f32.mrb[0].mxu0
          %v1222 = vadd.f32 0.0, %v1221
          %v1223 = vpop.f32.mrb[0].mxu0
          %v1224 = vadd.f32 0.0, %v1223
          %1225 = vmatprep.mubr.f32.mxu0 0.0
          %1226 = vmatmul.mubr.f32.gmra.mrb[0].mxu0 %v1076
          %v1227 = vpop.f32.mrb[0].mxu0
          %v1228 = vadd.f32 0.0, %v1227
          %v1229 = vpop.f32.mrb[0].mxu0
          %v1230 = vadd.f32 0.0, %v1229
          %1231 = vdwg.mxu0
          %1232 = vmatprep.subr.mxu0 %v454
          %1233 = vmatpush1.msra.mxu0 %v453
          %1234 = vmatprep.subr.mxu0 0.0
          %1235 = vmatpush1.msra.mxu0 0.0
          %1236 = vmatprep.subr.mxu0 0.0
          %1237 = vmatpush1.msra.mxu0 0.0
          %1238 = vmatprep.subr.mxu0 0.0
          %1239 = vmatpush1.msra.mxu0 0.0
          %1240 = vmatprep.subr.mxu0 0.0
          %1241 = vmatpush1.msra.mxu0 0.0
          %1242 = vmatprep.subr.mxu0 0.0
          %1243 = vmatpush1.msra.mxu0 0.0
          %1244 = vmatprep.subr.mxu0 0.0
          %1245 = vmatpush1.msra.mxu0 0.0
          %1246 = vmatprep.subr.mxu0 0.0
          %1247 = vmatpush1.msra.mxu0 0.0
          %1248 = vmatprep.subr.mxu0 0.0
          %1249 = vmatpush1.msra.mxu0 0.0
          %1250 = vmatprep.subr.mxu0 0.0
          %1251 = vmatpush1.msra.mxu0 0.0
          %1252 = vmatprep.subr.mxu0 0.0
          %1253 = vmatpush1.msra.mxu0 0.0
          %1254 = vmatprep.subr.mxu0 0.0
          %1255 = vmatpush1.msra.mxu0 0.0
          %1256 = vmatprep.subr.mxu0 0.0
          %1257 = vmatpush1.msra.mxu0 0.0
          %1258 = vmatprep.subr.mxu0 0.0
          %1259 = vmatpush1.msra.mxu0 0.0
          %1260 = vmatprep.subr.mxu0 0.0
          %1261 = vmatpush1.msra.mxu0 0.0
          %1262 = vmatprep.subr.mxu0 0.0
          %1263 = vmatpush1.msra.mxu0 0.0
          %1264 = vmatprep.subr.mxu0 0.0
          %1265 = vmatpush1.msra.mxu0 0.0
          %1266 = vmatprep.subr.mxu0 0.0
          %1267 = vmatpush1.msra.mxu0 0.0
          %1268 = vmatprep.subr.mxu0 0.0
          %1269 = vmatpush1.msra.mxu0 0.0
          %1270 = vmatprep.subr.mxu0 0.0
          %1271 = vmatpush1.msra.mxu0 0.0
          %1272 = vmatprep.subr.mxu0 0.0
          %1273 = vmatpush1.msra.mxu0 0.0
          %1274 = vmatprep.subr.mxu0 0.0
          %1275 = vmatpush1.msra.mxu0 0.0
          %1276 = vmatprep.subr.mxu0 0.0
          %1277 = vmatpush1.msra.mxu0 0.0
          %1278 = vmatprep.subr.mxu0 0.0
          %1279 = vmatpush1.msra.mxu0 0.0
          %1280 = vmatprep.subr.mxu0 0.0
          %1281 = vmatpush1.msra.mxu0 0.0
          %1282 = vmatprep.subr.mxu0 0.0
          %1283 = vmatpush1.msra.mxu0 0.0
          %1284 = vmatprep.subr.mxu0 0.0
          %1285 = vmatpush1.msra.mxu0 0.0
          %1286 = vmatprep.subr.mxu0 0.0
          %1287 = vmatpush1.msra.mxu0 0.0
          %1288 = vmatprep.subr.mxu0 0.0
          %1289 = vmatpush1.msra.mxu0 0.0
          %1290 = vmatprep.subr.mxu0 0.0
          %1291 = vmatpush1.msra.mxu0 0.0
          %1292 = vmatprep.subr.mxu0 0.0
          %1293 = vmatpush1.msra.mxu0 0.0
          %1294 = vmatprep.subr.mxu0 0.0
          %1295 = vmatpush1.msra.mxu0 0.0
          %1296 = vmatprep.mubr.f32.mxu0 0.0
          %1297 = vmatmul.mubr.f32.gmra.mrb[0].mxu0 %v1073
          %v1298 = vpop.f32.mrb[0].mxu0
          %v1299 = vadd.f32 0.0, %v1298
          %v1300 = vpop.f32.mrb[0].mxu0
          %v1301 = vadd.f32 0.0, %v1300
          %1302 = vmatprep.mubr.f32.mxu0 0.0
          %1303 = vmatmul.mubr.f32.gmra.mrb[0].mxu0 %v1076
          %v1304 = vpop.f32.mrb[0].mxu0
          %v1305 = vadd.f32 0.0, %v1304
          %v1306 = vpop.f32.mrb[0].mxu0
          %v1307 = vadd.f32 0.0, %v1306
          %1308 = vdwg.mxu0
          %1309 = vmatprep.subr.mxu0 %v456
          %1310 = vmatpush1.msra.mxu0 %v455
          %1311 = vmatprep.subr.mxu0 0.0
          %1312 = vmatpush1.msra.mxu0 0.0
          %1313 = vmatprep.subr.mxu0 0.0
          %1314 = vmatpush1.msra.mxu0 0.0
          %1315 = vmatprep.subr.mxu0 0.0
          %1316 = vmatpush1.msra.mxu0 0.0
          %1317 = vmatprep.subr.mxu0 0.0
          %1318 = vmatpush1.msra.mxu0 0.0
          %1319 = vmatprep.subr.mxu0 0.0
          %1320 = vmatpush1.msra.mxu0 0.0
          %1321 = vmatprep.subr.mxu0 0.0
          %1322 = vmatpush1.msra.mxu0 0.0
          %1323 = vmatprep.subr.mxu0 0.0
          %1324 = vmatpush1.msra.mxu0 0.0
          %1325 = vmatprep.subr.mxu0 0.0
          %1326 = vmatpush1.msra.mxu0 0.0
          %1327 = vmatprep.subr.mxu0 0.0
          %1328 = vmatpush1.msra.mxu0 0.0
          %1329 = vmatprep.subr.mxu0 0.0
          %1330 = vmatpush1.msra.mxu0 0.0
          %1331 = vmatprep.subr.mxu0 0.0
          %1332 = vmatpush1.msra.mxu0 0.0
          %1333 = vmatprep.subr.mxu0 0.0
          %1334 = vmatpush1.msra.mxu0 0.0
          %1335 = vmatprep.subr.mxu0 0.0
          %1336 = vmatpush1.msra.mxu0 0.0
          %1337 = vmatprep.subr.mxu0 0.0
          %1338 = vmatpush1.msra.mxu0 0.0
          %1339 = vmatprep.subr.mxu0 0.0
          %1340 = vmatpush1.msra.mxu0 0.0
          %1341 = vmatprep.subr.mxu0 0.0
          %1342 = vmatpush1.msra.mxu0 0.0
          %1343 = vmatprep.subr.mxu0 0.0
          %1344 = vmatpush1.msra.mxu0 0.0
          %1345 = vmatprep.subr.mxu0 0.0
          %1346 = vmatpush1.msra.mxu0 0.0
          %1347 = vmatprep.subr.mxu0 0.0
          %1348 = vmatpush1.msra.mxu0 0.0
          %1349 = vmatprep.subr.mxu0 0.0
          %1350 = vmatpush1.msra.mxu0 0.0
          %1351 = vmatprep.subr.mxu0 0.0
          %1352 = vmatpush1.msra.mxu0 0.0
          %1353 = vmatprep.subr.mxu0 0.0
          %1354 = vmatpush1.msra.mxu0 0.0
          %1355 = vmatprep.subr.mxu0 0.0
          %1356 = vmatpush1.msra.mxu0 0.0
          %1357 = vmatprep.subr.mxu0 0.0
          %1358 = vmatpush1.msra.mxu0 0.0
          %1359 = vmatprep.subr.mxu0 0.0
          %1360 = vmatpush1.msra.mxu0 0.0
          %1361 = vmatprep.subr.mxu0 0.0
          %1362 = vmatpush1.msra.mxu0 0.0
          %1363 = vmatprep.subr.mxu0 0.0
          %1364 = vmatpush1.msra.mxu0 0.0
          %1365 = vmatprep.subr.mxu0 0.0
          %1366 = vmatpush1.msra.mxu0 0.0
          %1367 = vmatprep.subr.mxu0 0.0
          %1368 = vmatpush1.msra.mxu0 0.0
          %1369 = vmatprep.subr.mxu0 0.0
          %1370 = vmatpush1.msra.mxu0 0.0
          %1371 = vmatprep.subr.mxu0 0.0
          %1372 = vmatpush1.msra.mxu0 0.0
          %1373 = vmatprep.mubr.f32.mxu0 0.0
          %1374 = vmatmul.mubr.f32.gmra.mrb[0].mxu0 %v1073
          %v1375 = vpop.f32.mrb[0].mxu0
          %v1376 = vadd.f32 0.0, %v1375
          %v1377 = vpop.f32.mrb[0].mxu0
          %v1378 = vadd.f32 0.0, %v1377
          %1379 = vmatprep.mubr.f32.mxu0 0.0
          %1380 = vmatmul.mubr.f32.gmra.mrb[0].mxu0 %v1076
          %v1381 = vpop.f32.mrb[0].mxu0
          %v1382 = vadd.f32 0.0, %v1381
          %v1383 = vpop.f32.mrb[0].mxu0
          %v1384 = vadd.f32 0.0, %v1383
          %1385 = vdwg.mxu0
          %1386 = vst [vmem:[#allocation3] sm:$0xff] %v1145
          %1387 = vst [vmem:[#allocation3 + $0x8] sm:$0xff] %v1147
          %1388 = vst [vmem:[#allocation3 + $0x10] sm:$0xff] %v1222
          %1389 = vst [vmem:[#allocation3 + $0x18] sm:$0xff] %v1224
          %1390 = vst [vmem:[#allocation3 + $0x20] sm:$0xff] %v1299
          %1391 = vst [vmem:[#allocation3 + $0x28] sm:$0xff] %v1301
          %1392 = vst [vmem:[#allocation3 + $0x30] sm:$0xff] %v1376
          %1393 = vst [vmem:[#allocation3 + $0x38] sm:$0xff] %v1378
          %1394 = vst [vmem:[#allocation3 + $0x40] sm:$0xff] %v1151
          %1395 = vst [vmem:[#allocation3 + $0x48] sm:$0xff] %v1153
          %1396 = vst [vmem:[#allocation3 + $0x50] sm:$0xff] %v1228
          %1397 = vst [vmem:[#allocation3 + $0x58] sm:$0xff] %v1230
          %1398 = vst [vmem:[#allocation3 + $0x60] sm:$0xff] %v1305
          %1399 = vst [vmem:[#allocation3 + $0x68] sm:$0xff] %v1307
          %1400 = vst [vmem:[#allocation3 + $0x70] sm:$0xff] %v1382
          %1401 = vst [vmem:[#allocation3 + $0x78] sm:$0xff] %v1384
          %s1402 = scalar_lea.vmem [#allocation3], 128
          %1403 = vst [vmem:[%s1402] ss:$8 sm:$0xf] 1.0
          %1404 = vst [vmem:[%s1402] ss:$8 sm:$0xf0] 1.0
        $region76: #{tpu_custom_call.1} parent=67 // pred_fallthru
          _
        %s1405 = smul.u32 %s34, 512
        %s1406 = sshra.s32 %s1405, 7
        %s1407 = sand.u32 %s1405, 127
        %s1408 = smul.addr %s1406, 8
        %s1409 = scalar_lea.vmem %s403, %s1408 [#allocation4]
        %v1410 = vld [vmem:[%s1409] sm:$0xff]
        %v1411 = vld [vmem:[%s1409 + $0x8] sm:$0xff]
        %v1412 = vld [vmem:[%s1409 + $0x10] sm:$0xff]
        %v1413 = vld [vmem:[%s1409 + $0x18] sm:$0xff]
        %v1414 = vld [vmem:[%s1] sm:$0xff]
        %v1415 = vld [vmem:[%s2] sm:$0xff]
        %1417 = vset.pattern.permute.xlu0 0
        %1418 = vperm.xlu0 %1417, %v1415
        %v1419 = vpop.permute.xlu0 %1418
        %vm1421 = vcmask 64512
        %v1423 = vsel %vm1421, %v1414, 0
        %1425 = vmatprep.subr.mxu0 %v1411
        %1426 = vmatpush1.msra.mxu0 %v1410
        %1427 = vmatprep.subr.mxu0 0.0
        %1428 = vmatpush1.msra.mxu0 0.0
        %1429 = vmatprep.subr.mxu0 0.0
        %1430 = vmatpush1.msra.mxu0 0.0
        %1431 = vmatprep.subr.mxu0 0.0
        %1432 = vmatpush1.msra.mxu0 0.0
        %1433 = vmatprep.subr.mxu0 0.0
        %1434 = vmatpush1.msra.mxu0 0.0
        %1435 = vmatprep.subr.mxu0 0.0
        %1436 = vmatpush1.msra.mxu0 0.0
        %1437 = vmatprep.subr.mxu0 0.0
        %1438 = vmatpush1.msra.mxu0 0.0
        %1439 = vmatprep.subr.mxu0 0.0
        %1440 = vmatpush1.msra.mxu0 0.0
        %1441 = vmatprep.subr.mxu0 0.0
        %1442 = vmatpush1.msra.mxu0 0.0
        %1443 = vmatprep.subr.mxu0 0.0
        %1444 = vmatpush1.msra.mxu0 0.0
        %1445 = vmatprep.subr.mxu0 0.0
        %1446 = vmatpush1.msra.mxu0 0.0
        %1447 = vmatprep.subr.mxu0 0.0
        %1448 = vmatpush1.msra.mxu0 0.0
        %1449 = vmatprep.subr.mxu0 0.0
        %1450 = vmatpush1.msra.mxu0 0.0
        %1451 = vmatprep.subr.mxu0 0.0
        %1452 = vmatpush1.msra.mxu0 0.0
        %1453 = vmatprep.subr.mxu0 0.0
        %1454 = vmatpush1.msra.mxu0 0.0
        %1455 = vmatprep.subr.mxu0 0.0
        %1456 = vmatpush1.msra.mxu0 0.0
        %1457 = vmatprep.subr.mxu0 0.0
        %1458 = vmatpush1.msra.mxu0 0.0
        %1459 = vmatprep.subr.mxu0 0.0
        %1460 = vmatpush1.msra.mxu0 0.0
        %1461 = vmatprep.subr.mxu0 0.0
        %1462 = vmatpush1.msra.mxu0 0.0
        %1463 = vmatprep.subr.mxu0 0.0
        %1464 = vmatpush1.msra.mxu0 0.0
        %1465 = vmatprep.subr.mxu0 0.0
        %1466 = vmatpush1.msra.mxu0 0.0
        %1467 = vmatprep.subr.mxu0 0.0
        %1468 = vmatpush1.msra.mxu0 0.0
        %1469 = vmatprep.subr.mxu0 0.0
        %1470 = vmatpush1.msra.mxu0 0.0
        %1471 = vmatprep.subr.mxu0 0.0
        %1472 = vmatpush1.msra.mxu0 0.0
        %1473 = vmatprep.subr.mxu0 0.0
        %1474 = vmatpush1.msra.mxu0 0.0
        %1475 = vmatprep.subr.mxu0 0.0
        %1476 = vmatpush1.msra.mxu0 0.0
        %1477 = vmatprep.subr.mxu0 0.0
        %1478 = vmatpush1.msra.mxu0 0.0
        %1479 = vmatprep.subr.mxu0 0.0
        %1480 = vmatpush1.msra.mxu0 0.0
        %1481 = vmatprep.subr.mxu0 0.0
        %1482 = vmatpush1.msra.mxu0 0.0
        %1483 = vmatprep.subr.mxu0 0.0
        %1484 = vmatpush1.msra.mxu0 0.0
        %1485 = vmatprep.subr.mxu0 0.0
        %1486 = vmatpush1.msra.mxu0 0.0
        %1487 = vmatprep.subr.mxu0 0.0
        %1488 = vmatpush1.msra.mxu0 0.0
        %1489 = vmatprep.mubr.f32.mxu0 0.0
        %1490 = vmatmul.mubr.f32.gmra.mrb[0].mxu0 %v1423
        %v1491 = vpop.f32.mrb[0].mxu0
        %v1492 = vadd.f32 %v1419, %v1491
        %v1493 = vpop.f32.mrb[0].mxu0
        %v1494 = vadd.f32 %v1419, %v1493
        %1495 = vdwg.mxu0
        %1496 = vmatprep.subr.mxu0 %v1413
        %1497 = vmatpush1.msra.mxu0 %v1412
        %1498 = vmatprep.subr.mxu0 0.0
        %1499 = vmatpush1.msra.mxu0 0.0
        %1500 = vmatprep.subr.mxu0 0.0
        %1501 = vmatpush1.msra.mxu0 0.0
        %1502 = vmatprep.subr.mxu0 0.0
        %1503 = vmatpush1.msra.mxu0 0.0
        %1504 = vmatprep.subr.mxu0 0.0
        %1505 = vmatpush1.msra.mxu0 0.0
        %1506 = vmatprep.subr.mxu0 0.0
        %1507 = vmatpush1.msra.mxu0 0.0
        %1508 = vmatprep.subr.mxu0 0.0
        %1509 = vmatpush1.msra.mxu0 0.0
        %1510 = vmatprep.subr.mxu0 0.0
        %1511 = vmatpush1.msra.mxu0 0.0
        %1512 = vmatprep.subr.mxu0 0.0
        %1513 = vmatpush1.msra.mxu0 0.0
        %1514 = vmatprep.subr.mxu0 0.0
        %1515 = vmatpush1.msra.mxu0 0.0
        %1516 = vmatprep.subr.mxu0 0.0
        %1517 = vmatpush1.msra.mxu0 0.0
        %1518 = vmatprep.subr.mxu0 0.0
        %1519 = vmatpush1.msra.mxu0 0.0
        %1520 = vmatprep.subr.mxu0 0.0
        %1521 = vmatpush1.msra.mxu0 0.0
        %1522 = vmatprep.subr.mxu0 0.0
        %1523 = vmatpush1.msra.mxu0 0.0
        %1524 = vmatprep.subr.mxu0 0.0
        %1525 = vmatpush1.msra.mxu0 0.0
        %1526 = vmatprep.subr.mxu0 0.0
        %1527 = vmatpush1.msra.mxu0 0.0
        %1528 = vmatprep.subr.mxu0 0.0
        %1529 = vmatpush1.msra.mxu0 0.0
        %1530 = vmatprep.subr.mxu0 0.0
        %1531 = vmatpush1.msra.mxu0 0.0
        %1532 = vmatprep.subr.mxu0 0.0
        %1533 = vmatpush1.msra.mxu0 0.0
        %1534 = vmatprep.subr.mxu0 0.0
        %1535 = vmatpush1.msra.mxu0 0.0
        %1536 = vmatprep.subr.mxu0 0.0
        %1537 = vmatpush1.msra.mxu0 0.0
        %1538 = vmatprep.subr.mxu0 0.0
        %1539 = vmatpush1.msra.mxu0 0.0
        %1540 = vmatprep.subr.mxu0 0.0
        %1541 = vmatpush1.msra.mxu0 0.0
        %1542 = vmatprep.subr.mxu0 0.0
        %1543 = vmatpush1.msra.mxu0 0.0
        %1544 = vmatprep.subr.mxu0 0.0
        %1545 = vmatpush1.msra.mxu0 0.0
        %1546 = vmatprep.subr.mxu0 0.0
        %1547 = vmatpush1.msra.mxu0 0.0
        %1548 = vmatprep.subr.mxu0 0.0
        %1549 = vmatpush1.msra.mxu0 0.0
        %1550 = vmatprep.subr.mxu0 0.0
        %1551 = vmatpush1.msra.mxu0 0.0
        %1552 = vmatprep.subr.mxu0 0.0
        %1553 = vmatpush1.msra.mxu0 0.0
        %1554 = vmatprep.subr.mxu0 0.0
        %1555 = vmatpush1.msra.mxu0 0.0
        %1556 = vmatprep.subr.mxu0 0.0
        %1557 = vmatpush1.msra.mxu0 0.0
        %1558 = vmatprep.subr.mxu0 0.0
        %1559 = vmatpush1.msra.mxu0 0.0
        %1560 = vmatprep.mubr.f32.mxu0 0.0
        %1561 = vmatmul.mubr.f32.gmra.mrb[0].mxu0 %v1423
        %v1562 = vpop.f32.mrb[0].mxu0
        %v1563 = vadd.f32 %v1419, %v1562
        %v1564 = vpop.f32.mrb[0].mxu0
        %v1565 = vadd.f32 %v1419, %v1564
        %1566 = vdwg.mxu0
        %v1567 = vmax.f32 %v1492, 0.0
        %v1568 = vmax.f32 %v1494, 0.0
        %v1569 = vmax.f32 %v1563, 0.0
        %v1570 = vmax.f32 %v1565, 0.0
        %v1571 = vld [vmem:[%s3] sm:$0xff]
        %v1572 = vld [vmem:[%s4] sm:$0xff]
        %1574 = vset.pattern.permute.xlu0 0
        %1575 = vperm.xlu0 %1574, %v1572
        %v1576 = vpop.permute.xlu0 %1575
        %v1579 = vsel %vm1421, %v1571, 0
        %1581 = vmatprep.subr.mxu0 %v1568
        %1582 = vmatpush1.msra.mxu0 %v1567
        %1583 = vmatprep.subr.mxu0 0.0
        %1584 = vmatpush1.msra.mxu0 0.0
        %1585 = vmatprep.subr.mxu0 0.0
        %1586 = vmatpush1.msra.mxu0 0.0
        %1587 = vmatprep.subr.mxu0 0.0
        %1588 = vmatpush1.msra.mxu0 0.0
        %1589 = vmatprep.subr.mxu0 0.0
        %1590 = vmatpush1.msra.mxu0 0.0
        %1591 = vmatprep.subr.mxu0 0.0
        %1592 = vmatpush1.msra.mxu0 0.0
        %1593 = vmatprep.subr.mxu0 0.0
        %1594 = vmatpush1.msra.mxu0 0.0
        %1595 = vmatprep.subr.mxu0 0.0
        %1596 = vmatpush1.msra.mxu0 0.0
        %1597 = vmatprep.subr.mxu0 0.0
        %1598 = vmatpush1.msra.mxu0 0.0
        %1599 = vmatprep.subr.mxu0 0.0
        %1600 = vmatpush1.msra.mxu0 0.0
        %1601 = vmatprep.subr.mxu0 0.0
        %1602 = vmatpush1.msra.mxu0 0.0
        %1603 = vmatprep.subr.mxu0 0.0
        %1604 = vmatpush1.msra.mxu0 0.0
        %1605 = vmatprep.subr.mxu0 0.0
        %1606 = vmatpush1.msra.mxu0 0.0
        %1607 = vmatprep.subr.mxu0 0.0
        %1608 = vmatpush1.msra.mxu0 0.0
        %1609 = vmatprep.subr.mxu0 0.0
        %1610 = vmatpush1.msra.mxu0 0.0
        %1611 = vmatprep.subr.mxu0 0.0
        %1612 = vmatpush1.msra.mxu0 0.0
        %1613 = vmatprep.subr.mxu0 0.0
        %1614 = vmatpush1.msra.mxu0 0.0
        %1615 = vmatprep.subr.mxu0 0.0
        %1616 = vmatpush1.msra.mxu0 0.0
        %1617 = vmatprep.subr.mxu0 0.0
        %1618 = vmatpush1.msra.mxu0 0.0
        %1619 = vmatprep.subr.mxu0 0.0
        %1620 = vmatpush1.msra.mxu0 0.0
        %1621 = vmatprep.subr.mxu0 0.0
        %1622 = vmatpush1.msra.mxu0 0.0
        %1623 = vmatprep.subr.mxu0 0.0
        %1624 = vmatpush1.msra.mxu0 0.0
        %1625 = vmatprep.subr.mxu0 0.0
        %1626 = vmatpush1.msra.mxu0 0.0
        %1627 = vmatprep.subr.mxu0 0.0
        %1628 = vmatpush1.msra.mxu0 0.0
        %1629 = vmatprep.subr.mxu0 0.0
        %1630 = vmatpush1.msra.mxu0 0.0
        %1631 = vmatprep.subr.mxu0 0.0
        %1632 = vmatpush1.msra.mxu0 0.0
        %1633 = vmatprep.subr.mxu0 0.0
        %1634 = vmatpush1.msra.mxu0 0.0
        %1635 = vmatprep.subr.mxu0 0.0
        %1636 = vmatpush1.msra.mxu0 0.0
        %1637 = vmatprep.subr.mxu0 0.0
        %1638 = vmatpush1.msra.mxu0 0.0
        %1639 = vmatprep.subr.mxu0 0.0
        %1640 = vmatpush1.msra.mxu0 0.0
        %1641 = vmatprep.subr.mxu0 0.0
        %1642 = vmatpush1.msra.mxu0 0.0
        %1643 = vmatprep.subr.mxu0 0.0
        %1644 = vmatpush1.msra.mxu0 0.0
        %1645 = vmatprep.mubr.f32.mxu0 0.0
        %1646 = vmatmul.mubr.f32.gmra.mrb[0].mxu0 %v1579
        %v1647 = vpop.f32.mrb[0].mxu0
        %v1648 = vadd.f32 %v1576, %v1647
        %v1649 = vpop.f32.mrb[0].mxu0
        %v1650 = vadd.f32 %v1576, %v1649
        %1651 = vdwg.mxu0
        %1652 = vmatprep.subr.mxu0 %v1570
        %1653 = vmatpush1.msra.mxu0 %v1569
        %1654 = vmatprep.subr.mxu0 0.0
        %1655 = vmatpush1.msra.mxu0 0.0
        %1656 = vmatprep.subr.mxu0 0.0
        %1657 = vmatpush1.msra.mxu0 0.0
        %1658 = vmatprep.subr.mxu0 0.0
        %1659 = vmatpush1.msra.mxu0 0.0
        %1660 = vmatprep.subr.mxu0 0.0
        %1661 = vmatpush1.msra.mxu0 0.0
        %1662 = vmatprep.subr.mxu0 0.0
        %1663 = vmatpush1.msra.mxu0 0.0
        %1664 = vmatprep.subr.mxu0 0.0
        %1665 = vmatpush1.msra.mxu0 0.0
        %1666 = vmatprep.subr.mxu0 0.0
        %1667 = vmatpush1.msra.mxu0 0.0
        %1668 = vmatprep.subr.mxu0 0.0
        %1669 = vmatpush1.msra.mxu0 0.0
        %1670 = vmatprep.subr.mxu0 0.0
        %1671 = vmatpush1.msra.mxu0 0.0
        %1672 = vmatprep.subr.mxu0 0.0
        %1673 = vmatpush1.msra.mxu0 0.0
        %1674 = vmatprep.subr.mxu0 0.0
        %1675 = vmatpush1.msra.mxu0 0.0
        %1676 = vmatprep.subr.mxu0 0.0
        %1677 = vmatpush1.msra.mxu0 0.0
        %1678 = vmatprep.subr.mxu0 0.0
        %1679 = vmatpush1.msra.mxu0 0.0
        %1680 = vmatprep.subr.mxu0 0.0
        %1681 = vmatpush1.msra.mxu0 0.0
        %1682 = vmatprep.subr.mxu0 0.0
        %1683 = vmatpush1.msra.mxu0 0.0
        %1684 = vmatprep.subr.mxu0 0.0
        %1685 = vmatpush1.msra.mxu0 0.0
        %1686 = vmatprep.subr.mxu0 0.0
        %1687 = vmatpush1.msra.mxu0 0.0
        %1688 = vmatprep.subr.mxu0 0.0
        %1689 = vmatpush1.msra.mxu0 0.0
        %1690 = vmatprep.subr.mxu0 0.0
        %1691 = vmatpush1.msra.mxu0 0.0
        %1692 = vmatprep.subr.mxu0 0.0
        %1693 = vmatpush1.msra.mxu0 0.0
        %1694 = vmatprep.subr.mxu0 0.0
        %1695 = vmatpush1.msra.mxu0 0.0
        %1696 = vmatprep.subr.mxu0 0.0
        %1697 = vmatpush1.msra.mxu0 0.0
        %1698 = vmatprep.subr.mxu0 0.0
        %1699 = vmatpush1.msra.mxu0 0.0
        %1700 = vmatprep.subr.mxu0 0.0
        %1701 = vmatpush1.msra.mxu0 0.0
        %1702 = vmatprep.subr.mxu0 0.0
        %1703 = vmatpush1.msra.mxu0 0.0
        %1704 = vmatprep.subr.mxu0 0.0
        %1705 = vmatpush1.msra.mxu0 0.0
        %1706 = vmatprep.subr.mxu0 0.0
        %1707 = vmatpush1.msra.mxu0 0.0
        %1708 = vmatprep.subr.mxu0 0.0
        %1709 = vmatpush1.msra.mxu0 0.0
        %1710 = vmatprep.subr.mxu0 0.0
        %1711 = vmatpush1.msra.mxu0 0.0
        %1712 = vmatprep.subr.mxu0 0.0
        %1713 = vmatpush1.msra.mxu0 0.0
        %1714 = vmatprep.subr.mxu0 0.0
        %1715 = vmatpush1.msra.mxu0 0.0
        %1716 = vmatprep.mubr.f32.mxu0 0.0
        %1717 = vmatmul.mubr.f32.gmra.mrb[0].mxu0 %v1579
        %v1718 = vpop.f32.mrb[0].mxu0
        %v1719 = vadd.f32 %v1576, %v1718
        %v1720 = vpop.f32.mrb[0].mxu0
        %v1721 = vadd.f32 %v1576, %v1720
        %1722 = vdwg.mxu0
        %v1723 = vmax.f32 %v1648, 0.0
        %v1724 = vmax.f32 %v1650, 0.0
        %v1725 = vmax.f32 %v1719, 0.0
        %v1726 = vmax.f32 %v1721, 0.0
        %v1727 = vld [vmem:[#allocation2] sm:$0xff]
        %v1728 = vld [vmem:[#allocation2 + $0x8] sm:$0xff]
        %v1729 = vld [vmem:[#allocation2 + $0x10] sm:$0xff]
        %v1730 = vld [vmem:[#allocation2 + $0x18] sm:$0xff]
        %v1731 = vld [vmem:[#allocation2 + $0x20] sm:$0xff]
        %v1732 = vld [vmem:[#allocation2 + $0x28] sm:$0xff]
        %v1733 = vld [vmem:[#allocation2 + $0x30] sm:$0xff]
        %v1734 = vld [vmem:[#allocation2 + $0x38] sm:$0xff]
        %1735 = vxpose.xlu0.b32.start [1/16] %v1727, 128
        %1736 = vxpose.xlu0.b32.cont [2/16] 0.0, 128
        %1737 = vxpose.xlu0.b32.cont [3/16] 0.0, 128
        %1738 = vxpose.xlu0.b32.cont [4/16] 0.0, 128
        %1739 = vxpose.xlu0.b32.cont [5/16] 0.0, 128
        %1740 = vxpose.xlu0.b32.cont [6/16] 0.0, 128
        %1741 = vxpose.xlu0.b32.cont [7/16] 0.0, 128
        %1742 = vxpose.xlu0.b32.cont [8/16] 0.0, 128
        %1743 = vxpose.xlu0.b32.cont [9/16] 0.0, 128
        %1744 = vxpose.xlu0.b32.cont [10/16] 0.0, 128
        %1745 = vxpose.xlu0.b32.cont [11/16] 0.0, 128
        %1746 = vxpose.xlu0.b32.cont [12/16] 0.0, 128
        %1747 = vxpose.xlu0.b32.cont [13/16] 0.0, 128
        %1748 = vxpose.xlu0.b32.cont [14/16] 0.0, 128
        %1749 = vxpose.xlu0.b32.cont [15/16] 0.0, 128
        %1750 = vxpose.xlu0.b32.end [16/16] 0.0, 128
        %v1751 = vpop.trf.xlu0
        %v1752 = vpop.trf.xlu0
        %v1753 = vpop.trf.xlu0
        %v1754 = vpop.trf.xlu0
        %v1755 = vpop.trf.xlu0
        %v1756 = vpop.trf.xlu0
        %v1757 = vpop.trf.xlu0
        %v1758 = vpop.trf.xlu0
        %v1759 = vpop.trf.xlu0
        %v1760 = vpop.trf.xlu0
        %v1761 = vpop.trf.xlu0
        %v1762 = vpop.trf.xlu0
        %v1763 = vpop.trf.xlu0
        %v1764 = vpop.trf.xlu0
        %v1765 = vpop.trf.xlu0
        %v1766 = vpop.trf.xlu0
        %1767 = vxpose.xlu0.b32.start [1/16] %v1728, 128
        %1768 = vxpose.xlu0.b32.cont [2/16] 0.0, 128
        %1769 = vxpose.xlu0.b32.cont [3/16] 0.0, 128
        %1770 = vxpose.xlu0.b32.cont [4/16] 0.0, 128
        %1771 = vxpose.xlu0.b32.cont [5/16] 0.0, 128
        %1772 = vxpose.xlu0.b32.cont [6/16] 0.0, 128
        %1773 = vxpose.xlu0.b32.cont [7/16] 0.0, 128
        %1774 = vxpose.xlu0.b32.cont [8/16] 0.0, 128
        %1775 = vxpose.xlu0.b32.cont [9/16] 0.0, 128
        %1776 = vxpose.xlu0.b32.cont [10/16] 0.0, 128
        %1777 = vxpose.xlu0.b32.cont [11/16] 0.0, 128
        %1778 = vxpose.xlu0.b32.cont [12/16] 0.0, 128
        %1779 = vxpose.xlu0.b32.cont [13/16] 0.0, 128
        %1780 = vxpose.xlu0.b32.cont [14/16] 0.0, 128
        %1781 = vxpose.xlu0.b32.cont [15/16] 0.0, 128
        %1782 = vxpose.xlu0.b32.end [16/16] 0.0, 128
        %v1783 = vpop.trf.xlu0
        %v1784 = vpop.trf.xlu0
        %v1785 = vpop.trf.xlu0
        %v1786 = vpop.trf.xlu0
        %v1787 = vpop.trf.xlu0
        %v1788 = vpop.trf.xlu0
        %v1789 = vpop.trf.xlu0
        %v1790 = vpop.trf.xlu0
        %v1791 = vpop.trf.xlu0
        %v1792 = vpop.trf.xlu0
        %v1793 = vpop.trf.xlu0
        %v1794 = vpop.trf.xlu0
        %v1795 = vpop.trf.xlu0
        %v1796 = vpop.trf.xlu0
        %v1797 = vpop.trf.xlu0
        %v1798 = vpop.trf.xlu0
        %1799 = vxpose.xlu0.b32.start [1/16] %v1729, 128
        %1800 = vxpose.xlu0.b32.cont [2/16] 0.0, 128
        %1801 = vxpose.xlu0.b32.cont [3/16] 0.0, 128
        %1802 = vxpose.xlu0.b32.cont [4/16] 0.0, 128
        %1803 = vxpose.xlu0.b32.cont [5/16] 0.0, 128
        %1804 = vxpose.xlu0.b32.cont [6/16] 0.0, 128
        %1805 = vxpose.xlu0.b32.cont [7/16] 0.0, 128
        %1806 = vxpose.xlu0.b32.cont [8/16] 0.0, 128
        %1807 = vxpose.xlu0.b32.cont [9/16] 0.0, 128
        %1808 = vxpose.xlu0.b32.cont [10/16] 0.0, 128
        %1809 = vxpose.xlu0.b32.cont [11/16] 0.0, 128
        %1810 = vxpose.xlu0.b32.cont [12/16] 0.0, 128
        %1811 = vxpose.xlu0.b32.cont [13/16] 0.0, 128
        %1812 = vxpose.xlu0.b32.cont [14/16] 0.0, 128
        %1813 = vxpose.xlu0.b32.cont [15/16] 0.0, 128
        %1814 = vxpose.xlu0.b32.end [16/16] 0.0, 128
        %v1815 = vpop.trf.xlu0
        %v1816 = vpop.trf.xlu0
        %v1817 = vpop.trf.xlu0
        %v1818 = vpop.trf.xlu0
        %v1819 = vpop.trf.xlu0
        %v1820 = vpop.trf.xlu0
        %v1821 = vpop.trf.xlu0
        %v1822 = vpop.trf.xlu0
        %v1823 = vpop.trf.xlu0
        %v1824 = vpop.trf.xlu0
        %v1825 = vpop.trf.xlu0
        %v1826 = vpop.trf.xlu0
        %v1827 = vpop.trf.xlu0
        %v1828 = vpop.trf.xlu0
        %v1829 = vpop.trf.xlu0
        %v1830 = vpop.trf.xlu0
        %1831 = vxpose.xlu0.b32.start [1/16] %v1730, 128
        %1832 = vxpose.xlu0.b32.cont [2/16] 0.0, 128
        %1833 = vxpose.xlu0.b32.cont [3/16] 0.0, 128
        %1834 = vxpose.xlu0.b32.cont [4/16] 0.0, 128
        %1835 = vxpose.xlu0.b32.cont [5/16] 0.0, 128
        %1836 = vxpose.xlu0.b32.cont [6/16] 0.0, 128
        %1837 = vxpose.xlu0.b32.cont [7/16] 0.0, 128
        %1838 = vxpose.xlu0.b32.cont [8/16] 0.0, 128
        %1839 = vxpose.xlu0.b32.cont [9/16] 0.0, 128
        %1840 = vxpose.xlu0.b32.cont [10/16] 0.0, 128
        %1841 = vxpose.xlu0.b32.cont [11/16] 0.0, 128
        %1842 = vxpose.xlu0.b32.cont [12/16] 0.0, 128
        %1843 = vxpose.xlu0.b32.cont [13/16] 0.0, 128
        %1844 = vxpose.xlu0.b32.cont [14/16] 0.0, 128
        %1845 = vxpose.xlu0.b32.cont [15/16] 0.0, 128
        %1846 = vxpose.xlu0.b32.end [16/16] 0.0, 128
        %v1847 = vpop.trf.xlu0
        %v1848 = vpop.trf.xlu0
        %v1849 = vpop.trf.xlu0
        %v1850 = vpop.trf.xlu0
        %v1851 = vpop.trf.xlu0
        %v1852 = vpop.trf.xlu0
        %v1853 = vpop.trf.xlu0
        %v1854 = vpop.trf.xlu0
        %v1855 = vpop.trf.xlu0
        %v1856 = vpop.trf.xlu0
        %v1857 = vpop.trf.xlu0
        %v1858 = vpop.trf.xlu0
        %v1859 = vpop.trf.xlu0
        %v1860 = vpop.trf.xlu0
        %v1861 = vpop.trf.xlu0
        %v1862 = vpop.trf.xlu0
        %1863 = vxpose.xlu0.b32.start [1/16] %v1731, 128
        %1864 = vxpose.xlu0.b32.cont [2/16] 0.0, 128
        %1865 = vxpose.xlu0.b32.cont [3/16] 0.0, 128
        %1866 = vxpose.xlu0.b32.cont [4/16] 0.0, 128
        %1867 = vxpose.xlu0.b32.cont [5/16] 0.0, 128
        %1868 = vxpose.xlu0.b32.cont [6/16] 0.0, 128
        %1869 = vxpose.xlu0.b32.cont [7/16] 0.0, 128
        %1870 = vxpose.xlu0.b32.cont [8/16] 0.0, 128
        %1871 = vxpose.xlu0.b32.cont [9/16] 0.0, 128
        %1872 = vxpose.xlu0.b32.cont [10/16] 0.0, 128
        %1873 = vxpose.xlu0.b32.cont [11/16] 0.0, 128
        %1874 = vxpose.xlu0.b32.cont [12/16] 0.0, 128
        %1875 = vxpose.xlu0.b32.cont [13/16] 0.0, 128
        %1876 = vxpose.xlu0.b32.cont [14/16] 0.0, 128
        %1877 = vxpose.xlu0.b32.cont [15/16] 0.0, 128
        %1878 = vxpose.xlu0.b32.end [16/16] 0.0, 128
        %v1879 = vpop.trf.xlu0
        %v1880 = vpop.trf.xlu0
        %v1881 = vpop.trf.xlu0
        %v1882 = vpop.trf.xlu0
        %v1883 = vpop.trf.xlu0
        %v1884 = vpop.trf.xlu0
        %v1885 = vpop.trf.xlu0
        %v1886 = vpop.trf.xlu0
        %v1887 = vpop.trf.xlu0
        %v1888 = vpop.trf.xlu0
        %v1889 = vpop.trf.xlu0
        %v1890 = vpop.trf.xlu0
        %v1891 = vpop.trf.xlu0
        %v1892 = vpop.trf.xlu0
        %v1893 = vpop.trf.xlu0
        %v1894 = vpop.trf.xlu0
        %1895 = vxpose.xlu0.b32.start [1/16] %v1732, 128
        %1896 = vxpose.xlu0.b32.cont [2/16] 0.0, 128
        %1897 = vxpose.xlu0.b32.cont [3/16] 0.0, 128
        %1898 = vxpose.xlu0.b32.cont [4/16] 0.0, 128
        %1899 = vxpose.xlu0.b32.cont [5/16] 0.0, 128
        %1900 = vxpose.xlu0.b32.cont [6/16] 0.0, 128
        %1901 = vxpose.xlu0.b32.cont [7/16] 0.0, 128
        %1902 = vxpose.xlu0.b32.cont [8/16] 0.0, 128
        %1903 = vxpose.xlu0.b32.cont [9/16] 0.0, 128
        %1904 = vxpose.xlu0.b32.cont [10/16] 0.0, 128
        %1905 = vxpose.xlu0.b32.cont [11/16] 0.0, 128
        %1906 = vxpose.xlu0.b32.cont [12/16] 0.0, 128
        %1907 = vxpose.xlu0.b32.cont [13/16] 0.0, 128
        %1908 = vxpose.xlu0.b32.cont [14/16] 0.0, 128
        %1909 = vxpose.xlu0.b32.cont [15/16] 0.0, 128
        %1910 = vxpose.xlu0.b32.end [16/16] 0.0, 128
        %v1911 = vpop.trf.xlu0
        %v1912 = vpop.trf.xlu0
        %v1913 = vpop.trf.xlu0
        %v1914 = vpop.trf.xlu0
        %v1915 = vpop.trf.xlu0
        %v1916 = vpop.trf.xlu0
        %v1917 = vpop.trf.xlu0
        %v1918 = vpop.trf.xlu0
        %v1919 = vpop.trf.xlu0
        %v1920 = vpop.trf.xlu0
        %v1921 = vpop.trf.xlu0
        %v1922 = vpop.trf.xlu0
        %v1923 = vpop.trf.xlu0
        %v1924 = vpop.trf.xlu0
        %v1925 = vpop.trf.xlu0
        %v1926 = vpop.trf.xlu0
        %1927 = vxpose.xlu0.b32.start [1/16] %v1733, 128
        %1928 = vxpose.xlu0.b32.cont [2/16] 0.0, 128
        %1929 = vxpose.xlu0.b32.cont [3/16] 0.0, 128
        %1930 = vxpose.xlu0.b32.cont [4/16] 0.0, 128
        %1931 = vxpose.xlu0.b32.cont [5/16] 0.0, 128
        %1932 = vxpose.xlu0.b32.cont [6/16] 0.0, 128
        %1933 = vxpose.xlu0.b32.cont [7/16] 0.0, 128
        %1934 = vxpose.xlu0.b32.cont [8/16] 0.0, 128
        %1935 = vxpose.xlu0.b32.cont [9/16] 0.0, 128
        %1936 = vxpose.xlu0.b32.cont [10/16] 0.0, 128
        %1937 = vxpose.xlu0.b32.cont [11/16] 0.0, 128
        %1938 = vxpose.xlu0.b32.cont [12/16] 0.0, 128
        %1939 = vxpose.xlu0.b32.cont [13/16] 0.0, 128
        %1940 = vxpose.xlu0.b32.cont [14/16] 0.0, 128
        %1941 = vxpose.xlu0.b32.cont [15/16] 0.0, 128
        %1942 = vxpose.xlu0.b32.end [16/16] 0.0, 128
        %v1943 = vpop.trf.xlu0
        %v1944 = vpop.trf.xlu0
        %v1945 = vpop.trf.xlu0
        %v1946 = vpop.trf.xlu0
        %v1947 = vpop.trf.xlu0
        %v1948 = vpop.trf.xlu0
        %v1949 = vpop.trf.xlu0
        %v1950 = vpop.trf.xlu0
        %v1951 = vpop.trf.xlu0
        %v1952 = vpop.trf.xlu0
        %v1953 = vpop.trf.xlu0
        %v1954 = vpop.trf.xlu0
        %v1955 = vpop.trf.xlu0
        %v1956 = vpop.trf.xlu0
        %v1957 = vpop.trf.xlu0
        %v1958 = vpop.trf.xlu0
        %1959 = vxpose.xlu0.b32.start [1/16] %v1734, 128
        %1960 = vxpose.xlu0.b32.cont [2/16] 0.0, 128
        %1961 = vxpose.xlu0.b32.cont [3/16] 0.0, 128
        %1962 = vxpose.xlu0.b32.cont [4/16] 0.0, 128
        %1963 = vxpose.xlu0.b32.cont [5/16] 0.0, 128
        %1964 = vxpose.xlu0.b32.cont [6/16] 0.0, 128
        %1965 = vxpose.xlu0.b32.cont [7/16] 0.0, 128
        %1966 = vxpose.xlu0.b32.cont [8/16] 0.0, 128
        %1967 = vxpose.xlu0.b32.cont [9/16] 0.0, 128
        %1968 = vxpose.xlu0.b32.cont [10/16] 0.0, 128
        %1969 = vxpose.xlu0.b32.cont [11/16] 0.0, 128
        %1970 = vxpose.xlu0.b32.cont [12/16] 0.0, 128
        %1971 = vxpose.xlu0.b32.cont [13/16] 0.0, 128
        %1972 = vxpose.xlu0.b32.cont [14/16] 0.0, 128
        %1973 = vxpose.xlu0.b32.cont [15/16] 0.0, 128
        %1974 = vxpose.xlu0.b32.end [16/16] 0.0, 128
        %v1975 = vpop.trf.xlu0
        %v1976 = vpop.trf.xlu0
        %v1977 = vpop.trf.xlu0
        %v1978 = vpop.trf.xlu0
        %v1979 = vpop.trf.xlu0
        %v1980 = vpop.trf.xlu0
        %v1981 = vpop.trf.xlu0
        %v1982 = vpop.trf.xlu0
        %v1983 = vpop.trf.xlu0
        %v1984 = vpop.trf.xlu0
        %v1985 = vpop.trf.xlu0
        %v1986 = vpop.trf.xlu0
        %v1987 = vpop.trf.xlu0
        %v1988 = vpop.trf.xlu0
        %v1989 = vpop.trf.xlu0
        %v1990 = vpop.trf.xlu0
        %v1992 = vsel %vm1421, %v1751, 0
        %v1995 = vsel %vm1421, %v1752, 0
        %v1998 = vsel %vm1421, %v1753, 0
        %v2001 = vsel %vm1421, %v1754, 0
        %v2004 = vsel %vm1421, %v1755, 0
        %v2007 = vsel %vm1421, %v1756, 0
        %v2010 = vsel %vm1421, %v1757, 0
        %v2013 = vsel %vm1421, %v1758, 0
        %v2016 = vsel %vm1421, %v1759, 0
        %v2019 = vsel %vm1421, %v1760, 0
        %v2022 = vsel %vm1421, %v1761, 0
        %v2025 = vsel %vm1421, %v1762, 0
        %v2028 = vsel %vm1421, %v1763, 0
        %v2031 = vsel %vm1421, %v1764, 0
        %v2034 = vsel %vm1421, %v1765, 0
        %v2037 = vsel %vm1421, %v1766, 0
        %v2040 = vsel %vm1421, %v1783, 0
        %v2043 = vsel %vm1421, %v1784, 0
        %v2046 = vsel %vm1421, %v1785, 0
        %v2049 = vsel %vm1421, %v1786, 0
        %v2052 = vsel %vm1421, %v1787, 0
        %v2055 = vsel %vm1421, %v1788, 0
        %v2058 = vsel %vm1421, %v1789, 0
        %v2061 = vsel %vm1421, %v1790, 0
        %v2064 = vsel %vm1421, %v1791, 0
        %v2067 = vsel %vm1421, %v1792, 0
        %v2070 = vsel %vm1421, %v1793, 0
        %v2073 = vsel %vm1421, %v1794, 0
        %v2076 = vsel %vm1421, %v1795, 0
        %v2079 = vsel %vm1421, %v1796, 0
        %v2082 = vsel %vm1421, %v1797, 0
        %v2085 = vsel %vm1421, %v1798, 0
        %v2088 = vsel %vm1421, %v1815, 0
        %v2091 = vsel %vm1421, %v1816, 0
        %v2094 = vsel %vm1421, %v1817, 0
        %v2097 = vsel %vm1421, %v1818, 0
        %v2100 = vsel %vm1421, %v1819, 0
        %v2103 = vsel %vm1421, %v1820, 0
        %v2106 = vsel %vm1421, %v1821, 0
        %v2109 = vsel %vm1421, %v1822, 0
        %v2112 = vsel %vm1421, %v1823, 0
        %v2115 = vsel %vm1421, %v1824, 0
        %v2118 = vsel %vm1421, %v1825, 0
        %v2121 = vsel %vm1421, %v1826, 0
        %v2124 = vsel %vm1421, %v1827, 0
        %v2127 = vsel %vm1421, %v1828, 0
        %v2130 = vsel %vm1421, %v1829, 0
        %v2133 = vsel %vm1421, %v1830, 0
        %v2136 = vsel %vm1421, %v1847, 0
        %v2139 = vsel %vm1421, %v1848, 0
        %v2142 = vsel %vm1421, %v1849, 0
        %v2145 = vsel %vm1421, %v1850, 0
        %v2148 = vsel %vm1421, %v1851, 0
        %v2151 = vsel %vm1421, %v1852, 0
        %v2154 = vsel %vm1421, %v1853, 0
        %v2157 = vsel %vm1421, %v1854, 0
        %v2160 = vsel %vm1421, %v1855, 0
        %v2163 = vsel %vm1421, %v1856, 0
        %v2166 = vsel %vm1421, %v1857, 0
        %v2169 = vsel %vm1421, %v1858, 0
        %v2172 = vsel %vm1421, %v1859, 0
        %v2175 = vsel %vm1421, %v1860, 0
        %v2178 = vsel %vm1421, %v1861, 0
        %v2181 = vsel %vm1421, %v1862, 0
        %v2184 = vsel %vm1421, %v1879, 0
        %v2187 = vsel %vm1421, %v1880, 0
        %v2190 = vsel %vm1421, %v1881, 0
        %v2193 = vsel %vm1421, %v1882, 0
        %v2196 = vsel %vm1421, %v1883, 0
        %v2199 = vsel %vm1421, %v1884, 0
        %v2202 = vsel %vm1421, %v1885, 0
        %v2205 = vsel %vm1421, %v1886, 0
        %v2208 = vsel %vm1421, %v1887, 0
        %v2211 = vsel %vm1421, %v1888, 0
        %v2214 = vsel %vm1421, %v1889, 0
        %v2217 = vsel %vm1421, %v1890, 0
        %v2220 = vsel %vm1421, %v1891, 0
        %v2223 = vsel %vm1421, %v1892, 0
        %v2226 = vsel %vm1421, %v1893, 0
        %v2229 = vsel %vm1421, %v1894, 0
        %v2232 = vsel %vm1421, %v1911, 0
        %v2235 = vsel %vm1421, %v1912, 0
        %v2238 = vsel %vm1421, %v1913, 0
        %v2241 = vsel %vm1421, %v1914, 0
        %v2244 = vsel %vm1421, %v1915, 0
        %v2247 = vsel %vm1421, %v1916, 0
        %v2250 = vsel %vm1421, %v1917, 0
        %v2253 = vsel %vm1421, %v1918, 0
        %v2256 = vsel %vm1421, %v1919, 0
        %v2259 = vsel %vm1421, %v1920, 0
        %v2262 = vsel %vm1421, %v1921, 0
        %v2265 = vsel %vm1421, %v1922, 0
        %v2268 = vsel %vm1421, %v1923, 0
        %v2271 = vsel %vm1421, %v1924, 0
        %v2274 = vsel %vm1421, %v1925, 0
        %v2277 = vsel %vm1421, %v1926, 0
        %v2280 = vsel %vm1421, %v1943, 0
        %v2283 = vsel %vm1421, %v1944, 0
        %v2286 = vsel %vm1421, %v1945, 0
        %v2289 = vsel %vm1421, %v1946, 0
        %v2292 = vsel %vm1421, %v1947, 0
        %v2295 = vsel %vm1421, %v1948, 0
        %v2298 = vsel %vm1421, %v1949, 0
        %v2301 = vsel %vm1421, %v1950, 0
        %v2304 = vsel %vm1421, %v1951, 0
        %v2307 = vsel %vm1421, %v1952, 0
        %v2310 = vsel %vm1421, %v1953, 0
        %v2313 = vsel %vm1421, %v1954, 0
        %v2316 = vsel %vm1421, %v1955, 0
        %v2319 = vsel %vm1421, %v1956, 0
        %v2322 = vsel %vm1421, %v1957, 0
        %v2325 = vsel %vm1421, %v1958, 0
        %v2328 = vsel %vm1421, %v1975, 0
        %v2331 = vsel %vm1421, %v1976, 0
        %v2334 = vsel %vm1421, %v1977, 0
        %v2337 = vsel %vm1421, %v1978, 0
        %v2340 = vsel %vm1421, %v1979, 0
        %v2343 = vsel %vm1421, %v1980, 0
        %v2346 = vsel %vm1421, %v1981, 0
        %v2349 = vsel %vm1421, %v1982, 0
        %v2352 = vsel %vm1421, %v1983, 0
        %v2355 = vsel %vm1421, %v1984, 0
        %v2358 = vsel %vm1421, %v1985, 0
        %v2361 = vsel %vm1421, %v1986, 0
        %v2364 = vsel %vm1421, %v1987, 0
        %v2367 = vsel %vm1421, %v1988, 0
        %v2370 = vsel %vm1421, %v1989, 0
        %v2373 = vsel %vm1421, %v1990, 0
        %2375 = vmatprep.subr.mxu0 %v1724
        %2376 = vmatpush1.msra.mxu0 %v1723
        %2377 = vmatprep.subr.mxu0 0.0
        %2378 = vmatpush1.msra.mxu0 0.0
        %2379 = vmatprep.subr.mxu0 0.0
        %2380 = vmatpush1.msra.mxu0 0.0
        %2381 = vmatprep.subr.mxu0 0.0
        %2382 = vmatpush1.msra.mxu0 0.0
        %2383 = vmatprep.subr.mxu0 0.0
        %2384 = vmatpush1.msra.mxu0 0.0
        %2385 = vmatprep.subr.mxu0 0.0
        %2386 = vmatpush1.msra.mxu0 0.0
        %2387 = vmatprep.subr.mxu0 0.0
        %2388 = vmatpush1.msra.mxu0 0.0
        %2389 = vmatprep.subr.mxu0 0.0
        %2390 = vmatpush1.msra.mxu0 0.0
        %2391 = vmatprep.subr.mxu0 0.0
        %2392 = vmatpush1.msra.mxu0 0.0
        %2393 = vmatprep.subr.mxu0 0.0
        %2394 = vmatpush1.msra.mxu0 0.0
        %2395 = vmatprep.subr.mxu0 0.0
        %2396 = vmatpush1.msra.mxu0 0.0
        %2397 = vmatprep.subr.mxu0 0.0
        %2398 = vmatpush1.msra.mxu0 0.0
        %2399 = vmatprep.subr.mxu0 0.0
        %2400 = vmatpush1.msra.mxu0 0.0
        %2401 = vmatprep.subr.mxu0 0.0
        %2402 = vmatpush1.msra.mxu0 0.0
        %2403 = vmatprep.subr.mxu0 0.0
        %2404 = vmatpush1.msra.mxu0 0.0
        %2405 = vmatprep.subr.mxu0 0.0
        %2406 = vmatpush1.msra.mxu0 0.0
        %2407 = vmatprep.subr.mxu0 0.0
        %2408 = vmatpush1.msra.mxu0 0.0
        %2409 = vmatprep.subr.mxu0 0.0
        %2410 = vmatpush1.msra.mxu0 0.0
        %2411 = vmatprep.subr.mxu0 0.0
        %2412 = vmatpush1.msra.mxu0 0.0
        %2413 = vmatprep.subr.mxu0 0.0
        %2414 = vmatpush1.msra.mxu0 0.0
        %2415 = vmatprep.subr.mxu0 0.0
        %2416 = vmatpush1.msra.mxu0 0.0
        %2417 = vmatprep.subr.mxu0 0.0
        %2418 = vmatpush1.msra.mxu0 0.0
        %2419 = vmatprep.subr.mxu0 0.0
        %2420 = vmatpush1.msra.mxu0 0.0
        %2421 = vmatprep.subr.mxu0 0.0
        %2422 = vmatpush1.msra.mxu0 0.0
        %2423 = vmatprep.subr.mxu0 0.0
        %2424 = vmatpush1.msra.mxu0 0.0
        %2425 = vmatprep.subr.mxu0 0.0
        %2426 = vmatpush1.msra.mxu0 0.0
        %2427 = vmatprep.subr.mxu0 0.0
        %2428 = vmatpush1.msra.mxu0 0.0
        %2429 = vmatprep.subr.mxu0 0.0
        %2430 = vmatpush1.msra.mxu0 0.0
        %2431 = vmatprep.subr.mxu0 0.0
        %2432 = vmatpush1.msra.mxu0 0.0
        %2433 = vmatprep.subr.mxu0 0.0
        %2434 = vmatpush1.msra.mxu0 0.0
        %2435 = vmatprep.subr.mxu0 0.0
        %2436 = vmatpush1.msra.mxu0 0.0
        %2437 = vmatprep.subr.mxu0 0.0
        %2438 = vmatpush1.msra.mxu0 0.0
        %2439 = vmatprep.mubr.f32.mxu0 0.0
        %2440 = vmatmul.mubr.f32.gmra.mrb[0].mxu0 %v1992
        %v2441 = vpop.f32.mrb[0].mxu0
        %v2442 = vadd.f32 0.0, %v2441
        %v2443 = vpop.f32.mrb[0].mxu0
        %v2444 = vadd.f32 0.0, %v2443
        %2445 = vmatprep.mubr.f32.mxu0 0.0
        %2446 = vmatmul.mubr.f32.gmra.mrb[0].mxu0 %v1995
        %v2447 = vpop.f32.mrb[0].mxu0
        %v2448 = vadd.f32 0.0, %v2447
        %v2449 = vpop.f32.mrb[0].mxu0
        %v2450 = vadd.f32 0.0, %v2449
        %2451 = vmatprep.mubr.f32.mxu0 0.0
        %2452 = vmatmul.mubr.f32.gmra.mrb[0].mxu0 %v1998
        %v2453 = vpop.f32.mrb[0].mxu0
        %v2454 = vadd.f32 0.0, %v2453
        %v2455 = vpop.f32.mrb[0].mxu0
        %v2456 = vadd.f32 0.0, %v2455
        %2457 = vmatprep.mubr.f32.mxu0 0.0
        %2458 = vmatmul.mubr.f32.gmra.mrb[0].mxu0 %v2001
        %v2459 = vpop.f32.mrb[0].mxu0
        %v2460 = vadd.f32 0.0, %v2459
        %v2461 = vpop.f32.mrb[0].mxu0
        %v2462 = vadd.f32 0.0, %v2461
        %2463 = vmatprep.mubr.f32.mxu0 0.0
        %2464 = vmatmul.mubr.f32.gmra.mrb[0].mxu0 %v2004
        %v2465 = vpop.f32.mrb[0].mxu0
        %v2466 = vadd.f32 0.0, %v2465
        %v2467 = vpop.f32.mrb[0].mxu0
        %v2468 = vadd.f32 0.0, %v2467
        %2469 = vmatprep.mubr.f32.mxu0 0.0
        %2470 = vmatmul.mubr.f32.gmra.mrb[0].mxu0 %v2007
        %v2471 = vpop.f32.mrb[0].mxu0
        %v2472 = vadd.f32 0.0, %v2471
        %v2473 = vpop.f32.mrb[0].mxu0
        %v2474 = vadd.f32 0.0, %v2473
        %2475 = vmatprep.mubr.f32.mxu0 0.0
        %2476 = vmatmul.mubr.f32.gmra.mrb[0].mxu0 %v2010
        %v2477 = vpop.f32.mrb[0].mxu0
        %v2478 = vadd.f32 0.0, %v2477
        %v2479 = vpop.f32.mrb[0].mxu0
        %v2480 = vadd.f32 0.0, %v2479
        %2481 = vmatprep.mubr.f32.mxu0 0.0
        %2482 = vmatmul.mubr.f32.gmra.mrb[0].mxu0 %v2013
        %v2483 = vpop.f32.mrb[0].mxu0
        %v2484 = vadd.f32 0.0, %v2483
        %v2485 = vpop.f32.mrb[0].mxu0
        %v2486 = vadd.f32 0.0, %v2485
        %2487 = vmatprep.mubr.f32.mxu0 0.0
        %2488 = vmatmul.mubr.f32.gmra.mrb[0].mxu0 %v2016
        %v2489 = vpop.f32.mrb[0].mxu0
        %v2490 = vadd.f32 0.0, %v2489
        %v2491 = vpop.f32.mrb[0].mxu0
        %v2492 = vadd.f32 0.0, %v2491
        %2493 = vmatprep.mubr.f32.mxu0 0.0
        %2494 = vmatmul.mubr.f32.gmra.mrb[0].mxu0 %v2019
        %v2495 = vpop.f32.mrb[0].mxu0
        %v2496 = vadd.f32 0.0, %v2495
        %v2497 = vpop.f32.mrb[0].mxu0
        %v2498 = vadd.f32 0.0, %v2497
        %2499 = vmatprep.mubr.f32.mxu0 0.0
        %2500 = vmatmul.mubr.f32.gmra.mrb[0].mxu0 %v2022
        %v2501 = vpop.f32.mrb[0].mxu0
        %v2502 = vadd.f32 0.0, %v2501
        %v2503 = vpop.f32.mrb[0].mxu0
        %v2504 = vadd.f32 0.0, %v2503
        %2505 = vmatprep.mubr.f32.mxu0 0.0
        %2506 = vmatmul.mubr.f32.gmra.mrb[0].mxu0 %v2025
        %v2507 = vpop.f32.mrb[0].mxu0
        %v2508 = vadd.f32 0.0, %v2507
        %v2509 = vpop.f32.mrb[0].mxu0
        %v2510 = vadd.f32 0.0, %v2509
        %2511 = vmatprep.mubr.f32.mxu0 0.0
        %2512 = vmatmul.mubr.f32.gmra.mrb[0].mxu0 %v2028
        %v2513 = vpop.f32.mrb[0].mxu0
        %v2514 = vadd.f32 0.0, %v2513
        %v2515 = vpop.f32.mrb[0].mxu0
        %v2516 = vadd.f32 0.0, %v2515
        %2517 = vmatprep.mubr.f32.mxu0 0.0
        %2518 = vmatmul.mubr.f32.gmra.mrb[0].mxu0 %v2031
        %v2519 = vpop.f32.mrb[0].mxu0
        %v2520 = vadd.f32 0.0, %v2519
        %v2521 = vpop.f32.mrb[0].mxu0
        %v2522 = vadd.f32 0.0, %v2521
        %2523 = vmatprep.mubr.f32.mxu0 0.0
        %2524 = vmatmul.mubr.f32.gmra.mrb[0].mxu0 %v2034
        %v2525 = vpop.f32.mrb[0].mxu0
        %v2526 = vadd.f32 0.0, %v2525
        %v2527 = vpop.f32.mrb[0].mxu0
        %v2528 = vadd.f32 0.0, %v2527
        %2529 = vmatprep.mubr.f32.mxu0 0.0
        %2530 = vmatmul.mubr.f32.gmra.mrb[0].mxu0 %v2037
        %v2531 = vpop.f32.mrb[0].mxu0
        %v2532 = vadd.f32 0.0, %v2531
        %v2533 = vpop.f32.mrb[0].mxu0
        %v2534 = vadd.f32 0.0, %v2533
        %2535 = vmatprep.mubr.f32.mxu0 0.0
        %2536 = vmatmul.mubr.f32.gmra.mrb[0].mxu0 %v2040
        %v2537 = vpop.f32.mrb[0].mxu0
        %v2538 = vadd.f32 0.0, %v2537
        %v2539 = vpop.f32.mrb[0].mxu0
        %v2540 = vadd.f32 0.0, %v2539
        %2541 = vmatprep.mubr.f32.mxu0 0.0
        %2542 = vmatmul.mubr.f32.gmra.mrb[0].mxu0 %v2043
        %v2543 = vpop.f32.mrb[0].mxu0
        %v2544 = vadd.f32 0.0, %v2543
        %v2545 = vpop.f32.mrb[0].mxu0
        %v2546 = vadd.f32 0.0, %v2545
        %2547 = vmatprep.mubr.f32.mxu0 0.0
        %2548 = vmatmul.mubr.f32.gmra.mrb[0].mxu0 %v2046
        %v2549 = vpop.f32.mrb[0].mxu0
        %v2550 = vadd.f32 0.0, %v2549
        %v2551 = vpop.f32.mrb[0].mxu0
        %v2552 = vadd.f32 0.0, %v2551
        %2553 = vmatprep.mubr.f32.mxu0 0.0
        %2554 = vmatmul.mubr.f32.gmra.mrb[0].mxu0 %v2049
        %v2555 = vpop.f32.mrb[0].mxu0
        %v2556 = vadd.f32 0.0, %v2555
        %v2557 = vpop.f32.mrb[0].mxu0
        %v2558 = vadd.f32 0.0, %v2557
        %2559 = vmatprep.mubr.f32.mxu0 0.0
        %2560 = vmatmul.mubr.f32.gmra.mrb[0].mxu0 %v2052
        %v2561 = vpop.f32.mrb[0].mxu0
        %v2562 = vadd.f32 0.0, %v2561
        %v2563 = vpop.f32.mrb[0].mxu0
        %v2564 = vadd.f32 0.0, %v2563
        %2565 = vmatprep.mubr.f32.mxu0 0.0
        %2566 = vmatmul.mubr.f32.gmra.mrb[0].mxu0 %v2055
        %v2567 = vpop.f32.mrb[0].mxu0
        %v2568 = vadd.f32 0.0, %v2567
        %v2569 = vpop.f32.mrb[0].mxu0
        %v2570 = vadd.f32 0.0, %v2569
        %2571 = vmatprep.mubr.f32.mxu0 0.0
        %2572 = vmatmul.mubr.f32.gmra.mrb[0].mxu0 %v2058
        %v2573 = vpop.f32.mrb[0].mxu0
        %v2574 = vadd.f32 0.0, %v2573
        %v2575 = vpop.f32.mrb[0].mxu0
        %v2576 = vadd.f32 0.0, %v2575
        %2577 = vmatprep.mubr.f32.mxu0 0.0
        %2578 = vmatmul.mubr.f32.gmra.mrb[0].mxu0 %v2061
        %v2579 = vpop.f32.mrb[0].mxu0
        %v2580 = vadd.f32 0.0, %v2579
        %v2581 = vpop.f32.mrb[0].mxu0
        %v2582 = vadd.f32 0.0, %v2581
        %2583 = vmatprep.mubr.f32.mxu0 0.0
        %2584 = vmatmul.mubr.f32.gmra.mrb[0].mxu0 %v2064
        %v2585 = vpop.f32.mrb[0].mxu0
        %v2586 = vadd.f32 0.0, %v2585
        %v2587 = vpop.f32.mrb[0].mxu0
        %v2588 = vadd.f32 0.0, %v2587
        %2589 = vmatprep.mubr.f32.mxu0 0.0
        %2590 = vmatmul.mubr.f32.gmra.mrb[0].mxu0 %v2067
        %v2591 = vpop.f32.mrb[0].mxu0
        %v2592 = vadd.f32 0.0, %v2591
        %v2593 = vpop.f32.mrb[0].mxu0
        %v2594 = vadd.f32 0.0, %v2593
        %2595 = vmatprep.mubr.f32.mxu0 0.0
        %2596 = vmatmul.mubr.f32.gmra.mrb[0].mxu0 %v2070
        %v2597 = vpop.f32.mrb[0].mxu0
        %v2598 = vadd.f32 0.0, %v2597
        %v2599 = vpop.f32.mrb[0].mxu0
        %v2600 = vadd.f32 0.0, %v2599
        %2601 = vmatprep.mubr.f32.mxu0 0.0
        %2602 = vmatmul.mubr.f32.gmra.mrb[0].mxu0 %v2073
        %v2603 = vpop.f32.mrb[0].mxu0
        %v2604 = vadd.f32 0.0, %v2603
        %v2605 = vpop.f32.mrb[0].mxu0
        %v2606 = vadd.f32 0.0, %v2605
        %2607 = vmatprep.mubr.f32.mxu0 0.0
        %2608 = vmatmul.mubr.f32.gmra.mrb[0].mxu0 %v2076
        %v2609 = vpop.f32.mrb[0].mxu0
        %v2610 = vadd.f32 0.0, %v2609
        %v2611 = vpop.f32.mrb[0].mxu0
        %v2612 = vadd.f32 0.0, %v2611
        %2613 = vmatprep.mubr.f32.mxu0 0.0
        %2614 = vmatmul.mubr.f32.gmra.mrb[0].mxu0 %v2079
        %v2615 = vpop.f32.mrb[0].mxu0
        %v2616 = vadd.f32 0.0, %v2615
        %v2617 = vpop.f32.mrb[0].mxu0
        %v2618 = vadd.f32 0.0, %v2617
        %2619 = vmatprep.mubr.f32.mxu0 0.0
        %2620 = vmatmul.mubr.f32.gmra.mrb[0].mxu0 %v2082
        %v2621 = vpop.f32.mrb[0].mxu0
        %v2622 = vadd.f32 0.0, %v2621
        %v2623 = vpop.f32.mrb[0].mxu0
        %v2624 = vadd.f32 0.0, %v2623
        %2625 = vmatprep.mubr.f32.mxu0 0.0
        %2626 = vmatmul.mubr.f32.gmra.mrb[0].mxu0 %v2085
        %v2627 = vpop.f32.mrb[0].mxu0
        %v2628 = vadd.f32 0.0, %v2627
        %v2629 = vpop.f32.mrb[0].mxu0
        %v2630 = vadd.f32 0.0, %v2629
        %2631 = vmatprep.mubr.f32.mxu0 0.0
        %2632 = vmatmul.mubr.f32.gmra.mrb[0].mxu0 %v2088
        %v2633 = vpop.f32.mrb[0].mxu0
        %v2634 = vadd.f32 0.0, %v2633
        %v2635 = vpop.f32.mrb[0].mxu0
        %v2636 = vadd.f32 0.0, %v2635
        %2637 = vmatprep.mubr.f32.mxu0 0.0
        %2638 = vmatmul.mubr.f32.gmra.mrb[0].mxu0 %v2091
        %v2639 = vpop.f32.mrb[0].mxu0
        %v2640 = vadd.f32 0.0, %v2639
        %v2641 = vpop.f32.mrb[0].mxu0
        %v2642 = vadd.f32 0.0, %v2641
        %2643 = vmatprep.mubr.f32.mxu0 0.0
        %2644 = vmatmul.mubr.f32.gmra.mrb[0].mxu0 %v2094
        %v2645 = vpop.f32.mrb[0].mxu0
        %v2646 = vadd.f32 0.0, %v2645
        %v2647 = vpop.f32.mrb[0].mxu0
        %v2648 = vadd.f32 0.0, %v2647
        %2649 = vmatprep.mubr.f32.mxu0 0.0
        %2650 = vmatmul.mubr.f32.gmra.mrb[0].mxu0 %v2097
        %v2651 = vpop.f32.mrb[0].mxu0
        %v2652 = vadd.f32 0.0, %v2651
        %v2653 = vpop.f32.mrb[0].mxu0
        %v2654 = vadd.f32 0.0, %v2653
        %2655 = vmatprep.mubr.f32.mxu0 0.0
        %2656 = vmatmul.mubr.f32.gmra.mrb[0].mxu0 %v2100
        %v2657 = vpop.f32.mrb[0].mxu0
        %v2658 = vadd.f32 0.0, %v2657
        %v2659 = vpop.f32.mrb[0].mxu0
        %v2660 = vadd.f32 0.0, %v2659
        %2661 = vmatprep.mubr.f32.mxu0 0.0
        %2662 = vmatmul.mubr.f32.gmra.mrb[0].mxu0 %v2103
        %v2663 = vpop.f32.mrb[0].mxu0
        %v2664 = vadd.f32 0.0, %v2663
        %v2665 = vpop.f32.mrb[0].mxu0
        %v2666 = vadd.f32 0.0, %v2665
        %2667 = vmatprep.mubr.f32.mxu0 0.0
        %2668 = vmatmul.mubr.f32.gmra.mrb[0].mxu0 %v2106
        %v2669 = vpop.f32.mrb[0].mxu0
        %v2670 = vadd.f32 0.0, %v2669
        %v2671 = vpop.f32.mrb[0].mxu0
        %v2672 = vadd.f32 0.0, %v2671
        %2673 = vmatprep.mubr.f32.mxu0 0.0
        %2674 = vmatmul.mubr.f32.gmra.mrb[0].mxu0 %v2109
        %v2675 = vpop.f32.mrb[0].mxu0
        %v2676 = vadd.f32 0.0, %v2675
        %v2677 = vpop.f32.mrb[0].mxu0
        %v2678 = vadd.f32 0.0, %v2677
        %2679 = vmatprep.mubr.f32.mxu0 0.0
        %2680 = vmatmul.mubr.f32.gmra.mrb[0].mxu0 %v2112
        %v2681 = vpop.f32.mrb[0].mxu0
        %v2682 = vadd.f32 0.0, %v2681
        %v2683 = vpop.f32.mrb[0].mxu0
        %v2684 = vadd.f32 0.0, %v2683
        %2685 = vmatprep.mubr.f32.mxu0 0.0
        %2686 = vmatmul.mubr.f32.gmra.mrb[0].mxu0 %v2115
        %v2687 = vpop.f32.mrb[0].mxu0
        %v2688 = vadd.f32 0.0, %v2687
        %v2689 = vpop.f32.mrb[0].mxu0
        %v2690 = vadd.f32 0.0, %v2689
        %2691 = vmatprep.mubr.f32.mxu0 0.0
        %2692 = vmatmul.mubr.f32.gmra.mrb[0].mxu0 %v2118
        %v2693 = vpop.f32.mrb[0].mxu0
        %v2694 = vadd.f32 0.0, %v2693
        %v2695 = vpop.f32.mrb[0].mxu0
        %v2696 = vadd.f32 0.0, %v2695
        %2697 = vmatprep.mubr.f32.mxu0 0.0
        %2698 = vmatmul.mubr.f32.gmra.mrb[0].mxu0 %v2121
        %v2699 = vpop.f32.mrb[0].mxu0
        %v2700 = vadd.f32 0.0, %v2699
        %v2701 = vpop.f32.mrb[0].mxu0
        %v2702 = vadd.f32 0.0, %v2701
        %2703 = vmatprep.mubr.f32.mxu0 0.0
        %2704 = vmatmul.mubr.f32.gmra.mrb[0].mxu0 %v2124
        %v2705 = vpop.f32.mrb[0].mxu0
        %v2706 = vadd.f32 0.0, %v2705
        %v2707 = vpop.f32.mrb[0].mxu0
        %v2708 = vadd.f32 0.0, %v2707
        %2709 = vmatprep.mubr.f32.mxu0 0.0
        %2710 = vmatmul.mubr.f32.gmra.mrb[0].mxu0 %v2127
        %v2711 = vpop.f32.mrb[0].mxu0
        %v2712 = vadd.f32 0.0, %v2711
        %v2713 = vpop.f32.mrb[0].mxu0
        %v2714 = vadd.f32 0.0, %v2713
        %2715 = vmatprep.mubr.f32.mxu0 0.0
        %2716 = vmatmul.mubr.f32.gmra.mrb[0].mxu0 %v2130
        %v2717 = vpop.f32.mrb[0].mxu0
        %v2718 = vadd.f32 0.0, %v2717
        %v2719 = vpop.f32.mrb[0].mxu0
        %v2720 = vadd.f32 0.0, %v2719
        %2721 = vmatprep.mubr.f32.mxu0 0.0
        %2722 = vmatmul.mubr.f32.gmra.mrb[0].mxu0 %v2133
        %v2723 = vpop.f32.mrb[0].mxu0
        %v2724 = vadd.f32 0.0, %v2723
        %v2725 = vpop.f32.mrb[0].mxu0
        %v2726 = vadd.f32 0.0, %v2725
        %2727 = vmatprep.mubr.f32.mxu0 0.0
        %2728 = vmatmul.mubr.f32.gmra.mrb[0].mxu0 %v2136
        %v2729 = vpop.f32.mrb[0].mxu0
        %v2730 = vadd.f32 0.0, %v2729
        %v2731 = vpop.f32.mrb[0].mxu0
        %v2732 = vadd.f32 0.0, %v2731
        %2733 = vmatprep.mubr.f32.mxu0 0.0
        %2734 = vmatmul.mubr.f32.gmra.mrb[0].mxu0 %v2139
        %v2735 = vpop.f32.mrb[0].mxu0
        %v2736 = vadd.f32 0.0, %v2735
        %v2737 = vpop.f32.mrb[0].mxu0
        %v2738 = vadd.f32 0.0, %v2737
        %2739 = vmatprep.mubr.f32.mxu0 0.0
        %2740 = vmatmul.mubr.f32.gmra.mrb[0].mxu0 %v2142
        %v2741 = vpop.f32.mrb[0].mxu0
        %v2742 = vadd.f32 0.0, %v2741
        %v2743 = vpop.f32.mrb[0].mxu0
        %v2744 = vadd.f32 0.0, %v2743
        %2745 = vmatprep.mubr.f32.mxu0 0.0
        %2746 = vmatmul.mubr.f32.gmra.mrb[0].mxu0 %v2145
        %v2747 = vpop.f32.mrb[0].mxu0
        %v2748 = vadd.f32 0.0, %v2747
        %v2749 = vpop.f32.mrb[0].mxu0
        %v2750 = vadd.f32 0.0, %v2749
        %2751 = vmatprep.mubr.f32.mxu0 0.0
        %2752 = vmatmul.mubr.f32.gmra.mrb[0].mxu0 %v2148
        %v2753 = vpop.f32.mrb[0].mxu0
        %v2754 = vadd.f32 0.0, %v2753
        %v2755 = vpop.f32.mrb[0].mxu0
        %v2756 = vadd.f32 0.0, %v2755
        %2757 = vmatprep.mubr.f32.mxu0 0.0
        %2758 = vmatmul.mubr.f32.gmra.mrb[0].mxu0 %v2151
        %v2759 = vpop.f32.mrb[0].mxu0
        %v2760 = vadd.f32 0.0, %v2759
        %v2761 = vpop.f32.mrb[0].mxu0
        %v2762 = vadd.f32 0.0, %v2761
        %2763 = vmatprep.mubr.f32.mxu0 0.0
        %2764 = vmatmul.mubr.f32.gmra.mrb[0].mxu0 %v2154
        %v2765 = vpop.f32.mrb[0].mxu0
        %v2766 = vadd.f32 0.0, %v2765
        %v2767 = vpop.f32.mrb[0].mxu0
        %v2768 = vadd.f32 0.0, %v2767
        %2769 = vmatprep.mubr.f32.mxu0 0.0
        %2770 = vmatmul.mubr.f32.gmra.mrb[0].mxu0 %v2157
        %v2771 = vpop.f32.mrb[0].mxu0
        %v2772 = vadd.f32 0.0, %v2771
        %v2773 = vpop.f32.mrb[0].mxu0
        %v2774 = vadd.f32 0.0, %v2773
        %2775 = vmatprep.mubr.f32.mxu0 0.0
        %2776 = vmatmul.mubr.f32.gmra.mrb[0].mxu0 %v2160
        %v2777 = vpop.f32.mrb[0].mxu0
        %v2778 = vadd.f32 0.0, %v2777
        %v2779 = vpop.f32.mrb[0].mxu0
        %v2780 = vadd.f32 0.0, %v2779
        %2781 = vmatprep.mubr.f32.mxu0 0.0
        %2782 = vmatmul.mubr.f32.gmra.mrb[0].mxu0 %v2163
        %v2783 = vpop.f32.mrb[0].mxu0
        %v2784 = vadd.f32 0.0, %v2783
        %v2785 = vpop.f32.mrb[0].mxu0
        %v2786 = vadd.f32 0.0, %v2785
        %2787 = vmatprep.mubr.f32.mxu0 0.0
        %2788 = vmatmul.mubr.f32.gmra.mrb[0].mxu0 %v2166
        %v2789 = vpop.f32.mrb[0].mxu0
        %v2790 = vadd.f32 0.0, %v2789
        %v2791 = vpop.f32.mrb[0].mxu0
        %v2792 = vadd.f32 0.0, %v2791
        %2793 = vmatprep.mubr.f32.mxu0 0.0
        %2794 = vmatmul.mubr.f32.gmra.mrb[0].mxu0 %v2169
        %v2795 = vpop.f32.mrb[0].mxu0
        %v2796 = vadd.f32 0.0, %v2795
        %v2797 = vpop.f32.mrb[0].mxu0
        %v2798 = vadd.f32 0.0, %v2797
        %2799 = vmatprep.mubr.f32.mxu0 0.0
        %2800 = vmatmul.mubr.f32.gmra.mrb[0].mxu0 %v2172
        %v2801 = vpop.f32.mrb[0].mxu0
        %v2802 = vadd.f32 0.0, %v2801
        %v2803 = vpop.f32.mrb[0].mxu0
        %v2804 = vadd.f32 0.0, %v2803
        %2805 = vmatprep.mubr.f32.mxu0 0.0
        %2806 = vmatmul.mubr.f32.gmra.mrb[0].mxu0 %v2175
        %v2807 = vpop.f32.mrb[0].mxu0
        %v2808 = vadd.f32 0.0, %v2807
        %v2809 = vpop.f32.mrb[0].mxu0
        %v2810 = vadd.f32 0.0, %v2809
        %2811 = vmatprep.mubr.f32.mxu0 0.0
        %2812 = vmatmul.mubr.f32.gmra.mrb[0].mxu0 %v2178
        %v2813 = vpop.f32.mrb[0].mxu0
        %v2814 = vadd.f32 0.0, %v2813
        %v2815 = vpop.f32.mrb[0].mxu0
        %v2816 = vadd.f32 0.0, %v2815
        %2817 = vmatprep.mubr.f32.mxu0 0.0
        %2818 = vmatmul.mubr.f32.gmra.mrb[0].mxu0 %v2181
        %v2819 = vpop.f32.mrb[0].mxu0
        %v2820 = vadd.f32 0.0, %v2819
        %v2821 = vpop.f32.mrb[0].mxu0
        %v2822 = vadd.f32 0.0, %v2821
        %2823 = vmatprep.mubr.f32.mxu0 0.0
        %2824 = vmatmul.mubr.f32.gmra.mrb[0].mxu0 %v2184
        %v2825 = vpop.f32.mrb[0].mxu0
        %v2826 = vadd.f32 0.0, %v2825
        %v2827 = vpop.f32.mrb[0].mxu0
        %v2828 = vadd.f32 0.0, %v2827
        %2829 = vmatprep.mubr.f32.mxu0 0.0
        %2830 = vmatmul.mubr.f32.gmra.mrb[0].mxu0 %v2187
        %v2831 = vpop.f32.mrb[0].mxu0
        %v2832 = vadd.f32 0.0, %v2831
        %v2833 = vpop.f32.mrb[0].mxu0
        %v2834 = vadd.f32 0.0, %v2833
        %2835 = vmatprep.mubr.f32.mxu0 0.0
        %2836 = vmatmul.mubr.f32.gmra.mrb[0].mxu0 %v2190
        %v2837 = vpop.f32.mrb[0].mxu0
        %v2838 = vadd.f32 0.0, %v2837
        %v2839 = vpop.f32.mrb[0].mxu0
        %v2840 = vadd.f32 0.0, %v2839
        %2841 = vmatprep.mubr.f32.mxu0 0.0
        %2842 = vmatmul.mubr.f32.gmra.mrb[0].mxu0 %v2193
        %v2843 = vpop.f32.mrb[0].mxu0
        %v2844 = vadd.f32 0.0, %v2843
        %v2845 = vpop.f32.mrb[0].mxu0
        %v2846 = vadd.f32 0.0, %v2845
        %2847 = vmatprep.mubr.f32.mxu0 0.0
        %2848 = vmatmul.mubr.f32.gmra.mrb[0].mxu0 %v2196
        %v2849 = vpop.f32.mrb[0].mxu0
        %v2850 = vadd.f32 0.0, %v2849
        %v2851 = vpop.f32.mrb[0].mxu0
        %v2852 = vadd.f32 0.0, %v2851
        %2853 = vmatprep.mubr.f32.mxu0 0.0
        %2854 = vmatmul.mubr.f32.gmra.mrb[0].mxu0 %v2199
        %v2855 = vpop.f32.mrb[0].mxu0
        %v2856 = vadd.f32 0.0, %v2855
        %v2857 = vpop.f32.mrb[0].mxu0
        %v2858 = vadd.f32 0.0, %v2857
        %2859 = vmatprep.mubr.f32.mxu0 0.0
        %2860 = vmatmul.mubr.f32.gmra.mrb[0].mxu0 %v2202
        %v2861 = vpop.f32.mrb[0].mxu0
        %v2862 = vadd.f32 0.0, %v2861
        %v2863 = vpop.f32.mrb[0].mxu0
        %v2864 = vadd.f32 0.0, %v2863
        %2865 = vmatprep.mubr.f32.mxu0 0.0
        %2866 = vmatmul.mubr.f32.gmra.mrb[0].mxu0 %v2205
        %v2867 = vpop.f32.mrb[0].mxu0
        %v2868 = vadd.f32 0.0, %v2867
        %v2869 = vpop.f32.mrb[0].mxu0
        %v2870 = vadd.f32 0.0, %v2869
        %2871 = vmatprep.mubr.f32.mxu0 0.0
        %2872 = vmatmul.mubr.f32.gmra.mrb[0].mxu0 %v2208
        %v2873 = vpop.f32.mrb[0].mxu0
        %v2874 = vadd.f32 0.0, %v2873
        %v2875 = vpop.f32.mrb[0].mxu0
        %v2876 = vadd.f32 0.0, %v2875
        %2877 = vmatprep.mubr.f32.mxu0 0.0
        %2878 = vmatmul.mubr.f32.gmra.mrb[0].mxu0 %v2211
        %v2879 = vpop.f32.mrb[0].mxu0
        %v2880 = vadd.f32 0.0, %v2879
        %v2881 = vpop.f32.mrb[0].mxu0
        %v2882 = vadd.f32 0.0, %v2881
        %2883 = vmatprep.mubr.f32.mxu0 0.0
        %2884 = vmatmul.mubr.f32.gmra.mrb[0].mxu0 %v2214
        %v2885 = vpop.f32.mrb[0].mxu0
        %v2886 = vadd.f32 0.0, %v2885
        %v2887 = vpop.f32.mrb[0].mxu0
        %v2888 = vadd.f32 0.0, %v2887
        %2889 = vmatprep.mubr.f32.mxu0 0.0
        %2890 = vmatmul.mubr.f32.gmra.mrb[0].mxu0 %v2217
        %v2891 = vpop.f32.mrb[0].mxu0
        %v2892 = vadd.f32 0.0, %v2891
        %v2893 = vpop.f32.mrb[0].mxu0
        %v2894 = vadd.f32 0.0, %v2893
        %2895 = vmatprep.mubr.f32.mxu0 0.0
        %2896 = vmatmul.mubr.f32.gmra.mrb[0].mxu0 %v2220
        %v2897 = vpop.f32.mrb[0].mxu0
        %v2898 = vadd.f32 0.0, %v2897
        %v2899 = vpop.f32.mrb[0].mxu0
        %v2900 = vadd.f32 0.0, %v2899
        %2901 = vmatprep.mubr.f32.mxu0 0.0
        %2902 = vmatmul.mubr.f32.gmra.mrb[0].mxu0 %v2223
        %v2903 = vpop.f32.mrb[0].mxu0
        %v2904 = vadd.f32 0.0, %v2903
        %v2905 = vpop.f32.mrb[0].mxu0
        %v2906 = vadd.f32 0.0, %v2905
        %2907 = vmatprep.mubr.f32.mxu0 0.0
        %2908 = vmatmul.mubr.f32.gmra.mrb[0].mxu0 %v2226
        %v2909 = vpop.f32.mrb[0].mxu0
        %v2910 = vadd.f32 0.0, %v2909
        %v2911 = vpop.f32.mrb[0].mxu0
        %v2912 = vadd.f32 0.0, %v2911
        %2913 = vmatprep.mubr.f32.mxu0 0.0
        %2914 = vmatmul.mubr.f32.gmra.mrb[0].mxu0 %v2229
        %v2915 = vpop.f32.mrb[0].mxu0
        %v2916 = vadd.f32 0.0, %v2915
        %v2917 = vpop.f32.mrb[0].mxu0
        %v2918 = vadd.f32 0.0, %v2917
        %2919 = vmatprep.mubr.f32.mxu0 0.0
        %2920 = vmatmul.mubr.f32.gmra.mrb[0].mxu0 %v2232
        %v2921 = vpop.f32.mrb[0].mxu0
        %v2922 = vadd.f32 0.0, %v2921
        %v2923 = vpop.f32.mrb[0].mxu0
        %v2924 = vadd.f32 0.0, %v2923
        %2925 = vmatprep.mubr.f32.mxu0 0.0
        %2926 = vmatmul.mubr.f32.gmra.mrb[0].mxu0 %v2235
        %v2927 = vpop.f32.mrb[0].mxu0
        %v2928 = vadd.f32 0.0, %v2927
        %v2929 = vpop.f32.mrb[0].mxu0
        %v2930 = vadd.f32 0.0, %v2929
        %2931 = vmatprep.mubr.f32.mxu0 0.0
        %2932 = vmatmul.mubr.f32.gmra.mrb[0].mxu0 %v2238
        %v2933 = vpop.f32.mrb[0].mxu0
        %v2934 = vadd.f32 0.0, %v2933
        %v2935 = vpop.f32.mrb[0].mxu0
        %v2936 = vadd.f32 0.0, %v2935
        %2937 = vmatprep.mubr.f32.mxu0 0.0
        %2938 = vmatmul.mubr.f32.gmra.mrb[0].mxu0 %v2241
        %v2939 = vpop.f32.mrb[0].mxu0
        %v2940 = vadd.f32 0.0, %v2939
        %v2941 = vpop.f32.mrb[0].mxu0
        %v2942 = vadd.f32 0.0, %v2941
        %2943 = vmatprep.mubr.f32.mxu0 0.0
        %2944 = vmatmul.mubr.f32.gmra.mrb[0].mxu0 %v2244
        %v2945 = vpop.f32.mrb[0].mxu0
        %v2946 = vadd.f32 0.0, %v2945
        %v2947 = vpop.f32.mrb[0].mxu0
        %v2948 = vadd.f32 0.0, %v2947
        %2949 = vmatprep.mubr.f32.mxu0 0.0
        %2950 = vmatmul.mubr.f32.gmra.mrb[0].mxu0 %v2247
        %v2951 = vpop.f32.mrb[0].mxu0
        %v2952 = vadd.f32 0.0, %v2951
        %v2953 = vpop.f32.mrb[0].mxu0
        %v2954 = vadd.f32 0.0, %v2953
        %2955 = vmatprep.mubr.f32.mxu0 0.0
        %2956 = vmatmul.mubr.f32.gmra.mrb[0].mxu0 %v2250
        %v2957 = vpop.f32.mrb[0].mxu0
        %v2958 = vadd.f32 0.0, %v2957
        %v2959 = vpop.f32.mrb[0].mxu0
        %v2960 = vadd.f32 0.0, %v2959
        %2961 = vmatprep.mubr.f32.mxu0 0.0
        %2962 = vmatmul.mubr.f32.gmra.mrb[0].mxu0 %v2253
        %v2963 = vpop.f32.mrb[0].mxu0
        %v2964 = vadd.f32 0.0, %v2963
        %v2965 = vpop.f32.mrb[0].mxu0
        %v2966 = vadd.f32 0.0, %v2965
        %2967 = vmatprep.mubr.f32.mxu0 0.0
        %2968 = vmatmul.mubr.f32.gmra.mrb[0].mxu0 %v2256
        %v2969 = vpop.f32.mrb[0].mxu0
        %v2970 = vadd.f32 0.0, %v2969
        %v2971 = vpop.f32.mrb[0].mxu0
        %v2972 = vadd.f32 0.0, %v2971
        %2973 = vmatprep.mubr.f32.mxu0 0.0
        %2974 = vmatmul.mubr.f32.gmra.mrb[0].mxu0 %v2259
        %v2975 = vpop.f32.mrb[0].mxu0
        %v2976 = vadd.f32 0.0, %v2975
        %v2977 = vpop.f32.mrb[0].mxu0
        %v2978 = vadd.f32 0.0, %v2977
        %2979 = vmatprep.mubr.f32.mxu0 0.0
        %2980 = vmatmul.mubr.f32.gmra.mrb[0].mxu0 %v2262
        %v2981 = vpop.f32.mrb[0].mxu0
        %v2982 = vadd.f32 0.0, %v2981
        %v2983 = vpop.f32.mrb[0].mxu0
        %v2984 = vadd.f32 0.0, %v2983
        %2985 = vmatprep.mubr.f32.mxu0 0.0
        %2986 = vmatmul.mubr.f32.gmra.mrb[0].mxu0 %v2265
        %v2987 = vpop.f32.mrb[0].mxu0
        %v2988 = vadd.f32 0.0, %v2987
        %v2989 = vpop.f32.mrb[0].mxu0
        %v2990 = vadd.f32 0.0, %v2989
        %2991 = vmatprep.mubr.f32.mxu0 0.0
        %2992 = vmatmul.mubr.f32.gmra.mrb[0].mxu0 %v2268
        %v2993 = vpop.f32.mrb[0].mxu0
        %v2994 = vadd.f32 0.0, %v2993
        %v2995 = vpop.f32.mrb[0].mxu0
        %v2996 = vadd.f32 0.0, %v2995
        %2997 = vmatprep.mubr.f32.mxu0 0.0
        %2998 = vmatmul.mubr.f32.gmra.mrb[0].mxu0 %v2271
        %v2999 = vpop.f32.mrb[0].mxu0
        %v3000 = vadd.f32 0.0, %v2999
        %v3001 = vpop.f32.mrb[0].mxu0
        %v3002 = vadd.f32 0.0, %v3001
        %3003 = vmatprep.mubr.f32.mxu0 0.0
        %3004 = vmatmul.mubr.f32.gmra.mrb[0].mxu0 %v2274
        %v3005 = vpop.f32.mrb[0].mxu0
        %v3006 = vadd.f32 0.0, %v3005
        %v3007 = vpop.f32.mrb[0].mxu0
        %v3008 = vadd.f32 0.0, %v3007
        %3009 = vmatprep.mubr.f32.mxu0 0.0
        %3010 = vmatmul.mubr.f32.gmra.mrb[0].mxu0 %v2277
        %v3011 = vpop.f32.mrb[0].mxu0
        %v3012 = vadd.f32 0.0, %v3011
        %v3013 = vpop.f32.mrb[0].mxu0
        %v3014 = vadd.f32 0.0, %v3013
        %3015 = vmatprep.mubr.f32.mxu0 0.0
        %3016 = vmatmul.mubr.f32.gmra.mrb[0].mxu0 %v2280
        %v3017 = vpop.f32.mrb[0].mxu0
        %v3018 = vadd.f32 0.0, %v3017
        %v3019 = vpop.f32.mrb[0].mxu0
        %v3020 = vadd.f32 0.0, %v3019
        %3021 = vmatprep.mubr.f32.mxu0 0.0
        %3022 = vmatmul.mubr.f32.gmra.mrb[0].mxu0 %v2283
        %v3023 = vpop.f32.mrb[0].mxu0
        %v3024 = vadd.f32 0.0, %v3023
        %v3025 = vpop.f32.mrb[0].mxu0
        %v3026 = vadd.f32 0.0, %v3025
        %3027 = vmatprep.mubr.f32.mxu0 0.0
        %3028 = vmatmul.mubr.f32.gmra.mrb[0].mxu0 %v2286
        %v3029 = vpop.f32.mrb[0].mxu0
        %v3030 = vadd.f32 0.0, %v3029
        %v3031 = vpop.f32.mrb[0].mxu0
        %v3032 = vadd.f32 0.0, %v3031
        %3033 = vmatprep.mubr.f32.mxu0 0.0
        %3034 = vmatmul.mubr.f32.gmra.mrb[0].mxu0 %v2289
        %v3035 = vpop.f32.mrb[0].mxu0
        %v3036 = vadd.f32 0.0, %v3035
        %v3037 = vpop.f32.mrb[0].mxu0
        %v3038 = vadd.f32 0.0, %v3037
        %3039 = vmatprep.mubr.f32.mxu0 0.0
        %3040 = vmatmul.mubr.f32.gmra.mrb[0].mxu0 %v2292
        %v3041 = vpop.f32.mrb[0].mxu0
        %v3042 = vadd.f32 0.0, %v3041
        %v3043 = vpop.f32.mrb[0].mxu0
        %v3044 = vadd.f32 0.0, %v3043
        %3045 = vmatprep.mubr.f32.mxu0 0.0
        %3046 = vmatmul.mubr.f32.gmra.mrb[0].mxu0 %v2295
        %v3047 = vpop.f32.mrb[0].mxu0
        %v3048 = vadd.f32 0.0, %v3047
        %v3049 = vpop.f32.mrb[0].mxu0
        %v3050 = vadd.f32 0.0, %v3049
        %3051 = vmatprep.mubr.f32.mxu0 0.0
        %3052 = vmatmul.mubr.f32.gmra.mrb[0].mxu0 %v2298
        %v3053 = vpop.f32.mrb[0].mxu0
        %v3054 = vadd.f32 0.0, %v3053
        %v3055 = vpop.f32.mrb[0].mxu0
        %v3056 = vadd.f32 0.0, %v3055
        %3057 = vmatprep.mubr.f32.mxu0 0.0
        %3058 = vmatmul.mubr.f32.gmra.mrb[0].mxu0 %v2301
        %v3059 = vpop.f32.mrb[0].mxu0
        %v3060 = vadd.f32 0.0, %v3059
        %v3061 = vpop.f32.mrb[0].mxu0
        %v3062 = vadd.f32 0.0, %v3061
        %3063 = vmatprep.mubr.f32.mxu0 0.0
        %3064 = vmatmul.mubr.f32.gmra.mrb[0].mxu0 %v2304
        %v3065 = vpop.f32.mrb[0].mxu0
        %v3066 = vadd.f32 0.0, %v3065
        %v3067 = vpop.f32.mrb[0].mxu0
        %v3068 = vadd.f32 0.0, %v3067
        %3069 = vmatprep.mubr.f32.mxu0 0.0
        %3070 = vmatmul.mubr.f32.gmra.mrb[0].mxu0 %v2307
        %v3071 = vpop.f32.mrb[0].mxu0
        %v3072 = vadd.f32 0.0, %v3071
        %v3073 = vpop.f32.mrb[0].mxu0
        %v3074 = vadd.f32 0.0, %v3073
        %3075 = vmatprep.mubr.f32.mxu0 0.0
        %3076 = vmatmul.mubr.f32.gmra.mrb[0].mxu0 %v2310
        %v3077 = vpop.f32.mrb[0].mxu0
        %v3078 = vadd.f32 0.0, %v3077
        %v3079 = vpop.f32.mrb[0].mxu0
        %v3080 = vadd.f32 0.0, %v3079
        %3081 = vmatprep.mubr.f32.mxu0 0.0
        %3082 = vmatmul.mubr.f32.gmra.mrb[0].mxu0 %v2313
        %v3083 = vpop.f32.mrb[0].mxu0
        %v3084 = vadd.f32 0.0, %v3083
        %v3085 = vpop.f32.mrb[0].mxu0
        %v3086 = vadd.f32 0.0, %v3085
        %3087 = vmatprep.mubr.f32.mxu0 0.0
        %3088 = vmatmul.mubr.f32.gmra.mrb[0].mxu0 %v2316
        %v3089 = vpop.f32.mrb[0].mxu0
        %v3090 = vadd.f32 0.0, %v3089
        %v3091 = vpop.f32.mrb[0].mxu0
        %v3092 = vadd.f32 0.0, %v3091
        %3093 = vmatprep.mubr.f32.mxu0 0.0
        %3094 = vmatmul.mubr.f32.gmra.mrb[0].mxu0 %v2319
        %v3095 = vpop.f32.mrb[0].mxu0
        %v3096 = vadd.f32 0.0, %v3095
        %v3097 = vpop.f32.mrb[0].mxu0
        %v3098 = vadd.f32 0.0, %v3097
        %3099 = vmatprep.mubr.f32.mxu0 0.0
        %3100 = vmatmul.mubr.f32.gmra.mrb[0].mxu0 %v2322
        %v3101 = vpop.f32.mrb[0].mxu0
        %v3102 = vadd.f32 0.0, %v3101
        %v3103 = vpop.f32.mrb[0].mxu0
        %v3104 = vadd.f32 0.0, %v3103
        %3105 = vmatprep.mubr.f32.mxu0 0.0
        %3106 = vmatmul.mubr.f32.gmra.mrb[0].mxu0 %v2325
        %v3107 = vpop.f32.mrb[0].mxu0
        %v3108 = vadd.f32 0.0, %v3107
        %v3109 = vpop.f32.mrb[0].mxu0
        %v3110 = vadd.f32 0.0, %v3109
        %3111 = vmatprep.mubr.f32.mxu0 0.0
        %3112 = vmatmul.mubr.f32.gmra.mrb[0].mxu0 %v2328
        %v3113 = vpop.f32.mrb[0].mxu0
        %v3114 = vadd.f32 0.0, %v3113
        %v3115 = vpop.f32.mrb[0].mxu0
        %v3116 = vadd.f32 0.0, %v3115
        %3117 = vmatprep.mubr.f32.mxu0 0.0
        %3118 = vmatmul.mubr.f32.gmra.mrb[0].mxu0 %v2331
        %v3119 = vpop.f32.mrb[0].mxu0
        %v3120 = vadd.f32 0.0, %v3119
        %v3121 = vpop.f32.mrb[0].mxu0
        %v3122 = vadd.f32 0.0, %v3121
        %3123 = vmatprep.mubr.f32.mxu0 0.0
        %3124 = vmatmul.mubr.f32.gmra.mrb[0].mxu0 %v2334
        %v3125 = vpop.f32.mrb[0].mxu0
        %v3126 = vadd.f32 0.0, %v3125
        %v3127 = vpop.f32.mrb[0].mxu0
        %v3128 = vadd.f32 0.0, %v3127
        %3129 = vmatprep.mubr.f32.mxu0 0.0
        %3130 = vmatmul.mubr.f32.gmra.mrb[0].mxu0 %v2337
        %v3131 = vpop.f32.mrb[0].mxu0
        %v3132 = vadd.f32 0.0, %v3131
        %v3133 = vpop.f32.mrb[0].mxu0
        %v3134 = vadd.f32 0.0, %v3133
        %3135 = vmatprep.mubr.f32.mxu0 0.0
        %3136 = vmatmul.mubr.f32.gmra.mrb[0].mxu0 %v2340
        %v3137 = vpop.f32.mrb[0].mxu0
        %v3138 = vadd.f32 0.0, %v3137
        %v3139 = vpop.f32.mrb[0].mxu0
        %v3140 = vadd.f32 0.0, %v3139
        %3141 = vmatprep.mubr.f32.mxu0 0.0
        %3142 = vmatmul.mubr.f32.gmra.mrb[0].mxu0 %v2343
        %v3143 = vpop.f32.mrb[0].mxu0
        %v3144 = vadd.f32 0.0, %v3143
        %v3145 = vpop.f32.mrb[0].mxu0
        %v3146 = vadd.f32 0.0, %v3145
        %3147 = vmatprep.mubr.f32.mxu0 0.0
        %3148 = vmatmul.mubr.f32.gmra.mrb[0].mxu0 %v2346
        %v3149 = vpop.f32.mrb[0].mxu0
        %v3150 = vadd.f32 0.0, %v3149
        %v3151 = vpop.f32.mrb[0].mxu0
        %v3152 = vadd.f32 0.0, %v3151
        %3153 = vmatprep.mubr.f32.mxu0 0.0
        %3154 = vmatmul.mubr.f32.gmra.mrb[0].mxu0 %v2349
        %v3155 = vpop.f32.mrb[0].mxu0
        %v3156 = vadd.f32 0.0, %v3155
        %v3157 = vpop.f32.mrb[0].mxu0
        %v3158 = vadd.f32 0.0, %v3157
        %3159 = vmatprep.mubr.f32.mxu0 0.0
        %3160 = vmatmul.mubr.f32.gmra.mrb[0].mxu0 %v2352
        %v3161 = vpop.f32.mrb[0].mxu0
        %v3162 = vadd.f32 0.0, %v3161
        %v3163 = vpop.f32.mrb[0].mxu0
        %v3164 = vadd.f32 0.0, %v3163
        %3165 = vmatprep.mubr.f32.mxu0 0.0
        %3166 = vmatmul.mubr.f32.gmra.mrb[0].mxu0 %v2355
        %v3167 = vpop.f32.mrb[0].mxu0
        %v3168 = vadd.f32 0.0, %v3167
        %v3169 = vpop.f32.mrb[0].mxu0
        %v3170 = vadd.f32 0.0, %v3169
        %3171 = vmatprep.mubr.f32.mxu0 0.0
        %3172 = vmatmul.mubr.f32.gmra.mrb[0].mxu0 %v2358
        %v3173 = vpop.f32.mrb[0].mxu0
        %v3174 = vadd.f32 0.0, %v3173
        %v3175 = vpop.f32.mrb[0].mxu0
        %v3176 = vadd.f32 0.0, %v3175
        %3177 = vmatprep.mubr.f32.mxu0 0.0
        %3178 = vmatmul.mubr.f32.gmra.mrb[0].mxu0 %v2361
        %v3179 = vpop.f32.mrb[0].mxu0
        %v3180 = vadd.f32 0.0, %v3179
        %v3181 = vpop.f32.mrb[0].mxu0
        %v3182 = vadd.f32 0.0, %v3181
        %3183 = vmatprep.mubr.f32.mxu0 0.0
        %3184 = vmatmul.mubr.f32.gmra.mrb[0].mxu0 %v2364
        %v3185 = vpop.f32.mrb[0].mxu0
        %v3186 = vadd.f32 0.0, %v3185
        %v3187 = vpop.f32.mrb[0].mxu0
        %v3188 = vadd.f32 0.0, %v3187
        %3189 = vmatprep.mubr.f32.mxu0 0.0
        %3190 = vmatmul.mubr.f32.gmra.mrb[0].mxu0 %v2367
        %v3191 = vpop.f32.mrb[0].mxu0
        %v3192 = vadd.f32 0.0, %v3191
        %v3193 = vpop.f32.mrb[0].mxu0
        %v3194 = vadd.f32 0.0, %v3193
        %3195 = vmatprep.mubr.f32.mxu0 0.0
        %3196 = vmatmul.mubr.f32.gmra.mrb[0].mxu0 %v2370
        %v3197 = vpop.f32.mrb[0].mxu0
        %v3198 = vadd.f32 0.0, %v3197
        %v3199 = vpop.f32.mrb[0].mxu0
        %v3200 = vadd.f32 0.0, %v3199
        %3201 = vmatprep.mubr.f32.mxu0 0.0
        %3202 = vmatmul.mubr.f32.gmra.mrb[0].mxu0 %v2373
        %v3203 = vpop.f32.mrb[0].mxu0
        %v3204 = vadd.f32 0.0, %v3203
        %v3205 = vpop.f32.mrb[0].mxu0
        %v3206 = vadd.f32 0.0, %v3205
        %3207 = vdwg.mxu0
        %3208 = vmatprep.subr.mxu0 %v1726
        %3209 = vmatpush1.msra.mxu0 %v1725
        %3210 = vmatprep.subr.mxu0 0.0
        %3211 = vmatpush1.msra.mxu0 0.0
        %3212 = vmatprep.subr.mxu0 0.0
        %3213 = vmatpush1.msra.mxu0 0.0
        %3214 = vmatprep.subr.mxu0 0.0
        %3215 = vmatpush1.msra.mxu0 0.0
        %3216 = vmatprep.subr.mxu0 0.0
        %3217 = vmatpush1.msra.mxu0 0.0
        %3218 = vmatprep.subr.mxu0 0.0
        %3219 = vmatpush1.msra.mxu0 0.0
        %3220 = vmatprep.subr.mxu0 0.0
        %3221 = vmatpush1.msra.mxu0 0.0
        %3222 = vmatprep.subr.mxu0 0.0
        %3223 = vmatpush1.msra.mxu0 0.0
        %3224 = vmatprep.subr.mxu0 0.0
        %3225 = vmatpush1.msra.mxu0 0.0
        %3226 = vmatprep.subr.mxu0 0.0
        %3227 = vmatpush1.msra.mxu0 0.0
        %3228 = vmatprep.subr.mxu0 0.0
        %3229 = vmatpush1.msra.mxu0 0.0
        %3230 = vmatprep.subr.mxu0 0.0
        %3231 = vmatpush1.msra.mxu0 0.0
        %3232 = vmatprep.subr.mxu0 0.0
        %3233 = vmatpush1.msra.mxu0 0.0
        %3234 = vmatprep.subr.mxu0 0.0
        %3235 = vmatpush1.msra.mxu0 0.0
        %3236 = vmatprep.subr.mxu0 0.0
        %3237 = vmatpush1.msra.mxu0 0.0
        %3238 = vmatprep.subr.mxu0 0.0
        %3239 = vmatpush1.msra.mxu0 0.0
        %3240 = vmatprep.subr.mxu0 0.0
        %3241 = vmatpush1.msra.mxu0 0.0
        %3242 = vmatprep.subr.mxu0 0.0
        %3243 = vmatpush1.msra.mxu0 0.0
        %3244 = vmatprep.subr.mxu0 0.0
        %3245 = vmatpush1.msra.mxu0 0.0
        %3246 = vmatprep.subr.mxu0 0.0
        %3247 = vmatpush1.msra.mxu0 0.0
        %3248 = vmatprep.subr.mxu0 0.0
        %3249 = vmatpush1.msra.mxu0 0.0
        %3250 = vmatprep.subr.mxu0 0.0
        %3251 = vmatpush1.msra.mxu0 0.0
        %3252 = vmatprep.subr.mxu0 0.0
        %3253 = vmatpush1.msra.mxu0 0.0
        %3254 = vmatprep.subr.mxu0 0.0
        %3255 = vmatpush1.msra.mxu0 0.0
        %3256 = vmatprep.subr.mxu0 0.0
        %3257 = vmatpush1.msra.mxu0 0.0
        %3258 = vmatprep.subr.mxu0 0.0
        %3259 = vmatpush1.msra.mxu0 0.0
        %3260 = vmatprep.subr.mxu0 0.0
        %3261 = vmatpush1.msra.mxu0 0.0
        %3262 = vmatprep.subr.mxu0 0.0
        %3263 = vmatpush1.msra.mxu0 0.0
        %3264 = vmatprep.subr.mxu0 0.0
        %3265 = vmatpush1.msra.mxu0 0.0
        %3266 = vmatprep.subr.mxu0 0.0
        %3267 = vmatpush1.msra.mxu0 0.0
        %3268 = vmatprep.subr.mxu0 0.0
        %3269 = vmatpush1.msra.mxu0 0.0
        %3270 = vmatprep.subr.mxu0 0.0
        %3271 = vmatpush1.msra.mxu0 0.0
        %3272 = vmatprep.mubr.f32.mxu0 0.0
        %3273 = vmatmul.mubr.f32.gmra.mrb[0].mxu0 %v1992
        %v3274 = vpop.f32.mrb[0].mxu0
        %v3275 = vadd.f32 0.0, %v3274
        %v3276 = vpop.f32.mrb[0].mxu0
        %v3277 = vadd.f32 0.0, %v3276
        %3278 = vmatprep.mubr.f32.mxu0 0.0
        %3279 = vmatmul.mubr.f32.gmra.mrb[0].mxu0 %v1995
        %v3280 = vpop.f32.mrb[0].mxu0
        %v3281 = vadd.f32 0.0, %v3280
        %v3282 = vpop.f32.mrb[0].mxu0
        %v3283 = vadd.f32 0.0, %v3282
        %3284 = vmatprep.mubr.f32.mxu0 0.0
        %3285 = vmatmul.mubr.f32.gmra.mrb[0].mxu0 %v1998
        %v3286 = vpop.f32.mrb[0].mxu0
        %v3287 = vadd.f32 0.0, %v3286
        %v3288 = vpop.f32.mrb[0].mxu0
        %v3289 = vadd.f32 0.0, %v3288
        %3290 = vmatprep.mubr.f32.mxu0 0.0
        %3291 = vmatmul.mubr.f32.gmra.mrb[0].mxu0 %v2001
        %v3292 = vpop.f32.mrb[0].mxu0
        %v3293 = vadd.f32 0.0, %v3292
        %v3294 = vpop.f32.mrb[0].mxu0
        %v3295 = vadd.f32 0.0, %v3294
        %3296 = vmatprep.mubr.f32.mxu0 0.0
        %3297 = vmatmul.mubr.f32.gmra.mrb[0].mxu0 %v2004
        %v3298 = vpop.f32.mrb[0].mxu0
        %v3299 = vadd.f32 0.0, %v3298
        %v3300 = vpop.f32.mrb[0].mxu0
        %v3301 = vadd.f32 0.0, %v3300
        %3302 = vmatprep.mubr.f32.mxu0 0.0
        %3303 = vmatmul.mubr.f32.gmra.mrb[0].mxu0 %v2007
        %v3304 = vpop.f32.mrb[0].mxu0
        %v3305 = vadd.f32 0.0, %v3304
        %v3306 = vpop.f32.mrb[0].mxu0
        %v3307 = vadd.f32 0.0, %v3306
        %3308 = vmatprep.mubr.f32.mxu0 0.0
        %3309 = vmatmul.mubr.f32.gmra.mrb[0].mxu0 %v2010
        %v3310 = vpop.f32.mrb[0].mxu0
        %v3311 = vadd.f32 0.0, %v3310
        %v3312 = vpop.f32.mrb[0].mxu0
        %v3313 = vadd.f32 0.0, %v3312
        %3314 = vmatprep.mubr.f32.mxu0 0.0
        %3315 = vmatmul.mubr.f32.gmra.mrb[0].mxu0 %v2013
        %v3316 = vpop.f32.mrb[0].mxu0
        %v3317 = vadd.f32 0.0, %v3316
        %v3318 = vpop.f32.mrb[0].mxu0
        %v3319 = vadd.f32 0.0, %v3318
        %3320 = vmatprep.mubr.f32.mxu0 0.0
        %3321 = vmatmul.mubr.f32.gmra.mrb[0].mxu0 %v2016
        %v3322 = vpop.f32.mrb[0].mxu0
        %v3323 = vadd.f32 0.0, %v3322
        %v3324 = vpop.f32.mrb[0].mxu0
        %v3325 = vadd.f32 0.0, %v3324
        %3326 = vmatprep.mubr.f32.mxu0 0.0
        %3327 = vmatmul.mubr.f32.gmra.mrb[0].mxu0 %v2019
        %v3328 = vpop.f32.mrb[0].mxu0
        %v3329 = vadd.f32 0.0, %v3328
        %v3330 = vpop.f32.mrb[0].mxu0
        %v3331 = vadd.f32 0.0, %v3330
        %3332 = vmatprep.mubr.f32.mxu0 0.0
        %3333 = vmatmul.mubr.f32.gmra.mrb[0].mxu0 %v2022
        %v3334 = vpop.f32.mrb[0].mxu0
        %v3335 = vadd.f32 0.0, %v3334
        %v3336 = vpop.f32.mrb[0].mxu0
        %v3337 = vadd.f32 0.0, %v3336
        %3338 = vmatprep.mubr.f32.mxu0 0.0
        %3339 = vmatmul.mubr.f32.gmra.mrb[0].mxu0 %v2025
        %v3340 = vpop.f32.mrb[0].mxu0
        %v3341 = vadd.f32 0.0, %v3340
        %v3342 = vpop.f32.mrb[0].mxu0
        %v3343 = vadd.f32 0.0, %v3342
        %3344 = vmatprep.mubr.f32.mxu0 0.0
        %3345 = vmatmul.mubr.f32.gmra.mrb[0].mxu0 %v2028
        %v3346 = vpop.f32.mrb[0].mxu0
        %v3347 = vadd.f32 0.0, %v3346
        %v3348 = vpop.f32.mrb[0].mxu0
        %v3349 = vadd.f32 0.0, %v3348
        %3350 = vmatprep.mubr.f32.mxu0 0.0
        %3351 = vmatmul.mubr.f32.gmra.mrb[0].mxu0 %v2031
        %v3352 = vpop.f32.mrb[0].mxu0
        %v3353 = vadd.f32 0.0, %v3352
        %v3354 = vpop.f32.mrb[0].mxu0
        %v3355 = vadd.f32 0.0, %v3354
        %3356 = vmatprep.mubr.f32.mxu0 0.0
        %3357 = vmatmul.mubr.f32.gmra.mrb[0].mxu0 %v2034
        %v3358 = vpop.f32.mrb[0].mxu0
        %v3359 = vadd.f32 0.0, %v3358
        %v3360 = vpop.f32.mrb[0].mxu0
        %v3361 = vadd.f32 0.0, %v3360
        %3362 = vmatprep.mubr.f32.mxu0 0.0
        %3363 = vmatmul.mubr.f32.gmra.mrb[0].mxu0 %v2037
        %v3364 = vpop.f32.mrb[0].mxu0
        %v3365 = vadd.f32 0.0, %v3364
        %v3366 = vpop.f32.mrb[0].mxu0
        %v3367 = vadd.f32 0.0, %v3366
        %3368 = vmatprep.mubr.f32.mxu0 0.0
        %3369 = vmatmul.mubr.f32.gmra.mrb[0].mxu0 %v2040
        %v3370 = vpop.f32.mrb[0].mxu0
        %v3371 = vadd.f32 0.0, %v3370
        %v3372 = vpop.f32.mrb[0].mxu0
        %v3373 = vadd.f32 0.0, %v3372
        %3374 = vmatprep.mubr.f32.mxu0 0.0
        %3375 = vmatmul.mubr.f32.gmra.mrb[0].mxu0 %v2043
        %v3376 = vpop.f32.mrb[0].mxu0
        %v3377 = vadd.f32 0.0, %v3376
        %v3378 = vpop.f32.mrb[0].mxu0
        %v3379 = vadd.f32 0.0, %v3378
        %3380 = vmatprep.mubr.f32.mxu0 0.0
        %3381 = vmatmul.mubr.f32.gmra.mrb[0].mxu0 %v2046
        %v3382 = vpop.f32.mrb[0].mxu0
        %v3383 = vadd.f32 0.0, %v3382
        %v3384 = vpop.f32.mrb[0].mxu0
        %v3385 = vadd.f32 0.0, %v3384
        %3386 = vmatprep.mubr.f32.mxu0 0.0
        %3387 = vmatmul.mubr.f32.gmra.mrb[0].mxu0 %v2049
        %v3388 = vpop.f32.mrb[0].mxu0
        %v3389 = vadd.f32 0.0, %v3388
        %v3390 = vpop.f32.mrb[0].mxu0
        %v3391 = vadd.f32 0.0, %v3390
        %3392 = vmatprep.mubr.f32.mxu0 0.0
        %3393 = vmatmul.mubr.f32.gmra.mrb[0].mxu0 %v2052
        %v3394 = vpop.f32.mrb[0].mxu0
        %v3395 = vadd.f32 0.0, %v3394
        %v3396 = vpop.f32.mrb[0].mxu0
        %v3397 = vadd.f32 0.0, %v3396
        %3398 = vmatprep.mubr.f32.mxu0 0.0
        %3399 = vmatmul.mubr.f32.gmra.mrb[0].mxu0 %v2055
        %v3400 = vpop.f32.mrb[0].mxu0
        %v3401 = vadd.f32 0.0, %v3400
        %v3402 = vpop.f32.mrb[0].mxu0
        %v3403 = vadd.f32 0.0, %v3402
        %3404 = vmatprep.mubr.f32.mxu0 0.0
        %3405 = vmatmul.mubr.f32.gmra.mrb[0].mxu0 %v2058
        %v3406 = vpop.f32.mrb[0].mxu0
        %v3407 = vadd.f32 0.0, %v3406
        %v3408 = vpop.f32.mrb[0].mxu0
        %v3409 = vadd.f32 0.0, %v3408
        %3410 = vmatprep.mubr.f32.mxu0 0.0
        %3411 = vmatmul.mubr.f32.gmra.mrb[0].mxu0 %v2061
        %v3412 = vpop.f32.mrb[0].mxu0
        %v3413 = vadd.f32 0.0, %v3412
        %v3414 = vpop.f32.mrb[0].mxu0
        %v3415 = vadd.f32 0.0, %v3414
        %3416 = vmatprep.mubr.f32.mxu0 0.0
        %3417 = vmatmul.mubr.f32.gmra.mrb[0].mxu0 %v2064
        %v3418 = vpop.f32.mrb[0].mxu0
        %v3419 = vadd.f32 0.0, %v3418
        %v3420 = vpop.f32.mrb[0].mxu0
        %v3421 = vadd.f32 0.0, %v3420
        %3422 = vmatprep.mubr.f32.mxu0 0.0
        %3423 = vmatmul.mubr.f32.gmra.mrb[0].mxu0 %v2067
        %v3424 = vpop.f32.mrb[0].mxu0
        %v3425 = vadd.f32 0.0, %v3424
        %v3426 = vpop.f32.mrb[0].mxu0
        %v3427 = vadd.f32 0.0, %v3426
        %3428 = vmatprep.mubr.f32.mxu0 0.0
        %3429 = vmatmul.mubr.f32.gmra.mrb[0].mxu0 %v2070
        %v3430 = vpop.f32.mrb[0].mxu0
        %v3431 = vadd.f32 0.0, %v3430
        %v3432 = vpop.f32.mrb[0].mxu0
        %v3433 = vadd.f32 0.0, %v3432
        %3434 = vmatprep.mubr.f32.mxu0 0.0
        %3435 = vmatmul.mubr.f32.gmra.mrb[0].mxu0 %v2073
        %v3436 = vpop.f32.mrb[0].mxu0
        %v3437 = vadd.f32 0.0, %v3436
        %v3438 = vpop.f32.mrb[0].mxu0
        %v3439 = vadd.f32 0.0, %v3438
        %3440 = vmatprep.mubr.f32.mxu0 0.0
        %3441 = vmatmul.mubr.f32.gmra.mrb[0].mxu0 %v2076
        %v3442 = vpop.f32.mrb[0].mxu0
        %v3443 = vadd.f32 0.0, %v3442
        %v3444 = vpop.f32.mrb[0].mxu0
        %v3445 = vadd.f32 0.0, %v3444
        %3446 = vmatprep.mubr.f32.mxu0 0.0
        %3447 = vmatmul.mubr.f32.gmra.mrb[0].mxu0 %v2079
        %v3448 = vpop.f32.mrb[0].mxu0
        %v3449 = vadd.f32 0.0, %v3448
        %v3450 = vpop.f32.mrb[0].mxu0
        %v3451 = vadd.f32 0.0, %v3450
        %3452 = vmatprep.mubr.f32.mxu0 0.0
        %3453 = vmatmul.mubr.f32.gmra.mrb[0].mxu0 %v2082
        %v3454 = vpop.f32.mrb[0].mxu0
        %v3455 = vadd.f32 0.0, %v3454
        %v3456 = vpop.f32.mrb[0].mxu0
        %v3457 = vadd.f32 0.0, %v3456
        %3458 = vmatprep.mubr.f32.mxu0 0.0
        %3459 = vmatmul.mubr.f32.gmra.mrb[0].mxu0 %v2085
        %v3460 = vpop.f32.mrb[0].mxu0
        %v3461 = vadd.f32 0.0, %v3460
        %v3462 = vpop.f32.mrb[0].mxu0
        %v3463 = vadd.f32 0.0, %v3462
        %3464 = vmatprep.mubr.f32.mxu0 0.0
        %3465 = vmatmul.mubr.f32.gmra.mrb[0].mxu0 %v2088
        %v3466 = vpop.f32.mrb[0].mxu0
        %v3467 = vadd.f32 0.0, %v3466
        %v3468 = vpop.f32.mrb[0].mxu0
        %v3469 = vadd.f32 0.0, %v3468
        %3470 = vmatprep.mubr.f32.mxu0 0.0
        %3471 = vmatmul.mubr.f32.gmra.mrb[0].mxu0 %v2091
        %v3472 = vpop.f32.mrb[0].mxu0
        %v3473 = vadd.f32 0.0, %v3472
        %v3474 = vpop.f32.mrb[0].mxu0
        %v3475 = vadd.f32 0.0, %v3474
        %3476 = vmatprep.mubr.f32.mxu0 0.0
        %3477 = vmatmul.mubr.f32.gmra.mrb[0].mxu0 %v2094
        %v3478 = vpop.f32.mrb[0].mxu0
        %v3479 = vadd.f32 0.0, %v3478
        %v3480 = vpop.f32.mrb[0].mxu0
        %v3481 = vadd.f32 0.0, %v3480
        %3482 = vmatprep.mubr.f32.mxu0 0.0
        %3483 = vmatmul.mubr.f32.gmra.mrb[0].mxu0 %v2097
        %v3484 = vpop.f32.mrb[0].mxu0
        %v3485 = vadd.f32 0.0, %v3484
        %v3486 = vpop.f32.mrb[0].mxu0
        %v3487 = vadd.f32 0.0, %v3486
        %3488 = vmatprep.mubr.f32.mxu0 0.0
        %3489 = vmatmul.mubr.f32.gmra.mrb[0].mxu0 %v2100
        %v3490 = vpop.f32.mrb[0].mxu0
        %v3491 = vadd.f32 0.0, %v3490
        %v3492 = vpop.f32.mrb[0].mxu0
        %v3493 = vadd.f32 0.0, %v3492
        %3494 = vmatprep.mubr.f32.mxu0 0.0
        %3495 = vmatmul.mubr.f32.gmra.mrb[0].mxu0 %v2103
        %v3496 = vpop.f32.mrb[0].mxu0
        %v3497 = vadd.f32 0.0, %v3496
        %v3498 = vpop.f32.mrb[0].mxu0
        %v3499 = vadd.f32 0.0, %v3498
        %3500 = vmatprep.mubr.f32.mxu0 0.0
        %3501 = vmatmul.mubr.f32.gmra.mrb[0].mxu0 %v2106
        %v3502 = vpop.f32.mrb[0].mxu0
        %v3503 = vadd.f32 0.0, %v3502
        %v3504 = vpop.f32.mrb[0].mxu0
        %v3505 = vadd.f32 0.0, %v3504
        %3506 = vmatprep.mubr.f32.mxu0 0.0
        %3507 = vmatmul.mubr.f32.gmra.mrb[0].mxu0 %v2109
        %v3508 = vpop.f32.mrb[0].mxu0
        %v3509 = vadd.f32 0.0, %v3508
        %v3510 = vpop.f32.mrb[0].mxu0
        %v3511 = vadd.f32 0.0, %v3510
        %3512 = vmatprep.mubr.f32.mxu0 0.0
        %3513 = vmatmul.mubr.f32.gmra.mrb[0].mxu0 %v2112
        %v3514 = vpop.f32.mrb[0].mxu0
        %v3515 = vadd.f32 0.0, %v3514
        %v3516 = vpop.f32.mrb[0].mxu0
        %v3517 = vadd.f32 0.0, %v3516
        %3518 = vmatprep.mubr.f32.mxu0 0.0
        %3519 = vmatmul.mubr.f32.gmra.mrb[0].mxu0 %v2115
        %v3520 = vpop.f32.mrb[0].mxu0
        %v3521 = vadd.f32 0.0, %v3520
        %v3522 = vpop.f32.mrb[0].mxu0
        %v3523 = vadd.f32 0.0, %v3522
        %3524 = vmatprep.mubr.f32.mxu0 0.0
        %3525 = vmatmul.mubr.f32.gmra.mrb[0].mxu0 %v2118
        %v3526 = vpop.f32.mrb[0].mxu0
        %v3527 = vadd.f32 0.0, %v3526
        %v3528 = vpop.f32.mrb[0].mxu0
        %v3529 = vadd.f32 0.0, %v3528
        %3530 = vmatprep.mubr.f32.mxu0 0.0
        %3531 = vmatmul.mubr.f32.gmra.mrb[0].mxu0 %v2121
        %v3532 = vpop.f32.mrb[0].mxu0
        %v3533 = vadd.f32 0.0, %v3532
        %v3534 = vpop.f32.mrb[0].mxu0
        %v3535 = vadd.f32 0.0, %v3534
        %3536 = vmatprep.mubr.f32.mxu0 0.0
        %3537 = vmatmul.mubr.f32.gmra.mrb[0].mxu0 %v2124
        %v3538 = vpop.f32.mrb[0].mxu0
        %v3539 = vadd.f32 0.0, %v3538
        %v3540 = vpop.f32.mrb[0].mxu0
        %v3541 = vadd.f32 0.0, %v3540
        %3542 = vmatprep.mubr.f32.mxu0 0.0
        %3543 = vmatmul.mubr.f32.gmra.mrb[0].mxu0 %v2127
        %v3544 = vpop.f32.mrb[0].mxu0
        %v3545 = vadd.f32 0.0, %v3544
        %v3546 = vpop.f32.mrb[0].mxu0
        %v3547 = vadd.f32 0.0, %v3546
        %3548 = vmatprep.mubr.f32.mxu0 0.0
        %3549 = vmatmul.mubr.f32.gmra.mrb[0].mxu0 %v2130
        %v3550 = vpop.f32.mrb[0].mxu0
        %v3551 = vadd.f32 0.0, %v3550
        %v3552 = vpop.f32.mrb[0].mxu0
        %v3553 = vadd.f32 0.0, %v3552
        %3554 = vmatprep.mubr.f32.mxu0 0.0
        %3555 = vmatmul.mubr.f32.gmra.mrb[0].mxu0 %v2133
        %v3556 = vpop.f32.mrb[0].mxu0
        %v3557 = vadd.f32 0.0, %v3556
        %v3558 = vpop.f32.mrb[0].mxu0
        %v3559 = vadd.f32 0.0, %v3558
        %3560 = vmatprep.mubr.f32.mxu0 0.0
        %3561 = vmatmul.mubr.f32.gmra.mrb[0].mxu0 %v2136
        %v3562 = vpop.f32.mrb[0].mxu0
        %v3563 = vadd.f32 0.0, %v3562
        %v3564 = vpop.f32.mrb[0].mxu0
        %v3565 = vadd.f32 0.0, %v3564
        %3566 = vmatprep.mubr.f32.mxu0 0.0
        %3567 = vmatmul.mubr.f32.gmra.mrb[0].mxu0 %v2139
        %v3568 = vpop.f32.mrb[0].mxu0
        %v3569 = vadd.f32 0.0, %v3568
        %v3570 = vpop.f32.mrb[0].mxu0
        %v3571 = vadd.f32 0.0, %v3570
        %3572 = vmatprep.mubr.f32.mxu0 0.0
        %3573 = vmatmul.mubr.f32.gmra.mrb[0].mxu0 %v2142
        %v3574 = vpop.f32.mrb[0].mxu0
        %v3575 = vadd.f32 0.0, %v3574
        %v3576 = vpop.f32.mrb[0].mxu0
        %v3577 = vadd.f32 0.0, %v3576
        %3578 = vmatprep.mubr.f32.mxu0 0.0
        %3579 = vmatmul.mubr.f32.gmra.mrb[0].mxu0 %v2145
        %v3580 = vpop.f32.mrb[0].mxu0
        %v3581 = vadd.f32 0.0, %v3580
        %v3582 = vpop.f32.mrb[0].mxu0
        %v3583 = vadd.f32 0.0, %v3582
        %3584 = vmatprep.mubr.f32.mxu0 0.0
        %3585 = vmatmul.mubr.f32.gmra.mrb[0].mxu0 %v2148
        %v3586 = vpop.f32.mrb[0].mxu0
        %v3587 = vadd.f32 0.0, %v3586
        %v3588 = vpop.f32.mrb[0].mxu0
        %v3589 = vadd.f32 0.0, %v3588
        %3590 = vmatprep.mubr.f32.mxu0 0.0
        %3591 = vmatmul.mubr.f32.gmra.mrb[0].mxu0 %v2151
        %v3592 = vpop.f32.mrb[0].mxu0
        %v3593 = vadd.f32 0.0, %v3592
        %v3594 = vpop.f32.mrb[0].mxu0
        %v3595 = vadd.f32 0.0, %v3594
        %3596 = vmatprep.mubr.f32.mxu0 0.0
        %3597 = vmatmul.mubr.f32.gmra.mrb[0].mxu0 %v2154
        %v3598 = vpop.f32.mrb[0].mxu0
        %v3599 = vadd.f32 0.0, %v3598
        %v3600 = vpop.f32.mrb[0].mxu0
        %v3601 = vadd.f32 0.0, %v3600
        %3602 = vmatprep.mubr.f32.mxu0 0.0
        %3603 = vmatmul.mubr.f32.gmra.mrb[0].mxu0 %v2157
        %v3604 = vpop.f32.mrb[0].mxu0
        %v3605 = vadd.f32 0.0, %v3604
        %v3606 = vpop.f32.mrb[0].mxu0
        %v3607 = vadd.f32 0.0, %v3606
        %3608 = vmatprep.mubr.f32.mxu0 0.0
        %3609 = vmatmul.mubr.f32.gmra.mrb[0].mxu0 %v2160
        %v3610 = vpop.f32.mrb[0].mxu0
        %v3611 = vadd.f32 0.0, %v3610
        %v3612 = vpop.f32.mrb[0].mxu0
        %v3613 = vadd.f32 0.0, %v3612
        %3614 = vmatprep.mubr.f32.mxu0 0.0
        %3615 = vmatmul.mubr.f32.gmra.mrb[0].mxu0 %v2163
        %v3616 = vpop.f32.mrb[0].mxu0
        %v3617 = vadd.f32 0.0, %v3616
        %v3618 = vpop.f32.mrb[0].mxu0
        %v3619 = vadd.f32 0.0, %v3618
        %3620 = vmatprep.mubr.f32.mxu0 0.0
        %3621 = vmatmul.mubr.f32.gmra.mrb[0].mxu0 %v2166
        %v3622 = vpop.f32.mrb[0].mxu0
        %v3623 = vadd.f32 0.0, %v3622
        %v3624 = vpop.f32.mrb[0].mxu0
        %v3625 = vadd.f32 0.0, %v3624
        %3626 = vmatprep.mubr.f32.mxu0 0.0
        %3627 = vmatmul.mubr.f32.gmra.mrb[0].mxu0 %v2169
        %v3628 = vpop.f32.mrb[0].mxu0
        %v3629 = vadd.f32 0.0, %v3628
        %v3630 = vpop.f32.mrb[0].mxu0
        %v3631 = vadd.f32 0.0, %v3630
        %3632 = vmatprep.mubr.f32.mxu0 0.0
        %3633 = vmatmul.mubr.f32.gmra.mrb[0].mxu0 %v2172
        %v3634 = vpop.f32.mrb[0].mxu0
        %v3635 = vadd.f32 0.0, %v3634
        %v3636 = vpop.f32.mrb[0].mxu0
        %v3637 = vadd.f32 0.0, %v3636
        %3638 = vmatprep.mubr.f32.mxu0 0.0
        %3639 = vmatmul.mubr.f32.gmra.mrb[0].mxu0 %v2175
        %v3640 = vpop.f32.mrb[0].mxu0
        %v3641 = vadd.f32 0.0, %v3640
        %v3642 = vpop.f32.mrb[0].mxu0
        %v3643 = vadd.f32 0.0, %v3642
        %3644 = vmatprep.mubr.f32.mxu0 0.0
        %3645 = vmatmul.mubr.f32.gmra.mrb[0].mxu0 %v2178
        %v3646 = vpop.f32.mrb[0].mxu0
        %v3647 = vadd.f32 0.0, %v3646
        %v3648 = vpop.f32.mrb[0].mxu0
        %v3649 = vadd.f32 0.0, %v3648
        %3650 = vmatprep.mubr.f32.mxu0 0.0
        %3651 = vmatmul.mubr.f32.gmra.mrb[0].mxu0 %v2181
        %v3652 = vpop.f32.mrb[0].mxu0
        %v3653 = vadd.f32 0.0, %v3652
        %v3654 = vpop.f32.mrb[0].mxu0
        %v3655 = vadd.f32 0.0, %v3654
        %3656 = vmatprep.mubr.f32.mxu0 0.0
        %3657 = vmatmul.mubr.f32.gmra.mrb[0].mxu0 %v2184
        %v3658 = vpop.f32.mrb[0].mxu0
        %v3659 = vadd.f32 0.0, %v3658
        %v3660 = vpop.f32.mrb[0].mxu0
        %v3661 = vadd.f32 0.0, %v3660
        %3662 = vmatprep.mubr.f32.mxu0 0.0
        %3663 = vmatmul.mubr.f32.gmra.mrb[0].mxu0 %v2187
        %v3664 = vpop.f32.mrb[0].mxu0
        %v3665 = vadd.f32 0.0, %v3664
        %v3666 = vpop.f32.mrb[0].mxu0
        %v3667 = vadd.f32 0.0, %v3666
        %3668 = vmatprep.mubr.f32.mxu0 0.0
        %3669 = vmatmul.mubr.f32.gmra.mrb[0].mxu0 %v2190
        %v3670 = vpop.f32.mrb[0].mxu0
        %v3671 = vadd.f32 0.0, %v3670
        %v3672 = vpop.f32.mrb[0].mxu0
        %v3673 = vadd.f32 0.0, %v3672
        %3674 = vmatprep.mubr.f32.mxu0 0.0
        %3675 = vmatmul.mubr.f32.gmra.mrb[0].mxu0 %v2193
        %v3676 = vpop.f32.mrb[0].mxu0
        %v3677 = vadd.f32 0.0, %v3676
        %v3678 = vpop.f32.mrb[0].mxu0
        %v3679 = vadd.f32 0.0, %v3678
        %3680 = vmatprep.mubr.f32.mxu0 0.0
        %3681 = vmatmul.mubr.f32.gmra.mrb[0].mxu0 %v2196
        %v3682 = vpop.f32.mrb[0].mxu0
        %v3683 = vadd.f32 0.0, %v3682
        %v3684 = vpop.f32.mrb[0].mxu0
        %v3685 = vadd.f32 0.0, %v3684
        %3686 = vmatprep.mubr.f32.mxu0 0.0
        %3687 = vmatmul.mubr.f32.gmra.mrb[0].mxu0 %v2199
        %v3688 = vpop.f32.mrb[0].mxu0
        %v3689 = vadd.f32 0.0, %v3688
        %v3690 = vpop.f32.mrb[0].mxu0
        %v3691 = vadd.f32 0.0, %v3690
        %3692 = vmatprep.mubr.f32.mxu0 0.0
        %3693 = vmatmul.mubr.f32.gmra.mrb[0].mxu0 %v2202
        %v3694 = vpop.f32.mrb[0].mxu0
        %v3695 = vadd.f32 0.0, %v3694
        %v3696 = vpop.f32.mrb[0].mxu0
        %v3697 = vadd.f32 0.0, %v3696
        %3698 = vmatprep.mubr.f32.mxu0 0.0
        %3699 = vmatmul.mubr.f32.gmra.mrb[0].mxu0 %v2205
        %v3700 = vpop.f32.mrb[0].mxu0
        %v3701 = vadd.f32 0.0, %v3700
        %v3702 = vpop.f32.mrb[0].mxu0
        %v3703 = vadd.f32 0.0, %v3702
        %3704 = vmatprep.mubr.f32.mxu0 0.0
        %3705 = vmatmul.mubr.f32.gmra.mrb[0].mxu0 %v2208
        %v3706 = vpop.f32.mrb[0].mxu0
        %v3707 = vadd.f32 0.0, %v3706
        %v3708 = vpop.f32.mrb[0].mxu0
        %v3709 = vadd.f32 0.0, %v3708
        %3710 = vmatprep.mubr.f32.mxu0 0.0
        %3711 = vmatmul.mubr.f32.gmra.mrb[0].mxu0 %v2211
        %v3712 = vpop.f32.mrb[0].mxu0
        %v3713 = vadd.f32 0.0, %v3712
        %v3714 = vpop.f32.mrb[0].mxu0
        %v3715 = vadd.f32 0.0, %v3714
        %3716 = vmatprep.mubr.f32.mxu0 0.0
        %3717 = vmatmul.mubr.f32.gmra.mrb[0].mxu0 %v2214
        %v3718 = vpop.f32.mrb[0].mxu0
        %v3719 = vadd.f32 0.0, %v3718
        %v3720 = vpop.f32.mrb[0].mxu0
        %v3721 = vadd.f32 0.0, %v3720
        %3722 = vmatprep.mubr.f32.mxu0 0.0
        %3723 = vmatmul.mubr.f32.gmra.mrb[0].mxu0 %v2217
        %v3724 = vpop.f32.mrb[0].mxu0
        %v3725 = vadd.f32 0.0, %v3724
        %v3726 = vpop.f32.mrb[0].mxu0
        %v3727 = vadd.f32 0.0, %v3726
        %3728 = vmatprep.mubr.f32.mxu0 0.0
        %3729 = vmatmul.mubr.f32.gmra.mrb[0].mxu0 %v2220
        %v3730 = vpop.f32.mrb[0].mxu0
        %v3731 = vadd.f32 0.0, %v3730
        %v3732 = vpop.f32.mrb[0].mxu0
        %v3733 = vadd.f32 0.0, %v3732
        %3734 = vmatprep.mubr.f32.mxu0 0.0
        %3735 = vmatmul.mubr.f32.gmra.mrb[0].mxu0 %v2223
        %v3736 = vpop.f32.mrb[0].mxu0
        %v3737 = vadd.f32 0.0, %v3736
        %v3738 = vpop.f32.mrb[0].mxu0
        %v3739 = vadd.f32 0.0, %v3738
        %3740 = vmatprep.mubr.f32.mxu0 0.0
        %3741 = vmatmul.mubr.f32.gmra.mrb[0].mxu0 %v2226
        %v3742 = vpop.f32.mrb[0].mxu0
        %v3743 = vadd.f32 0.0, %v3742
        %v3744 = vpop.f32.mrb[0].mxu0
        %v3745 = vadd.f32 0.0, %v3744
        %3746 = vmatprep.mubr.f32.mxu0 0.0
        %3747 = vmatmul.mubr.f32.gmra.mrb[0].mxu0 %v2229
        %v3748 = vpop.f32.mrb[0].mxu0
        %v3749 = vadd.f32 0.0, %v3748
        %v3750 = vpop.f32.mrb[0].mxu0
        %v3751 = vadd.f32 0.0, %v3750
        %3752 = vmatprep.mubr.f32.mxu0 0.0
        %3753 = vmatmul.mubr.f32.gmra.mrb[0].mxu0 %v2232
        %v3754 = vpop.f32.mrb[0].mxu0
        %v3755 = vadd.f32 0.0, %v3754
        %v3756 = vpop.f32.mrb[0].mxu0
        %v3757 = vadd.f32 0.0, %v3756
        %3758 = vmatprep.mubr.f32.mxu0 0.0
        %3759 = vmatmul.mubr.f32.gmra.mrb[0].mxu0 %v2235
        %v3760 = vpop.f32.mrb[0].mxu0
        %v3761 = vadd.f32 0.0, %v3760
        %v3762 = vpop.f32.mrb[0].mxu0
        %v3763 = vadd.f32 0.0, %v3762
        %3764 = vmatprep.mubr.f32.mxu0 0.0
        %3765 = vmatmul.mubr.f32.gmra.mrb[0].mxu0 %v2238
        %v3766 = vpop.f32.mrb[0].mxu0
        %v3767 = vadd.f32 0.0, %v3766
        %v3768 = vpop.f32.mrb[0].mxu0
        %v3769 = vadd.f32 0.0, %v3768
        %3770 = vmatprep.mubr.f32.mxu0 0.0
        %3771 = vmatmul.mubr.f32.gmra.mrb[0].mxu0 %v2241
        %v3772 = vpop.f32.mrb[0].mxu0
        %v3773 = vadd.f32 0.0, %v3772
        %v3774 = vpop.f32.mrb[0].mxu0
        %v3775 = vadd.f32 0.0, %v3774
        %3776 = vmatprep.mubr.f32.mxu0 0.0
        %3777 = vmatmul.mubr.f32.gmra.mrb[0].mxu0 %v2244
        %v3778 = vpop.f32.mrb[0].mxu0
        %v3779 = vadd.f32 0.0, %v3778
        %v3780 = vpop.f32.mrb[0].mxu0
        %v3781 = vadd.f32 0.0, %v3780
        %3782 = vmatprep.mubr.f32.mxu0 0.0
        %3783 = vmatmul.mubr.f32.gmra.mrb[0].mxu0 %v2247
        %v3784 = vpop.f32.mrb[0].mxu0
        %v3785 = vadd.f32 0.0, %v3784
        %v3786 = vpop.f32.mrb[0].mxu0
        %v3787 = vadd.f32 0.0, %v3786
        %3788 = vmatprep.mubr.f32.mxu0 0.0
        %3789 = vmatmul.mubr.f32.gmra.mrb[0].mxu0 %v2250
        %v3790 = vpop.f32.mrb[0].mxu0
        %v3791 = vadd.f32 0.0, %v3790
        %v3792 = vpop.f32.mrb[0].mxu0
        %v3793 = vadd.f32 0.0, %v3792
        %3794 = vmatprep.mubr.f32.mxu0 0.0
        %3795 = vmatmul.mubr.f32.gmra.mrb[0].mxu0 %v2253
        %v3796 = vpop.f32.mrb[0].mxu0
        %v3797 = vadd.f32 0.0, %v3796
        %v3798 = vpop.f32.mrb[0].mxu0
        %v3799 = vadd.f32 0.0, %v3798
        %3800 = vmatprep.mubr.f32.mxu0 0.0
        %3801 = vmatmul.mubr.f32.gmra.mrb[0].mxu0 %v2256
        %v3802 = vpop.f32.mrb[0].mxu0
        %v3803 = vadd.f32 0.0, %v3802
        %v3804 = vpop.f32.mrb[0].mxu0
        %v3805 = vadd.f32 0.0, %v3804
        %3806 = vmatprep.mubr.f32.mxu0 0.0
        %3807 = vmatmul.mubr.f32.gmra.mrb[0].mxu0 %v2259
        %v3808 = vpop.f32.mrb[0].mxu0
        %v3809 = vadd.f32 0.0, %v3808
        %v3810 = vpop.f32.mrb[0].mxu0
        %v3811 = vadd.f32 0.0, %v3810
        %3812 = vmatprep.mubr.f32.mxu0 0.0
        %3813 = vmatmul.mubr.f32.gmra.mrb[0].mxu0 %v2262
        %v3814 = vpop.f32.mrb[0].mxu0
        %v3815 = vadd.f32 0.0, %v3814
        %v3816 = vpop.f32.mrb[0].mxu0
        %v3817 = vadd.f32 0.0, %v3816
        %3818 = vmatprep.mubr.f32.mxu0 0.0
        %3819 = vmatmul.mubr.f32.gmra.mrb[0].mxu0 %v2265
        %v3820 = vpop.f32.mrb[0].mxu0
        %v3821 = vadd.f32 0.0, %v3820
        %v3822 = vpop.f32.mrb[0].mxu0
        %v3823 = vadd.f32 0.0, %v3822
        %3824 = vmatprep.mubr.f32.mxu0 0.0
        %3825 = vmatmul.mubr.f32.gmra.mrb[0].mxu0 %v2268
        %v3826 = vpop.f32.mrb[0].mxu0
        %v3827 = vadd.f32 0.0, %v3826
        %v3828 = vpop.f32.mrb[0].mxu0
        %v3829 = vadd.f32 0.0, %v3828
        %3830 = vmatprep.mubr.f32.mxu0 0.0
        %3831 = vmatmul.mubr.f32.gmra.mrb[0].mxu0 %v2271
        %v3832 = vpop.f32.mrb[0].mxu0
        %v3833 = vadd.f32 0.0, %v3832
        %v3834 = vpop.f32.mrb[0].mxu0
        %v3835 = vadd.f32 0.0, %v3834
        %3836 = vmatprep.mubr.f32.mxu0 0.0
        %3837 = vmatmul.mubr.f32.gmra.mrb[0].mxu0 %v2274
        %v3838 = vpop.f32.mrb[0].mxu0
        %v3839 = vadd.f32 0.0, %v3838
        %v3840 = vpop.f32.mrb[0].mxu0
        %v3841 = vadd.f32 0.0, %v3840
        %3842 = vmatprep.mubr.f32.mxu0 0.0
        %3843 = vmatmul.mubr.f32.gmra.mrb[0].mxu0 %v2277
        %v3844 = vpop.f32.mrb[0].mxu0
        %v3845 = vadd.f32 0.0, %v3844
        %v3846 = vpop.f32.mrb[0].mxu0
        %v3847 = vadd.f32 0.0, %v3846
        %3848 = vmatprep.mubr.f32.mxu0 0.0
        %3849 = vmatmul.mubr.f32.gmra.mrb[0].mxu0 %v2280
        %v3850 = vpop.f32.mrb[0].mxu0
        %v3851 = vadd.f32 0.0, %v3850
        %v3852 = vpop.f32.mrb[0].mxu0
        %v3853 = vadd.f32 0.0, %v3852
        %3854 = vmatprep.mubr.f32.mxu0 0.0
        %3855 = vmatmul.mubr.f32.gmra.mrb[0].mxu0 %v2283
        %v3856 = vpop.f32.mrb[0].mxu0
        %v3857 = vadd.f32 0.0, %v3856
        %v3858 = vpop.f32.mrb[0].mxu0
        %v3859 = vadd.f32 0.0, %v3858
        %3860 = vmatprep.mubr.f32.mxu0 0.0
        %3861 = vmatmul.mubr.f32.gmra.mrb[0].mxu0 %v2286
        %v3862 = vpop.f32.mrb[0].mxu0
        %v3863 = vadd.f32 0.0, %v3862
        %v3864 = vpop.f32.mrb[0].mxu0
        %v3865 = vadd.f32 0.0, %v3864
        %3866 = vmatprep.mubr.f32.mxu0 0.0
        %3867 = vmatmul.mubr.f32.gmra.mrb[0].mxu0 %v2289
        %v3868 = vpop.f32.mrb[0].mxu0
        %v3869 = vadd.f32 0.0, %v3868
        %v3870 = vpop.f32.mrb[0].mxu0
        %v3871 = vadd.f32 0.0, %v3870
        %3872 = vmatprep.mubr.f32.mxu0 0.0
        %3873 = vmatmul.mubr.f32.gmra.mrb[0].mxu0 %v2292
        %v3874 = vpop.f32.mrb[0].mxu0
        %v3875 = vadd.f32 0.0, %v3874
        %v3876 = vpop.f32.mrb[0].mxu0
        %v3877 = vadd.f32 0.0, %v3876
        %3878 = vmatprep.mubr.f32.mxu0 0.0
        %3879 = vmatmul.mubr.f32.gmra.mrb[0].mxu0 %v2295
        %v3880 = vpop.f32.mrb[0].mxu0
        %v3881 = vadd.f32 0.0, %v3880
        %v3882 = vpop.f32.mrb[0].mxu0
        %v3883 = vadd.f32 0.0, %v3882
        %3884 = vmatprep.mubr.f32.mxu0 0.0
        %3885 = vmatmul.mubr.f32.gmra.mrb[0].mxu0 %v2298
        %v3886 = vpop.f32.mrb[0].mxu0
        %v3887 = vadd.f32 0.0, %v3886
        %v3888 = vpop.f32.mrb[0].mxu0
        %v3889 = vadd.f32 0.0, %v3888
        %3890 = vmatprep.mubr.f32.mxu0 0.0
        %3891 = vmatmul.mubr.f32.gmra.mrb[0].mxu0 %v2301
        %v3892 = vpop.f32.mrb[0].mxu0
        %v3893 = vadd.f32 0.0, %v3892
        %v3894 = vpop.f32.mrb[0].mxu0
        %v3895 = vadd.f32 0.0, %v3894
        %3896 = vmatprep.mubr.f32.mxu0 0.0
        %3897 = vmatmul.mubr.f32.gmra.mrb[0].mxu0 %v2304
        %v3898 = vpop.f32.mrb[0].mxu0
        %v3899 = vadd.f32 0.0, %v3898
        %v3900 = vpop.f32.mrb[0].mxu0
        %v3901 = vadd.f32 0.0, %v3900
        %3902 = vmatprep.mubr.f32.mxu0 0.0
        %3903 = vmatmul.mubr.f32.gmra.mrb[0].mxu0 %v2307
        %v3904 = vpop.f32.mrb[0].mxu0
        %v3905 = vadd.f32 0.0, %v3904
        %v3906 = vpop.f32.mrb[0].mxu0
        %v3907 = vadd.f32 0.0, %v3906
        %3908 = vmatprep.mubr.f32.mxu0 0.0
        %3909 = vmatmul.mubr.f32.gmra.mrb[0].mxu0 %v2310
        %v3910 = vpop.f32.mrb[0].mxu0
        %v3911 = vadd.f32 0.0, %v3910
        %v3912 = vpop.f32.mrb[0].mxu0
        %v3913 = vadd.f32 0.0, %v3912
        %3914 = vmatprep.mubr.f32.mxu0 0.0
        %3915 = vmatmul.mubr.f32.gmra.mrb[0].mxu0 %v2313
        %v3916 = vpop.f32.mrb[0].mxu0
        %v3917 = vadd.f32 0.0, %v3916
        %v3918 = vpop.f32.mrb[0].mxu0
        %v3919 = vadd.f32 0.0, %v3918
        %3920 = vmatprep.mubr.f32.mxu0 0.0
        %3921 = vmatmul.mubr.f32.gmra.mrb[0].mxu0 %v2316
        %v3922 = vpop.f32.mrb[0].mxu0
        %v3923 = vadd.f32 0.0, %v3922
        %v3924 = vpop.f32.mrb[0].mxu0
        %v3925 = vadd.f32 0.0, %v3924
        %3926 = vmatprep.mubr.f32.mxu0 0.0
        %3927 = vmatmul.mubr.f32.gmra.mrb[0].mxu0 %v2319
        %v3928 = vpop.f32.mrb[0].mxu0
        %v3929 = vadd.f32 0.0, %v3928
        %v3930 = vpop.f32.mrb[0].mxu0
        %v3931 = vadd.f32 0.0, %v3930
        %3932 = vmatprep.mubr.f32.mxu0 0.0
        %3933 = vmatmul.mubr.f32.gmra.mrb[0].mxu0 %v2322
        %v3934 = vpop.f32.mrb[0].mxu0
        %v3935 = vadd.f32 0.0, %v3934
        %v3936 = vpop.f32.mrb[0].mxu0
        %v3937 = vadd.f32 0.0, %v3936
        %3938 = vmatprep.mubr.f32.mxu0 0.0
        %3939 = vmatmul.mubr.f32.gmra.mrb[0].mxu0 %v2325
        %v3940 = vpop.f32.mrb[0].mxu0
        %v3941 = vadd.f32 0.0, %v3940
        %v3942 = vpop.f32.mrb[0].mxu0
        %v3943 = vadd.f32 0.0, %v3942
        %3944 = vmatprep.mubr.f32.mxu0 0.0
        %3945 = vmatmul.mubr.f32.gmra.mrb[0].mxu0 %v2328
        %v3946 = vpop.f32.mrb[0].mxu0
        %v3947 = vadd.f32 0.0, %v3946
        %v3948 = vpop.f32.mrb[0].mxu0
        %v3949 = vadd.f32 0.0, %v3948
        %3950 = vmatprep.mubr.f32.mxu0 0.0
        %3951 = vmatmul.mubr.f32.gmra.mrb[0].mxu0 %v2331
        %v3952 = vpop.f32.mrb[0].mxu0
        %v3953 = vadd.f32 0.0, %v3952
        %v3954 = vpop.f32.mrb[0].mxu0
        %v3955 = vadd.f32 0.0, %v3954
        %3956 = vmatprep.mubr.f32.mxu0 0.0
        %3957 = vmatmul.mubr.f32.gmra.mrb[0].mxu0 %v2334
        %v3958 = vpop.f32.mrb[0].mxu0
        %v3959 = vadd.f32 0.0, %v3958
        %v3960 = vpop.f32.mrb[0].mxu0
        %v3961 = vadd.f32 0.0, %v3960
        %3962 = vmatprep.mubr.f32.mxu0 0.0
        %3963 = vmatmul.mubr.f32.gmra.mrb[0].mxu0 %v2337
        %v3964 = vpop.f32.mrb[0].mxu0
        %v3965 = vadd.f32 0.0, %v3964
        %v3966 = vpop.f32.mrb[0].mxu0
        %v3967 = vadd.f32 0.0, %v3966
        %3968 = vmatprep.mubr.f32.mxu0 0.0
        %3969 = vmatmul.mubr.f32.gmra.mrb[0].mxu0 %v2340
        %v3970 = vpop.f32.mrb[0].mxu0
        %v3971 = vadd.f32 0.0, %v3970
        %v3972 = vpop.f32.mrb[0].mxu0
        %v3973 = vadd.f32 0.0, %v3972
        %3974 = vmatprep.mubr.f32.mxu0 0.0
        %3975 = vmatmul.mubr.f32.gmra.mrb[0].mxu0 %v2343
        %v3976 = vpop.f32.mrb[0].mxu0
        %v3977 = vadd.f32 0.0, %v3976
        %v3978 = vpop.f32.mrb[0].mxu0
        %v3979 = vadd.f32 0.0, %v3978
        %3980 = vmatprep.mubr.f32.mxu0 0.0
        %3981 = vmatmul.mubr.f32.gmra.mrb[0].mxu0 %v2346
        %v3982 = vpop.f32.mrb[0].mxu0
        %v3983 = vadd.f32 0.0, %v3982
        %v3984 = vpop.f32.mrb[0].mxu0
        %v3985 = vadd.f32 0.0, %v3984
        %3986 = vmatprep.mubr.f32.mxu0 0.0
        %3987 = vmatmul.mubr.f32.gmra.mrb[0].mxu0 %v2349
        %v3988 = vpop.f32.mrb[0].mxu0
        %v3989 = vadd.f32 0.0, %v3988
        %v3990 = vpop.f32.mrb[0].mxu0
        %v3991 = vadd.f32 0.0, %v3990
        %3992 = vmatprep.mubr.f32.mxu0 0.0
        %3993 = vmatmul.mubr.f32.gmra.mrb[0].mxu0 %v2352
        %v3994 = vpop.f32.mrb[0].mxu0
        %v3995 = vadd.f32 0.0, %v3994
        %v3996 = vpop.f32.mrb[0].mxu0
        %v3997 = vadd.f32 0.0, %v3996
        %3998 = vmatprep.mubr.f32.mxu0 0.0
        %3999 = vmatmul.mubr.f32.gmra.mrb[0].mxu0 %v2355
        %v4000 = vpop.f32.mrb[0].mxu0
        %v4001 = vadd.f32 0.0, %v4000
        %v4002 = vpop.f32.mrb[0].mxu0
        %v4003 = vadd.f32 0.0, %v4002
        %4004 = vmatprep.mubr.f32.mxu0 0.0
        %4005 = vmatmul.mubr.f32.gmra.mrb[0].mxu0 %v2358
        %v4006 = vpop.f32.mrb[0].mxu0
        %v4007 = vadd.f32 0.0, %v4006
        %v4008 = vpop.f32.mrb[0].mxu0
        %v4009 = vadd.f32 0.0, %v4008
        %4010 = vmatprep.mubr.f32.mxu0 0.0
        %4011 = vmatmul.mubr.f32.gmra.mrb[0].mxu0 %v2361
        %v4012 = vpop.f32.mrb[0].mxu0
        %v4013 = vadd.f32 0.0, %v4012
        %v4014 = vpop.f32.mrb[0].mxu0
        %v4015 = vadd.f32 0.0, %v4014
        %4016 = vmatprep.mubr.f32.mxu0 0.0
        %4017 = vmatmul.mubr.f32.gmra.mrb[0].mxu0 %v2364
        %v4018 = vpop.f32.mrb[0].mxu0
        %v4019 = vadd.f32 0.0, %v4018
        %v4020 = vpop.f32.mrb[0].mxu0
        %v4021 = vadd.f32 0.0, %v4020
        %4022 = vmatprep.mubr.f32.mxu0 0.0
        %4023 = vmatmul.mubr.f32.gmra.mrb[0].mxu0 %v2367
        %v4024 = vpop.f32.mrb[0].mxu0
        %v4025 = vadd.f32 0.0, %v4024
        %v4026 = vpop.f32.mrb[0].mxu0
        %v4027 = vadd.f32 0.0, %v4026
        %4028 = vmatprep.mubr.f32.mxu0 0.0
        %4029 = vmatmul.mubr.f32.gmra.mrb[0].mxu0 %v2370
        %v4030 = vpop.f32.mrb[0].mxu0
        %v4031 = vadd.f32 0.0, %v4030
        %v4032 = vpop.f32.mrb[0].mxu0
        %v4033 = vadd.f32 0.0, %v4032
        %4034 = vmatprep.mubr.f32.mxu0 0.0
        %4035 = vmatmul.mubr.f32.gmra.mrb[0].mxu0 %v2373
        %v4036 = vpop.f32.mrb[0].mxu0
        %v4037 = vadd.f32 0.0, %v4036
        %v4038 = vpop.f32.mrb[0].mxu0
        %v4039 = vadd.f32 0.0, %v4038
        %4040 = vdwg.mxu0
        %v4041 = vmax.f32 %v2442, %v2448
        %v4042 = vmax.f32 %v4041, %v2454
        %v4043 = vmax.f32 %v4042, %v2460
        %v4044 = vmax.f32 %v4043, %v2466
        %v4045 = vmax.f32 %v4044, %v2472
        %v4046 = vmax.f32 %v4045, %v2478
        %v4047 = vmax.f32 %v4046, %v2484
        %v4048 = vmax.f32 %v4047, %v2490
        %v4049 = vmax.f32 %v4048, %v2496
        %v4050 = vmax.f32 %v4049, %v2502
        %v4051 = vmax.f32 %v4050, %v2508
        %v4052 = vmax.f32 %v4051, %v2514
        %v4053 = vmax.f32 %v4052, %v2520
        %v4054 = vmax.f32 %v4053, %v2526
        %v4055 = vmax.f32 %v4054, %v2532
        %v4056 = vmax.f32 %v4055, %v2538
        %v4057 = vmax.f32 %v4056, %v2544
        %v4058 = vmax.f32 %v4057, %v2550
        %v4059 = vmax.f32 %v4058, %v2556
        %v4060 = vmax.f32 %v4059, %v2562
        %v4061 = vmax.f32 %v4060, %v2568
        %v4062 = vmax.f32 %v4061, %v2574
        %v4063 = vmax.f32 %v4062, %v2580
        %v4064 = vmax.f32 %v4063, %v2586
        %v4065 = vmax.f32 %v4064, %v2592
        %v4066 = vmax.f32 %v4065, %v2598
        %v4067 = vmax.f32 %v4066, %v2604
        %v4068 = vmax.f32 %v4067, %v2610
        %v4069 = vmax.f32 %v4068, %v2616
        %v4070 = vmax.f32 %v4069, %v2622
        %v4071 = vmax.f32 %v4070, %v2628
        %v4072 = vmax.f32 %v4071, %v2634
        %v4073 = vmax.f32 %v4072, %v2640
        %v4074 = vmax.f32 %v4073, %v2646
        %v4075 = vmax.f32 %v4074, %v2652
        %v4076 = vmax.f32 %v4075, %v2658
        %v4077 = vmax.f32 %v4076, %v2664
        %v4078 = vmax.f32 %v4077, %v2670
        %v4079 = vmax.f32 %v4078, %v2676
        %v4080 = vmax.f32 %v4079, %v2682
        %v4081 = vmax.f32 %v4080, %v2688
        %v4082 = vmax.f32 %v4081, %v2694
        %v4083 = vmax.f32 %v4082, %v2700
        %v4084 = vmax.f32 %v4083, %v2706
        %v4085 = vmax.f32 %v4084, %v2712
        %v4086 = vmax.f32 %v4085, %v2718
        %v4087 = vmax.f32 %v4086, %v2724
        %v4088 = vmax.f32 %v4087, %v2730
        %v4089 = vmax.f32 %v4088, %v2736
        %v4090 = vmax.f32 %v4089, %v2742
        %v4091 = vmax.f32 %v4090, %v2748
        %v4092 = vmax.f32 %v4091, %v2754
        %v4093 = vmax.f32 %v4092, %v2760
        %v4094 = vmax.f32 %v4093, %v2766
        %v4095 = vmax.f32 %v4094, %v2772
        %v4096 = vmax.f32 %v4095, %v2778
        %v4097 = vmax.f32 %v4096, %v2784
        %v4098 = vmax.f32 %v4097, %v2790
        %v4099 = vmax.f32 %v4098, %v2796
        %v4100 = vmax.f32 %v4099, %v2802
        %v4101 = vmax.f32 %v4100, %v2808
        %v4102 = vmax.f32 %v4101, %v2814
        %v4103 = vmax.f32 %v4102, %v2820
        %v4104 = vmax.f32 %v4103, %v2826
        %v4105 = vmax.f32 %v4104, %v2832
        %v4106 = vmax.f32 %v4105, %v2838
        %v4107 = vmax.f32 %v4106, %v2844
        %v4108 = vmax.f32 %v4107, %v2850
        %v4109 = vmax.f32 %v4108, %v2856
        %v4110 = vmax.f32 %v4109, %v2862
        %v4111 = vmax.f32 %v4110, %v2868
        %v4112 = vmax.f32 %v4111, %v2874
        %v4113 = vmax.f32 %v4112, %v2880
        %v4114 = vmax.f32 %v4113, %v2886
        %v4115 = vmax.f32 %v4114, %v2892
        %v4116 = vmax.f32 %v4115, %v2898
        %v4117 = vmax.f32 %v4116, %v2904
        %v4118 = vmax.f32 %v4117, %v2910
        %v4119 = vmax.f32 %v4118, %v2916
        %v4120 = vmax.f32 %v4119, %v2922
        %v4121 = vmax.f32 %v4120, %v2928
        %v4122 = vmax.f32 %v4121, %v2934
        %v4123 = vmax.f32 %v4122, %v2940
        %v4124 = vmax.f32 %v4123, %v2946
        %v4125 = vmax.f32 %v4124, %v2952
        %v4126 = vmax.f32 %v4125, %v2958
        %v4127 = vmax.f32 %v4126, %v2964
        %v4128 = vmax.f32 %v4127, %v2970
        %v4129 = vmax.f32 %v4128, %v2976
        %v4130 = vmax.f32 %v4129, %v2982
        %v4131 = vmax.f32 %v4130, %v2988
        %v4132 = vmax.f32 %v4131, %v2994
        %v4133 = vmax.f32 %v4132, %v3000
        %v4134 = vmax.f32 %v4133, %v3006
        %v4135 = vmax.f32 %v4134, %v3012
        %v4136 = vmax.f32 %v4135, %v3018
        %v4137 = vmax.f32 %v4136, %v3024
        %v4138 = vmax.f32 %v4137, %v3030
        %v4139 = vmax.f32 %v4138, %v3036
        %v4140 = vmax.f32 %v4139, %v3042
        %v4141 = vmax.f32 %v4140, %v3048
        %v4142 = vmax.f32 %v4141, %v3054
        %v4143 = vmax.f32 %v4142, %v3060
        %v4144 = vmax.f32 %v4143, %v3066
        %v4145 = vmax.f32 %v4144, %v3072
        %v4146 = vmax.f32 %v4145, %v3078
        %v4147 = vmax.f32 %v4146, %v3084
        %v4148 = vmax.f32 %v4147, %v3090
        %v4149 = vmax.f32 %v4148, %v3096
        %v4150 = vmax.f32 %v4149, %v3102
        %v4151 = vmax.f32 %v4150, %v3108
        %v4152 = vmax.f32 %v4151, %v3114
        %v4153 = vmax.f32 %v4152, %v3120
        %v4154 = vmax.f32 %v4153, %v3126
        %v4155 = vmax.f32 %v4154, %v3132
        %v4156 = vmax.f32 %v4155, %v3138
        %v4157 = vmax.f32 %v4156, %v3144
        %v4158 = vmax.f32 %v4157, %v3150
        %v4159 = vmax.f32 %v4158, %v3156
        %v4160 = vmax.f32 %v4159, %v3162
        %v4161 = vmax.f32 %v4160, %v3168
        %v4162 = vmax.f32 %v4161, %v3174
        %v4163 = vmax.f32 %v4162, %v3180
        %v4164 = vmax.f32 %v4163, %v3186
        %v4165 = vmax.f32 %v4164, %v3192
        %v4166 = vmax.f32 %v4165, %v3198
        %v4167 = vmax.f32 %v4166, %v3204
        %v4168 = vrot.slane %v4167, 4
        %v4169 = vmax.f32 %v4167, %v4168
        %v4170 = vrot.slane %v4169, 2
        %v4171 = vmax.f32 %v4169, %v4170
        %v4172 = vrot.slane %v4171, 1
        %v4173 = vmax.f32 %v4171, %v4172
        %v4174 = vmax.f32 %v2444, %v2450
        %v4175 = vmax.f32 %v4174, %v2456
        %v4176 = vmax.f32 %v4175, %v2462
        %v4177 = vmax.f32 %v4176, %v2468
        %v4178 = vmax.f32 %v4177, %v2474
        %v4179 = vmax.f32 %v4178, %v2480
        %v4180 = vmax.f32 %v4179, %v2486
        %v4181 = vmax.f32 %v4180, %v2492
        %v4182 = vmax.f32 %v4181, %v2498
        %v4183 = vmax.f32 %v4182, %v2504
        %v4184 = vmax.f32 %v4183, %v2510
        %v4185 = vmax.f32 %v4184, %v2516
        %v4186 = vmax.f32 %v4185, %v2522
        %v4187 = vmax.f32 %v4186, %v2528
        %v4188 = vmax.f32 %v4187, %v2534
        %v4189 = vmax.f32 %v4188, %v2540
        %v4190 = vmax.f32 %v4189, %v2546
        %v4191 = vmax.f32 %v4190, %v2552
        %v4192 = vmax.f32 %v4191, %v2558
        %v4193 = vmax.f32 %v4192, %v2564
        %v4194 = vmax.f32 %v4193, %v2570
        %v4195 = vmax.f32 %v4194, %v2576
        %v4196 = vmax.f32 %v4195, %v2582
        %v4197 = vmax.f32 %v4196, %v2588
        %v4198 = vmax.f32 %v4197, %v2594
        %v4199 = vmax.f32 %v4198, %v2600
        %v4200 = vmax.f32 %v4199, %v2606
        %v4201 = vmax.f32 %v4200, %v2612
        %v4202 = vmax.f32 %v4201, %v2618
        %v4203 = vmax.f32 %v4202, %v2624
        %v4204 = vmax.f32 %v4203, %v2630
        %v4205 = vmax.f32 %v4204, %v2636
        %v4206 = vmax.f32 %v4205, %v2642
        %v4207 = vmax.f32 %v4206, %v2648
        %v4208 = vmax.f32 %v4207, %v2654
        %v4209 = vmax.f32 %v4208, %v2660
        %v4210 = vmax.f32 %v4209, %v2666
        %v4211 = vmax.f32 %v4210, %v2672
        %v4212 = vmax.f32 %v4211, %v2678
        %v4213 = vmax.f32 %v4212, %v2684
        %v4214 = vmax.f32 %v4213, %v2690
        %v4215 = vmax.f32 %v4214, %v2696
        %v4216 = vmax.f32 %v4215, %v2702
        %v4217 = vmax.f32 %v4216, %v2708
        %v4218 = vmax.f32 %v4217, %v2714
        %v4219 = vmax.f32 %v4218, %v2720
        %v4220 = vmax.f32 %v4219, %v2726
        %v4221 = vmax.f32 %v4220, %v2732
        %v4222 = vmax.f32 %v4221, %v2738
        %v4223 = vmax.f32 %v4222, %v2744
        %v4224 = vmax.f32 %v4223, %v2750
        %v4225 = vmax.f32 %v4224, %v2756
        %v4226 = vmax.f32 %v4225, %v2762
        %v4227 = vmax.f32 %v4226, %v2768
        %v4228 = vmax.f32 %v4227, %v2774
        %v4229 = vmax.f32 %v4228, %v2780
        %v4230 = vmax.f32 %v4229, %v2786
        %v4231 = vmax.f32 %v4230, %v2792
        %v4232 = vmax.f32 %v4231, %v2798
        %v4233 = vmax.f32 %v4232, %v2804
        %v4234 = vmax.f32 %v4233, %v2810
        %v4235 = vmax.f32 %v4234, %v2816
        %v4236 = vmax.f32 %v4235, %v2822
        %v4237 = vmax.f32 %v4236, %v2828
        %v4238 = vmax.f32 %v4237, %v2834
        %v4239 = vmax.f32 %v4238, %v2840
        %v4240 = vmax.f32 %v4239, %v2846
        %v4241 = vmax.f32 %v4240, %v2852
        %v4242 = vmax.f32 %v4241, %v2858
        %v4243 = vmax.f32 %v4242, %v2864
        %v4244 = vmax.f32 %v4243, %v2870
        %v4245 = vmax.f32 %v4244, %v2876
        %v4246 = vmax.f32 %v4245, %v2882
        %v4247 = vmax.f32 %v4246, %v2888
        %v4248 = vmax.f32 %v4247, %v2894
        %v4249 = vmax.f32 %v4248, %v2900
        %v4250 = vmax.f32 %v4249, %v2906
        %v4251 = vmax.f32 %v4250, %v2912
        %v4252 = vmax.f32 %v4251, %v2918
        %v4253 = vmax.f32 %v4252, %v2924
        %v4254 = vmax.f32 %v4253, %v2930
        %v4255 = vmax.f32 %v4254, %v2936
        %v4256 = vmax.f32 %v4255, %v2942
        %v4257 = vmax.f32 %v4256, %v2948
        %v4258 = vmax.f32 %v4257, %v2954
        %v4259 = vmax.f32 %v4258, %v2960
        %v4260 = vmax.f32 %v4259, %v2966
        %v4261 = vmax.f32 %v4260, %v2972
        %v4262 = vmax.f32 %v4261, %v2978
        %v4263 = vmax.f32 %v4262, %v2984
        %v4264 = vmax.f32 %v4263, %v2990
        %v4265 = vmax.f32 %v4264, %v2996
        %v4266 = vmax.f32 %v4265, %v3002
        %v4267 = vmax.f32 %v4266, %v3008
        %v4268 = vmax.f32 %v4267, %v3014
        %v4269 = vmax.f32 %v4268, %v3020
        %v4270 = vmax.f32 %v4269, %v3026
        %v4271 = vmax.f32 %v4270, %v3032
        %v4272 = vmax.f32 %v4271, %v3038
        %v4273 = vmax.f32 %v4272, %v3044
        %v4274 = vmax.f32 %v4273, %v3050
        %v4275 = vmax.f32 %v4274, %v3056
        %v4276 = vmax.f32 %v4275, %v3062
        %v4277 = vmax.f32 %v4276, %v3068
        %v4278 = vmax.f32 %v4277, %v3074
        %v4279 = vmax.f32 %v4278, %v3080
        %v4280 = vmax.f32 %v4279, %v3086
        %v4281 = vmax.f32 %v4280, %v3092
        %v4282 = vmax.f32 %v4281, %v3098
        %v4283 = vmax.f32 %v4282, %v3104
        %v4284 = vmax.f32 %v4283, %v3110
        %v4285 = vmax.f32 %v4284, %v3116
        %v4286 = vmax.f32 %v4285, %v3122
        %v4287 = vmax.f32 %v4286, %v3128
        %v4288 = vmax.f32 %v4287, %v3134
        %v4289 = vmax.f32 %v4288, %v3140
        %v4290 = vmax.f32 %v4289, %v3146
        %v4291 = vmax.f32 %v4290, %v3152
        %v4292 = vmax.f32 %v4291, %v3158
        %v4293 = vmax.f32 %v4292, %v3164
        %v4294 = vmax.f32 %v4293, %v3170
        %v4295 = vmax.f32 %v4294, %v3176
        %v4296 = vmax.f32 %v4295, %v3182
        %v4297 = vmax.f32 %v4296, %v3188
        %v4298 = vmax.f32 %v4297, %v3194
        %v4299 = vmax.f32 %v4298, %v3200
        %v4300 = vmax.f32 %v4299, %v3206
        %v4301 = vrot.slane %v4300, 4
        %v4302 = vmax.f32 %v4300, %v4301
        %v4303 = vrot.slane %v4302, 2
        %v4304 = vmax.f32 %v4302, %v4303
        %v4305 = vrot.slane %v4304, 1
        %v4306 = vmax.f32 %v4304, %v4305
        %v4307 = vmax.f32 %v3275, %v3281
        %v4308 = vmax.f32 %v4307, %v3287
        %v4309 = vmax.f32 %v4308, %v3293
        %v4310 = vmax.f32 %v4309, %v3299
        %v4311 = vmax.f32 %v4310, %v3305
        %v4312 = vmax.f32 %v4311, %v3311
        %v4313 = vmax.f32 %v4312, %v3317
        %v4314 = vmax.f32 %v4313, %v3323
        %v4315 = vmax.f32 %v4314, %v3329
        %v4316 = vmax.f32 %v4315, %v3335
        %v4317 = vmax.f32 %v4316, %v3341
        %v4318 = vmax.f32 %v4317, %v3347
        %v4319 = vmax.f32 %v4318, %v3353
        %v4320 = vmax.f32 %v4319, %v3359
        %v4321 = vmax.f32 %v4320, %v3365
        %v4322 = vmax.f32 %v4321, %v3371
        %v4323 = vmax.f32 %v4322, %v3377
        %v4324 = vmax.f32 %v4323, %v3383
        %v4325 = vmax.f32 %v4324, %v3389
        %v4326 = vmax.f32 %v4325, %v3395
        %v4327 = vmax.f32 %v4326, %v3401
        %v4328 = vmax.f32 %v4327, %v3407
        %v4329 = vmax.f32 %v4328, %v3413
        %v4330 = vmax.f32 %v4329, %v3419
        %v4331 = vmax.f32 %v4330, %v3425
        %v4332 = vmax.f32 %v4331, %v3431
        %v4333 = vmax.f32 %v4332, %v3437
        %v4334 = vmax.f32 %v4333, %v3443
        %v4335 = vmax.f32 %v4334, %v3449
        %v4336 = vmax.f32 %v4335, %v3455
        %v4337 = vmax.f32 %v4336, %v3461
        %v4338 = vmax.f32 %v4337, %v3467
        %v4339 = vmax.f32 %v4338, %v3473
        %v4340 = vmax.f32 %v4339, %v3479
        %v4341 = vmax.f32 %v4340, %v3485
        %v4342 = vmax.f32 %v4341, %v3491
        %v4343 = vmax.f32 %v4342, %v3497
        %v4344 = vmax.f32 %v4343, %v3503
        %v4345 = vmax.f32 %v4344, %v3509
        %v4346 = vmax.f32 %v4345, %v3515
        %v4347 = vmax.f32 %v4346, %v3521
        %v4348 = vmax.f32 %v4347, %v3527
        %v4349 = vmax.f32 %v4348, %v3533
        %v4350 = vmax.f32 %v4349, %v3539
        %v4351 = vmax.f32 %v4350, %v3545
        %v4352 = vmax.f32 %v4351, %v3551
        %v4353 = vmax.f32 %v4352, %v3557
        %v4354 = vmax.f32 %v4353, %v3563
        %v4355 = vmax.f32 %v4354, %v3569
        %v4356 = vmax.f32 %v4355, %v3575
        %v4357 = vmax.f32 %v4356, %v3581
        %v4358 = vmax.f32 %v4357, %v3587
        %v4359 = vmax.f32 %v4358, %v3593
        %v4360 = vmax.f32 %v4359, %v3599
        %v4361 = vmax.f32 %v4360, %v3605
        %v4362 = vmax.f32 %v4361, %v3611
        %v4363 = vmax.f32 %v4362, %v3617
        %v4364 = vmax.f32 %v4363, %v3623
        %v4365 = vmax.f32 %v4364, %v3629
        %v4366 = vmax.f32 %v4365, %v3635
        %v4367 = vmax.f32 %v4366, %v3641
        %v4368 = vmax.f32 %v4367, %v3647
        %v4369 = vmax.f32 %v4368, %v3653
        %v4370 = vmax.f32 %v4369, %v3659
        %v4371 = vmax.f32 %v4370, %v3665
        %v4372 = vmax.f32 %v4371, %v3671
        %v4373 = vmax.f32 %v4372, %v3677
        %v4374 = vmax.f32 %v4373, %v3683
        %v4375 = vmax.f32 %v4374, %v3689
        %v4376 = vmax.f32 %v4375, %v3695
        %v4377 = vmax.f32 %v4376, %v3701
        %v4378 = vmax.f32 %v4377, %v3707
        %v4379 = vmax.f32 %v4378, %v3713
        %v4380 = vmax.f32 %v4379, %v3719
        %v4381 = vmax.f32 %v4380, %v3725
        %v4382 = vmax.f32 %v4381, %v3731
        %v4383 = vmax.f32 %v4382, %v3737
        %v4384 = vmax.f32 %v4383, %v3743
        %v4385 = vmax.f32 %v4384, %v3749
        %v4386 = vmax.f32 %v4385, %v3755
        %v4387 = vmax.f32 %v4386, %v3761
        %v4388 = vmax.f32 %v4387, %v3767
        %v4389 = vmax.f32 %v4388, %v3773
        %v4390 = vmax.f32 %v4389, %v3779
        %v4391 = vmax.f32 %v4390, %v3785
        %v4392 = vmax.f32 %v4391, %v3791
        %v4393 = vmax.f32 %v4392, %v3797
        %v4394 = vmax.f32 %v4393, %v3803
        %v4395 = vmax.f32 %v4394, %v3809
        %v4396 = vmax.f32 %v4395, %v3815
        %v4397 = vmax.f32 %v4396, %v3821
        %v4398 = vmax.f32 %v4397, %v3827
        %v4399 = vmax.f32 %v4398, %v3833
        %v4400 = vmax.f32 %v4399, %v3839
        %v4401 = vmax.f32 %v4400, %v3845
        %v4402 = vmax.f32 %v4401, %v3851
        %v4403 = vmax.f32 %v4402, %v3857
        %v4404 = vmax.f32 %v4403, %v3863
        %v4405 = vmax.f32 %v4404, %v3869
        %v4406 = vmax.f32 %v4405, %v3875
        %v4407 = vmax.f32 %v4406, %v3881
        %v4408 = vmax.f32 %v4407, %v3887
        %v4409 = vmax.f32 %v4408, %v3893
        %v4410 = vmax.f32 %v4409, %v3899
        %v4411 = vmax.f32 %v4410, %v3905
        %v4412 = vmax.f32 %v4411, %v3911
        %v4413 = vmax.f32 %v4412, %v3917
        %v4414 = vmax.f32 %v4413, %v3923
        %v4415 = vmax.f32 %v4414, %v3929
        %v4416 = vmax.f32 %v4415, %v3935
        %v4417 = vmax.f32 %v4416, %v3941
        %v4418 = vmax.f32 %v4417, %v3947
        %v4419 = vmax.f32 %v4418, %v3953
        %v4420 = vmax.f32 %v4419, %v3959
        %v4421 = vmax.f32 %v4420, %v3965
        %v4422 = vmax.f32 %v4421, %v3971
        %v4423 = vmax.f32 %v4422, %v3977
        %v4424 = vmax.f32 %v4423, %v3983
        %v4425 = vmax.f32 %v4424, %v3989
        %v4426 = vmax.f32 %v4425, %v3995
        %v4427 = vmax.f32 %v4426, %v4001
        %v4428 = vmax.f32 %v4427, %v4007
        %v4429 = vmax.f32 %v4428, %v4013
        %v4430 = vmax.f32 %v4429, %v4019
        %v4431 = vmax.f32 %v4430, %v4025
        %v4432 = vmax.f32 %v4431, %v4031
        %v4433 = vmax.f32 %v4432, %v4037
        %v4434 = vrot.slane %v4433, 4
        %v4435 = vmax.f32 %v4433, %v4434
        %v4436 = vrot.slane %v4435, 2
        %v4437 = vmax.f32 %v4435, %v4436
        %v4438 = vrot.slane %v4437, 1
        %v4439 = vmax.f32 %v4437, %v4438
        %v4440 = vmax.f32 %v3277, %v3283
        %v4441 = vmax.f32 %v4440, %v3289
        %v4442 = vmax.f32 %v4441, %v3295
        %v4443 = vmax.f32 %v4442, %v3301
        %v4444 = vmax.f32 %v4443, %v3307
        %v4445 = vmax.f32 %v4444, %v3313
        %v4446 = vmax.f32 %v4445, %v3319
        %v4447 = vmax.f32 %v4446, %v3325
        %v4448 = vmax.f32 %v4447, %v3331
        %v4449 = vmax.f32 %v4448, %v3337
        %v4450 = vmax.f32 %v4449, %v3343
        %v4451 = vmax.f32 %v4450, %v3349
        %v4452 = vmax.f32 %v4451, %v3355
        %v4453 = vmax.f32 %v4452, %v3361
        %v4454 = vmax.f32 %v4453, %v3367
        %v4455 = vmax.f32 %v4454, %v3373
        %v4456 = vmax.f32 %v4455, %v3379
        %v4457 = vmax.f32 %v4456, %v3385
        %v4458 = vmax.f32 %v4457, %v3391
        %v4459 = vmax.f32 %v4458, %v3397
        %v4460 = vmax.f32 %v4459, %v3403
        %v4461 = vmax.f32 %v4460, %v3409
        %v4462 = vmax.f32 %v4461, %v3415
        %v4463 = vmax.f32 %v4462, %v3421
        %v4464 = vmax.f32 %v4463, %v3427
        %v4465 = vmax.f32 %v4464, %v3433
        %v4466 = vmax.f32 %v4465, %v3439
        %v4467 = vmax.f32 %v4466, %v3445
        %v4468 = vmax.f32 %v4467, %v3451
        %v4469 = vmax.f32 %v4468, %v3457
        %v4470 = vmax.f32 %v4469, %v3463
        %v4471 = vmax.f32 %v4470, %v3469
        %v4472 = vmax.f32 %v4471, %v3475
        %v4473 = vmax.f32 %v4472, %v3481
        %v4474 = vmax.f32 %v4473, %v3487
        %v4475 = vmax.f32 %v4474, %v3493
        %v4476 = vmax.f32 %v4475, %v3499
        %v4477 = vmax.f32 %v4476, %v3505
        %v4478 = vmax.f32 %v4477, %v3511
        %v4479 = vmax.f32 %v4478, %v3517
        %v4480 = vmax.f32 %v4479, %v3523
        %v4481 = vmax.f32 %v4480, %v3529
        %v4482 = vmax.f32 %v4481, %v3535
        %v4483 = vmax.f32 %v4482, %v3541
        %v4484 = vmax.f32 %v4483, %v3547
        %v4485 = vmax.f32 %v4484, %v3553
        %v4486 = vmax.f32 %v4485, %v3559
        %v4487 = vmax.f32 %v4486, %v3565
        %v4488 = vmax.f32 %v4487, %v3571
        %v4489 = vmax.f32 %v4488, %v3577
        %v4490 = vmax.f32 %v4489, %v3583
        %v4491 = vmax.f32 %v4490, %v3589
        %v4492 = vmax.f32 %v4491, %v3595
        %v4493 = vmax.f32 %v4492, %v3601
        %v4494 = vmax.f32 %v4493, %v3607
        %v4495 = vmax.f32 %v4494, %v3613
        %v4496 = vmax.f32 %v4495, %v3619
        %v4497 = vmax.f32 %v4496, %v3625
        %v4498 = vmax.f32 %v4497, %v3631
        %v4499 = vmax.f32 %v4498, %v3637
        %v4500 = vmax.f32 %v4499, %v3643
        %v4501 = vmax.f32 %v4500, %v3649
        %v4502 = vmax.f32 %v4501, %v3655
        %v4503 = vmax.f32 %v4502, %v3661
        %v4504 = vmax.f32 %v4503, %v3667
        %v4505 = vmax.f32 %v4504, %v3673
        %v4506 = vmax.f32 %v4505, %v3679
        %v4507 = vmax.f32 %v4506, %v3685
        %v4508 = vmax.f32 %v4507, %v3691
        %v4509 = vmax.f32 %v4508, %v3697
        %v4510 = vmax.f32 %v4509, %v3703
        %v4511 = vmax.f32 %v4510, %v3709
        %v4512 = vmax.f32 %v4511, %v3715
        %v4513 = vmax.f32 %v4512, %v3721
        %v4514 = vmax.f32 %v4513, %v3727
        %v4515 = vmax.f32 %v4514, %v3733
        %v4516 = vmax.f32 %v4515, %v3739
        %v4517 = vmax.f32 %v4516, %v3745
        %v4518 = vmax.f32 %v4517, %v3751
        %v4519 = vmax.f32 %v4518, %v3757
        %v4520 = vmax.f32 %v4519, %v3763
        %v4521 = vmax.f32 %v4520, %v3769
        %v4522 = vmax.f32 %v4521, %v3775
        %v4523 = vmax.f32 %v4522, %v3781
        %v4524 = vmax.f32 %v4523, %v3787
        %v4525 = vmax.f32 %v4524, %v3793
        %v4526 = vmax.f32 %v4525, %v3799
        %v4527 = vmax.f32 %v4526, %v3805
        %v4528 = vmax.f32 %v4527, %v3811
        %v4529 = vmax.f32 %v4528, %v3817
        %v4530 = vmax.f32 %v4529, %v3823
        %v4531 = vmax.f32 %v4530, %v3829
        %v4532 = vmax.f32 %v4531, %v3835
        %v4533 = vmax.f32 %v4532, %v3841
        %v4534 = vmax.f32 %v4533, %v3847
        %v4535 = vmax.f32 %v4534, %v3853
        %v4536 = vmax.f32 %v4535, %v3859
        %v4537 = vmax.f32 %v4536, %v3865
        %v4538 = vmax.f32 %v4537, %v3871
        %v4539 = vmax.f32 %v4538, %v3877
        %v4540 = vmax.f32 %v4539, %v3883
        %v4541 = vmax.f32 %v4540, %v3889
        %v4542 = vmax.f32 %v4541, %v3895
        %v4543 = vmax.f32 %v4542, %v3901
        %v4544 = vmax.f32 %v4543, %v3907
        %v4545 = vmax.f32 %v4544, %v3913
        %v4546 = vmax.f32 %v4545, %v3919
        %v4547 = vmax.f32 %v4546, %v3925
        %v4548 = vmax.f32 %v4547, %v3931
        %v4549 = vmax.f32 %v4548, %v3937
        %v4550 = vmax.f32 %v4549, %v3943
        %v4551 = vmax.f32 %v4550, %v3949
        %v4552 = vmax.f32 %v4551, %v3955
        %v4553 = vmax.f32 %v4552, %v3961
        %v4554 = vmax.f32 %v4553, %v3967
        %v4555 = vmax.f32 %v4554, %v3973
        %v4556 = vmax.f32 %v4555, %v3979
        %v4557 = vmax.f32 %v4556, %v3985
        %v4558 = vmax.f32 %v4557, %v3991
        %v4559 = vmax.f32 %v4558, %v3997
        %v4560 = vmax.f32 %v4559, %v4003
        %v4561 = vmax.f32 %v4560, %v4009
        %v4562 = vmax.f32 %v4561, %v4015
        %v4563 = vmax.f32 %v4562, %v4021
        %v4564 = vmax.f32 %v4563, %v4027
        %v4565 = vmax.f32 %v4564, %v4033
        %v4566 = vmax.f32 %v4565, %v4039
        %v4567 = vrot.slane %v4566, 4
        %v4568 = vmax.f32 %v4566, %v4567
        %v4569 = vrot.slane %v4568, 2
        %v4570 = vmax.f32 %v4568, %v4569
        %v4571 = vrot.slane %v4570, 1
        %v4572 = vmax.f32 %v4570, %v4571
        %v4573 = vsub.f32 %v2442, %v4173
        %v4574 = vsub.f32 %v2444, %v4306
        %v4575 = vsub.f32 %v3275, %v4439
        %v4576 = vsub.f32 %v3277, %v4572
        %v4577 = vsub.f32 %v2448, %v4173
        %v4578 = vsub.f32 %v2450, %v4306
        %v4579 = vsub.f32 %v3281, %v4439
        %v4580 = vsub.f32 %v3283, %v4572
        %v4581 = vsub.f32 %v2454, %v4173
        %v4582 = vsub.f32 %v2456, %v4306
        %v4583 = vsub.f32 %v3287, %v4439
        %v4584 = vsub.f32 %v3289, %v4572
        %v4585 = vsub.f32 %v2460, %v4173
        %v4586 = vsub.f32 %v2462, %v4306
        %v4587 = vsub.f32 %v3293, %v4439
        %v4588 = vsub.f32 %v3295, %v4572
        %v4589 = vsub.f32 %v2466, %v4173
        %v4590 = vsub.f32 %v2468, %v4306
        %v4591 = vsub.f32 %v3299, %v4439
        %v4592 = vsub.f32 %v3301, %v4572
        %v4593 = vsub.f32 %v2472, %v4173
        %v4594 = vsub.f32 %v2474, %v4306
        %v4595 = vsub.f32 %v3305, %v4439
        %v4596 = vsub.f32 %v3307, %v4572
        %v4597 = vsub.f32 %v2478, %v4173
        %v4598 = vsub.f32 %v2480, %v4306
        %v4599 = vsub.f32 %v3311, %v4439
        %v4600 = vsub.f32 %v3313, %v4572
        %v4601 = vsub.f32 %v2484, %v4173
        %v4602 = vsub.f32 %v2486, %v4306
        %v4603 = vsub.f32 %v3317, %v4439
        %v4604 = vsub.f32 %v3319, %v4572
        %v4605 = vsub.f32 %v2490, %v4173
        %v4606 = vsub.f32 %v2492, %v4306
        %v4607 = vsub.f32 %v3323, %v4439
        %v4608 = vsub.f32 %v3325, %v4572
        %v4609 = vsub.f32 %v2496, %v4173
        %v4610 = vsub.f32 %v2498, %v4306
        %v4611 = vsub.f32 %v3329, %v4439
        %v4612 = vsub.f32 %v3331, %v4572
        %v4613 = vsub.f32 %v2502, %v4173
        %v4614 = vsub.f32 %v2504, %v4306
        %v4615 = vsub.f32 %v3335, %v4439
        %v4616 = vsub.f32 %v3337, %v4572
        %v4617 = vsub.f32 %v2508, %v4173
        %v4618 = vsub.f32 %v2510, %v4306
        %v4619 = vsub.f32 %v3341, %v4439
        %v4620 = vsub.f32 %v3343, %v4572
        %v4621 = vsub.f32 %v2514, %v4173
        %v4622 = vsub.f32 %v2516, %v4306
        %v4623 = vsub.f32 %v3347, %v4439
        %v4624 = vsub.f32 %v3349, %v4572
        %v4625 = vsub.f32 %v2520, %v4173
        %v4626 = vsub.f32 %v2522, %v4306
        %v4627 = vsub.f32 %v3353, %v4439
        %v4628 = vsub.f32 %v3355, %v4572
        %v4629 = vsub.f32 %v2526, %v4173
        %v4630 = vsub.f32 %v2528, %v4306
        %v4631 = vsub.f32 %v3359, %v4439
        %v4632 = vsub.f32 %v3361, %v4572
        %v4633 = vsub.f32 %v2532, %v4173
        %v4634 = vsub.f32 %v2534, %v4306
        %v4635 = vsub.f32 %v3365, %v4439
        %v4636 = vsub.f32 %v3367, %v4572
        %v4637 = vsub.f32 %v2538, %v4173
        %v4638 = vsub.f32 %v2540, %v4306
        %v4639 = vsub.f32 %v3371, %v4439
        %v4640 = vsub.f32 %v3373, %v4572
        %v4641 = vsub.f32 %v2544, %v4173
        %v4642 = vsub.f32 %v2546, %v4306
        %v4643 = vsub.f32 %v3377, %v4439
        %v4644 = vsub.f32 %v3379, %v4572
        %v4645 = vsub.f32 %v2550, %v4173
        %v4646 = vsub.f32 %v2552, %v4306
        %v4647 = vsub.f32 %v3383, %v4439
        %v4648 = vsub.f32 %v3385, %v4572
        %v4649 = vsub.f32 %v2556, %v4173
        %v4650 = vsub.f32 %v2558, %v4306
        %v4651 = vsub.f32 %v3389, %v4439
        %v4652 = vsub.f32 %v3391, %v4572
        %v4653 = vsub.f32 %v2562, %v4173
        %v4654 = vsub.f32 %v2564, %v4306
        %v4655 = vsub.f32 %v3395, %v4439
        %v4656 = vsub.f32 %v3397, %v4572
        %v4657 = vsub.f32 %v2568, %v4173
        %v4658 = vsub.f32 %v2570, %v4306
        %v4659 = vsub.f32 %v3401, %v4439
        %v4660 = vsub.f32 %v3403, %v4572
        %v4661 = vsub.f32 %v2574, %v4173
        %v4662 = vsub.f32 %v2576, %v4306
        %v4663 = vsub.f32 %v3407, %v4439
        %v4664 = vsub.f32 %v3409, %v4572
        %v4665 = vsub.f32 %v2580, %v4173
        %v4666 = vsub.f32 %v2582, %v4306
        %v4667 = vsub.f32 %v3413, %v4439
        %v4668 = vsub.f32 %v3415, %v4572
        %v4669 = vsub.f32 %v2586, %v4173
        %v4670 = vsub.f32 %v2588, %v4306
        %v4671 = vsub.f32 %v3419, %v4439
        %v4672 = vsub.f32 %v3421, %v4572
        %v4673 = vsub.f32 %v2592, %v4173
        %v4674 = vsub.f32 %v2594, %v4306
        %v4675 = vsub.f32 %v3425, %v4439
        %v4676 = vsub.f32 %v3427, %v4572
        %v4677 = vsub.f32 %v2598, %v4173
        %v4678 = vsub.f32 %v2600, %v4306
        %v4679 = vsub.f32 %v3431, %v4439
        %v4680 = vsub.f32 %v3433, %v4572
        %v4681 = vsub.f32 %v2604, %v4173
        %v4682 = vsub.f32 %v2606, %v4306
        %v4683 = vsub.f32 %v3437, %v4439
        %v4684 = vsub.f32 %v3439, %v4572
        %v4685 = vsub.f32 %v2610, %v4173
        %v4686 = vsub.f32 %v2612, %v4306
        %v4687 = vsub.f32 %v3443, %v4439
        %v4688 = vsub.f32 %v3445, %v4572
        %v4689 = vsub.f32 %v2616, %v4173
        %v4690 = vsub.f32 %v2618, %v4306
        %v4691 = vsub.f32 %v3449, %v4439
        %v4692 = vsub.f32 %v3451, %v4572
        %v4693 = vsub.f32 %v2622, %v4173
        %v4694 = vsub.f32 %v2624, %v4306
        %v4695 = vsub.f32 %v3455, %v4439
        %v4696 = vsub.f32 %v3457, %v4572
        %v4697 = vsub.f32 %v2628, %v4173
        %v4698 = vsub.f32 %v2630, %v4306
        %v4699 = vsub.f32 %v3461, %v4439
        %v4700 = vsub.f32 %v3463, %v4572
        %v4701 = vsub.f32 %v2634, %v4173
        %v4702 = vsub.f32 %v2636, %v4306
        %v4703 = vsub.f32 %v3467, %v4439
        %v4704 = vsub.f32 %v3469, %v4572
        %v4705 = vsub.f32 %v2640, %v4173
        %v4706 = vsub.f32 %v2642, %v4306
        %v4707 = vsub.f32 %v3473, %v4439
        %v4708 = vsub.f32 %v3475, %v4572
        %v4709 = vsub.f32 %v2646, %v4173
        %v4710 = vsub.f32 %v2648, %v4306
        %v4711 = vsub.f32 %v3479, %v4439
        %v4712 = vsub.f32 %v3481, %v4572
        %v4713 = vsub.f32 %v2652, %v4173
        %v4714 = vsub.f32 %v2654, %v4306
        %v4715 = vsub.f32 %v3485, %v4439
        %v4716 = vsub.f32 %v3487, %v4572
        %v4717 = vsub.f32 %v2658, %v4173
        %v4718 = vsub.f32 %v2660, %v4306
        %v4719 = vsub.f32 %v3491, %v4439
        %v4720 = vsub.f32 %v3493, %v4572
        %v4721 = vsub.f32 %v2664, %v4173
        %v4722 = vsub.f32 %v2666, %v4306
        %v4723 = vsub.f32 %v3497, %v4439
        %v4724 = vsub.f32 %v3499, %v4572
        %v4725 = vsub.f32 %v2670, %v4173
        %v4726 = vsub.f32 %v2672, %v4306
        %v4727 = vsub.f32 %v3503, %v4439
        %v4728 = vsub.f32 %v3505, %v4572
        %v4729 = vsub.f32 %v2676, %v4173
        %v4730 = vsub.f32 %v2678, %v4306
        %v4731 = vsub.f32 %v3509, %v4439
        %v4732 = vsub.f32 %v3511, %v4572
        %v4733 = vsub.f32 %v2682, %v4173
        %v4734 = vsub.f32 %v2684, %v4306
        %v4735 = vsub.f32 %v3515, %v4439
        %v4736 = vsub.f32 %v3517, %v4572
        %v4737 = vsub.f32 %v2688, %v4173
        %v4738 = vsub.f32 %v2690, %v4306
        %v4739 = vsub.f32 %v3521, %v4439
        %v4740 = vsub.f32 %v3523, %v4572
        %v4741 = vsub.f32 %v2694, %v4173
        %v4742 = vsub.f32 %v2696, %v4306
        %v4743 = vsub.f32 %v3527, %v4439
        %v4744 = vsub.f32 %v3529, %v4572
        %v4745 = vsub.f32 %v2700, %v4173
        %v4746 = vsub.f32 %v2702, %v4306
        %v4747 = vsub.f32 %v3533, %v4439
        %v4748 = vsub.f32 %v3535, %v4572
        %v4749 = vsub.f32 %v2706, %v4173
        %v4750 = vsub.f32 %v2708, %v4306
        %v4751 = vsub.f32 %v3539, %v4439
        %v4752 = vsub.f32 %v3541, %v4572
        %v4753 = vsub.f32 %v2712, %v4173
        %v4754 = vsub.f32 %v2714, %v4306
        %v4755 = vsub.f32 %v3545, %v4439
        %v4756 = vsub.f32 %v3547, %v4572
        %v4757 = vsub.f32 %v2718, %v4173
        %v4758 = vsub.f32 %v2720, %v4306
        %v4759 = vsub.f32 %v3551, %v4439
        %v4760 = vsub.f32 %v3553, %v4572
        %v4761 = vsub.f32 %v2724, %v4173
        %v4762 = vsub.f32 %v2726, %v4306
        %v4763 = vsub.f32 %v3557, %v4439
        %v4764 = vsub.f32 %v3559, %v4572
        %v4765 = vsub.f32 %v2730, %v4173
        %v4766 = vsub.f32 %v2732, %v4306
        %v4767 = vsub.f32 %v3563, %v4439
        %v4768 = vsub.f32 %v3565, %v4572
        %v4769 = vsub.f32 %v2736, %v4173
        %v4770 = vsub.f32 %v2738, %v4306
        %v4771 = vsub.f32 %v3569, %v4439
        %v4772 = vsub.f32 %v3571, %v4572
        %v4773 = vsub.f32 %v2742, %v4173
        %v4774 = vsub.f32 %v2744, %v4306
        %v4775 = vsub.f32 %v3575, %v4439
        %v4776 = vsub.f32 %v3577, %v4572
        %v4777 = vsub.f32 %v2748, %v4173
        %v4778 = vsub.f32 %v2750, %v4306
        %v4779 = vsub.f32 %v3581, %v4439
        %v4780 = vsub.f32 %v3583, %v4572
        %v4781 = vsub.f32 %v2754, %v4173
        %v4782 = vsub.f32 %v2756, %v4306
        %v4783 = vsub.f32 %v3587, %v4439
        %v4784 = vsub.f32 %v3589, %v4572
        %v4785 = vsub.f32 %v2760, %v4173
        %v4786 = vsub.f32 %v2762, %v4306
        %v4787 = vsub.f32 %v3593, %v4439
        %v4788 = vsub.f32 %v3595, %v4572
        %v4789 = vsub.f32 %v2766, %v4173
        %v4790 = vsub.f32 %v2768, %v4306
        %v4791 = vsub.f32 %v3599, %v4439
        %v4792 = vsub.f32 %v3601, %v4572
        %v4793 = vsub.f32 %v2772, %v4173
        %v4794 = vsub.f32 %v2774, %v4306
        %v4795 = vsub.f32 %v3605, %v4439
        %v4796 = vsub.f32 %v3607, %v4572
        %v4797 = vsub.f32 %v2778, %v4173
        %v4798 = vsub.f32 %v2780, %v4306
        %v4799 = vsub.f32 %v3611, %v4439
        %v4800 = vsub.f32 %v3613, %v4572
        %v4801 = vsub.f32 %v2784, %v4173
        %v4802 = vsub.f32 %v2786, %v4306
        %v4803 = vsub.f32 %v3617, %v4439
        %v4804 = vsub.f32 %v3619, %v4572
        %v4805 = vsub.f32 %v2790, %v4173
        %v4806 = vsub.f32 %v2792, %v4306
        %v4807 = vsub.f32 %v3623, %v4439
        %v4808 = vsub.f32 %v3625, %v4572
        %v4809 = vsub.f32 %v2796, %v4173
        %v4810 = vsub.f32 %v2798, %v4306
        %v4811 = vsub.f32 %v3629, %v4439
        %v4812 = vsub.f32 %v3631, %v4572
        %v4813 = vsub.f32 %v2802, %v4173
        %v4814 = vsub.f32 %v2804, %v4306
        %v4815 = vsub.f32 %v3635, %v4439
        %v4816 = vsub.f32 %v3637, %v4572
        %v4817 = vsub.f32 %v2808, %v4173
        %v4818 = vsub.f32 %v2810, %v4306
        %v4819 = vsub.f32 %v3641, %v4439
        %v4820 = vsub.f32 %v3643, %v4572
        %v4821 = vsub.f32 %v2814, %v4173
        %v4822 = vsub.f32 %v2816, %v4306
        %v4823 = vsub.f32 %v3647, %v4439
        %v4824 = vsub.f32 %v3649, %v4572
        %v4825 = vsub.f32 %v2820, %v4173
        %v4826 = vsub.f32 %v2822, %v4306
        %v4827 = vsub.f32 %v3653, %v4439
        %v4828 = vsub.f32 %v3655, %v4572
        %v4829 = vsub.f32 %v2826, %v4173
        %v4830 = vsub.f32 %v2828, %v4306
        %v4831 = vsub.f32 %v3659, %v4439
        %v4832 = vsub.f32 %v3661, %v4572
        %v4833 = vsub.f32 %v2832, %v4173
        %v4834 = vsub.f32 %v2834, %v4306
        %v4835 = vsub.f32 %v3665, %v4439
        %v4836 = vsub.f32 %v3667, %v4572
        %v4837 = vsub.f32 %v2838, %v4173
        %v4838 = vsub.f32 %v2840, %v4306
        %v4839 = vsub.f32 %v3671, %v4439
        %v4840 = vsub.f32 %v3673, %v4572
        %v4841 = vsub.f32 %v2844, %v4173
        %v4842 = vsub.f32 %v2846, %v4306
        %v4843 = vsub.f32 %v3677, %v4439
        %v4844 = vsub.f32 %v3679, %v4572
        %v4845 = vsub.f32 %v2850, %v4173
        %v4846 = vsub.f32 %v2852, %v4306
        %v4847 = vsub.f32 %v3683, %v4439
        %v4848 = vsub.f32 %v3685, %v4572
        %v4849 = vsub.f32 %v2856, %v4173
        %v4850 = vsub.f32 %v2858, %v4306
        %v4851 = vsub.f32 %v3689, %v4439
        %v4852 = vsub.f32 %v3691, %v4572
        %v4853 = vsub.f32 %v2862, %v4173
        %v4854 = vsub.f32 %v2864, %v4306
        %v4855 = vsub.f32 %v3695, %v4439
        %v4856 = vsub.f32 %v3697, %v4572
        %v4857 = vsub.f32 %v2868, %v4173
        %v4858 = vsub.f32 %v2870, %v4306
        %v4859 = vsub.f32 %v3701, %v4439
        %v4860 = vsub.f32 %v3703, %v4572
        %v4861 = vsub.f32 %v2874, %v4173
        %v4862 = vsub.f32 %v2876, %v4306
        %v4863 = vsub.f32 %v3707, %v4439
        %v4864 = vsub.f32 %v3709, %v4572
        %v4865 = vsub.f32 %v2880, %v4173
        %v4866 = vsub.f32 %v2882, %v4306
        %v4867 = vsub.f32 %v3713, %v4439
        %v4868 = vsub.f32 %v3715, %v4572
        %v4869 = vsub.f32 %v2886, %v4173
        %v4870 = vsub.f32 %v2888, %v4306
        %v4871 = vsub.f32 %v3719, %v4439
        %v4872 = vsub.f32 %v3721, %v4572
        %v4873 = vsub.f32 %v2892, %v4173
        %v4874 = vsub.f32 %v2894, %v4306
        %v4875 = vsub.f32 %v3725, %v4439
        %v4876 = vsub.f32 %v3727, %v4572
        %v4877 = vsub.f32 %v2898, %v4173
        %v4878 = vsub.f32 %v2900, %v4306
        %v4879 = vsub.f32 %v3731, %v4439
        %v4880 = vsub.f32 %v3733, %v4572
        %v4881 = vsub.f32 %v2904, %v4173
        %v4882 = vsub.f32 %v2906, %v4306
        %v4883 = vsub.f32 %v3737, %v4439
        %v4884 = vsub.f32 %v3739, %v4572
        %v4885 = vsub.f32 %v2910, %v4173
        %v4886 = vsub.f32 %v2912, %v4306
        %v4887 = vsub.f32 %v3743, %v4439
        %v4888 = vsub.f32 %v3745, %v4572
        %v4889 = vsub.f32 %v2916, %v4173
        %v4890 = vsub.f32 %v2918, %v4306
        %v4891 = vsub.f32 %v3749, %v4439
        %v4892 = vsub.f32 %v3751, %v4572
        %v4893 = vsub.f32 %v2922, %v4173
        %v4894 = vsub.f32 %v2924, %v4306
        %v4895 = vsub.f32 %v3755, %v4439
        %v4896 = vsub.f32 %v3757, %v4572
        %v4897 = vsub.f32 %v2928, %v4173
        %v4898 = vsub.f32 %v2930, %v4306
        %v4899 = vsub.f32 %v3761, %v4439
        %v4900 = vsub.f32 %v3763, %v4572
        %v4901 = vsub.f32 %v2934, %v4173
        %v4902 = vsub.f32 %v2936, %v4306
        %v4903 = vsub.f32 %v3767, %v4439
        %v4904 = vsub.f32 %v3769, %v4572
        %v4905 = vsub.f32 %v2940, %v4173
        %v4906 = vsub.f32 %v2942, %v4306
        %v4907 = vsub.f32 %v3773, %v4439
        %v4908 = vsub.f32 %v3775, %v4572
        %v4909 = vsub.f32 %v2946, %v4173
        %v4910 = vsub.f32 %v2948, %v4306
        %v4911 = vsub.f32 %v3779, %v4439
        %v4912 = vsub.f32 %v3781, %v4572
        %v4913 = vsub.f32 %v2952, %v4173
        %v4914 = vsub.f32 %v2954, %v4306
        %v4915 = vsub.f32 %v3785, %v4439
        %v4916 = vsub.f32 %v3787, %v4572
        %v4917 = vsub.f32 %v2958, %v4173
        %v4918 = vsub.f32 %v2960, %v4306
        %v4919 = vsub.f32 %v3791, %v4439
        %v4920 = vsub.f32 %v3793, %v4572
        %v4921 = vsub.f32 %v2964, %v4173
        %v4922 = vsub.f32 %v2966, %v4306
        %v4923 = vsub.f32 %v3797, %v4439
        %v4924 = vsub.f32 %v3799, %v4572
        %v4925 = vsub.f32 %v2970, %v4173
        %v4926 = vsub.f32 %v2972, %v4306
        %v4927 = vsub.f32 %v3803, %v4439
        %v4928 = vsub.f32 %v3805, %v4572
        %v4929 = vsub.f32 %v2976, %v4173
        %v4930 = vsub.f32 %v2978, %v4306
        %v4931 = vsub.f32 %v3809, %v4439
        %v4932 = vsub.f32 %v3811, %v4572
        %v4933 = vsub.f32 %v2982, %v4173
        %v4934 = vsub.f32 %v2984, %v4306
        %v4935 = vsub.f32 %v3815, %v4439
        %v4936 = vsub.f32 %v3817, %v4572
        %v4937 = vsub.f32 %v2988, %v4173
        %v4938 = vsub.f32 %v2990, %v4306
        %v4939 = vsub.f32 %v3821, %v4439
        %v4940 = vsub.f32 %v3823, %v4572
        %v4941 = vsub.f32 %v2994, %v4173
        %v4942 = vsub.f32 %v2996, %v4306
        %v4943 = vsub.f32 %v3827, %v4439
        %v4944 = vsub.f32 %v3829, %v4572
        %v4945 = vsub.f32 %v3000, %v4173
        %v4946 = vsub.f32 %v3002, %v4306
        %v4947 = vsub.f32 %v3833, %v4439
        %v4948 = vsub.f32 %v3835, %v4572
        %v4949 = vsub.f32 %v3006, %v4173
        %v4950 = vsub.f32 %v3008, %v4306
        %v4951 = vsub.f32 %v3839, %v4439
        %v4952 = vsub.f32 %v3841, %v4572
        %v4953 = vsub.f32 %v3012, %v4173
        %v4954 = vsub.f32 %v3014, %v4306
        %v4955 = vsub.f32 %v3845, %v4439
        %v4956 = vsub.f32 %v3847, %v4572
        %v4957 = vsub.f32 %v3018, %v4173
        %v4958 = vsub.f32 %v3020, %v4306
        %v4959 = vsub.f32 %v3851, %v4439
        %v4960 = vsub.f32 %v3853, %v4572
        %v4961 = vsub.f32 %v3024, %v4173
        %v4962 = vsub.f32 %v3026, %v4306
        %v4963 = vsub.f32 %v3857, %v4439
        %v4964 = vsub.f32 %v3859, %v4572
        %v4965 = vsub.f32 %v3030, %v4173
        %v4966 = vsub.f32 %v3032, %v4306
        %v4967 = vsub.f32 %v3863, %v4439
        %v4968 = vsub.f32 %v3865, %v4572
        %v4969 = vsub.f32 %v3036, %v4173
        %v4970 = vsub.f32 %v3038, %v4306
        %v4971 = vsub.f32 %v3869, %v4439
        %v4972 = vsub.f32 %v3871, %v4572
        %v4973 = vsub.f32 %v3042, %v4173
        %v4974 = vsub.f32 %v3044, %v4306
        %v4975 = vsub.f32 %v3875, %v4439
        %v4976 = vsub.f32 %v3877, %v4572
        %v4977 = vsub.f32 %v3048, %v4173
        %v4978 = vsub.f32 %v3050, %v4306
        %v4979 = vsub.f32 %v3881, %v4439
        %v4980 = vsub.f32 %v3883, %v4572
        %v4981 = vsub.f32 %v3054, %v4173
        %v4982 = vsub.f32 %v3056, %v4306
        %v4983 = vsub.f32 %v3887, %v4439
        %v4984 = vsub.f32 %v3889, %v4572
        %v4985 = vsub.f32 %v3060, %v4173
        %v4986 = vsub.f32 %v3062, %v4306
        %v4987 = vsub.f32 %v3893, %v4439
        %v4988 = vsub.f32 %v3895, %v4572
        %v4989 = vsub.f32 %v3066, %v4173
        %v4990 = vsub.f32 %v3068, %v4306
        %v4991 = vsub.f32 %v3899, %v4439
        %v4992 = vsub.f32 %v3901, %v4572
        %v4993 = vsub.f32 %v3072, %v4173
        %v4994 = vsub.f32 %v3074, %v4306
        %v4995 = vsub.f32 %v3905, %v4439
        %v4996 = vsub.f32 %v3907, %v4572
        %v4997 = vsub.f32 %v3078, %v4173
        %v4998 = vsub.f32 %v3080, %v4306
        %v4999 = vsub.f32 %v3911, %v4439
        %v5000 = vsub.f32 %v3913, %v4572
        %v5001 = vsub.f32 %v3084, %v4173
        %v5002 = vsub.f32 %v3086, %v4306
        %v5003 = vsub.f32 %v3917, %v4439
        %v5004 = vsub.f32 %v3919, %v4572
        %v5005 = vsub.f32 %v3090, %v4173
        %v5006 = vsub.f32 %v3092, %v4306
        %v5007 = vsub.f32 %v3923, %v4439
        %v5008 = vsub.f32 %v3925, %v4572
        %v5009 = vsub.f32 %v3096, %v4173
        %v5010 = vsub.f32 %v3098, %v4306
        %v5011 = vsub.f32 %v3929, %v4439
        %v5012 = vsub.f32 %v3931, %v4572
        %v5013 = vsub.f32 %v3102, %v4173
        %v5014 = vsub.f32 %v3104, %v4306
        %v5015 = vsub.f32 %v3935, %v4439
        %v5016 = vsub.f32 %v3937, %v4572
        %v5017 = vsub.f32 %v3108, %v4173
        %v5018 = vsub.f32 %v3110, %v4306
        %v5019 = vsub.f32 %v3941, %v4439
        %v5020 = vsub.f32 %v3943, %v4572
        %v5021 = vsub.f32 %v3114, %v4173
        %v5022 = vsub.f32 %v3116, %v4306
        %v5023 = vsub.f32 %v3947, %v4439
        %v5024 = vsub.f32 %v3949, %v4572
        %v5025 = vsub.f32 %v3120, %v4173
        %v5026 = vsub.f32 %v3122, %v4306
        %v5027 = vsub.f32 %v3953, %v4439
        %v5028 = vsub.f32 %v3955, %v4572
        %v5029 = vsub.f32 %v3126, %v4173
        %v5030 = vsub.f32 %v3128, %v4306
        %v5031 = vsub.f32 %v3959, %v4439
        %v5032 = vsub.f32 %v3961, %v4572
        %v5033 = vsub.f32 %v3132, %v4173
        %v5034 = vsub.f32 %v3134, %v4306
        %v5035 = vsub.f32 %v3965, %v4439
        %v5036 = vsub.f32 %v3967, %v4572
        %v5037 = vsub.f32 %v3138, %v4173
        %v5038 = vsub.f32 %v3140, %v4306
        %v5039 = vsub.f32 %v3971, %v4439
        %v5040 = vsub.f32 %v3973, %v4572
        %v5041 = vsub.f32 %v3144, %v4173
        %v5042 = vsub.f32 %v3146, %v4306
        %v5043 = vsub.f32 %v3977, %v4439
        %v5044 = vsub.f32 %v3979, %v4572
        %v5045 = vsub.f32 %v3150, %v4173
        %v5046 = vsub.f32 %v3152, %v4306
        %v5047 = vsub.f32 %v3983, %v4439
        %v5048 = vsub.f32 %v3985, %v4572
        %v5049 = vsub.f32 %v3156, %v4173
        %v5050 = vsub.f32 %v3158, %v4306
        %v5051 = vsub.f32 %v3989, %v4439
        %v5052 = vsub.f32 %v3991, %v4572
        %v5053 = vsub.f32 %v3162, %v4173
        %v5054 = vsub.f32 %v3164, %v4306
        %v5055 = vsub.f32 %v3995, %v4439
        %v5056 = vsub.f32 %v3997, %v4572
        %v5057 = vsub.f32 %v3168, %v4173
        %v5058 = vsub.f32 %v3170, %v4306
        %v5059 = vsub.f32 %v4001, %v4439
        %v5060 = vsub.f32 %v4003, %v4572
        %v5061 = vsub.f32 %v3174, %v4173
        %v5062 = vsub.f32 %v3176, %v4306
        %v5063 = vsub.f32 %v4007, %v4439
        %v5064 = vsub.f32 %v4009, %v4572
        %v5065 = vsub.f32 %v3180, %v4173
        %v5066 = vsub.f32 %v3182, %v4306
        %v5067 = vsub.f32 %v4013, %v4439
        %v5068 = vsub.f32 %v4015, %v4572
        %v5069 = vsub.f32 %v3186, %v4173
        %v5070 = vsub.f32 %v3188, %v4306
        %v5071 = vsub.f32 %v4019, %v4439
        %v5072 = vsub.f32 %v4021, %v4572
        %v5073 = vsub.f32 %v3192, %v4173
        %v5074 = vsub.f32 %v3194, %v4306
        %v5075 = vsub.f32 %v4025, %v4439
        %v5076 = vsub.f32 %v4027, %v4572
        %v5077 = vsub.f32 %v3198, %v4173
        %v5078 = vsub.f32 %v3200, %v4306
        %v5079 = vsub.f32 %v4031, %v4439
        %v5080 = vsub.f32 %v4033, %v4572
        %v5081 = vsub.f32 %v3204, %v4173
        %v5082 = vsub.f32 %v3206, %v4306
        %v5083 = vsub.f32 %v4037, %v4439
        %v5084 = vsub.f32 %v4039, %v4572
        %v5085 = vmul.f32 %v4573, 1.442695
        %v5086 = vpow.pop %v5085
        %v5087 = vmul.f32 %v4574, 1.442695
        %v5088 = vpow.pop %v5087
        %v5089 = vmul.f32 %v4575, 1.442695
        %v5090 = vpow.pop %v5089
        %v5091 = vmul.f32 %v4576, 1.442695
        %v5092 = vpow.pop %v5091
        %v5093 = vmul.f32 %v4577, 1.442695
        %v5094 = vpow.pop %v5093
        %v5095 = vmul.f32 %v4578, 1.442695
        %v5096 = vpow.pop %v5095
        %v5097 = vmul.f32 %v4579, 1.442695
        %v5098 = vpow.pop %v5097
        %v5099 = vmul.f32 %v4580, 1.442695
        %v5100 = vpow.pop %v5099
        %v5101 = vmul.f32 %v4581, 1.442695
        %v5102 = vpow.pop %v5101
        %v5103 = vmul.f32 %v4582, 1.442695
        %v5104 = vpow.pop %v5103
        %v5105 = vmul.f32 %v4583, 1.442695
        %v5106 = vpow.pop %v5105
        %v5107 = vmul.f32 %v4584, 1.442695
        %v5108 = vpow.pop %v5107
        %v5109 = vmul.f32 %v4585, 1.442695
        %v5110 = vpow.pop %v5109
        %v5111 = vmul.f32 %v4586, 1.442695
        %v5112 = vpow.pop %v5111
        %v5113 = vmul.f32 %v4587, 1.442695
        %v5114 = vpow.pop %v5113
        %v5115 = vmul.f32 %v4588, 1.442695
        %v5116 = vpow.pop %v5115
        %v5117 = vmul.f32 %v4589, 1.442695
        %v5118 = vpow.pop %v5117
        %v5119 = vmul.f32 %v4590, 1.442695
        %v5120 = vpow.pop %v5119
        %v5121 = vmul.f32 %v4591, 1.442695
        %v5122 = vpow.pop %v5121
        %v5123 = vmul.f32 %v4592, 1.442695
        %v5124 = vpow.pop %v5123
        %v5125 = vmul.f32 %v4593, 1.442695
        %v5126 = vpow.pop %v5125
        %v5127 = vmul.f32 %v4594, 1.442695
        %v5128 = vpow.pop %v5127
        %v5129 = vmul.f32 %v4595, 1.442695
        %v5130 = vpow.pop %v5129
        %v5131 = vmul.f32 %v4596, 1.442695
        %v5132 = vpow.pop %v5131
        %v5133 = vmul.f32 %v4597, 1.442695
        %v5134 = vpow.pop %v5133
        %v5135 = vmul.f32 %v4598, 1.442695
        %v5136 = vpow.pop %v5135
        %v5137 = vmul.f32 %v4599, 1.442695
        %v5138 = vpow.pop %v5137
        %v5139 = vmul.f32 %v4600, 1.442695
        %v5140 = vpow.pop %v5139
        %v5141 = vmul.f32 %v4601, 1.442695
        %v5142 = vpow.pop %v5141
        %v5143 = vmul.f32 %v4602, 1.442695
        %v5144 = vpow.pop %v5143
        %v5145 = vmul.f32 %v4603, 1.442695
        %v5146 = vpow.pop %v5145
        %v5147 = vmul.f32 %v4604, 1.442695
        %v5148 = vpow.pop %v5147
        %v5149 = vmul.f32 %v4605, 1.442695
        %v5150 = vpow.pop %v5149
        %v5151 = vmul.f32 %v4606, 1.442695
        %v5152 = vpow.pop %v5151
        %v5153 = vmul.f32 %v4607, 1.442695
        %v5154 = vpow.pop %v5153
        %v5155 = vmul.f32 %v4608, 1.442695
        %v5156 = vpow.pop %v5155
        %v5157 = vmul.f32 %v4609, 1.442695
        %v5158 = vpow.pop %v5157
        %v5159 = vmul.f32 %v4610, 1.442695
        %v5160 = vpow.pop %v5159
        %v5161 = vmul.f32 %v4611, 1.442695
        %v5162 = vpow.pop %v5161
        %v5163 = vmul.f32 %v4612, 1.442695
        %v5164 = vpow.pop %v5163
        %v5165 = vmul.f32 %v4613, 1.442695
        %v5166 = vpow.pop %v5165
        %v5167 = vmul.f32 %v4614, 1.442695
        %v5168 = vpow.pop %v5167
        %v5169 = vmul.f32 %v4615, 1.442695
        %v5170 = vpow.pop %v5169
        %v5171 = vmul.f32 %v4616, 1.442695
        %v5172 = vpow.pop %v5171
        %v5173 = vmul.f32 %v4617, 1.442695
        %v5174 = vpow.pop %v5173
        %v5175 = vmul.f32 %v4618, 1.442695
        %v5176 = vpow.pop %v5175
        %v5177 = vmul.f32 %v4619, 1.442695
        %v5178 = vpow.pop %v5177
        %v5179 = vmul.f32 %v4620, 1.442695
        %v5180 = vpow.pop %v5179
        %v5181 = vmul.f32 %v4621, 1.442695
        %v5182 = vpow.pop %v5181
        %v5183 = vmul.f32 %v4622, 1.442695
        %v5184 = vpow.pop %v5183
        %v5185 = vmul.f32 %v4623, 1.442695
        %v5186 = vpow.pop %v5185
        %v5187 = vmul.f32 %v4624, 1.442695
        %v5188 = vpow.pop %v5187
        %v5189 = vmul.f32 %v4625, 1.442695
        %v5190 = vpow.pop %v5189
        %v5191 = vmul.f32 %v4626, 1.442695
        %v5192 = vpow.pop %v5191
        %v5193 = vmul.f32 %v4627, 1.442695
        %v5194 = vpow.pop %v5193
        %v5195 = vmul.f32 %v4628, 1.442695
        %v5196 = vpow.pop %v5195
        %v5197 = vmul.f32 %v4629, 1.442695
        %v5198 = vpow.pop %v5197
        %v5199 = vmul.f32 %v4630, 1.442695
        %v5200 = vpow.pop %v5199
        %v5201 = vmul.f32 %v4631, 1.442695
        %v5202 = vpow.pop %v5201
        %v5203 = vmul.f32 %v4632, 1.442695
        %v5204 = vpow.pop %v5203
        %v5205 = vmul.f32 %v4633, 1.442695
        %v5206 = vpow.pop %v5205
        %v5207 = vmul.f32 %v4634, 1.442695
        %v5208 = vpow.pop %v5207
        %v5209 = vmul.f32 %v4635, 1.442695
        %v5210 = vpow.pop %v5209
        %v5211 = vmul.f32 %v4636, 1.442695
        %v5212 = vpow.pop %v5211
        %v5213 = vmul.f32 %v4637, 1.442695
        %v5214 = vpow.pop %v5213
        %v5215 = vmul.f32 %v4638, 1.442695
        %v5216 = vpow.pop %v5215
        %v5217 = vmul.f32 %v4639, 1.442695
        %v5218 = vpow.pop %v5217
        %v5219 = vmul.f32 %v4640, 1.442695
        %v5220 = vpow.pop %v5219
        %v5221 = vmul.f32 %v4641, 1.442695
        %v5222 = vpow.pop %v5221
        %v5223 = vmul.f32 %v4642, 1.442695
        %v5224 = vpow.pop %v5223
        %v5225 = vmul.f32 %v4643, 1.442695
        %v5226 = vpow.pop %v5225
        %v5227 = vmul.f32 %v4644, 1.442695
        %v5228 = vpow.pop %v5227
        %v5229 = vmul.f32 %v4645, 1.442695
        %v5230 = vpow.pop %v5229
        %v5231 = vmul.f32 %v4646, 1.442695
        %v5232 = vpow.pop %v5231
        %v5233 = vmul.f32 %v4647, 1.442695
        %v5234 = vpow.pop %v5233
        %v5235 = vmul.f32 %v4648, 1.442695
        %v5236 = vpow.pop %v5235
        %v5237 = vmul.f32 %v4649, 1.442695
        %v5238 = vpow.pop %v5237
        %v5239 = vmul.f32 %v4650, 1.442695
        %v5240 = vpow.pop %v5239
        %v5241 = vmul.f32 %v4651, 1.442695
        %v5242 = vpow.pop %v5241
        %v5243 = vmul.f32 %v4652, 1.442695
        %v5244 = vpow.pop %v5243
        %v5245 = vmul.f32 %v4653, 1.442695
        %v5246 = vpow.pop %v5245
        %v5247 = vmul.f32 %v4654, 1.442695
        %v5248 = vpow.pop %v5247
        %v5249 = vmul.f32 %v4655, 1.442695
        %v5250 = vpow.pop %v5249
        %v5251 = vmul.f32 %v4656, 1.442695
        %v5252 = vpow.pop %v5251
        %v5253 = vmul.f32 %v4657, 1.442695
        %v5254 = vpow.pop %v5253
        %v5255 = vmul.f32 %v4658, 1.442695
        %v5256 = vpow.pop %v5255
        %v5257 = vmul.f32 %v4659, 1.442695
        %v5258 = vpow.pop %v5257
        %v5259 = vmul.f32 %v4660, 1.442695
        %v5260 = vpow.pop %v5259
        %v5261 = vmul.f32 %v4661, 1.442695
        %v5262 = vpow.pop %v5261
        %v5263 = vmul.f32 %v4662, 1.442695
        %v5264 = vpow.pop %v5263
        %v5265 = vmul.f32 %v4663, 1.442695
        %v5266 = vpow.pop %v5265
        %v5267 = vmul.f32 %v4664, 1.442695
        %v5268 = vpow.pop %v5267
        %v5269 = vmul.f32 %v4665, 1.442695
        %v5270 = vpow.pop %v5269
        %v5271 = vmul.f32 %v4666, 1.442695
        %v5272 = vpow.pop %v5271
        %v5273 = vmul.f32 %v4667, 1.442695
        %v5274 = vpow.pop %v5273
        %v5275 = vmul.f32 %v4668, 1.442695
        %v5276 = vpow.pop %v5275
        %v5277 = vmul.f32 %v4669, 1.442695
        %v5278 = vpow.pop %v5277
        %v5279 = vmul.f32 %v4670, 1.442695
        %v5280 = vpow.pop %v5279
        %v5281 = vmul.f32 %v4671, 1.442695
        %v5282 = vpow.pop %v5281
        %v5283 = vmul.f32 %v4672, 1.442695
        %v5284 = vpow.pop %v5283
        %v5285 = vmul.f32 %v4673, 1.442695
        %v5286 = vpow.pop %v5285
        %v5287 = vmul.f32 %v4674, 1.442695
        %v5288 = vpow.pop %v5287
        %v5289 = vmul.f32 %v4675, 1.442695
        %v5290 = vpow.pop %v5289
        %v5291 = vmul.f32 %v4676, 1.442695
        %v5292 = vpow.pop %v5291
        %v5293 = vmul.f32 %v4677, 1.442695
        %v5294 = vpow.pop %v5293
        %v5295 = vmul.f32 %v4678, 1.442695
        %v5296 = vpow.pop %v5295
        %v5297 = vmul.f32 %v4679, 1.442695
        %v5298 = vpow.pop %v5297
        %v5299 = vmul.f32 %v4680, 1.442695
        %v5300 = vpow.pop %v5299
        %v5301 = vmul.f32 %v4681, 1.442695
        %v5302 = vpow.pop %v5301
        %v5303 = vmul.f32 %v4682, 1.442695
        %v5304 = vpow.pop %v5303
        %v5305 = vmul.f32 %v4683, 1.442695
        %v5306 = vpow.pop %v5305
        %v5307 = vmul.f32 %v4684, 1.442695
        %v5308 = vpow.pop %v5307
        %v5309 = vmul.f32 %v4685, 1.442695
        %v5310 = vpow.pop %v5309
        %v5311 = vmul.f32 %v4686, 1.442695
        %v5312 = vpow.pop %v5311
        %v5313 = vmul.f32 %v4687, 1.442695
        %v5314 = vpow.pop %v5313
        %v5315 = vmul.f32 %v4688, 1.442695
        %v5316 = vpow.pop %v5315
        %v5317 = vmul.f32 %v4689, 1.442695
        %v5318 = vpow.pop %v5317
        %v5319 = vmul.f32 %v4690, 1.442695
        %v5320 = vpow.pop %v5319
        %v5321 = vmul.f32 %v4691, 1.442695
        %v5322 = vpow.pop %v5321
        %v5323 = vmul.f32 %v4692, 1.442695
        %v5324 = vpow.pop %v5323
        %v5325 = vmul.f32 %v4693, 1.442695
        %v5326 = vpow.pop %v5325
        %v5327 = vmul.f32 %v4694, 1.442695
        %v5328 = vpow.pop %v5327
        %v5329 = vmul.f32 %v4695, 1.442695
        %v5330 = vpow.pop %v5329
        %v5331 = vmul.f32 %v4696, 1.442695
        %v5332 = vpow.pop %v5331
        %v5333 = vmul.f32 %v4697, 1.442695
        %v5334 = vpow.pop %v5333
        %v5335 = vmul.f32 %v4698, 1.442695
        %v5336 = vpow.pop %v5335
        %v5337 = vmul.f32 %v4699, 1.442695
        %v5338 = vpow.pop %v5337
        %v5339 = vmul.f32 %v4700, 1.442695
        %v5340 = vpow.pop %v5339
        %v5341 = vmul.f32 %v4701, 1.442695
        %v5342 = vpow.pop %v5341
        %v5343 = vmul.f32 %v4702, 1.442695
        %v5344 = vpow.pop %v5343
        %v5345 = vmul.f32 %v4703, 1.442695
        %v5346 = vpow.pop %v5345
        %v5347 = vmul.f32 %v4704, 1.442695
        %v5348 = vpow.pop %v5347
        %v5349 = vmul.f32 %v4705, 1.442695
        %v5350 = vpow.pop %v5349
        %v5351 = vmul.f32 %v4706, 1.442695
        %v5352 = vpow.pop %v5351
        %v5353 = vmul.f32 %v4707, 1.442695
        %v5354 = vpow.pop %v5353
        %v5355 = vmul.f32 %v4708, 1.442695
        %v5356 = vpow.pop %v5355
        %v5357 = vmul.f32 %v4709, 1.442695
        %v5358 = vpow.pop %v5357
        %v5359 = vmul.f32 %v4710, 1.442695
        %v5360 = vpow.pop %v5359
        %v5361 = vmul.f32 %v4711, 1.442695
        %v5362 = vpow.pop %v5361
        %v5363 = vmul.f32 %v4712, 1.442695
        %v5364 = vpow.pop %v5363
        %v5365 = vmul.f32 %v4713, 1.442695
        %v5366 = vpow.pop %v5365
        %v5367 = vmul.f32 %v4714, 1.442695
        %v5368 = vpow.pop %v5367
        %v5369 = vmul.f32 %v4715, 1.442695
        %v5370 = vpow.pop %v5369
        %v5371 = vmul.f32 %v4716, 1.442695
        %v5372 = vpow.pop %v5371
        %v5373 = vmul.f32 %v4717, 1.442695
        %v5374 = vpow.pop %v5373
        %v5375 = vmul.f32 %v4718, 1.442695
        %v5376 = vpow.pop %v5375
        %v5377 = vmul.f32 %v4719, 1.442695
        %v5378 = vpow.pop %v5377
        %v5379 = vmul.f32 %v4720, 1.442695
        %v5380 = vpow.pop %v5379
        %v5381 = vmul.f32 %v4721, 1.442695
        %v5382 = vpow.pop %v5381
        %v5383 = vmul.f32 %v4722, 1.442695
        %v5384 = vpow.pop %v5383
        %v5385 = vmul.f32 %v4723, 1.442695
        %v5386 = vpow.pop %v5385
        %v5387 = vmul.f32 %v4724, 1.442695
        %v5388 = vpow.pop %v5387
        %v5389 = vmul.f32 %v4725, 1.442695
        %v5390 = vpow.pop %v5389
        %v5391 = vmul.f32 %v4726, 1.442695
        %v5392 = vpow.pop %v5391
        %v5393 = vmul.f32 %v4727, 1.442695
        %v5394 = vpow.pop %v5393
        %v5395 = vmul.f32 %v4728, 1.442695
        %v5396 = vpow.pop %v5395
        %v5397 = vmul.f32 %v4729, 1.442695
        %v5398 = vpow.pop %v5397
        %v5399 = vmul.f32 %v4730, 1.442695
        %v5400 = vpow.pop %v5399
        %v5401 = vmul.f32 %v4731, 1.442695
        %v5402 = vpow.pop %v5401
        %v5403 = vmul.f32 %v4732, 1.442695
        %v5404 = vpow.pop %v5403
        %v5405 = vmul.f32 %v4733, 1.442695
        %v5406 = vpow.pop %v5405
        %v5407 = vmul.f32 %v4734, 1.442695
        %v5408 = vpow.pop %v5407
        %v5409 = vmul.f32 %v4735, 1.442695
        %v5410 = vpow.pop %v5409
        %v5411 = vmul.f32 %v4736, 1.442695
        %v5412 = vpow.pop %v5411
        %v5413 = vmul.f32 %v4737, 1.442695
        %v5414 = vpow.pop %v5413
        %v5415 = vmul.f32 %v4738, 1.442695
        %v5416 = vpow.pop %v5415
        %v5417 = vmul.f32 %v4739, 1.442695
        %v5418 = vpow.pop %v5417
        %v5419 = vmul.f32 %v4740, 1.442695
        %v5420 = vpow.pop %v5419
        %v5421 = vmul.f32 %v4741, 1.442695
        %v5422 = vpow.pop %v5421
        %v5423 = vmul.f32 %v4742, 1.442695
        %v5424 = vpow.pop %v5423
        %v5425 = vmul.f32 %v4743, 1.442695
        %v5426 = vpow.pop %v5425
        %v5427 = vmul.f32 %v4744, 1.442695
        %v5428 = vpow.pop %v5427
        %v5429 = vmul.f32 %v4745, 1.442695
        %v5430 = vpow.pop %v5429
        %v5431 = vmul.f32 %v4746, 1.442695
        %v5432 = vpow.pop %v5431
        %v5433 = vmul.f32 %v4747, 1.442695
        %v5434 = vpow.pop %v5433
        %v5435 = vmul.f32 %v4748, 1.442695
        %v5436 = vpow.pop %v5435
        %v5437 = vmul.f32 %v4749, 1.442695
        %v5438 = vpow.pop %v5437
        %v5439 = vmul.f32 %v4750, 1.442695
        %v5440 = vpow.pop %v5439
        %v5441 = vmul.f32 %v4751, 1.442695
        %v5442 = vpow.pop %v5441
        %v5443 = vmul.f32 %v4752, 1.442695
        %v5444 = vpow.pop %v5443
        %v5445 = vmul.f32 %v4753, 1.442695
        %v5446 = vpow.pop %v5445
        %v5447 = vmul.f32 %v4754, 1.442695
        %v5448 = vpow.pop %v5447
        %v5449 = vmul.f32 %v4755, 1.442695
        %v5450 = vpow.pop %v5449
        %v5451 = vmul.f32 %v4756, 1.442695
        %v5452 = vpow.pop %v5451
        %v5453 = vmul.f32 %v4757, 1.442695
        %v5454 = vpow.pop %v5453
        %v5455 = vmul.f32 %v4758, 1.442695
        %v5456 = vpow.pop %v5455
        %v5457 = vmul.f32 %v4759, 1.442695
        %v5458 = vpow.pop %v5457
        %v5459 = vmul.f32 %v4760, 1.442695
        %v5460 = vpow.pop %v5459
        %v5461 = vmul.f32 %v4761, 1.442695
        %v5462 = vpow.pop %v5461
        %v5463 = vmul.f32 %v4762, 1.442695
        %v5464 = vpow.pop %v5463
        %v5465 = vmul.f32 %v4763, 1.442695
        %v5466 = vpow.pop %v5465
        %v5467 = vmul.f32 %v4764, 1.442695
        %v5468 = vpow.pop %v5467
        %v5469 = vmul.f32 %v4765, 1.442695
        %v5470 = vpow.pop %v5469
        %v5471 = vmul.f32 %v4766, 1.442695
        %v5472 = vpow.pop %v5471
        %v5473 = vmul.f32 %v4767, 1.442695
        %v5474 = vpow.pop %v5473
        %v5475 = vmul.f32 %v4768, 1.442695
        %v5476 = vpow.pop %v5475
        %v5477 = vmul.f32 %v4769, 1.442695
        %v5478 = vpow.pop %v5477
        %v5479 = vmul.f32 %v4770, 1.442695
        %v5480 = vpow.pop %v5479
        %v5481 = vmul.f32 %v4771, 1.442695
        %v5482 = vpow.pop %v5481
        %v5483 = vmul.f32 %v4772, 1.442695
        %v5484 = vpow.pop %v5483
        %v5485 = vmul.f32 %v4773, 1.442695
        %v5486 = vpow.pop %v5485
        %v5487 = vmul.f32 %v4774, 1.442695
        %v5488 = vpow.pop %v5487
        %v5489 = vmul.f32 %v4775, 1.442695
        %v5490 = vpow.pop %v5489
        %v5491 = vmul.f32 %v4776, 1.442695
        %v5492 = vpow.pop %v5491
        %v5493 = vmul.f32 %v4777, 1.442695
        %v5494 = vpow.pop %v5493
        %v5495 = vmul.f32 %v4778, 1.442695
        %v5496 = vpow.pop %v5495
        %v5497 = vmul.f32 %v4779, 1.442695
        %v5498 = vpow.pop %v5497
        %v5499 = vmul.f32 %v4780, 1.442695
        %v5500 = vpow.pop %v5499
        %v5501 = vmul.f32 %v4781, 1.442695
        %v5502 = vpow.pop %v5501
        %v5503 = vmul.f32 %v4782, 1.442695
        %v5504 = vpow.pop %v5503
        %v5505 = vmul.f32 %v4783, 1.442695
        %v5506 = vpow.pop %v5505
        %v5507 = vmul.f32 %v4784, 1.442695
        %v5508 = vpow.pop %v5507
        %v5509 = vmul.f32 %v4785, 1.442695
        %v5510 = vpow.pop %v5509
        %v5511 = vmul.f32 %v4786, 1.442695
        %v5512 = vpow.pop %v5511
        %v5513 = vmul.f32 %v4787, 1.442695
        %v5514 = vpow.pop %v5513
        %v5515 = vmul.f32 %v4788, 1.442695
        %v5516 = vpow.pop %v5515
        %v5517 = vmul.f32 %v4789, 1.442695
        %v5518 = vpow.pop %v5517
        %v5519 = vmul.f32 %v4790, 1.442695
        %v5520 = vpow.pop %v5519
        %v5521 = vmul.f32 %v4791, 1.442695
        %v5522 = vpow.pop %v5521
        %v5523 = vmul.f32 %v4792, 1.442695
        %v5524 = vpow.pop %v5523
        %v5525 = vmul.f32 %v4793, 1.442695
        %v5526 = vpow.pop %v5525
        %v5527 = vmul.f32 %v4794, 1.442695
        %v5528 = vpow.pop %v5527
        %v5529 = vmul.f32 %v4795, 1.442695
        %v5530 = vpow.pop %v5529
        %v5531 = vmul.f32 %v4796, 1.442695
        %v5532 = vpow.pop %v5531
        %v5533 = vmul.f32 %v4797, 1.442695
        %v5534 = vpow.pop %v5533
        %v5535 = vmul.f32 %v4798, 1.442695
        %v5536 = vpow.pop %v5535
        %v5537 = vmul.f32 %v4799, 1.442695
        %v5538 = vpow.pop %v5537
        %v5539 = vmul.f32 %v4800, 1.442695
        %v5540 = vpow.pop %v5539
        %v5541 = vmul.f32 %v4801, 1.442695
        %v5542 = vpow.pop %v5541
        %v5543 = vmul.f32 %v4802, 1.442695
        %v5544 = vpow.pop %v5543
        %v5545 = vmul.f32 %v4803, 1.442695
        %v5546 = vpow.pop %v5545
        %v5547 = vmul.f32 %v4804, 1.442695
        %v5548 = vpow.pop %v5547
        %v5549 = vmul.f32 %v4805, 1.442695
        %v5550 = vpow.pop %v5549
        %v5551 = vmul.f32 %v4806, 1.442695
        %v5552 = vpow.pop %v5551
        %v5553 = vmul.f32 %v4807, 1.442695
        %v5554 = vpow.pop %v5553
        %v5555 = vmul.f32 %v4808, 1.442695
        %v5556 = vpow.pop %v5555
        %v5557 = vmul.f32 %v4809, 1.442695
        %v5558 = vpow.pop %v5557
        %v5559 = vmul.f32 %v4810, 1.442695
        %v5560 = vpow.pop %v5559
        %v5561 = vmul.f32 %v4811, 1.442695
        %v5562 = vpow.pop %v5561
        %v5563 = vmul.f32 %v4812, 1.442695
        %v5564 = vpow.pop %v5563
        %v5565 = vmul.f32 %v4813, 1.442695
        %v5566 = vpow.pop %v5565
        %v5567 = vmul.f32 %v4814, 1.442695
        %v5568 = vpow.pop %v5567
        %v5569 = vmul.f32 %v4815, 1.442695
        %v5570 = vpow.pop %v5569
        %v5571 = vmul.f32 %v4816, 1.442695
        %v5572 = vpow.pop %v5571
        %v5573 = vmul.f32 %v4817, 1.442695
        %v5574 = vpow.pop %v5573
        %v5575 = vmul.f32 %v4818, 1.442695
        %v5576 = vpow.pop %v5575
        %v5577 = vmul.f32 %v4819, 1.442695
        %v5578 = vpow.pop %v5577
        %v5579 = vmul.f32 %v4820, 1.442695
        %v5580 = vpow.pop %v5579
        %v5581 = vmul.f32 %v4821, 1.442695
        %v5582 = vpow.pop %v5581
        %v5583 = vmul.f32 %v4822, 1.442695
        %v5584 = vpow.pop %v5583
        %v5585 = vmul.f32 %v4823, 1.442695
        %v5586 = vpow.pop %v5585
        %v5587 = vmul.f32 %v4824, 1.442695
        %v5588 = vpow.pop %v5587
        %v5589 = vmul.f32 %v4825, 1.442695
        %v5590 = vpow.pop %v5589
        %v5591 = vmul.f32 %v4826, 1.442695
        %v5592 = vpow.pop %v5591
        %v5593 = vmul.f32 %v4827, 1.442695
        %v5594 = vpow.pop %v5593
        %v5595 = vmul.f32 %v4828, 1.442695
        %v5596 = vpow.pop %v5595
        %v5597 = vmul.f32 %v4829, 1.442695
        %v5598 = vpow.pop %v5597
        %v5599 = vmul.f32 %v4830, 1.442695
        %v5600 = vpow.pop %v5599
        %v5601 = vmul.f32 %v4831, 1.442695
        %v5602 = vpow.pop %v5601
        %v5603 = vmul.f32 %v4832, 1.442695
        %v5604 = vpow.pop %v5603
        %v5605 = vmul.f32 %v4833, 1.442695
        %v5606 = vpow.pop %v5605
        %v5607 = vmul.f32 %v4834, 1.442695
        %v5608 = vpow.pop %v5607
        %v5609 = vmul.f32 %v4835, 1.442695
        %v5610 = vpow.pop %v5609
        %v5611 = vmul.f32 %v4836, 1.442695
        %v5612 = vpow.pop %v5611
        %v5613 = vmul.f32 %v4837, 1.442695
        %v5614 = vpow.pop %v5613
        %v5615 = vmul.f32 %v4838, 1.442695
        %v5616 = vpow.pop %v5615
        %v5617 = vmul.f32 %v4839, 1.442695
        %v5618 = vpow.pop %v5617
        %v5619 = vmul.f32 %v4840, 1.442695
        %v5620 = vpow.pop %v5619
        %v5621 = vmul.f32 %v4841, 1.442695
        %v5622 = vpow.pop %v5621
        %v5623 = vmul.f32 %v4842, 1.442695
        %v5624 = vpow.pop %v5623
        %v5625 = vmul.f32 %v4843, 1.442695
        %v5626 = vpow.pop %v5625
        %v5627 = vmul.f32 %v4844, 1.442695
        %v5628 = vpow.pop %v5627
        %v5629 = vmul.f32 %v4845, 1.442695
        %v5630 = vpow.pop %v5629
        %v5631 = vmul.f32 %v4846, 1.442695
        %v5632 = vpow.pop %v5631
        %v5633 = vmul.f32 %v4847, 1.442695
        %v5634 = vpow.pop %v5633
        %v5635 = vmul.f32 %v4848, 1.442695
        %v5636 = vpow.pop %v5635
        %v5637 = vmul.f32 %v4849, 1.442695
        %v5638 = vpow.pop %v5637
        %v5639 = vmul.f32 %v4850, 1.442695
        %v5640 = vpow.pop %v5639
        %v5641 = vmul.f32 %v4851, 1.442695
        %v5642 = vpow.pop %v5641
        %v5643 = vmul.f32 %v4852, 1.442695
        %v5644 = vpow.pop %v5643
        %v5645 = vmul.f32 %v4853, 1.442695
        %v5646 = vpow.pop %v5645
        %v5647 = vmul.f32 %v4854, 1.442695
        %v5648 = vpow.pop %v5647
        %v5649 = vmul.f32 %v4855, 1.442695
        %v5650 = vpow.pop %v5649
        %v5651 = vmul.f32 %v4856, 1.442695
        %v5652 = vpow.pop %v5651
        %v5653 = vmul.f32 %v4857, 1.442695
        %v5654 = vpow.pop %v5653
        %v5655 = vmul.f32 %v4858, 1.442695
        %v5656 = vpow.pop %v5655
        %v5657 = vmul.f32 %v4859, 1.442695
        %v5658 = vpow.pop %v5657
        %v5659 = vmul.f32 %v4860, 1.442695
        %v5660 = vpow.pop %v5659
        %v5661 = vmul.f32 %v4861, 1.442695
        %v5662 = vpow.pop %v5661
        %v5663 = vmul.f32 %v4862, 1.442695
        %v5664 = vpow.pop %v5663
        %v5665 = vmul.f32 %v4863, 1.442695
        %v5666 = vpow.pop %v5665
        %v5667 = vmul.f32 %v4864, 1.442695
        %v5668 = vpow.pop %v5667
        %v5669 = vmul.f32 %v4865, 1.442695
        %v5670 = vpow.pop %v5669
        %v5671 = vmul.f32 %v4866, 1.442695
        %v5672 = vpow.pop %v5671
        %v5673 = vmul.f32 %v4867, 1.442695
        %v5674 = vpow.pop %v5673
        %v5675 = vmul.f32 %v4868, 1.442695
        %v5676 = vpow.pop %v5675
        %v5677 = vmul.f32 %v4869, 1.442695
        %v5678 = vpow.pop %v5677
        %v5679 = vmul.f32 %v4870, 1.442695
        %v5680 = vpow.pop %v5679
        %v5681 = vmul.f32 %v4871, 1.442695
        %v5682 = vpow.pop %v5681
        %v5683 = vmul.f32 %v4872, 1.442695
        %v5684 = vpow.pop %v5683
        %v5685 = vmul.f32 %v4873, 1.442695
        %v5686 = vpow.pop %v5685
        %v5687 = vmul.f32 %v4874, 1.442695
        %v5688 = vpow.pop %v5687
        %v5689 = vmul.f32 %v4875, 1.442695
        %v5690 = vpow.pop %v5689
        %v5691 = vmul.f32 %v4876, 1.442695
        %v5692 = vpow.pop %v5691
        %v5693 = vmul.f32 %v4877, 1.442695
        %v5694 = vpow.pop %v5693
        %v5695 = vmul.f32 %v4878, 1.442695
        %v5696 = vpow.pop %v5695
        %v5697 = vmul.f32 %v4879, 1.442695
        %v5698 = vpow.pop %v5697
        %v5699 = vmul.f32 %v4880, 1.442695
        %v5700 = vpow.pop %v5699
        %v5701 = vmul.f32 %v4881, 1.442695
        %v5702 = vpow.pop %v5701
        %v5703 = vmul.f32 %v4882, 1.442695
        %v5704 = vpow.pop %v5703
        %v5705 = vmul.f32 %v4883, 1.442695
        %v5706 = vpow.pop %v5705
        %v5707 = vmul.f32 %v4884, 1.442695
        %v5708 = vpow.pop %v5707
        %v5709 = vmul.f32 %v4885, 1.442695
        %v5710 = vpow.pop %v5709
        %v5711 = vmul.f32 %v4886, 1.442695
        %v5712 = vpow.pop %v5711
        %v5713 = vmul.f32 %v4887, 1.442695
        %v5714 = vpow.pop %v5713
        %v5715 = vmul.f32 %v4888, 1.442695
        %v5716 = vpow.pop %v5715
        %v5717 = vmul.f32 %v4889, 1.442695
        %v5718 = vpow.pop %v5717
        %v5719 = vmul.f32 %v4890, 1.442695
        %v5720 = vpow.pop %v5719
        %v5721 = vmul.f32 %v4891, 1.442695
        %v5722 = vpow.pop %v5721
        %v5723 = vmul.f32 %v4892, 1.442695
        %v5724 = vpow.pop %v5723
        %v5725 = vmul.f32 %v4893, 1.442695
        %v5726 = vpow.pop %v5725
        %v5727 = vmul.f32 %v4894, 1.442695
        %v5728 = vpow.pop %v5727
        %v5729 = vmul.f32 %v4895, 1.442695
        %v5730 = vpow.pop %v5729
        %v5731 = vmul.f32 %v4896, 1.442695
        %v5732 = vpow.pop %v5731
        %v5733 = vmul.f32 %v4897, 1.442695
        %v5734 = vpow.pop %v5733
        %v5735 = vmul.f32 %v4898, 1.442695
        %v5736 = vpow.pop %v5735
        %v5737 = vmul.f32 %v4899, 1.442695
        %v5738 = vpow.pop %v5737
        %v5739 = vmul.f32 %v4900, 1.442695
        %v5740 = vpow.pop %v5739
        %v5741 = vmul.f32 %v4901, 1.442695
        %v5742 = vpow.pop %v5741
        %v5743 = vmul.f32 %v4902, 1.442695
        %v5744 = vpow.pop %v5743
        %v5745 = vmul.f32 %v4903, 1.442695
        %v5746 = vpow.pop %v5745
        %v5747 = vmul.f32 %v4904, 1.442695
        %v5748 = vpow.pop %v5747
        %v5749 = vmul.f32 %v4905, 1.442695
        %v5750 = vpow.pop %v5749
        %v5751 = vmul.f32 %v4906, 1.442695
        %v5752 = vpow.pop %v5751
        %v5753 = vmul.f32 %v4907, 1.442695
        %v5754 = vpow.pop %v5753
        %v5755 = vmul.f32 %v4908, 1.442695
        %v5756 = vpow.pop %v5755
        %v5757 = vmul.f32 %v4909, 1.442695
        %v5758 = vpow.pop %v5757
        %v5759 = vmul.f32 %v4910, 1.442695
        %v5760 = vpow.pop %v5759
        %v5761 = vmul.f32 %v4911, 1.442695
        %v5762 = vpow.pop %v5761
        %v5763 = vmul.f32 %v4912, 1.442695
        %v5764 = vpow.pop %v5763
        %v5765 = vmul.f32 %v4913, 1.442695
        %v5766 = vpow.pop %v5765
        %v5767 = vmul.f32 %v4914, 1.442695
        %v5768 = vpow.pop %v5767
        %v5769 = vmul.f32 %v4915, 1.442695
        %v5770 = vpow.pop %v5769
        %v5771 = vmul.f32 %v4916, 1.442695
        %v5772 = vpow.pop %v5771
        %v5773 = vmul.f32 %v4917, 1.442695
        %v5774 = vpow.pop %v5773
        %v5775 = vmul.f32 %v4918, 1.442695
        %v5776 = vpow.pop %v5775
        %v5777 = vmul.f32 %v4919, 1.442695
        %v5778 = vpow.pop %v5777
        %v5779 = vmul.f32 %v4920, 1.442695
        %v5780 = vpow.pop %v5779
        %v5781 = vmul.f32 %v4921, 1.442695
        %v5782 = vpow.pop %v5781
        %v5783 = vmul.f32 %v4922, 1.442695
        %v5784 = vpow.pop %v5783
        %v5785 = vmul.f32 %v4923, 1.442695
        %v5786 = vpow.pop %v5785
        %v5787 = vmul.f32 %v4924, 1.442695
        %v5788 = vpow.pop %v5787
        %v5789 = vmul.f32 %v4925, 1.442695
        %v5790 = vpow.pop %v5789
        %v5791 = vmul.f32 %v4926, 1.442695
        %v5792 = vpow.pop %v5791
        %v5793 = vmul.f32 %v4927, 1.442695
        %v5794 = vpow.pop %v5793
        %v5795 = vmul.f32 %v4928, 1.442695
        %v5796 = vpow.pop %v5795
        %v5797 = vmul.f32 %v4929, 1.442695
        %v5798 = vpow.pop %v5797
        %v5799 = vmul.f32 %v4930, 1.442695
        %v5800 = vpow.pop %v5799
        %v5801 = vmul.f32 %v4931, 1.442695
        %v5802 = vpow.pop %v5801
        %v5803 = vmul.f32 %v4932, 1.442695
        %v5804 = vpow.pop %v5803
        %v5805 = vmul.f32 %v4933, 1.442695
        %v5806 = vpow.pop %v5805
        %v5807 = vmul.f32 %v4934, 1.442695
        %v5808 = vpow.pop %v5807
        %v5809 = vmul.f32 %v4935, 1.442695
        %v5810 = vpow.pop %v5809
        %v5811 = vmul.f32 %v4936, 1.442695
        %v5812 = vpow.pop %v5811
        %v5813 = vmul.f32 %v4937, 1.442695
        %v5814 = vpow.pop %v5813
        %v5815 = vmul.f32 %v4938, 1.442695
        %v5816 = vpow.pop %v5815
        %v5817 = vmul.f32 %v4939, 1.442695
        %v5818 = vpow.pop %v5817
        %v5819 = vmul.f32 %v4940, 1.442695
        %v5820 = vpow.pop %v5819
        %v5821 = vmul.f32 %v4941, 1.442695
        %v5822 = vpow.pop %v5821
        %v5823 = vmul.f32 %v4942, 1.442695
        %v5824 = vpow.pop %v5823
        %v5825 = vmul.f32 %v4943, 1.442695
        %v5826 = vpow.pop %v5825
        %v5827 = vmul.f32 %v4944, 1.442695
        %v5828 = vpow.pop %v5827
        %v5829 = vmul.f32 %v4945, 1.442695
        %v5830 = vpow.pop %v5829
        %v5831 = vmul.f32 %v4946, 1.442695
        %v5832 = vpow.pop %v5831
        %v5833 = vmul.f32 %v4947, 1.442695
        %v5834 = vpow.pop %v5833
        %v5835 = vmul.f32 %v4948, 1.442695
        %v5836 = vpow.pop %v5835
        %v5837 = vmul.f32 %v4949, 1.442695
        %v5838 = vpow.pop %v5837
        %v5839 = vmul.f32 %v4950, 1.442695
        %v5840 = vpow.pop %v5839
        %v5841 = vmul.f32 %v4951, 1.442695
        %v5842 = vpow.pop %v5841
        %v5843 = vmul.f32 %v4952, 1.442695
        %v5844 = vpow.pop %v5843
        %v5845 = vmul.f32 %v4953, 1.442695
        %v5846 = vpow.pop %v5845
        %v5847 = vmul.f32 %v4954, 1.442695
        %v5848 = vpow.pop %v5847
        %v5849 = vmul.f32 %v4955, 1.442695
        %v5850 = vpow.pop %v5849
        %v5851 = vmul.f32 %v4956, 1.442695
        %v5852 = vpow.pop %v5851
        %v5853 = vmul.f32 %v4957, 1.442695
        %v5854 = vpow.pop %v5853
        %v5855 = vmul.f32 %v4958, 1.442695
        %v5856 = vpow.pop %v5855
        %v5857 = vmul.f32 %v4959, 1.442695
        %v5858 = vpow.pop %v5857
        %v5859 = vmul.f32 %v4960, 1.442695
        %v5860 = vpow.pop %v5859
        %v5861 = vmul.f32 %v4961, 1.442695
        %v5862 = vpow.pop %v5861
        %v5863 = vmul.f32 %v4962, 1.442695
        %v5864 = vpow.pop %v5863
        %v5865 = vmul.f32 %v4963, 1.442695
        %v5866 = vpow.pop %v5865
        %v5867 = vmul.f32 %v4964, 1.442695
        %v5868 = vpow.pop %v5867
        %v5869 = vmul.f32 %v4965, 1.442695
        %v5870 = vpow.pop %v5869
        %v5871 = vmul.f32 %v4966, 1.442695
        %v5872 = vpow.pop %v5871
        %v5873 = vmul.f32 %v4967, 1.442695
        %v5874 = vpow.pop %v5873
        %v5875 = vmul.f32 %v4968, 1.442695
        %v5876 = vpow.pop %v5875
        %v5877 = vmul.f32 %v4969, 1.442695
        %v5878 = vpow.pop %v5877
        %v5879 = vmul.f32 %v4970, 1.442695
        %v5880 = vpow.pop %v5879
        %v5881 = vmul.f32 %v4971, 1.442695
        %v5882 = vpow.pop %v5881
        %v5883 = vmul.f32 %v4972, 1.442695
        %v5884 = vpow.pop %v5883
        %v5885 = vmul.f32 %v4973, 1.442695
        %v5886 = vpow.pop %v5885
        %v5887 = vmul.f32 %v4974, 1.442695
        %v5888 = vpow.pop %v5887
        %v5889 = vmul.f32 %v4975, 1.442695
        %v5890 = vpow.pop %v5889
        %v5891 = vmul.f32 %v4976, 1.442695
        %v5892 = vpow.pop %v5891
        %v5893 = vmul.f32 %v4977, 1.442695
        %v5894 = vpow.pop %v5893
        %v5895 = vmul.f32 %v4978, 1.442695
        %v5896 = vpow.pop %v5895
        %v5897 = vmul.f32 %v4979, 1.442695
        %v5898 = vpow.pop %v5897
        %v5899 = vmul.f32 %v4980, 1.442695
        %v5900 = vpow.pop %v5899
        %v5901 = vmul.f32 %v4981, 1.442695
        %v5902 = vpow.pop %v5901
        %v5903 = vmul.f32 %v4982, 1.442695
        %v5904 = vpow.pop %v5903
        %v5905 = vmul.f32 %v4983, 1.442695
        %v5906 = vpow.pop %v5905
        %v5907 = vmul.f32 %v4984, 1.442695
        %v5908 = vpow.pop %v5907
        %v5909 = vmul.f32 %v4985, 1.442695
        %v5910 = vpow.pop %v5909
        %v5911 = vmul.f32 %v4986, 1.442695
        %v5912 = vpow.pop %v5911
        %v5913 = vmul.f32 %v4987, 1.442695
        %v5914 = vpow.pop %v5913
        %v5915 = vmul.f32 %v4988, 1.442695
        %v5916 = vpow.pop %v5915
        %v5917 = vmul.f32 %v4989, 1.442695
        %v5918 = vpow.pop %v5917
        %v5919 = vmul.f32 %v4990, 1.442695
        %v5920 = vpow.pop %v5919
        %v5921 = vmul.f32 %v4991, 1.442695
        %v5922 = vpow.pop %v5921
        %v5923 = vmul.f32 %v4992, 1.442695
        %v5924 = vpow.pop %v5923
        %v5925 = vmul.f32 %v4993, 1.442695
        %v5926 = vpow.pop %v5925
        %v5927 = vmul.f32 %v4994, 1.442695
        %v5928 = vpow.pop %v5927
        %v5929 = vmul.f32 %v4995, 1.442695
        %v5930 = vpow.pop %v5929
        %v5931 = vmul.f32 %v4996, 1.442695
        %v5932 = vpow.pop %v5931
        %v5933 = vmul.f32 %v4997, 1.442695
        %v5934 = vpow.pop %v5933
        %v5935 = vmul.f32 %v4998, 1.442695
        %v5936 = vpow.pop %v5935
        %v5937 = vmul.f32 %v4999, 1.442695
        %v5938 = vpow.pop %v5937
        %v5939 = vmul.f32 %v5000, 1.442695
        %v5940 = vpow.pop %v5939
        %v5941 = vmul.f32 %v5001, 1.442695
        %v5942 = vpow.pop %v5941
        %v5943 = vmul.f32 %v5002, 1.442695
        %v5944 = vpow.pop %v5943
        %v5945 = vmul.f32 %v5003, 1.442695
        %v5946 = vpow.pop %v5945
        %v5947 = vmul.f32 %v5004, 1.442695
        %v5948 = vpow.pop %v5947
        %v5949 = vmul.f32 %v5005, 1.442695
        %v5950 = vpow.pop %v5949
        %v5951 = vmul.f32 %v5006, 1.442695
        %v5952 = vpow.pop %v5951
        %v5953 = vmul.f32 %v5007, 1.442695
        %v5954 = vpow.pop %v5953
        %v5955 = vmul.f32 %v5008, 1.442695
        %v5956 = vpow.pop %v5955
        %v5957 = vmul.f32 %v5009, 1.442695
        %v5958 = vpow.pop %v5957
        %v5959 = vmul.f32 %v5010, 1.442695
        %v5960 = vpow.pop %v5959
        %v5961 = vmul.f32 %v5011, 1.442695
        %v5962 = vpow.pop %v5961
        %v5963 = vmul.f32 %v5012, 1.442695
        %v5964 = vpow.pop %v5963
        %v5965 = vmul.f32 %v5013, 1.442695
        %v5966 = vpow.pop %v5965
        %v5967 = vmul.f32 %v5014, 1.442695
        %v5968 = vpow.pop %v5967
        %v5969 = vmul.f32 %v5015, 1.442695
        %v5970 = vpow.pop %v5969
        %v5971 = vmul.f32 %v5016, 1.442695
        %v5972 = vpow.pop %v5971
        %v5973 = vmul.f32 %v5017, 1.442695
        %v5974 = vpow.pop %v5973
        %v5975 = vmul.f32 %v5018, 1.442695
        %v5976 = vpow.pop %v5975
        %v5977 = vmul.f32 %v5019, 1.442695
        %v5978 = vpow.pop %v5977
        %v5979 = vmul.f32 %v5020, 1.442695
        %v5980 = vpow.pop %v5979
        %v5981 = vmul.f32 %v5021, 1.442695
        %v5982 = vpow.pop %v5981
        %v5983 = vmul.f32 %v5022, 1.442695
        %v5984 = vpow.pop %v5983
        %v5985 = vmul.f32 %v5023, 1.442695
        %v5986 = vpow.pop %v5985
        %v5987 = vmul.f32 %v5024, 1.442695
        %v5988 = vpow.pop %v5987
        %v5989 = vmul.f32 %v5025, 1.442695
        %v5990 = vpow.pop %v5989
        %v5991 = vmul.f32 %v5026, 1.442695
        %v5992 = vpow.pop %v5991
        %v5993 = vmul.f32 %v5027, 1.442695
        %v5994 = vpow.pop %v5993
        %v5995 = vmul.f32 %v5028, 1.442695
        %v5996 = vpow.pop %v5995
        %v5997 = vmul.f32 %v5029, 1.442695
        %v5998 = vpow.pop %v5997
        %v5999 = vmul.f32 %v5030, 1.442695
        %v6000 = vpow.pop %v5999
        %v6001 = vmul.f32 %v5031, 1.442695
        %v6002 = vpow.pop %v6001
        %v6003 = vmul.f32 %v5032, 1.442695
        %v6004 = vpow.pop %v6003
        %v6005 = vmul.f32 %v5033, 1.442695
        %v6006 = vpow.pop %v6005
        %v6007 = vmul.f32 %v5034, 1.442695
        %v6008 = vpow.pop %v6007
        %v6009 = vmul.f32 %v5035, 1.442695
        %v6010 = vpow.pop %v6009
        %v6011 = vmul.f32 %v5036, 1.442695
        %v6012 = vpow.pop %v6011
        %v6013 = vmul.f32 %v5037, 1.442695
        %v6014 = vpow.pop %v6013
        %v6015 = vmul.f32 %v5038, 1.442695
        %v6016 = vpow.pop %v6015
        %v6017 = vmul.f32 %v5039, 1.442695
        %v6018 = vpow.pop %v6017
        %v6019 = vmul.f32 %v5040, 1.442695
        %v6020 = vpow.pop %v6019
        %v6021 = vmul.f32 %v5041, 1.442695
        %v6022 = vpow.pop %v6021
        %v6023 = vmul.f32 %v5042, 1.442695
        %v6024 = vpow.pop %v6023
        %v6025 = vmul.f32 %v5043, 1.442695
        %v6026 = vpow.pop %v6025
        %v6027 = vmul.f32 %v5044, 1.442695
        %v6028 = vpow.pop %v6027
        %v6029 = vmul.f32 %v5045, 1.442695
        %v6030 = vpow.pop %v6029
        %v6031 = vmul.f32 %v5046, 1.442695
        %v6032 = vpow.pop %v6031
        %v6033 = vmul.f32 %v5047, 1.442695
        %v6034 = vpow.pop %v6033
        %v6035 = vmul.f32 %v5048, 1.442695
        %v6036 = vpow.pop %v6035
        %v6037 = vmul.f32 %v5049, 1.442695
        %v6038 = vpow.pop %v6037
        %v6039 = vmul.f32 %v5050, 1.442695
        %v6040 = vpow.pop %v6039
        %v6041 = vmul.f32 %v5051, 1.442695
        %v6042 = vpow.pop %v6041
        %v6043 = vmul.f32 %v5052, 1.442695
        %v6044 = vpow.pop %v6043
        %v6045 = vmul.f32 %v5053, 1.442695
        %v6046 = vpow.pop %v6045
        %v6047 = vmul.f32 %v5054, 1.442695
        %v6048 = vpow.pop %v6047
        %v6049 = vmul.f32 %v5055, 1.442695
        %v6050 = vpow.pop %v6049
        %v6051 = vmul.f32 %v5056, 1.442695
        %v6052 = vpow.pop %v6051
        %v6053 = vmul.f32 %v5057, 1.442695
        %v6054 = vpow.pop %v6053
        %v6055 = vmul.f32 %v5058, 1.442695
        %v6056 = vpow.pop %v6055
        %v6057 = vmul.f32 %v5059, 1.442695
        %v6058 = vpow.pop %v6057
        %v6059 = vmul.f32 %v5060, 1.442695
        %v6060 = vpow.pop %v6059
        %v6061 = vmul.f32 %v5061, 1.442695
        %v6062 = vpow.pop %v6061
        %v6063 = vmul.f32 %v5062, 1.442695
        %v6064 = vpow.pop %v6063
        %v6065 = vmul.f32 %v5063, 1.442695
        %v6066 = vpow.pop %v6065
        %v6067 = vmul.f32 %v5064, 1.442695
        %v6068 = vpow.pop %v6067
        %v6069 = vmul.f32 %v5065, 1.442695
        %v6070 = vpow.pop %v6069
        %v6071 = vmul.f32 %v5066, 1.442695
        %v6072 = vpow.pop %v6071
        %v6073 = vmul.f32 %v5067, 1.442695
        %v6074 = vpow.pop %v6073
        %v6075 = vmul.f32 %v5068, 1.442695
        %v6076 = vpow.pop %v6075
        %v6077 = vmul.f32 %v5069, 1.442695
        %v6078 = vpow.pop %v6077
        %v6079 = vmul.f32 %v5070, 1.442695
        %v6080 = vpow.pop %v6079
        %v6081 = vmul.f32 %v5071, 1.442695
        %v6082 = vpow.pop %v6081
        %v6083 = vmul.f32 %v5072, 1.442695
        %v6084 = vpow.pop %v6083
        %v6085 = vmul.f32 %v5073, 1.442695
        %v6086 = vpow.pop %v6085
        %v6087 = vmul.f32 %v5074, 1.442695
        %v6088 = vpow.pop %v6087
        %v6089 = vmul.f32 %v5075, 1.442695
        %v6090 = vpow.pop %v6089
        %v6091 = vmul.f32 %v5076, 1.442695
        %v6092 = vpow.pop %v6091
        %v6093 = vmul.f32 %v5077, 1.442695
        %v6094 = vpow.pop %v6093
        %v6095 = vmul.f32 %v5078, 1.442695
        %v6096 = vpow.pop %v6095
        %v6097 = vmul.f32 %v5079, 1.442695
        %v6098 = vpow.pop %v6097
        %v6099 = vmul.f32 %v5080, 1.442695
        %v6100 = vpow.pop %v6099
        %v6101 = vmul.f32 %v5081, 1.442695
        %v6102 = vpow.pop %v6101
        %v6103 = vmul.f32 %v5082, 1.442695
        %v6104 = vpow.pop %v6103
        %v6105 = vmul.f32 %v5083, 1.442695
        %v6106 = vpow.pop %v6105
        %v6107 = vmul.f32 %v5084, 1.442695
        %v6108 = vpow.pop %v6107
        %v6109 = vld [vmem:[#allocation3] sm:$0xff]
        %v6110 = vld [vmem:[#allocation3 + $0x8] sm:$0xff]
        %v6111 = vld [vmem:[#allocation3 + $0x10] sm:$0xff]
        %v6112 = vld [vmem:[#allocation3 + $0x18] sm:$0xff]
        %v6113 = vld [vmem:[#allocation3 + $0x20] sm:$0xff]
        %v6114 = vld [vmem:[#allocation3 + $0x28] sm:$0xff]
        %v6115 = vld [vmem:[#allocation3 + $0x30] sm:$0xff]
        %v6116 = vld [vmem:[#allocation3 + $0x38] sm:$0xff]
        %v6117 = vld [vmem:[#allocation3 + $0x40] sm:$0xff]
        %v6118 = vld [vmem:[#allocation3 + $0x48] sm:$0xff]
        %v6119 = vld [vmem:[#allocation3 + $0x50] sm:$0xff]
        %v6120 = vld [vmem:[#allocation3 + $0x58] sm:$0xff]
        %v6121 = vld [vmem:[#allocation3 + $0x60] sm:$0xff]
        %v6122 = vld [vmem:[#allocation3 + $0x68] sm:$0xff]
        %v6123 = vld [vmem:[#allocation3 + $0x70] sm:$0xff]
        %v6124 = vld [vmem:[#allocation3 + $0x78] sm:$0xff]
        %v6125 = vld [vmem:[#allocation3 + $0x80] sm:$0x1]
        %v6126 = vld [vmem:[#allocation3 + $0x88] sm:$0x1]
        %v6127 = vld [vmem:[#allocation3 + $0x90] sm:$0x1]
        %v6128 = vld [vmem:[#allocation3 + $0x98] sm:$0x1]
        %v6129 = vld [vmem:[#allocation3 + $0xa0] sm:$0x1]
        %v6130 = vld [vmem:[#allocation3 + $0xa8] sm:$0x1]
        %v6131 = vld [vmem:[#allocation3 + $0xb0] sm:$0x1]
        %v6132 = vld [vmem:[#allocation3 + $0xb8] sm:$0x1]
        %6133 = vmatprep.subr.mxu0 %v5088
        %6134 = vmatpush1.msra.mxu0 %v5086
        %6135 = vmatprep.subr.mxu0 %v5096
        %6136 = vmatpush1.msra.mxu0 %v5094
        %6137 = vmatprep.subr.mxu0 %v5104
        %6138 = vmatpush1.msra.mxu0 %v5102
        %6139 = vmatprep.subr.mxu0 %v5112
        %6140 = vmatpush1.msra.mxu0 %v5110
        %6141 = vmatprep.subr.mxu0 %v5120
        %6142 = vmatpush1.msra.mxu0 %v5118
        %6143 = vmatprep.subr.mxu0 %v5128
        %6144 = vmatpush1.msra.mxu0 %v5126
        %6145 = vmatprep.subr.mxu0 %v5136
        %6146 = vmatpush1.msra.mxu0 %v5134
        %6147 = vmatprep.subr.mxu0 %v5144
        %6148 = vmatpush1.msra.mxu0 %v5142
        %6149 = vmatprep.subr.mxu0 %v5152
        %6150 = vmatpush1.msra.mxu0 %v5150
        %6151 = vmatprep.subr.mxu0 %v5160
        %6152 = vmatpush1.msra.mxu0 %v5158
        %6153 = vmatprep.subr.mxu0 %v5168
        %6154 = vmatpush1.msra.mxu0 %v5166
        %6155 = vmatprep.subr.mxu0 %v5176
        %6156 = vmatpush1.msra.mxu0 %v5174
        %6157 = vmatprep.subr.mxu0 %v5184
        %6158 = vmatpush1.msra.mxu0 %v5182
        %6159 = vmatprep.subr.mxu0 %v5192
        %6160 = vmatpush1.msra.mxu0 %v5190
        %6161 = vmatprep.subr.mxu0 %v5200
        %6162 = vmatpush1.msra.mxu0 %v5198
        %6163 = vmatprep.subr.mxu0 %v5208
        %6164 = vmatpush1.msra.mxu0 %v5206
        %6165 = vmatprep.subr.mxu0 %v5216
        %6166 = vmatpush1.msra.mxu0 %v5214
        %6167 = vmatprep.subr.mxu0 %v5224
        %6168 = vmatpush1.msra.mxu0 %v5222
        %6169 = vmatprep.subr.mxu0 %v5232
        %6170 = vmatpush1.msra.mxu0 %v5230
        %6171 = vmatprep.subr.mxu0 %v5240
        %6172 = vmatpush1.msra.mxu0 %v5238
        %6173 = vmatprep.subr.mxu0 %v5248
        %6174 = vmatpush1.msra.mxu0 %v5246
        %6175 = vmatprep.subr.mxu0 %v5256
        %6176 = vmatpush1.msra.mxu0 %v5254
        %6177 = vmatprep.subr.mxu0 %v5264
        %6178 = vmatpush1.msra.mxu0 %v5262
        %6179 = vmatprep.subr.mxu0 %v5272
        %6180 = vmatpush1.msra.mxu0 %v5270
        %6181 = vmatprep.subr.mxu0 %v5280
        %6182 = vmatpush1.msra.mxu0 %v5278
        %6183 = vmatprep.subr.mxu0 %v5288
        %6184 = vmatpush1.msra.mxu0 %v5286
        %6185 = vmatprep.subr.mxu0 %v5296
        %6186 = vmatpush1.msra.mxu0 %v5294
        %6187 = vmatprep.subr.mxu0 %v5304
        %6188 = vmatpush1.msra.mxu0 %v5302
        %6189 = vmatprep.subr.mxu0 %v5312
        %6190 = vmatpush1.msra.mxu0 %v5310
        %6191 = vmatprep.subr.mxu0 %v5320
        %6192 = vmatpush1.msra.mxu0 %v5318
        %6193 = vmatprep.subr.mxu0 %v5328
        %6194 = vmatpush1.msra.mxu0 %v5326
        %6195 = vmatprep.subr.mxu0 %v5336
        %6196 = vmatpush1.msra.mxu0 %v5334
        %6197 = vmatprep.mubr.f32.mxu0 %v6110
        %6198 = vmatmul.mubr.f32.gmra.mrb[0].mxu0 %v6109
        %v6199 = vpop.f32.mrb[0].mxu0
        %v6200 = vadd.f32 0.0, %v6199
        %v6201 = vpop.f32.mrb[0].mxu0
        %v6202 = vadd.f32 0.0, %v6201
        %6203 = vmatprep.mubr.f32.mxu0 %v6118
        %6204 = vmatmul.mubr.f32.gmra.mrb[0].mxu0 %v6117
        %v6205 = vpop.f32.mrb[0].mxu0
        %v6206 = vadd.f32 0.0, %v6205
        %v6207 = vpop.f32.mrb[0].mxu0
        %v6208 = vadd.f32 0.0, %v6207
        %6209 = vmatprep.mubr.f32.mxu0 %v6126
        %6210 = vmatmul.mubr.f32.gmra.mrb[0].mxu0 %v6125
        %v6211 = vpop.f32.mrb[0].mxu0
        %v6212 = vadd.f32 0.0, %v6211
        %v6213 = vpop.f32.mrb[0].mxu0
        %v6214 = vadd.f32 0.0, %v6213
        %6215 = vdwg.mxu0
        %6216 = vmatprep.subr.mxu0 %v5344
        %6217 = vmatpush1.msra.mxu0 %v5342
        %6218 = vmatprep.subr.mxu0 %v5352
        %6219 = vmatpush1.msra.mxu0 %v5350
        %6220 = vmatprep.subr.mxu0 %v5360
        %6221 = vmatpush1.msra.mxu0 %v5358
        %6222 = vmatprep.subr.mxu0 %v5368
        %6223 = vmatpush1.msra.mxu0 %v5366
        %6224 = vmatprep.subr.mxu0 %v5376
        %6225 = vmatpush1.msra.mxu0 %v5374
        %6226 = vmatprep.subr.mxu0 %v5384
        %6227 = vmatpush1.msra.mxu0 %v5382
        %6228 = vmatprep.subr.mxu0 %v5392
        %6229 = vmatpush1.msra.mxu0 %v5390
        %6230 = vmatprep.subr.mxu0 %v5400
        %6231 = vmatpush1.msra.mxu0 %v5398
        %6232 = vmatprep.subr.mxu0 %v5408
        %6233 = vmatpush1.msra.mxu0 %v5406
        %6234 = vmatprep.subr.mxu0 %v5416
        %6235 = vmatpush1.msra.mxu0 %v5414
        %6236 = vmatprep.subr.mxu0 %v5424
        %6237 = vmatpush1.msra.mxu0 %v5422
        %6238 = vmatprep.subr.mxu0 %v5432
        %6239 = vmatpush1.msra.mxu0 %v5430
        %6240 = vmatprep.subr.mxu0 %v5440
        %6241 = vmatpush1.msra.mxu0 %v5438
        %6242 = vmatprep.subr.mxu0 %v5448
        %6243 = vmatpush1.msra.mxu0 %v5446
        %6244 = vmatprep.subr.mxu0 %v5456
        %6245 = vmatpush1.msra.mxu0 %v5454
        %6246 = vmatprep.subr.mxu0 %v5464
        %6247 = vmatpush1.msra.mxu0 %v5462
        %6248 = vmatprep.subr.mxu0 %v5472
        %6249 = vmatpush1.msra.mxu0 %v5470
        %6250 = vmatprep.subr.mxu0 %v5480
        %6251 = vmatpush1.msra.mxu0 %v5478
        %6252 = vmatprep.subr.mxu0 %v5488
        %6253 = vmatpush1.msra.mxu0 %v5486
        %6254 = vmatprep.subr.mxu0 %v5496
        %6255 = vmatpush1.msra.mxu0 %v5494
        %6256 = vmatprep.subr.mxu0 %v5504
        %6257 = vmatpush1.msra.mxu0 %v5502
        %6258 = vmatprep.subr.mxu0 %v5512
        %6259 = vmatpush1.msra.mxu0 %v5510
        %6260 = vmatprep.subr.mxu0 %v5520
        %6261 = vmatpush1.msra.mxu0 %v5518
        %6262 = vmatprep.subr.mxu0 %v5528
        %6263 = vmatpush1.msra.mxu0 %v5526
        %6264 = vmatprep.subr.mxu0 %v5536
        %6265 = vmatpush1.msra.mxu0 %v5534
        %6266 = vmatprep.subr.mxu0 %v5544
        %6267 = vmatpush1.msra.mxu0 %v5542
        %6268 = vmatprep.subr.mxu0 %v5552
        %6269 = vmatpush1.msra.mxu0 %v5550
        %6270 = vmatprep.subr.mxu0 %v5560
        %6271 = vmatpush1.msra.mxu0 %v5558
        %6272 = vmatprep.subr.mxu0 %v5568
        %6273 = vmatpush1.msra.mxu0 %v5566
        %6274 = vmatprep.subr.mxu0 %v5576
        %6275 = vmatpush1.msra.mxu0 %v5574
        %6276 = vmatprep.subr.mxu0 %v5584
        %6277 = vmatpush1.msra.mxu0 %v5582
        %6278 = vmatprep.subr.mxu0 %v5592
        %6279 = vmatpush1.msra.mxu0 %v5590
        %6280 = vmatprep.mubr.f32.mxu0 %v6112
        %6281 = vmatmul.mubr.f32.gmra.mrb[0].mxu0 %v6111
        %v6282 = vpop.f32.mrb[0].mxu0
        %v6283 = vadd.f32 %v6200, %v6282
        %v6284 = vpop.f32.mrb[0].mxu0
        %v6285 = vadd.f32 %v6202, %v6284
        %6286 = vmatprep.mubr.f32.mxu0 %v6120
        %6287 = vmatmul.mubr.f32.gmra.mrb[0].mxu0 %v6119
        %v6288 = vpop.f32.mrb[0].mxu0
        %v6289 = vadd.f32 %v6206, %v6288
        %v6290 = vpop.f32.mrb[0].mxu0
        %v6291 = vadd.f32 %v6208, %v6290
        %6292 = vmatprep.mubr.f32.mxu0 %v6128
        %6293 = vmatmul.mubr.f32.gmra.mrb[0].mxu0 %v6127
        %v6294 = vpop.f32.mrb[0].mxu0
        %v6295 = vadd.f32 %v6212, %v6294
        %v6296 = vpop.f32.mrb[0].mxu0
        %v6297 = vadd.f32 %v6214, %v6296
        %6298 = vdwg.mxu0
        %6299 = vmatprep.subr.mxu0 %v5600
        %6300 = vmatpush1.msra.mxu0 %v5598
        %6301 = vmatprep.subr.mxu0 %v5608
        %6302 = vmatpush1.msra.mxu0 %v5606
        %6303 = vmatprep.subr.mxu0 %v5616
        %6304 = vmatpush1.msra.mxu0 %v5614
        %6305 = vmatprep.subr.mxu0 %v5624
        %6306 = vmatpush1.msra.mxu0 %v5622
        %6307 = vmatprep.subr.mxu0 %v5632
        %6308 = vmatpush1.msra.mxu0 %v5630
        %6309 = vmatprep.subr.mxu0 %v5640
        %6310 = vmatpush1.msra.mxu0 %v5638
        %6311 = vmatprep.subr.mxu0 %v5648
        %6312 = vmatpush1.msra.mxu0 %v5646
        %6313 = vmatprep.subr.mxu0 %v5656
        %6314 = vmatpush1.msra.mxu0 %v5654
        %6315 = vmatprep.subr.mxu0 %v5664
        %6316 = vmatpush1.msra.mxu0 %v5662
        %6317 = vmatprep.subr.mxu0 %v5672
        %6318 = vmatpush1.msra.mxu0 %v5670
        %6319 = vmatprep.subr.mxu0 %v5680
        %6320 = vmatpush1.msra.mxu0 %v5678
        %6321 = vmatprep.subr.mxu0 %v5688
        %6322 = vmatpush1.msra.mxu0 %v5686
        %6323 = vmatprep.subr.mxu0 %v5696
        %6324 = vmatpush1.msra.mxu0 %v5694
        %6325 = vmatprep.subr.mxu0 %v5704
        %6326 = vmatpush1.msra.mxu0 %v5702
        %6327 = vmatprep.subr.mxu0 %v5712
        %6328 = vmatpush1.msra.mxu0 %v5710
        %6329 = vmatprep.subr.mxu0 %v5720
        %6330 = vmatpush1.msra.mxu0 %v5718
        %6331 = vmatprep.subr.mxu0 %v5728
        %6332 = vmatpush1.msra.mxu0 %v5726
        %6333 = vmatprep.subr.mxu0 %v5736
        %6334 = vmatpush1.msra.mxu0 %v5734
        %6335 = vmatprep.subr.mxu0 %v5744
        %6336 = vmatpush1.msra.mxu0 %v5742
        %6337 = vmatprep.subr.mxu0 %v5752
        %6338 = vmatpush1.msra.mxu0 %v5750
        %6339 = vmatprep.subr.mxu0 %v5760
        %6340 = vmatpush1.msra.mxu0 %v5758
        %6341 = vmatprep.subr.mxu0 %v5768
        %6342 = vmatpush1.msra.mxu0 %v5766
        %6343 = vmatprep.subr.mxu0 %v5776
        %6344 = vmatpush1.msra.mxu0 %v5774
        %6345 = vmatprep.subr.mxu0 %v5784
        %6346 = vmatpush1.msra.mxu0 %v5782
        %6347 = vmatprep.subr.mxu0 %v5792
        %6348 = vmatpush1.msra.mxu0 %v5790
        %6349 = vmatprep.subr.mxu0 %v5800
        %6350 = vmatpush1.msra.mxu0 %v5798
        %6351 = vmatprep.subr.mxu0 %v5808
        %6352 = vmatpush1.msra.mxu0 %v5806
        %6353 = vmatprep.subr.mxu0 %v5816
        %6354 = vmatpush1.msra.mxu0 %v5814
        %6355 = vmatprep.subr.mxu0 %v5824
        %6356 = vmatpush1.msra.mxu0 %v5822
        %6357 = vmatprep.subr.mxu0 %v5832
        %6358 = vmatpush1.msra.mxu0 %v5830
        %6359 = vmatprep.subr.mxu0 %v5840
        %6360 = vmatpush1.msra.mxu0 %v5838
        %6361 = vmatprep.subr.mxu0 %v5848
        %6362 = vmatpush1.msra.mxu0 %v5846
        %6363 = vmatprep.mubr.f32.mxu0 %v6114
        %6364 = vmatmul.mubr.f32.gmra.mrb[0].mxu0 %v6113
        %v6365 = vpop.f32.mrb[0].mxu0
        %v6366 = vadd.f32 %v6283, %v6365
        %v6367 = vpop.f32.mrb[0].mxu0
        %v6368 = vadd.f32 %v6285, %v6367
        %6369 = vmatprep.mubr.f32.mxu0 %v6122
        %6370 = vmatmul.mubr.f32.gmra.mrb[0].mxu0 %v6121
        %v6371 = vpop.f32.mrb[0].mxu0
        %v6372 = vadd.f32 %v6289, %v6371
        %v6373 = vpop.f32.mrb[0].mxu0
        %v6374 = vadd.f32 %v6291, %v6373
        %6375 = vmatprep.mubr.f32.mxu0 %v6130
        %6376 = vmatmul.mubr.f32.gmra.mrb[0].mxu0 %v6129
        %v6377 = vpop.f32.mrb[0].mxu0
        %v6378 = vadd.f32 %v6295, %v6377
        %v6379 = vpop.f32.mrb[0].mxu0
        %v6380 = vadd.f32 %v6297, %v6379
        %6381 = vdwg.mxu0
        %6382 = vmatprep.subr.mxu0 %v5856
        %6383 = vmatpush1.msra.mxu0 %v5854
        %6384 = vmatprep.subr.mxu0 %v5864
        %6385 = vmatpush1.msra.mxu0 %v5862
        %6386 = vmatprep.subr.mxu0 %v5872
        %6387 = vmatpush1.msra.mxu0 %v5870
        %6388 = vmatprep.subr.mxu0 %v5880
        %6389 = vmatpush1.msra.mxu0 %v5878
        %6390 = vmatprep.subr.mxu0 %v5888
        %6391 = vmatpush1.msra.mxu0 %v5886
        %6392 = vmatprep.subr.mxu0 %v5896
        %6393 = vmatpush1.msra.mxu0 %v5894
        %6394 = vmatprep.subr.mxu0 %v5904
        %6395 = vmatpush1.msra.mxu0 %v5902
        %6396 = vmatprep.subr.mxu0 %v5912
        %6397 = vmatpush1.msra.mxu0 %v5910
        %6398 = vmatprep.subr.mxu0 %v5920
        %6399 = vmatpush1.msra.mxu0 %v5918
        %6400 = vmatprep.subr.mxu0 %v5928
        %6401 = vmatpush1.msra.mxu0 %v5926
        %6402 = vmatprep.subr.mxu0 %v5936
        %6403 = vmatpush1.msra.mxu0 %v5934
        %6404 = vmatprep.subr.mxu0 %v5944
        %6405 = vmatpush1.msra.mxu0 %v5942
        %6406 = vmatprep.subr.mxu0 %v5952
        %6407 = vmatpush1.msra.mxu0 %v5950
        %6408 = vmatprep.subr.mxu0 %v5960
        %6409 = vmatpush1.msra.mxu0 %v5958
        %6410 = vmatprep.subr.mxu0 %v5968
        %6411 = vmatpush1.msra.mxu0 %v5966
        %6412 = vmatprep.subr.mxu0 %v5976
        %6413 = vmatpush1.msra.mxu0 %v5974
        %6414 = vmatprep.subr.mxu0 %v5984
        %6415 = vmatpush1.msra.mxu0 %v5982
        %6416 = vmatprep.subr.mxu0 %v5992
        %6417 = vmatpush1.msra.mxu0 %v5990
        %6418 = vmatprep.subr.mxu0 %v6000
        %6419 = vmatpush1.msra.mxu0 %v5998
        %6420 = vmatprep.subr.mxu0 %v6008
        %6421 = vmatpush1.msra.mxu0 %v6006
        %6422 = vmatprep.subr.mxu0 %v6016
        %6423 = vmatpush1.msra.mxu0 %v6014
        %6424 = vmatprep.subr.mxu0 %v6024
        %6425 = vmatpush1.msra.mxu0 %v6022
        %6426 = vmatprep.subr.mxu0 %v6032
        %6427 = vmatpush1.msra.mxu0 %v6030
        %6428 = vmatprep.subr.mxu0 %v6040
        %6429 = vmatpush1.msra.mxu0 %v6038
        %6430 = vmatprep.subr.mxu0 %v6048
        %6431 = vmatpush1.msra.mxu0 %v6046
        %6432 = vmatprep.subr.mxu0 %v6056
        %6433 = vmatpush1.msra.mxu0 %v6054
        %6434 = vmatprep.subr.mxu0 %v6064
        %6435 = vmatpush1.msra.mxu0 %v6062
        %6436 = vmatprep.subr.mxu0 %v6072
        %6437 = vmatpush1.msra.mxu0 %v6070
        %6438 = vmatprep.subr.mxu0 %v6080
        %6439 = vmatpush1.msra.mxu0 %v6078
        %6440 = vmatprep.subr.mxu0 %v6088
        %6441 = vmatpush1.msra.mxu0 %v6086
        %6442 = vmatprep.subr.mxu0 %v6096
        %6443 = vmatpush1.msra.mxu0 %v6094
        %6444 = vmatprep.subr.mxu0 %v6104
        %6445 = vmatpush1.msra.mxu0 %v6102
        %6446 = vmatprep.mubr.f32.mxu0 %v6116
        %6447 = vmatmul.mubr.f32.gmra.mrb[0].mxu0 %v6115
        %v6448 = vpop.f32.mrb[0].mxu0
        %v6449 = vadd.f32 %v6366, %v6448
        %v6450 = vpop.f32.mrb[0].mxu0
        %v6451 = vadd.f32 %v6368, %v6450
        %6452 = vmatprep.mubr.f32.mxu0 %v6124
        %6453 = vmatmul.mubr.f32.gmra.mrb[0].mxu0 %v6123
        %v6454 = vpop.f32.mrb[0].mxu0
        %v6455 = vadd.f32 %v6372, %v6454
        %v6456 = vpop.f32.mrb[0].mxu0
        %v6457 = vadd.f32 %v6374, %v6456
        %6458 = vmatprep.mubr.f32.mxu0 %v6132
        %6459 = vmatmul.mubr.f32.gmra.mrb[0].mxu0 %v6131
        %v6460 = vpop.f32.mrb[0].mxu0
        %v6461 = vadd.f32 %v6378, %v6460
        %v6462 = vpop.f32.mrb[0].mxu0
        %v6463 = vadd.f32 %v6380, %v6462
        %6464 = vdwg.mxu0
        %6465 = vmatprep.subr.mxu0 %v5092
        %6466 = vmatpush1.msra.mxu0 %v5090
        %6467 = vmatprep.subr.mxu0 %v5100
        %6468 = vmatpush1.msra.mxu0 %v5098
        %6469 = vmatprep.subr.mxu0 %v5108
        %6470 = vmatpush1.msra.mxu0 %v5106
        %6471 = vmatprep.subr.mxu0 %v5116
        %6472 = vmatpush1.msra.mxu0 %v5114
        %6473 = vmatprep.subr.mxu0 %v5124
        %6474 = vmatpush1.msra.mxu0 %v5122
        %6475 = vmatprep.subr.mxu0 %v5132
        %6476 = vmatpush1.msra.mxu0 %v5130
        %6477 = vmatprep.subr.mxu0 %v5140
        %6478 = vmatpush1.msra.mxu0 %v5138
        %6479 = vmatprep.subr.mxu0 %v5148
        %6480 = vmatpush1.msra.mxu0 %v5146
        %6481 = vmatprep.subr.mxu0 %v5156
        %6482 = vmatpush1.msra.mxu0 %v5154
        %6483 = vmatprep.subr.mxu0 %v5164
        %6484 = vmatpush1.msra.mxu0 %v5162
        %6485 = vmatprep.subr.mxu0 %v5172
        %6486 = vmatpush1.msra.mxu0 %v5170
        %6487 = vmatprep.subr.mxu0 %v5180
        %6488 = vmatpush1.msra.mxu0 %v5178
        %6489 = vmatprep.subr.mxu0 %v5188
        %6490 = vmatpush1.msra.mxu0 %v5186
        %6491 = vmatprep.subr.mxu0 %v5196
        %6492 = vmatpush1.msra.mxu0 %v5194
        %6493 = vmatprep.subr.mxu0 %v5204
        %6494 = vmatpush1.msra.mxu0 %v5202
        %6495 = vmatprep.subr.mxu0 %v5212
        %6496 = vmatpush1.msra.mxu0 %v5210
        %6497 = vmatprep.subr.mxu0 %v5220
        %6498 = vmatpush1.msra.mxu0 %v5218
        %6499 = vmatprep.subr.mxu0 %v5228
        %6500 = vmatpush1.msra.mxu0 %v5226
        %6501 = vmatprep.subr.mxu0 %v5236
        %6502 = vmatpush1.msra.mxu0 %v5234
        %6503 = vmatprep.subr.mxu0 %v5244
        %6504 = vmatpush1.msra.mxu0 %v5242
        %6505 = vmatprep.subr.mxu0 %v5252
        %6506 = vmatpush1.msra.mxu0 %v5250
        %6507 = vmatprep.subr.mxu0 %v5260
        %6508 = vmatpush1.msra.mxu0 %v5258
        %6509 = vmatprep.subr.mxu0 %v5268
        %6510 = vmatpush1.msra.mxu0 %v5266
        %6511 = vmatprep.subr.mxu0 %v5276
        %6512 = vmatpush1.msra.mxu0 %v5274
        %6513 = vmatprep.subr.mxu0 %v5284
        %6514 = vmatpush1.msra.mxu0 %v5282
        %6515 = vmatprep.subr.mxu0 %v5292
        %6516 = vmatpush1.msra.mxu0 %v5290
        %6517 = vmatprep.subr.mxu0 %v5300
        %6518 = vmatpush1.msra.mxu0 %v5298
        %6519 = vmatprep.subr.mxu0 %v5308
        %6520 = vmatpush1.msra.mxu0 %v5306
        %6521 = vmatprep.subr.mxu0 %v5316
        %6522 = vmatpush1.msra.mxu0 %v5314
        %6523 = vmatprep.subr.mxu0 %v5324
        %6524 = vmatpush1.msra.mxu0 %v5322
        %6525 = vmatprep.subr.mxu0 %v5332
        %6526 = vmatpush1.msra.mxu0 %v5330
        %6527 = vmatprep.subr.mxu0 %v5340
        %6528 = vmatpush1.msra.mxu0 %v5338
        %6529 = vmatprep.mubr.f32.mxu0 %v6110
        %6530 = vmatmul.mubr.f32.gmra.mrb[0].mxu0 %v6109
        %v6531 = vpop.f32.mrb[0].mxu0
        %v6532 = vadd.f32 0.0, %v6531
        %v6533 = vpop.f32.mrb[0].mxu0
        %v6534 = vadd.f32 0.0, %v6533
        %6535 = vmatprep.mubr.f32.mxu0 %v6118
        %6536 = vmatmul.mubr.f32.gmra.mrb[0].mxu0 %v6117
        %v6537 = vpop.f32.mrb[0].mxu0
        %v6538 = vadd.f32 0.0, %v6537
        %v6539 = vpop.f32.mrb[0].mxu0
        %v6540 = vadd.f32 0.0, %v6539
        %6541 = vmatprep.mubr.f32.mxu0 %v6126
        %6542 = vmatmul.mubr.f32.gmra.mrb[0].mxu0 %v6125
        %v6543 = vpop.f32.mrb[0].mxu0
        %v6544 = vadd.f32 0.0, %v6543
        %v6545 = vpop.f32.mrb[0].mxu0
        %v6546 = vadd.f32 0.0, %v6545
        %6547 = vdwg.mxu0
        %6548 = vmatprep.subr.mxu0 %v5348
        %6549 = vmatpush1.msra.mxu0 %v5346
        %6550 = vmatprep.subr.mxu0 %v5356
        %6551 = vmatpush1.msra.mxu0 %v5354
        %6552 = vmatprep.subr.mxu0 %v5364
        %6553 = vmatpush1.msra.mxu0 %v5362
        %6554 = vmatprep.subr.mxu0 %v5372
        %6555 = vmatpush1.msra.mxu0 %v5370
        %6556 = vmatprep.subr.mxu0 %v5380
        %6557 = vmatpush1.msra.mxu0 %v5378
        %6558 = vmatprep.subr.mxu0 %v5388
        %6559 = vmatpush1.msra.mxu0 %v5386
        %6560 = vmatprep.subr.mxu0 %v5396
        %6561 = vmatpush1.msra.mxu0 %v5394
        %6562 = vmatprep.subr.mxu0 %v5404
        %6563 = vmatpush1.msra.mxu0 %v5402
        %6564 = vmatprep.subr.mxu0 %v5412
        %6565 = vmatpush1.msra.mxu0 %v5410
        %6566 = vmatprep.subr.mxu0 %v5420
        %6567 = vmatpush1.msra.mxu0 %v5418
        %6568 = vmatprep.subr.mxu0 %v5428
        %6569 = vmatpush1.msra.mxu0 %v5426
        %6570 = vmatprep.subr.mxu0 %v5436
        %6571 = vmatpush1.msra.mxu0 %v5434
        %6572 = vmatprep.subr.mxu0 %v5444
        %6573 = vmatpush1.msra.mxu0 %v5442
        %6574 = vmatprep.subr.mxu0 %v5452
        %6575 = vmatpush1.msra.mxu0 %v5450
        %6576 = vmatprep.subr.mxu0 %v5460
        %6577 = vmatpush1.msra.mxu0 %v5458
        %6578 = vmatprep.subr.mxu0 %v5468
        %6579 = vmatpush1.msra.mxu0 %v5466
        %6580 = vmatprep.subr.mxu0 %v5476
        %6581 = vmatpush1.msra.mxu0 %v5474
        %6582 = vmatprep.subr.mxu0 %v5484
        %6583 = vmatpush1.msra.mxu0 %v5482
        %6584 = vmatprep.subr.mxu0 %v5492
        %6585 = vmatpush1.msra.mxu0 %v5490
        %6586 = vmatprep.subr.mxu0 %v5500
        %6587 = vmatpush1.msra.mxu0 %v5498
        %6588 = vmatprep.subr.mxu0 %v5508
        %6589 = vmatpush1.msra.mxu0 %v5506
        %6590 = vmatprep.subr.mxu0 %v5516
        %6591 = vmatpush1.msra.mxu0 %v5514
        %6592 = vmatprep.subr.mxu0 %v5524
        %6593 = vmatpush1.msra.mxu0 %v5522
        %6594 = vmatprep.subr.mxu0 %v5532
        %6595 = vmatpush1.msra.mxu0 %v5530
        %6596 = vmatprep.subr.mxu0 %v5540
        %6597 = vmatpush1.msra.mxu0 %v5538
        %6598 = vmatprep.subr.mxu0 %v5548
        %6599 = vmatpush1.msra.mxu0 %v5546
        %6600 = vmatprep.subr.mxu0 %v5556
        %6601 = vmatpush1.msra.mxu0 %v5554
        %6602 = vmatprep.subr.mxu0 %v5564
        %6603 = vmatpush1.msra.mxu0 %v5562
        %6604 = vmatprep.subr.mxu0 %v5572
        %6605 = vmatpush1.msra.mxu0 %v5570
        %6606 = vmatprep.subr.mxu0 %v5580
        %6607 = vmatpush1.msra.mxu0 %v5578
        %6608 = vmatprep.subr.mxu0 %v5588
        %6609 = vmatpush1.msra.mxu0 %v5586
        %6610 = vmatprep.subr.mxu0 %v5596
        %6611 = vmatpush1.msra.mxu0 %v5594
        %6612 = vmatprep.mubr.f32.mxu0 %v6112
        %6613 = vmatmul.mubr.f32.gmra.mrb[0].mxu0 %v6111
        %v6614 = vpop.f32.mrb[0].mxu0
        %v6615 = vadd.f32 %v6532, %v6614
        %v6616 = vpop.f32.mrb[0].mxu0
        %v6617 = vadd.f32 %v6534, %v6616
        %6618 = vmatprep.mubr.f32.mxu0 %v6120
        %6619 = vmatmul.mubr.f32.gmra.mrb[0].mxu0 %v6119
        %v6620 = vpop.f32.mrb[0].mxu0
        %v6621 = vadd.f32 %v6538, %v6620
        %v6622 = vpop.f32.mrb[0].mxu0
        %v6623 = vadd.f32 %v6540, %v6622
        %6624 = vmatprep.mubr.f32.mxu0 %v6128
        %6625 = vmatmul.mubr.f32.gmra.mrb[0].mxu0 %v6127
        %v6626 = vpop.f32.mrb[0].mxu0
        %v6627 = vadd.f32 %v6544, %v6626
        %v6628 = vpop.f32.mrb[0].mxu0
        %v6629 = vadd.f32 %v6546, %v6628
        %6630 = vdwg.mxu0
        %6631 = vmatprep.subr.mxu0 %v5604
        %6632 = vmatpush1.msra.mxu0 %v5602
        %6633 = vmatprep.subr.mxu0 %v5612
        %6634 = vmatpush1.msra.mxu0 %v5610
        %6635 = vmatprep.subr.mxu0 %v5620
        %6636 = vmatpush1.msra.mxu0 %v5618
        %6637 = vmatprep.subr.mxu0 %v5628
        %6638 = vmatpush1.msra.mxu0 %v5626
        %6639 = vmatprep.subr.mxu0 %v5636
        %6640 = vmatpush1.msra.mxu0 %v5634
        %6641 = vmatprep.subr.mxu0 %v5644
        %6642 = vmatpush1.msra.mxu0 %v5642
        %6643 = vmatprep.subr.mxu0 %v5652
        %6644 = vmatpush1.msra.mxu0 %v5650
        %6645 = vmatprep.subr.mxu0 %v5660
        %6646 = vmatpush1.msra.mxu0 %v5658
        %6647 = vmatprep.subr.mxu0 %v5668
        %6648 = vmatpush1.msra.mxu0 %v5666
        %6649 = vmatprep.subr.mxu0 %v5676
        %6650 = vmatpush1.msra.mxu0 %v5674
        %6651 = vmatprep.subr.mxu0 %v5684
        %6652 = vmatpush1.msra.mxu0 %v5682
        %6653 = vmatprep.subr.mxu0 %v5692
        %6654 = vmatpush1.msra.mxu0 %v5690
        %6655 = vmatprep.subr.mxu0 %v5700
        %6656 = vmatpush1.msra.mxu0 %v5698
        %6657 = vmatprep.subr.mxu0 %v5708
        %6658 = vmatpush1.msra.mxu0 %v5706
        %6659 = vmatprep.subr.mxu0 %v5716
        %6660 = vmatpush1.msra.mxu0 %v5714
        %6661 = vmatprep.subr.mxu0 %v5724
        %6662 = vmatpush1.msra.mxu0 %v5722
        %6663 = vmatprep.subr.mxu0 %v5732
        %6664 = vmatpush1.msra.mxu0 %v5730
        %6665 = vmatprep.subr.mxu0 %v5740
        %6666 = vmatpush1.msra.mxu0 %v5738
        %6667 = vmatprep.subr.mxu0 %v5748
        %6668 = vmatpush1.msra.mxu0 %v5746
        %6669 = vmatprep.subr.mxu0 %v5756
        %6670 = vmatpush1.msra.mxu0 %v5754
        %6671 = vmatprep.subr.mxu0 %v5764
        %6672 = vmatpush1.msra.mxu0 %v5762
        %6673 = vmatprep.subr.mxu0 %v5772
        %6674 = vmatpush1.msra.mxu0 %v5770
        %6675 = vmatprep.subr.mxu0 %v5780
        %6676 = vmatpush1.msra.mxu0 %v5778
        %6677 = vmatprep.subr.mxu0 %v5788
        %6678 = vmatpush1.msra.mxu0 %v5786
        %6679 = vmatprep.subr.mxu0 %v5796
        %6680 = vmatpush1.msra.mxu0 %v5794
        %6681 = vmatprep.subr.mxu0 %v5804
        %6682 = vmatpush1.msra.mxu0 %v5802
        %6683 = vmatprep.subr.mxu0 %v5812
        %6684 = vmatpush1.msra.mxu0 %v5810
        %6685 = vmatprep.subr.mxu0 %v5820
        %6686 = vmatpush1.msra.mxu0 %v5818
        %6687 = vmatprep.subr.mxu0 %v5828
        %6688 = vmatpush1.msra.mxu0 %v5826
        %6689 = vmatprep.subr.mxu0 %v5836
        %6690 = vmatpush1.msra.mxu0 %v5834
        %6691 = vmatprep.subr.mxu0 %v5844
        %6692 = vmatpush1.msra.mxu0 %v5842
        %6693 = vmatprep.subr.mxu0 %v5852
        %6694 = vmatpush1.msra.mxu0 %v5850
        %6695 = vmatprep.mubr.f32.mxu0 %v6114
        %6696 = vmatmul.mubr.f32.gmra.mrb[0].mxu0 %v6113
        %v6697 = vpop.f32.mrb[0].mxu0
        %v6698 = vadd.f32 %v6615, %v6697
        %v6699 = vpop.f32.mrb[0].mxu0
        %v6700 = vadd.f32 %v6617, %v6699
        %6701 = vmatprep.mubr.f32.mxu0 %v6122
        %6702 = vmatmul.mubr.f32.gmra.mrb[0].mxu0 %v6121
        %v6703 = vpop.f32.mrb[0].mxu0
        %v6704 = vadd.f32 %v6621, %v6703
        %v6705 = vpop.f32.mrb[0].mxu0
        %v6706 = vadd.f32 %v6623, %v6705
        %6707 = vmatprep.mubr.f32.mxu0 %v6130
        %6708 = vmatmul.mubr.f32.gmra.mrb[0].mxu0 %v6129
        %v6709 = vpop.f32.mrb[0].mxu0
        %v6710 = vadd.f32 %v6627, %v6709
        %v6711 = vpop.f32.mrb[0].mxu0
        %v6712 = vadd.f32 %v6629, %v6711
        %6713 = vdwg.mxu0
        %6714 = vmatprep.subr.mxu0 %v5860
        %6715 = vmatpush1.msra.mxu0 %v5858
        %6716 = vmatprep.subr.mxu0 %v5868
        %6717 = vmatpush1.msra.mxu0 %v5866
        %6718 = vmatprep.subr.mxu0 %v5876
        %6719 = vmatpush1.msra.mxu0 %v5874
        %6720 = vmatprep.subr.mxu0 %v5884
        %6721 = vmatpush1.msra.mxu0 %v5882
        %6722 = vmatprep.subr.mxu0 %v5892
        %6723 = vmatpush1.msra.mxu0 %v5890
        %6724 = vmatprep.subr.mxu0 %v5900
        %6725 = vmatpush1.msra.mxu0 %v5898
        %6726 = vmatprep.subr.mxu0 %v5908
        %6727 = vmatpush1.msra.mxu0 %v5906
        %6728 = vmatprep.subr.mxu0 %v5916
        %6729 = vmatpush1.msra.mxu0 %v5914
        %6730 = vmatprep.subr.mxu0 %v5924
        %6731 = vmatpush1.msra.mxu0 %v5922
        %6732 = vmatprep.subr.mxu0 %v5932
        %6733 = vmatpush1.msra.mxu0 %v5930
        %6734 = vmatprep.subr.mxu0 %v5940
        %6735 = vmatpush1.msra.mxu0 %v5938
        %6736 = vmatprep.subr.mxu0 %v5948
        %6737 = vmatpush1.msra.mxu0 %v5946
        %6738 = vmatprep.subr.mxu0 %v5956
        %6739 = vmatpush1.msra.mxu0 %v5954
        %6740 = vmatprep.subr.mxu0 %v5964
        %6741 = vmatpush1.msra.mxu0 %v5962
        %6742 = vmatprep.subr.mxu0 %v5972
        %6743 = vmatpush1.msra.mxu0 %v5970
        %6744 = vmatprep.subr.mxu0 %v5980
        %6745 = vmatpush1.msra.mxu0 %v5978
        %6746 = vmatprep.subr.mxu0 %v5988
        %6747 = vmatpush1.msra.mxu0 %v5986
        %6748 = vmatprep.subr.mxu0 %v5996
        %6749 = vmatpush1.msra.mxu0 %v5994
        %6750 = vmatprep.subr.mxu0 %v6004
        %6751 = vmatpush1.msra.mxu0 %v6002
        %6752 = vmatprep.subr.mxu0 %v6012
        %6753 = vmatpush1.msra.mxu0 %v6010
        %6754 = vmatprep.subr.mxu0 %v6020
        %6755 = vmatpush1.msra.mxu0 %v6018
        %6756 = vmatprep.subr.mxu0 %v6028
        %6757 = vmatpush1.msra.mxu0 %v6026
        %6758 = vmatprep.subr.mxu0 %v6036
        %6759 = vmatpush1.msra.mxu0 %v6034
        %6760 = vmatprep.subr.mxu0 %v6044
        %6761 = vmatpush1.msra.mxu0 %v6042
        %6762 = vmatprep.subr.mxu0 %v6052
        %6763 = vmatpush1.msra.mxu0 %v6050
        %6764 = vmatprep.subr.mxu0 %v6060
        %6765 = vmatpush1.msra.mxu0 %v6058
        %6766 = vmatprep.subr.mxu0 %v6068
        %6767 = vmatpush1.msra.mxu0 %v6066
        %6768 = vmatprep.subr.mxu0 %v6076
        %6769 = vmatpush1.msra.mxu0 %v6074
        %6770 = vmatprep.subr.mxu0 %v6084
        %6771 = vmatpush1.msra.mxu0 %v6082
        %6772 = vmatprep.subr.mxu0 %v6092
        %6773 = vmatpush1.msra.mxu0 %v6090
        %6774 = vmatprep.subr.mxu0 %v6100
        %6775 = vmatpush1.msra.mxu0 %v6098
        %6776 = vmatprep.subr.mxu0 %v6108
        %6777 = vmatpush1.msra.mxu0 %v6106
        %6778 = vmatprep.mubr.f32.mxu0 %v6116
        %6779 = vmatmul.mubr.f32.gmra.mrb[0].mxu0 %v6115
        %v6780 = vpop.f32.mrb[0].mxu0
        %v6781 = vadd.f32 %v6698, %v6780
        %v6782 = vpop.f32.mrb[0].mxu0
        %v6783 = vadd.f32 %v6700, %v6782
        %6784 = vmatprep.mubr.f32.mxu0 %v6124
        %6785 = vmatmul.mubr.f32.gmra.mrb[0].mxu0 %v6123
        %v6786 = vpop.f32.mrb[0].mxu0
        %v6787 = vadd.f32 %v6704, %v6786
        %v6788 = vpop.f32.mrb[0].mxu0
        %v6789 = vadd.f32 %v6706, %v6788
        %6790 = vmatprep.mubr.f32.mxu0 %v6132
        %6791 = vmatmul.mubr.f32.gmra.mrb[0].mxu0 %v6131
        %v6792 = vpop.f32.mrb[0].mxu0
        %v6793 = vadd.f32 %v6710, %v6792
        %v6794 = vpop.f32.mrb[0].mxu0
        %v6795 = vadd.f32 %v6712, %v6794
        %6796 = vdwg.mxu0
        %v6797 = vrcp.pop %v6461
        %v6798 = vrcp.pop %v6463
        %v6799 = vrcp.pop %v6793
        %v6800 = vrcp.pop %v6795
        %v6801 = vlaneseq
        %v6802 = vshrl.u32 %v6801, 7
        %v6803 = vsub.s32 0, %v6802
        %v6804 = vrot.slane %v6797, %v6803
        %v6805 = vlaneseq
        %v6806 = vshrl.u32 %v6805, 7
        %v6807 = vsub.s32 0, %v6806
        %v6808 = vrot.slane %v6798, %v6807
        %v6809 = vlaneseq
        %v6810 = vshrl.u32 %v6809, 7
        %v6811 = vsub.s32 0, %v6810
        %v6812 = vrot.slane %v6799, %v6811
        %v6813 = vlaneseq
        %v6814 = vshrl.u32 %v6813, 7
        %v6815 = vsub.s32 0, %v6814
        %v6816 = vrot.slane %v6800, %v6815
        %v6817 = vmul.f32 %v6449, %v6804
        %v6818 = vmul.f32 %v6451, %v6808
        %v6819 = vmul.f32 %v6781, %v6812
        %v6820 = vmul.f32 %v6783, %v6816
        %v6821 = vmul.f32 %v6455, %v6804
        %v6822 = vmul.f32 %v6457, %v6808
        %v6823 = vmul.f32 %v6787, %v6812
        %v6824 = vmul.f32 %v6789, %v6816
        %v6825 = vld [vmem:[%s10] sm:$0xff]
        %v6826 = vld [vmem:[%s11] sm:$0xff]
        %6828 = vset.pattern.permute.xlu0 0
        %6829 = vperm.xlu0 %6828, %v6826
        %v6830 = vpop.permute.xlu0 %6829
        %vm6832 = vcmask 130048
        %v6834 = vsel %vm6832, %v6825, 0
        %6836 = vmatprep.subr.mxu0 %v6818
        %6837 = vmatpush1.msra.mxu0 %v6817
        %6838 = vmatprep.subr.mxu0 %v6822
        %6839 = vmatpush1.msra.mxu0 %v6821
        %6840 = vmatprep.subr.mxu0 0.0
        %6841 = vmatpush1.msra.mxu0 0.0
        %6842 = vmatprep.subr.mxu0 0.0
        %6843 = vmatpush1.msra.mxu0 0.0
        %6844 = vmatprep.subr.mxu0 0.0
        %6845 = vmatpush1.msra.mxu0 0.0
        %6846 = vmatprep.subr.mxu0 0.0
        %6847 = vmatpush1.msra.mxu0 0.0
        %6848 = vmatprep.subr.mxu0 0.0
        %6849 = vmatpush1.msra.mxu0 0.0
        %6850 = vmatprep.subr.mxu0 0.0
        %6851 = vmatpush1.msra.mxu0 0.0
        %6852 = vmatprep.subr.mxu0 0.0
        %6853 = vmatpush1.msra.mxu0 0.0
        %6854 = vmatprep.subr.mxu0 0.0
        %6855 = vmatpush1.msra.mxu0 0.0
        %6856 = vmatprep.subr.mxu0 0.0
        %6857 = vmatpush1.msra.mxu0 0.0
        %6858 = vmatprep.subr.mxu0 0.0
        %6859 = vmatpush1.msra.mxu0 0.0
        %6860 = vmatprep.subr.mxu0 0.0
        %6861 = vmatpush1.msra.mxu0 0.0
        %6862 = vmatprep.subr.mxu0 0.0
        %6863 = vmatpush1.msra.mxu0 0.0
        %6864 = vmatprep.subr.mxu0 0.0
        %6865 = vmatpush1.msra.mxu0 0.0
        %6866 = vmatprep.subr.mxu0 0.0
        %6867 = vmatpush1.msra.mxu0 0.0
        %6868 = vmatprep.subr.mxu0 0.0
        %6869 = vmatpush1.msra.mxu0 0.0
        %6870 = vmatprep.subr.mxu0 0.0
        %6871 = vmatpush1.msra.mxu0 0.0
        %6872 = vmatprep.subr.mxu0 0.0
        %6873 = vmatpush1.msra.mxu0 0.0
        %6874 = vmatprep.subr.mxu0 0.0
        %6875 = vmatpush1.msra.mxu0 0.0
        %6876 = vmatprep.subr.mxu0 0.0
        %6877 = vmatpush1.msra.mxu0 0.0
        %6878 = vmatprep.subr.mxu0 0.0
        %6879 = vmatpush1.msra.mxu0 0.0
        %6880 = vmatprep.subr.mxu0 0.0
        %6881 = vmatpush1.msra.mxu0 0.0
        %6882 = vmatprep.subr.mxu0 0.0
        %6883 = vmatpush1.msra.mxu0 0.0
        %6884 = vmatprep.subr.mxu0 0.0
        %6885 = vmatpush1.msra.mxu0 0.0
        %6886 = vmatprep.subr.mxu0 0.0
        %6887 = vmatpush1.msra.mxu0 0.0
        %6888 = vmatprep.subr.mxu0 0.0
        %6889 = vmatpush1.msra.mxu0 0.0
        %6890 = vmatprep.subr.mxu0 0.0
        %6891 = vmatpush1.msra.mxu0 0.0
        %6892 = vmatprep.subr.mxu0 0.0
        %6893 = vmatpush1.msra.mxu0 0.0
        %6894 = vmatprep.subr.mxu0 0.0
        %6895 = vmatpush1.msra.mxu0 0.0
        %6896 = vmatprep.subr.mxu0 0.0
        %6897 = vmatpush1.msra.mxu0 0.0
        %6898 = vmatprep.subr.mxu0 0.0
        %6899 = vmatpush1.msra.mxu0 0.0
        %6900 = vmatprep.mubr.f32.mxu0 0.0
        %6901 = vmatmul.mubr.f32.gmra.mrb[0].mxu0 %v6834
        %v6902 = vpop.f32.mrb[0].mxu0
        %v6903 = vadd.f32 %v6830, %v6902
        %v6904 = vpop.f32.mrb[0].mxu0
        %v6905 = vadd.f32 %v6830, %v6904
        %6906 = vdwg.mxu0
        %6907 = vmatprep.subr.mxu0 %v6820
        %6908 = vmatpush1.msra.mxu0 %v6819
        %6909 = vmatprep.subr.mxu0 %v6824
        %6910 = vmatpush1.msra.mxu0 %v6823
        %6911 = vmatprep.subr.mxu0 0.0
        %6912 = vmatpush1.msra.mxu0 0.0
        %6913 = vmatprep.subr.mxu0 0.0
        %6914 = vmatpush1.msra.mxu0 0.0
        %6915 = vmatprep.subr.mxu0 0.0
        %6916 = vmatpush1.msra.mxu0 0.0
        %6917 = vmatprep.subr.mxu0 0.0
        %6918 = vmatpush1.msra.mxu0 0.0
        %6919 = vmatprep.subr.mxu0 0.0
        %6920 = vmatpush1.msra.mxu0 0.0
        %6921 = vmatprep.subr.mxu0 0.0
        %6922 = vmatpush1.msra.mxu0 0.0
        %6923 = vmatprep.subr.mxu0 0.0
        %6924 = vmatpush1.msra.mxu0 0.0
        %6925 = vmatprep.subr.mxu0 0.0
        %6926 = vmatpush1.msra.mxu0 0.0
        %6927 = vmatprep.subr.mxu0 0.0
        %6928 = vmatpush1.msra.mxu0 0.0
        %6929 = vmatprep.subr.mxu0 0.0
        %6930 = vmatpush1.msra.mxu0 0.0
        %6931 = vmatprep.subr.mxu0 0.0
        %6932 = vmatpush1.msra.mxu0 0.0
        %6933 = vmatprep.subr.mxu0 0.0
        %6934 = vmatpush1.msra.mxu0 0.0
        %6935 = vmatprep.subr.mxu0 0.0
        %6936 = vmatpush1.msra.mxu0 0.0
        %6937 = vmatprep.subr.mxu0 0.0
        %6938 = vmatpush1.msra.mxu0 0.0
        %6939 = vmatprep.subr.mxu0 0.0
        %6940 = vmatpush1.msra.mxu0 0.0
        %6941 = vmatprep.subr.mxu0 0.0
        %6942 = vmatpush1.msra.mxu0 0.0
        %6943 = vmatprep.subr.mxu0 0.0
        %6944 = vmatpush1.msra.mxu0 0.0
        %6945 = vmatprep.subr.mxu0 0.0
        %6946 = vmatpush1.msra.mxu0 0.0
        %6947 = vmatprep.subr.mxu0 0.0
        %6948 = vmatpush1.msra.mxu0 0.0
        %6949 = vmatprep.subr.mxu0 0.0
        %6950 = vmatpush1.msra.mxu0 0.0
        %6951 = vmatprep.subr.mxu0 0.0
        %6952 = vmatpush1.msra.mxu0 0.0
        %6953 = vmatprep.subr.mxu0 0.0
        %6954 = vmatpush1.msra.mxu0 0.0
        %6955 = vmatprep.subr.mxu0 0.0
        %6956 = vmatpush1.msra.mxu0 0.0
        %6957 = vmatprep.subr.mxu0 0.0
        %6958 = vmatpush1.msra.mxu0 0.0
        %6959 = vmatprep.subr.mxu0 0.0
        %6960 = vmatpush1.msra.mxu0 0.0
        %6961 = vmatprep.subr.mxu0 0.0
        %6962 = vmatpush1.msra.mxu0 0.0
        %6963 = vmatprep.subr.mxu0 0.0
        %6964 = vmatpush1.msra.mxu0 0.0
        %6965 = vmatprep.subr.mxu0 0.0
        %6966 = vmatpush1.msra.mxu0 0.0
        %6967 = vmatprep.subr.mxu0 0.0
        %6968 = vmatpush1.msra.mxu0 0.0
        %6969 = vmatprep.subr.mxu0 0.0
        %6970 = vmatpush1.msra.mxu0 0.0
        %6971 = vmatprep.mubr.f32.mxu0 0.0
        %6972 = vmatmul.mubr.f32.gmra.mrb[0].mxu0 %v6834
        %v6973 = vpop.f32.mrb[0].mxu0
        %v6974 = vadd.f32 %v6830, %v6973
        %v6975 = vpop.f32.mrb[0].mxu0
        %v6976 = vadd.f32 %v6830, %v6975
        %6977 = vdwg.mxu0
        %v6978 = vmax.f32 %v6903, 0.0
        %v6979 = vmax.f32 %v6905, 0.0
        %v6980 = vmax.f32 %v6974, 0.0
        %v6981 = vmax.f32 %v6976, 0.0
        %6982 = vst [vmem:[%s443] sm:$0xff] %v6978
        %6983 = vst [vmem:[%s443 + $0x8] sm:$0xff] %v6979
        %6984 = vst [vmem:[%s443 + $0x10] sm:$0xff] %v6980
        %6985 = vst [vmem:[%s443 + $0x18] sm:$0xff] %v6981
        %s6986 = sand.u32 %s308, 1
        %s6987 = scalar_lea.sflag [#allocation6], %s6986
        %s6988 = sand.u32 %s308, 1
        %s6989 = smul.addr %s6988, 32
        %s6990 = scalar_lea.vmem [#allocation7], %s6989
        // Predicated region
        $region77: #{tpu_custom_call.1} parent=67 // pred_check
          %p6991 = pneg %p318
        $region78: #{tpu_custom_call.1} parent=67 // pred_check_branch
          %6993 = sbr.rel (%p6991) target = $region80
        $region79: #{tpu_custom_call.1} parent=67 // pred_region
          %s6994 = smul.u32 4, %s34
          %s6996 = ssub.s32 512, 512
          %6997 = vsyncadd %s6987, %s6996
          %s6998 = smul.addr %s33, 8
          %s6999 = sadd.s32 %s6994, %s6998
          %s7000 = smul.addr %s6999, 128
          %s7001 = scalar_lea.hbm %s12, %s7000
          %s7003 = sshll.u32 %s6990, 4
          %s7004 = int_to_ptr.vmem [resolvable:$true] %s7003
          %7006 = dma.vmem_to_hbm [thread:$0]  %s7004, 512, %s7001, %s6987
        $region80: #{tpu_custom_call.1} parent=67 // pred_fallthru
          _
      $region68: #{tpu_custom_call.1} parent=5 // pred_fallthru
        _
      %p7007 = scmp.le.s32.totalorder 2, %s24
      // Predicated region
      $region81: #{tpu_custom_call.1} parent=5 // pred_check
        %p7008 = pneg %p7007
      $region82: #{tpu_custom_call.1} parent=5 // pred_check_branch
        %7010 = sbr.rel (%p7008) target = $region84
      $region83: #{tpu_custom_call.1} parent=5 // pred_region
        %s7011 = ssub.s32 %s24, 2
        // Predicated region
        $region85: #{tpu_custom_call.1} parent=83 // pred_check
          %p7012 = pneg %p324
        $region86: #{tpu_custom_call.1} parent=83 // pred_check_branch
          %7014 = sbr.rel (%p7012) target = $region88
        $region87: #{tpu_custom_call.1} parent=83 // pred_region
          %s7015 = sand.u32 %s309, 1
          %s7016 = scalar_lea.sflag [#allocation6], %s7015
          %s7017 = sand.u32 %s309, 1
          %s7018 = smul.addr %s7017, 32
          %s7019 = scalar_lea.vmem [#allocation7], %s7018
          %7020 = dma.done %s7016, 512
        $region88: #{tpu_custom_call.1} parent=83 // pred_fallthru
          _
      $region84: #{tpu_custom_call.1} parent=5 // pred_fallthru
        _
    $region6: #{tpu_custom_call.1} parent=1 // loop_footer
      %s28 = sadd.s32 1, %s24
    $region7: #{tpu_custom_call.1} parent=1 // loop_footer_branch
      %23 = sbr.rel target = $region3
    $region8: #{tpu_custom_call.1} parent=1 // loop_exit
      _
    %7021 = vsyncpa [#allocation5], 1
    %s7022 = scalar_lea.sflag [#allocation5], 1
    %7023 = vsyncpa %s7022, 1
    %7024 = vsyncpa [#allocation6], 1
    %s7025 = scalar_lea.sflag [#allocation6], 1
    %7026 = vsyncpa %s7025, 1

</llo_original>
